<compile_context>
chip_gen: v7x
topology: tpu7x:2x2x1
jax: 0.10.0
libtpu: 0.0.40
codegen_flags: <defaults>
</compile_context>

<pallas_src>
import functools

import jax
import jax.numpy as jnp
from jax.experimental import pallas as pl
from jax.experimental.pallas import tpu as pltpu

LN_EPS = 1e-5
PAD = 128   # every channel dimension is zero-padded to this lane width


# ----------------------------------------------------------------------------
# Fused kernel: patch_embed + 3x PatchMerging + head for ONE batch element.
# ----------------------------------------------------------------------------
def fused_encoder_kernel(patches_ref, pe_w_ref, pm_w_ref, head_w_ref, vecs_ref,
                         o_ref, a0_ref, a1_ref, a2_ref, a3_ref, *, dims):
    d0 = dims[0]
    m0b = a0_ref.shape[0]

    vecs = vecs_ref[...]                       # (8, PAD) f32 -- one vreg
    pe_g, pe_bt = vecs[0:1, :], vecs[1:2, :]
    head_b = vecs[5:6, :]

    # ---- patch_embed: y = LN(patches @ W) * gamma + beta -------------------
    # (conv bias is folded into W via an all-ones column of `patches`)
    pe_w = pe_w_ref[...]                       # (PAD, PAD) bf16
    mask0 = jax.lax.broadcasted_iota(jnp.int32, (1, PAD), 1) < d0
    ch = 128 if m0b % 128 == 0 else (64 if m0b % 64 == 0 else m0b)
    inv_d0 = 1.0 / d0

    def pe_body(c, carry):
        r0 = pl.multiple_of(c * ch, ch)
        xb = patches_ref[pl.ds(r0, ch), :]                     # (ch, PAD) bf16
        y = jnp.dot(xb, pe_w, preferred_element_type=jnp.float32)
        mu = jnp.sum(y, axis=-1, keepdims=True) * inv_d0       # pad lanes of y are 0
        yc = jnp.where(mask0, y - mu, 0.0)                     # mask pad lanes
        var = jnp.sum(yc * yc, axis=-1, keepdims=True) * inv_d0
        inv = jax.lax.rsqrt(var + LN_EPS)
        a0_ref[pl.ds(r0, ch), :] = ((yc * inv) * pe_g + pe_bt).astype(a0_ref.dtype)
        return carry

    jax.lax.fori_loop(0, m0b // ch, pe_body, 0, unroll=True)

    # ---- PatchMerging: LN(4C) + Linear(4C -> C_out) ------------------------
    # The 4 channel blocks of the 2x2 merge are 4 *contiguous* row blocks of
    # the source activation (blocked-parity row order), so no strided gather.
    def merge(src_ref, dst_ref, widx, c_real):
        m_out = src_ref.shape[0] // 4
        rc = 64 if m_out % 64 == 0 else m_out
        inv_n = 1.0 / (4.0 * c_real)
        mask = jax.lax.broadcasted_iota(jnp.int32, (1, PAD), 1) < c_real
        bw = vecs[2 + widx:3 + widx, :]        # beta @ W (f32, padded with 0)

        def body(c, carry):
            r0 = pl.multiple_of(c * rc, rc)

            def blk(k):
                return src_ref[pl.ds(k * m_out + r0, rc), :].astype(jnp.float32)

            # pass 1: mean over the real 4*c_real channels (pad lanes are 0)
            s = jnp.zeros((rc, 1), jnp.float32)
            for k in range(4):
                s = s + jnp.sum(blk(k), axis=-1, keepdims=True)
            mu = s * inv_n
            # pass 2: numerically stable variance (pad lanes masked out)
            sq = jnp.zeros((rc, 1), jnp.float32)
            for k in range(4):
                d = jnp.where(mask, blk(k) - mu, 0.0)
                sq = sq + jnp.sum(d * d, axis=-1, keepdims=True)
            inv = jax.lax.rsqrt(sq * inv_n + LN_EPS)
            # pass 3: normalized bf16 activations -> MXU (gamma folded into W)
            acc = jnp.zeros((rc, PAD), jnp.float32)
            for k in range(4):
                xn = ((blk(k) - mu) * inv).astype(jnp.bfloat16)
                acc = acc + jnp.dot(xn, pm_w_ref[widx, k * PAD:(k + 1) * PAD, :],
                                    preferred_element_type=jnp.float32)
            dst_ref[pl.ds(r0, rc), :] = (acc + bw).astype(dst_ref.dtype)
            return carry

        jax.lax.fori_loop(0, m_out // rc, body, 0, unroll=True)

    merge(a0_ref, a1_ref, 0, dims[0])
    merge(a1_ref, a2_ref, 1, dims[1])
    merge(a2_ref, a3_ref, 2, dims[2])

    # ---- head: 1x1 conv == per-row matmul + bias ---------------------------
    o_ref[...] = (jnp.dot(a3_ref[...].astype(jnp.bfloat16), head_w_ref[...],
                          preferred_element_type=jnp.float32) + head_b)


# ----------------------------------------------------------------------------
# Parameter construction: raw (reference) params + packed/folded kernel params
# ----------------------------------------------------------------------------
def init_params(key, in_chans, patch_size, dims, out_chans):
    keys = jax.random.split(key, 16)
    d0 = dims[0]
    k_pe = in_chans * patch_size * patch_size

    raw = {}
    w_conv = 0.02 * jax.random.normal(
        keys[0], (d0, in_chans, patch_size, patch_size), jnp.float32)
    raw["pe_w"] = w_conv.reshape(d0, k_pe).T                   # (C*p*p, d0)
    raw["pe_b"] = 0.01 * jax.random.normal(keys[1], (d0,), jnp.float32)
    raw["pe_g"] = 1.0 + 0.1 * jax.random.normal(keys[2], (d0,), jnp.float32)
    raw["pe_beta"] = 0.05 * jax.random.normal(keys[3], (d0,), jnp.float32)
    for i in range(len(dims) - 1):
        cin, cout = 4 * dims[i], dims[i + 1]
        w_red = 0.02 * jax.random.normal(keys[4 + 3 * i], (cout, cin), jnp.float32)
        raw[f"pm{i}_w"] = w_red.T                              # (4*C_i, C_{i+1})
        raw[f"pm{i}_g"] = 1.0 + 0.1 * jax.random.normal(keys[5 + 3 * i], (cin,),
                                                        jnp.float32)
        raw[f"pm{i}_beta"] = 0.05 * jax.random.normal(keys[6 + 3 * i], (cin,),
                                                      jnp.float32)
    w_head = 0.02 * jax.random.normal(keys[13], (out_chans, dims[-1]), jnp.float32)
    raw["head_w"] = w_head.T                                   # (dims[-1], out)
    raw["head_b"] = 0.01 * jax.random.normal(keys[14], (out_chans,), jnp.float32)

    # ---- packed, lane-dense, gamma-folded kernel params --------------------
    kp = {}
    pe_w = jnp.zeros((PAD, PAD), jnp.float32)
    pe_w = pe_w.at[:k_pe, :d0].set(raw["pe_w"])
    pe_w = pe_w.at[k_pe, :d0].set(raw["pe_b"])     # bias row, hit by ones column
    kp["pe_w"] = pe_w.astype(jnp.bfloat16)

    pm_w = jnp.zeros((len(dims) - 1, 4 * PAD, PAD), jnp.float32)
    vecs = jnp.zeros((8, PAD), jnp.float32)
    vecs = vecs.at[0, :d0].set(raw["pe_g"])
    vecs = vecs.at[1, :d0].set(raw["pe_beta"])
    for i in range(len(dims) - 1):
        ci, co = dims[i], dims[i + 1]
        wf = raw[f"pm{i}_g"][:, None] * raw[f"pm{i}_w"]        # fold gamma (f32)
        for k in range(4):
            pm_w = pm_w.at[i, k * PAD:k * PAD + ci, :co].set(
                wf[k * ci:(k + 1) * ci, :])
        vecs = vecs.at[2 + i, :co].set(raw[f"pm{i}_beta"] @ raw[f"pm{i}_w"])
    kp["pm_w"] = pm_w.astype(jnp.bfloat16)

    head_w = jnp.zeros((PAD, PAD), jnp.float32)
    head_w = head_w.at[:dims[-1], :out_chans].set(raw["head_w"])
    kp["head_w"] = head_w.astype(jnp.bfloat16)
    vecs = vecs.at[5, :out_chans].set(raw["head_b"])
    kp["vecs"] = vecs
    return raw, kp


# ----------------------------------------------------------------------------
# Forward pass (single fused pallas_call, grid over batch)
# ----------------------------------------------------------------------------
def mamba_encoder_forward(x_nchw, snr, kparams, *, patch_size, dims, out_chans):
    del snr  # TODO(synk): MobileMambaBlock / SNR_embedding not provided -> identity path.
    B, C, H, W = x_nchw.shape
    p = patch_size
    Hp, Wp = H // p, W // p
    n_merge = len(dims) - 1
    assert n_merge == 3, "fused kernel is specialized to 4 stages / 3 merges"
    r = 1 << n_merge
    assert Hp % r == 0 and Wp % r == 0, "spatial size too small for 3 merges"
    h3, w3 = Hp // r, Wp // r
    m0b, m3 = Hp * Wp, h3 * w3
    assert m3 % 8 == 0, "need sublane-aligned final rows per batch element"
    k_pe = C * p * p
    assert k_pe < PAD and max(dims) <= PAD and out_chans <= PAD

    # Patchify + blocked-parity row order folded into ONE reshape/transpose
    # (no gather).  Per-batch row index bits (msb..lsb):
    #   (dj_m0, di_m0, dj_m1, di_m1, dj_m2, di_m2, i3, j3)
    # so merge-k's 4 parity blocks (x0,x1,x2,x3) are 4 contiguous row blocks.
    xr = x_nchw.reshape(B, C, h3, 2, 2, 2, p, w3, 2, 2, 2, p)
    xp = xr.transpose(0, 10, 5, 9, 4, 8, 3, 2, 7, 1, 6, 11)
    patches = xp.reshape(B, m0b, k_pe)
    parts = [patches, jnp.ones((B, m0b, 1), patches.dtype)]   # ones col = conv bias
    if PAD - k_pe - 1 > 0:
        parts.append(jnp.zeros((B, m0b, PAD - k_pe - 1), patches.dtype))
    patches = jnp.concatenate(parts, axis=-1).astype(jnp.bfloat16)

    out_pad = pl.pallas_call(
        functools.partial(fused_encoder_kernel, dims=tuple(dims)),
        out_shape=jax.ShapeDtypeStruct((B, m3, PAD), jnp.float32),
        grid_spec=pltpu.PrefetchScalarGridSpec(
            num_scalar_prefetch=0,
            grid=(B,),
            in_specs=[
                pl.BlockSpec((None, m0b, PAD), lambda b: (b, 0, 0)),   # patches
                pl.BlockSpec((PAD, PAD), lambda b: (0, 0)),            # pe_w
                pl.BlockSpec((3, 4 * PAD, PAD), lambda b: (0, 0, 0)),  # pm_w
                pl.BlockSpec((PAD, PAD), lambda b: (0, 0)),            # head_w
                pl.BlockSpec((8, PAD), lambda b: (0, 0)),              # vec slab
            ],
            out_specs=pl.BlockSpec((None, m3, PAD), lambda b: (b, 0, 0)),
            scratch_shapes=[
                pltpu.VMEM((m0b, PAD), jnp.bfloat16),        # stage-0 activations
                pltpu.VMEM((m0b // 4, PAD), jnp.bfloat16),   # stage-1
                pltpu.VMEM((m0b // 16, PAD), jnp.bfloat16),  # stage-2
                pltpu.VMEM((m0b // 64, PAD), jnp.float32),   # stage-3 (pre-head)
            ]),
        compiler_params=pltpu.CompilerParams(
            dimension_semantics=("parallel",),
            vmem_limit_bytes=32 * 1024 * 1024),
    )(patches, kparams["pe_w"], kparams["pm_w"], kparams["head_w"],
      kparams["vecs"])

    y = out_pad[:, :, :out_chans]                                 # drop lane padding
    return y.reshape(B, h3, w3, out_chans).transpose(0, 3, 1, 2)  # NCHW


# ----------------------------------------------------------------------------
# Pure-JAX reference (straightforward layout, same bf16 matmul precision)
# ----------------------------------------------------------------------------
def _layernorm(x, g, b):
    mu = jnp.mean(x, axis=-1, keepdims=True)
    var = jnp.mean(jnp.square(x - mu), axis=-1, keepdims=True)
    return (x - mu) * jax.lax.rsqrt(var + LN_EPS) * g + b


def reference_forward(x_nchw, raw, *, patch_size, dims, out_chans):
    B, C, H, W = x_nchw.shape
    p = patch_size
    Hp, Wp = H // p, W // p
    patches = (x_nchw.reshape(B, C, Hp, p, Wp, p)
               .transpose(0, 2, 4, 1, 3, 5)
               .reshape(B * Hp * Wp, C * p * p))
    y = jnp.dot(patches.astype(jnp.bfloat16), raw["pe_w"].astype(jnp.bfloat16),
                preferred_element_type=jnp.float32) + raw["pe_b"]
    x = _layernorm(y, raw["pe_g"], raw["pe_beta"]).reshape(B, Hp, Wp, dims[0])
    h, w = Hp, Wp
    for i in range(len(dims) - 1):
        x0 = x[:, 0::2, 0::2, :]
        x1 = x[:, 1::2, 0::2, :]
        x2 = x[:, 0::2, 1::2, :]
        x3 = x[:, 1::2, 1::2, :]
        xc = jnp.concatenate([x0, x1, x2, x3], axis=-1)
        h, w = h // 2, w // 2
        xc = xc.reshape(B * h * w, 4 * dims[i])
        xn = _layernorm(xc, raw[f"pm{i}_g"], raw[f"pm{i}_beta"])
        x = jnp.dot(xn.astype(jnp.bfloat16), raw[f"pm{i}_w"].astype(jnp.bfloat16),
                    preferred_element_type=jnp.float32).reshape(B, h, w, dims[i + 1])
    xf = x.reshape(B * h * w, dims[-1])
    yh = jnp.dot(xf.astype(jnp.bfloat16), raw["head_w"].astype(jnp.bfloat16),
                 preferred_element_type=jnp.float32) + raw["head_b"]
    return yh.reshape(B, h, w, out_chans).transpose(0, 3, 1, 2)


# ----------------------------------------------------------------------------
if __name__ == "__main__":
    B, C, H, W = 2, 3, 128, 128
    PATCH = 4
    DIMS = (32, 64, 96, 128)
    OUT_CHANS = 36

    key = jax.random.PRNGKey(0)
    kx, kp_key = jax.random.split(key)
    x = jax.random.normal(kx, (B, C, H, W), jnp.float32)
    snr = jnp.float32(10.0)   # unused by the implemented path

    raw, kparams = init_params(kp_key, C, PATCH, DIMS, OUT_CHANS)

    fwd = jax.jit(functools.partial(mamba_encoder_forward,
                                    patch_size=PATCH, dims=DIMS,
                                    out_chans=OUT_CHANS))
    out = jax.block_until_ready(fwd(x, snr, kparams))

    expected = (B, OUT_CHANS, H // PATCH // 8, W // PATCH // 8)
    assert out.shape == expected, (out.shape, expected)
    assert bool(jnp.all(jnp.isfinite(out)))

    ref = reference_forward(x, raw, patch_size=PATCH, dims=DIMS,
                            out_chans=OUT_CHANS)
    max_err = float(jnp.max(jnp.abs(out - ref)))
    assert max_err < 4e-2, f"mismatch vs reference: {max_err}"
    print("KERNEL_OK")
</pallas_src>

<mosaic_0001>
module attributes {stable_mosaic.version = 11 : i64} {
  func.func @fused_encoder_kernel(%arg0: i32, %arg1: memref<1x1024x128xbf16, #tpu.memory_space<vmem>>, %arg2: memref<128x128xbf16, #tpu.memory_space<vmem>>, %arg3: memref<3x512x128xbf16, #tpu.memory_space<vmem>>, %arg4: memref<128x128xbf16, #tpu.memory_space<vmem>>, %arg5: memref<8x128xf32, #tpu.memory_space<vmem>>, %arg6: memref<1x16x128xf32, #tpu.memory_space<vmem>>, %arg7: memref<1024x128xbf16, #tpu.memory_space<vmem>>, %arg8: memref<256x128xbf16, #tpu.memory_space<vmem>>, %arg9: memref<64x128xbf16, #tpu.memory_space<vmem>>, %arg10: memref<16x128xf32, #tpu.memory_space<vmem>>) attributes {dimension_semantics = [#tpu.dimension_semantics<parallel>], iteration_bounds = array<i64: 2>, scalar_prefetch = 0 : i64, scratch_operands = 4 : i64, tpu.core_type = #tpu.core_type<tc>, window_params = [{transform_indices = @transform_0, window_bounds = array<i64: 1, 1024, 128>}, {pipeline_mode = #tpu.pipeline_mode<synchronous>, transform_indices = @transform_1, window_bounds = array<i64: 128, 128>}, {pipeline_mode = #tpu.pipeline_mode<synchronous>, transform_indices = @transform_2, window_bounds = array<i64: 3, 512, 128>}, {pipeline_mode = #tpu.pipeline_mode<synchronous>, transform_indices = @transform_3, window_bounds = array<i64: 128, 128>}, {pipeline_mode = #tpu.pipeline_mode<synchronous>, transform_indices = @transform_4, window_bounds = array<i64: 8, 128>}, {transform_indices = @transform_5, window_bounds = array<i64: 1, 16, 128>}]} {
    %c0 = arith.constant 0 : index
    %c0_0 = arith.constant 0 : index
    %0 = vector.load %arg5[%c0, %c0_0] : memref<8x128xf32, #tpu.memory_space<vmem>>, vector<8x128xf32>
    %1 = vector.extract_strided_slice %0 {offsets = [0, 0], sizes = [1, 128], strides = [1, 1]} : vector<8x128xf32> to vector<1x128xf32>
    %2 = vector.extract_strided_slice %0 {offsets = [1, 0], sizes = [1, 128], strides = [1, 1]} : vector<8x128xf32> to vector<1x128xf32>
    %3 = vector.extract_strided_slice %0 {offsets = [5, 0], sizes = [1, 128], strides = [1, 1]} : vector<8x128xf32> to vector<1x128xf32>
    %c0_1 = arith.constant 0 : index
    %c0_2 = arith.constant 0 : index
    %4 = vector.load %arg2[%c0_1, %c0_2] : memref<128x128xbf16, #tpu.memory_space<vmem>>, vector<128x128xbf16>
    %5 = tpu.iota {dimensions = array<i32: 1>} : vector<1x128xi32>
    %c32_i32 = arith.constant 32 : i32
    %6 = vector.broadcast %c32_i32 : i32 to vector<1x128xi32>
    %7 = arith.cmpi slt, %5, %6 : vector<1x128xi32>
    %c0_i32 = arith.constant 0 : i32
    %c128_i32 = arith.constant 128 : i32
    %8 = arith.muli %c0_i32, %c128_i32 : i32
    %9 = tpu.assume_multiple %8, 128 : i32
    %c0_3 = arith.constant 0 : index
    %10 = arith.index_cast %9 : i32 to index
    %c0_4 = arith.constant 0 : index
    %11 = vector.load %arg1[%c0_3, %10, %c0_4] : memref<1x1024x128xbf16, #tpu.memory_space<vmem>>, vector<1x128x128xbf16>
    %12 = vector.shape_cast %11 : vector<1x128x128xbf16> to vector<128x128xbf16>
    %cst = arith.constant dense<0.000000e+00> : vector<128x128xf32>
    %13 = tpu.matmul %12, %4, %cst {dimension_numbers = #tpu.dot_dimension_numbers<[1], [0], [0], [1], [0, 0, 1, 1], [], []>} : vector<128x128xbf16>, vector<128x128xbf16>, vector<128x128xf32> -> vector<128x128xf32>
    %cst_5 = arith.constant dense<0.000000e+00> : vector<128xf32>
    %14 = vector.multi_reduction <add>, %13, %cst_5 [1] : vector<128x128xf32> to vector<128xf32>
    %15 = vector.shape_cast %14 : vector<128xf32> to vector<128x1xf32>
    %cst_6 = arith.constant 3.125000e-02 : f32
    %16 = vector.broadcast %cst_6 : f32 to vector<128x1xf32>
    %17 = arith.mulf %15, %16 : vector<128x1xf32>
    %18 = vector.broadcast %17 : vector<128x1xf32> to vector<128x128xf32>
    %19 = arith.subf %13, %18 : vector<128x128xf32>
    %cst_7 = arith.constant 0.000000e+00 : f32
    %20 = vector.shape_cast %7 : vector<1x128xi1> to vector<1x128xi1>
    %21 = vector.broadcast %20 : vector<1x128xi1> to vector<128x128xi1>
    %22 = vector.broadcast %cst_7 : f32 to vector<128x128xf32>
    %23 = arith.select %21, %19, %22 : vector<128x128xi1>, vector<128x128xf32>
    %24 = arith.mulf %23, %23 : vector<128x128xf32>
    %cst_8 = arith.constant dense<0.000000e+00> : vector<128xf32>
    %25 = vector.multi_reduction <add>, %24, %cst_8 [1] : vector<128x128xf32> to vector<128xf32>
    %26 = vector.shape_cast %25 : vector<128xf32> to vector<128x1xf32>
    %cst_9 = arith.constant 3.125000e-02 : f32
    %27 = vector.broadcast %cst_9 : f32 to vector<128x1xf32>
    %28 = arith.mulf %26, %27 : vector<128x1xf32>
    %cst_10 = arith.constant 9.99999974E-6 : f32
    %29 = vector.broadcast %cst_10 : f32 to vector<128x1xf32>
    %30 = arith.addf %28, %29 : vector<128x1xf32>
    %31 = math.rsqrt %30 : vector<128x1xf32>
    %32 = vector.broadcast %31 : vector<128x1xf32> to vector<128x128xf32>
    %33 = arith.mulf %23, %32 : vector<128x128xf32>
    %34 = vector.broadcast %1 : vector<1x128xf32> to vector<128x128xf32>
    %35 = arith.mulf %33, %34 : vector<128x128xf32>
    %36 = vector.broadcast %2 : vector<1x128xf32> to vector<128x128xf32>
    %37 = arith.addf %35, %36 : vector<128x128xf32>
    %38 = arith.truncf %37 : vector<128x128xf32> to vector<128x128xbf16>
    %39 = arith.index_cast %9 : i32 to index
    %c0_11 = arith.constant 0 : index
    %40 = vector.load %arg7[%39, %c0_11] : memref<1024x128xbf16, #tpu.memory_space<vmem>>, vector<128x128xbf16>
    tpu.vector_store %arg7[%39, %c0_11], %38 {strides = array<i32>} : memref<1024x128xbf16, #tpu.memory_space<vmem>>, vector<128x128xbf16>,
    %c1_i32 = arith.constant 1 : i32
    %c128_i32_12 = arith.constant 128 : i32
    %41 = arith.muli %c1_i32, %c128_i32_12 : i32
    %42 = tpu.assume_multiple %41, 128 : i32
    %c0_13 = arith.constant 0 : index
    %43 = arith.index_cast %42 : i32 to index
    %c0_14 = arith.constant 0 : index
    %44 = vector.load %arg1[%c0_13, %43, %c0_14] : memref<1x1024x128xbf16, #tpu.memory_space<vmem>>, vector<1x128x128xbf16>
    %45 = vector.shape_cast %44 : vector<1x128x128xbf16> to vector<128x128xbf16>
    %cst_15 = arith.constant dense<0.000000e+00> : vector<128x128xf32>
    %46 = tpu.matmul %45, %4, %cst_15 {dimension_numbers = #tpu.dot_dimension_numbers<[1], [0], [0], [1], [0, 0, 1, 1], [], []>} : vector<128x128xbf16>, vector<128x128xbf16>, vector<128x128xf32> -> vector<128x128xf32>
    %cst_16 = arith.constant dense<0.000000e+00> : vector<128xf32>
    %47 = vector.multi_reduction <add>, %46, %cst_16 [1] : vector<128x128xf32> to vector<128xf32>
    %48 = vector.shape_cast %47 : vector<128xf32> to vector<128x1xf32>
    %cst_17 = arith.constant 3.125000e-02 : f32
    %49 = vector.broadcast %cst_17 : f32 to vector<128x1xf32>
    %50 = arith.mulf %48, %49 : vector<128x1xf32>
    %51 = vector.broadcast %50 : vector<128x1xf32> to vector<128x128xf32>
    %52 = arith.subf %46, %51 : vector<128x128xf32>
    %cst_18 = arith.constant 0.000000e+00 : f32
    %53 = vector.shape_cast %7 : vector<1x128xi1> to vector<1x128xi1>
    %54 = vector.broadcast %53 : vector<1x128xi1> to vector<128x128xi1>
    %55 = vector.broadcast %cst_18 : f32 to vector<128x128xf32>
    %56 = arith.select %54, %52, %55 : vector<128x128xi1>, vector<128x128xf32>
    %57 = arith.mulf %56, %56 : vector<128x128xf32>
    %cst_19 = arith.constant dense<0.000000e+00> : vector<128xf32>
    %58 = vector.multi_reduction <add>, %57, %cst_19 [1] : vector<128x128xf32> to vector<128xf32>
    %59 = vector.shape_cast %58 : vector<128xf32> to vector<128x1xf32>
    %cst_20 = arith.constant 3.125000e-02 : f32
    %60 = vector.broadcast %cst_20 : f32 to vector<128x1xf32>
    %61 = arith.mulf %59, %60 : vector<128x1xf32>
    %cst_21 = arith.constant 9.99999974E-6 : f32
    %62 = vector.broadcast %cst_21 : f32 to vector<128x1xf32>
    %63 = arith.addf %61, %62 : vector<128x1xf32>
    %64 = math.rsqrt %63 : vector<128x1xf32>
    %65 = vector.broadcast %64 : vector<128x1xf32> to vector<128x128xf32>
    %66 = arith.mulf %56, %65 : vector<128x128xf32>
    %67 = vector.broadcast %1 : vector<1x128xf32> to vector<128x128xf32>
    %68 = arith.mulf %66, %67 : vector<128x128xf32>
    %69 = vector.broadcast %2 : vector<1x128xf32> to vector<128x128xf32>
    %70 = arith.addf %68, %69 : vector<128x128xf32>
    %71 = arith.truncf %70 : vector<128x128xf32> to vector<128x128xbf16>
    %72 = arith.index_cast %42 : i32 to index
    %c0_22 = arith.constant 0 : index
    %73 = vector.load %arg7[%72, %c0_22] : memref<1024x128xbf16, #tpu.memory_space<vmem>>, vector<128x128xbf16>
    tpu.vector_store %arg7[%72, %c0_22], %71 {strides = array<i32>} : memref<1024x128xbf16, #tpu.memory_space<vmem>>, vector<128x128xbf16>,
    %c2_i32 = arith.constant 2 : i32
    %c128_i32_23 = arith.constant 128 : i32
    %74 = arith.muli %c2_i32, %c128_i32_23 : i32
    %75 = tpu.assume_multiple %74, 128 : i32
    %c0_24 = arith.constant 0 : index
    %76 = arith.index_cast %75 : i32 to index
    %c0_25 = arith.constant 0 : index
    %77 = vector.load %arg1[%c0_24, %76, %c0_25] : memref<1x1024x128xbf16, #tpu.memory_space<vmem>>, vector<1x128x128xbf16>
    %78 = vector.shape_cast %77 : vector<1x128x128xbf16> to vector<128x128xbf16>
    %cst_26 = arith.constant dense<0.000000e+00> : vector<128x128xf32>
    %79 = tpu.matmul %78, %4, %cst_26 {dimension_numbers = #tpu.dot_dimension_numbers<[1], [0], [0], [1], [0, 0, 1, 1], [], []>} : vector<128x128xbf16>, vector<128x128xbf16>, vector<128x128xf32> -> vector<128x128xf32>
    %cst_27 = arith.constant dense<0.000000e+00> : vector<128xf32>
    %80 = vector.multi_reduction <add>, %79, %cst_27 [1] : vector<128x128xf32> to vector<128xf32>
    %81 = vector.shape_cast %80 : vector<128xf32> to vector<128x1xf32>
    %cst_28 = arith.constant 3.125000e-02 : f32
    %82 = vector.broadcast %cst_28 : f32 to vector<128x1xf32>
    %83 = arith.mulf %81, %82 : vector<128x1xf32>
    %84 = vector.broadcast %83 : vector<128x1xf32> to vector<128x128xf32>
    %85 = arith.subf %79, %84 : vector<128x128xf32>
    %cst_29 = arith.constant 0.000000e+00 : f32
    %86 = vector.shape_cast %7 : vector<1x128xi1> to vector<1x128xi1>
    %87 = vector.broadcast %86 : vector<1x128xi1> to vector<128x128xi1>
    %88 = vector.broadcast %cst_29 : f32 to vector<128x128xf32>
    %89 = arith.select %87, %85, %88 : vector<128x128xi1>, vector<128x128xf32>
    %90 = arith.mulf %89, %89 : vector<128x128xf32>
    %cst_30 = arith.constant dense<0.000000e+00> : vector<128xf32>
    %91 = vector.multi_reduction <add>, %90, %cst_30 [1] : vector<128x128xf32> to vector<128xf32>
    %92 = vector.shape_cast %91 : vector<128xf32> to vector<128x1xf32>
    %cst_31 = arith.constant 3.125000e-02 : f32
    %93 = vector.broadcast %cst_31 : f32 to vector<128x1xf32>
    %94 = arith.mulf %92, %93 : vector<128x1xf32>
    %cst_32 = arith.constant 9.99999974E-6 : f32
    %95 = vector.broadcast %cst_32 : f32 to vector<128x1xf32>
    %96 = arith.addf %94, %95 : vector<128x1xf32>
    %97 = math.rsqrt %96 : vector<128x1xf32>
    %98 = vector.broadcast %97 : vector<128x1xf32> to vector<128x128xf32>
    %99 = arith.mulf %89, %98 : vector<128x128xf32>
    %100 = vector.broadcast %1 : vector<1x128xf32> to vector<128x128xf32>
    %101 = arith.mulf %99, %100 : vector<128x128xf32>
    %102 = vector.broadcast %2 : vector<1x128xf32> to vector<128x128xf32>
    %103 = arith.addf %101, %102 : vector<128x128xf32>
    %104 = arith.truncf %103 : vector<128x128xf32> to vector<128x128xbf16>
    %105 = arith.index_cast %75 : i32 to index
    %c0_33 = arith.constant 0 : index
    %106 = vector.load %arg7[%105, %c0_33] : memref<1024x128xbf16, #tpu.memory_space<vmem>>, vector<128x128xbf16>
    tpu.vector_store %arg7[%105, %c0_33], %104 {strides = array<i32>} : memref<1024x128xbf16, #tpu.memory_space<vmem>>, vector<128x128xbf16>,
    %c3_i32 = arith.constant 3 : i32
    %c128_i32_34 = arith.constant 128 : i32
    %107 = arith.muli %c3_i32, %c128_i32_34 : i32
    %108 = tpu.assume_multiple %107, 128 : i32
    %c0_35 = arith.constant 0 : index
    %109 = arith.index_cast %108 : i32 to index
    %c0_36 = arith.constant 0 : index
    %110 = vector.load %arg1[%c0_35, %109, %c0_36] : memref<1x1024x128xbf16, #tpu.memory_space<vmem>>, vector<1x128x128xbf16>
    %111 = vector.shape_cast %110 : vector<1x128x128xbf16> to vector<128x128xbf16>
    %cst_37 = arith.constant dense<0.000000e+00> : vector<128x128xf32>
    %112 = tpu.matmul %111, %4, %cst_37 {dimension_numbers = #tpu.dot_dimension_numbers<[1], [0], [0], [1], [0, 0, 1, 1], [], []>} : vector<128x128xbf16>, vector<128x128xbf16>, vector<128x128xf32> -> vector<128x128xf32>
    %cst_38 = arith.constant dense<0.000000e+00> : vector<128xf32>
    %113 = vector.multi_reduction <add>, %112, %cst_38 [1] : vector<128x128xf32> to vector<128xf32>
    %114 = vector.shape_cast %113 : vector<128xf32> to vector<128x1xf32>
    %cst_39 = arith.constant 3.125000e-02 : f32
    %115 = vector.broadcast %cst_39 : f32 to vector<128x1xf32>
    %116 = arith.mulf %114, %115 : vector<128x1xf32>
    %117 = vector.broadcast %116 : vector<128x1xf32> to vector<128x128xf32>
    %118 = arith.subf %112, %117 : vector<128x128xf32>
    %cst_40 = arith.constant 0.000000e+00 : f32
    %119 = vector.shape_cast %7 : vector<1x128xi1> to vector<1x128xi1>
    %120 = vector.broadcast %119 : vector<1x128xi1> to vector<128x128xi1>
    %121 = vector.broadcast %cst_40 : f32 to vector<128x128xf32>
    %122 = arith.select %120, %118, %121 : vector<128x128xi1>, vector<128x128xf32>
    %123 = arith.mulf %122, %122 : vector<128x128xf32>
    %cst_41 = arith.constant dense<0.000000e+00> : vector<128xf32>
    %124 = vector.multi_reduction <add>, %123, %cst_41 [1] : vector<128x128xf32> to vector<128xf32>
    %125 = vector.shape_cast %124 : vector<128xf32> to vector<128x1xf32>
    %cst_42 = arith.constant 3.125000e-02 : f32
    %126 = vector.broadcast %cst_42 : f32 to vector<128x1xf32>
    %127 = arith.mulf %125, %126 : vector<128x1xf32>
    %cst_43 = arith.constant 9.99999974E-6 : f32
    %128 = vector.broadcast %cst_43 : f32 to vector<128x1xf32>
    %129 = arith.addf %127, %128 : vector<128x1xf32>
    %130 = math.rsqrt %129 : vector<128x1xf32>
    %131 = vector.broadcast %130 : vector<128x1xf32> to vector<128x128xf32>
    %132 = arith.mulf %122, %131 : vector<128x128xf32>
    %133 = vector.broadcast %1 : vector<1x128xf32> to vector<128x128xf32>
    %134 = arith.mulf %132, %133 : vector<128x128xf32>
    %135 = vector.broadcast %2 : vector<1x128xf32> to vector<128x128xf32>
    %136 = arith.addf %134, %135 : vector<128x128xf32>
    %137 = arith.truncf %136 : vector<128x128xf32> to vector<128x128xbf16>
    %138 = arith.index_cast %108 : i32 to index
    %c0_44 = arith.constant 0 : index
    %139 = vector.load %arg7[%138, %c0_44] : memref<1024x128xbf16, #tpu.memory_space<vmem>>, vector<128x128xbf16>
    tpu.vector_store %arg7[%138, %c0_44], %137 {strides = array<i32>} : memref<1024x128xbf16, #tpu.memory_space<vmem>>, vector<128x128xbf16>,
    %c4_i32 = arith.constant 4 : i32
    %c128_i32_45 = arith.constant 128 : i32
    %140 = arith.muli %c4_i32, %c128_i32_45 : i32
    %141 = tpu.assume_multiple %140, 128 : i32
    %c0_46 = arith.constant 0 : index
    %142 = arith.index_cast %141 : i32 to index
    %c0_47 = arith.constant 0 : index
    %143 = vector.load %arg1[%c0_46, %142, %c0_47] : memref<1x1024x128xbf16, #tpu.memory_space<vmem>>, vector<1x128x128xbf16>
    %144 = vector.shape_cast %143 : vector<1x128x128xbf16> to vector<128x128xbf16>
    %cst_48 = arith.constant dense<0.000000e+00> : vector<128x128xf32>
    %145 = tpu.matmul %144, %4, %cst_48 {dimension_numbers = #tpu.dot_dimension_numbers<[1], [0], [0], [1], [0, 0, 1, 1], [], []>} : vector<128x128xbf16>, vector<128x128xbf16>, vector<128x128xf32> -> vector<128x128xf32>
    %cst_49 = arith.constant dense<0.000000e+00> : vector<128xf32>
    %146 = vector.multi_reduction <add>, %145, %cst_49 [1] : vector<128x128xf32> to vector<128xf32>
    %147 = vector.shape_cast %146 : vector<128xf32> to vector<128x1xf32>
    %cst_50 = arith.constant 3.125000e-02 : f32
    %148 = vector.broadcast %cst_50 : f32 to vector<128x1xf32>
    %149 = arith.mulf %147, %148 : vector<128x1xf32>
    %150 = vector.broadcast %149 : vector<128x1xf32> to vector<128x128xf32>
    %151 = arith.subf %145, %150 : vector<128x128xf32>
    %cst_51 = arith.constant 0.000000e+00 : f32
    %152 = vector.shape_cast %7 : vector<1x128xi1> to vector<1x128xi1>
    %153 = vector.broadcast %152 : vector<1x128xi1> to vector<128x128xi1>
    %154 = vector.broadcast %cst_51 : f32 to vector<128x128xf32>
    %155 = arith.select %153, %151, %154 : vector<128x128xi1>, vector<128x128xf32>
    %156 = arith.mulf %155, %155 : vector<128x128xf32>
    %cst_52 = arith.constant dense<0.000000e+00> : vector<128xf32>
    %157 = vector.multi_reduction <add>, %156, %cst_52 [1] : vector<128x128xf32> to vector<128xf32>
    %158 = vector.shape_cast %157 : vector<128xf32> to vector<128x1xf32>
    %cst_53 = arith.constant 3.125000e-02 : f32
    %159 = vector.broadcast %cst_53 : f32 to vector<128x1xf32>
    %160 = arith.mulf %158, %159 : vector<128x1xf32>
    %cst_54 = arith.constant 9.99999974E-6 : f32
    %161 = vector.broadcast %cst_54 : f32 to vector<128x1xf32>
    %162 = arith.addf %160, %161 : vector<128x1xf32>
    %163 = math.rsqrt %162 : vector<128x1xf32>
    %164 = vector.broadcast %163 : vector<128x1xf32> to vector<128x128xf32>
    %165 = arith.mulf %155, %164 : vector<128x128xf32>
    %166 = vector.broadcast %1 : vector<1x128xf32> to vector<128x128xf32>
    %167 = arith.mulf %165, %166 : vector<128x128xf32>
    %168 = vector.broadcast %2 : vector<1x128xf32> to vector<128x128xf32>
    %169 = arith.addf %167, %168 : vector<128x128xf32>
    %170 = arith.truncf %169 : vector<128x128xf32> to vector<128x128xbf16>
    %171 = arith.index_cast %141 : i32 to index
    %c0_55 = arith.constant 0 : index
    %172 = vector.load %arg7[%171, %c0_55] : memref<1024x128xbf16, #tpu.memory_space<vmem>>, vector<128x128xbf16>
    tpu.vector_store %arg7[%171, %c0_55], %170 {strides = array<i32>} : memref<1024x128xbf16, #tpu.memory_space<vmem>>, vector<128x128xbf16>,
    %c5_i32 = arith.constant 5 : i32
    %c128_i32_56 = arith.constant 128 : i32
    %173 = arith.muli %c5_i32, %c128_i32_56 : i32
    %174 = tpu.assume_multiple %173, 128 : i32
    %c0_57 = arith.constant 0 : index
    %175 = arith.index_cast %174 : i32 to index
    %c0_58 = arith.constant 0 : index
    %176 = vector.load %arg1[%c0_57, %175, %c0_58] : memref<1x1024x128xbf16, #tpu.memory_space<vmem>>, vector<1x128x128xbf16>
    %177 = vector.shape_cast %176 : vector<1x128x128xbf16> to vector<128x128xbf16>
    %cst_59 = arith.constant dense<0.000000e+00> : vector<128x128xf32>
    %178 = tpu.matmul %177, %4, %cst_59 {dimension_numbers = #tpu.dot_dimension_numbers<[1], [0], [0], [1], [0, 0, 1, 1], [], []>} : vector<128x128xbf16>, vector<128x128xbf16>, vector<128x128xf32> -> vector<128x128xf32>
    %cst_60 = arith.constant dense<0.000000e+00> : vector<128xf32>
    %179 = vector.multi_reduction <add>, %178, %cst_60 [1] : vector<128x128xf32> to vector<128xf32>
    %180 = vector.shape_cast %179 : vector<128xf32> to vector<128x1xf32>
    %cst_61 = arith.constant 3.125000e-02 : f32
    %181 = vector.broadcast %cst_61 : f32 to vector<128x1xf32>
    %182 = arith.mulf %180, %181 : vector<128x1xf32>
    %183 = vector.broadcast %182 : vector<128x1xf32> to vector<128x128xf32>
    %184 = arith.subf %178, %183 : vector<128x128xf32>
    %cst_62 = arith.constant 0.000000e+00 : f32
    %185 = vector.shape_cast %7 : vector<1x128xi1> to vector<1x128xi1>
    %186 = vector.broadcast %185 : vector<1x128xi1> to vector<128x128xi1>
    %187 = vector.broadcast %cst_62 : f32 to vector<128x128xf32>
    %188 = arith.select %186, %184, %187 : vector<128x128xi1>, vector<128x128xf32>
    %189 = arith.mulf %188, %188 : vector<128x128xf32>
    %cst_63 = arith.constant dense<0.000000e+00> : vector<128xf32>
    %190 = vector.multi_reduction <add>, %189, %cst_63 [1] : vector<128x128xf32> to vector<128xf32>
    %191 = vector.shape_cast %190 : vector<128xf32> to vector<128x1xf32>
    %cst_64 = arith.constant 3.125000e-02 : f32
    %192 = vector.broadcast %cst_64 : f32 to vector<128x1xf32>
    %193 = arith.mulf %191, %192 : vector<128x1xf32>
    %cst_65 = arith.constant 9.99999974E-6 : f32
    %194 = vector.broadcast %cst_65 : f32 to vector<128x1xf32>
    %195 = arith.addf %193, %194 : vector<128x1xf32>
    %196 = math.rsqrt %195 : vector<128x1xf32>
    %197 = vector.broadcast %196 : vector<128x1xf32> to vector<128x128xf32>
    %198 = arith.mulf %188, %197 : vector<128x128xf32>
    %199 = vector.broadcast %1 : vector<1x128xf32> to vector<128x128xf32>
    %200 = arith.mulf %198, %199 : vector<128x128xf32>
    %201 = vector.broadcast %2 : vector<1x128xf32> to vector<128x128xf32>
    %202 = arith.addf %200, %201 : vector<128x128xf32>
    %203 = arith.truncf %202 : vector<128x128xf32> to vector<128x128xbf16>
    %204 = arith.index_cast %174 : i32 to index
    %c0_66 = arith.constant 0 : index
    %205 = vector.load %arg7[%204, %c0_66] : memref<1024x128xbf16, #tpu.memory_space<vmem>>, vector<128x128xbf16>
    tpu.vector_store %arg7[%204, %c0_66], %203 {strides = array<i32>} : memref<1024x128xbf16, #tpu.memory_space<vmem>>, vector<128x128xbf16>,
    %c6_i32 = arith.constant 6 : i32
    %c128_i32_67 = arith.constant 128 : i32
    %206 = arith.muli %c6_i32, %c128_i32_67 : i32
    %207 = tpu.assume_multiple %206, 128 : i32
    %c0_68 = arith.constant 0 : index
    %208 = arith.index_cast %207 : i32 to index
    %c0_69 = arith.constant 0 : index
    %209 = vector.load %arg1[%c0_68, %208, %c0_69] : memref<1x1024x128xbf16, #tpu.memory_space<vmem>>, vector<1x128x128xbf16>
    %210 = vector.shape_cast %209 : vector<1x128x128xbf16> to vector<128x128xbf16>
    %cst_70 = arith.constant dense<0.000000e+00> : vector<128x128xf32>
    %211 = tpu.matmul %210, %4, %cst_70 {dimension_numbers = #tpu.dot_dimension_numbers<[1], [0], [0], [1], [0, 0, 1, 1], [], []>} : vector<128x128xbf16>, vector<128x128xbf16>, vector<128x128xf32> -> vector<128x128xf32>
    %cst_71 = arith.constant dense<0.000000e+00> : vector<128xf32>
    %212 = vector.multi_reduction <add>, %211, %cst_71 [1] : vector<128x128xf32> to vector<128xf32>
    %213 = vector.shape_cast %212 : vector<128xf32> to vector<128x1xf32>
    %cst_72 = arith.constant 3.125000e-02 : f32
    %214 = vector.broadcast %cst_72 : f32 to vector<128x1xf32>
    %215 = arith.mulf %213, %214 : vector<128x1xf32>
    %216 = vector.broadcast %215 : vector<128x1xf32> to vector<128x128xf32>
    %217 = arith.subf %211, %216 : vector<128x128xf32>
    %cst_73 = arith.constant 0.000000e+00 : f32
    %218 = vector.shape_cast %7 : vector<1x128xi1> to vector<1x128xi1>
    %219 = vector.broadcast %218 : vector<1x128xi1> to vector<128x128xi1>
    %220 = vector.broadcast %cst_73 : f32 to vector<128x128xf32>
    %221 = arith.select %219, %217, %220 : vector<128x128xi1>, vector<128x128xf32>
    %222 = arith.mulf %221, %221 : vector<128x128xf32>
    %cst_74 = arith.constant dense<0.000000e+00> : vector<128xf32>
    %223 = vector.multi_reduction <add>, %222, %cst_74 [1] : vector<128x128xf32> to vector<128xf32>
    %224 = vector.shape_cast %223 : vector<128xf32> to vector<128x1xf32>
    %cst_75 = arith.constant 3.125000e-02 : f32
    %225 = vector.broadcast %cst_75 : f32 to vector<128x1xf32>
    %226 = arith.mulf %224, %225 : vector<128x1xf32>
    %cst_76 = arith.constant 9.99999974E-6 : f32
    %227 = vector.broadcast %cst_76 : f32 to vector<128x1xf32>
    %228 = arith.addf %226, %227 : vector<128x1xf32>
    %229 = math.rsqrt %228 : vector<128x1xf32>
    %230 = vector.broadcast %229 : vector<128x1xf32> to vector<128x128xf32>
    %231 = arith.mulf %221, %230 : vector<128x128xf32>
    %232 = vector.broadcast %1 : vector<1x128xf32> to vector<128x128xf32>
    %233 = arith.mulf %231, %232 : vector<128x128xf32>
    %234 = vector.broadcast %2 : vector<1x128xf32> to vector<128x128xf32>
    %235 = arith.addf %233, %234 : vector<128x128xf32>
    %236 = arith.truncf %235 : vector<128x128xf32> to vector<128x128xbf16>
    %237 = arith.index_cast %207 : i32 to index
    %c0_77 = arith.constant 0 : index
    %238 = vector.load %arg7[%237, %c0_77] : memref<1024x128xbf16, #tpu.memory_space<vmem>>, vector<128x128xbf16>
    tpu.vector_store %arg7[%237, %c0_77], %236 {strides = array<i32>} : memref<1024x128xbf16, #tpu.memory_space<vmem>>, vector<128x128xbf16>,
    %c7_i32 = arith.constant 7 : i32
    %c128_i32_78 = arith.constant 128 : i32
    %239 = arith.muli %c7_i32, %c128_i32_78 : i32
    %240 = tpu.assume_multiple %239, 128 : i32
    %c0_79 = arith.constant 0 : index
    %241 = arith.index_cast %240 : i32 to index
    %c0_80 = arith.constant 0 : index
    %242 = vector.load %arg1[%c0_79, %241, %c0_80] : memref<1x1024x128xbf16, #tpu.memory_space<vmem>>, vector<1x128x128xbf16>
    %243 = vector.shape_cast %242 : vector<1x128x128xbf16> to vector<128x128xbf16>
    %cst_81 = arith.constant dense<0.000000e+00> : vector<128x128xf32>
    %244 = tpu.matmul %243, %4, %cst_81 {dimension_numbers = #tpu.dot_dimension_numbers<[1], [0], [0], [1], [0, 0, 1, 1], [], []>} : vector<128x128xbf16>, vector<128x128xbf16>, vector<128x128xf32> -> vector<128x128xf32>
    %cst_82 = arith.constant dense<0.000000e+00> : vector<128xf32>
    %245 = vector.multi_reduction <add>, %244, %cst_82 [1] : vector<128x128xf32> to vector<128xf32>
    %246 = vector.shape_cast %245 : vector<128xf32> to vector<128x1xf32>
    %cst_83 = arith.constant 3.125000e-02 : f32
    %247 = vector.broadcast %cst_83 : f32 to vector<128x1xf32>
    %248 = arith.mulf %246, %247 : vector<128x1xf32>
    %249 = vector.broadcast %248 : vector<128x1xf32> to vector<128x128xf32>
    %250 = arith.subf %244, %249 : vector<128x128xf32>
    %cst_84 = arith.constant 0.000000e+00 : f32
    %251 = vector.shape_cast %7 : vector<1x128xi1> to vector<1x128xi1>
    %252 = vector.broadcast %251 : vector<1x128xi1> to vector<128x128xi1>
    %253 = vector.broadcast %cst_84 : f32 to vector<128x128xf32>
    %254 = arith.select %252, %250, %253 : vector<128x128xi1>, vector<128x128xf32>
    %255 = arith.mulf %254, %254 : vector<128x128xf32>
    %cst_85 = arith.constant dense<0.000000e+00> : vector<128xf32>
    %256 = vector.multi_reduction <add>, %255, %cst_85 [1] : vector<128x128xf32> to vector<128xf32>
    %257 = vector.shape_cast %256 : vector<128xf32> to vector<128x1xf32>
    %cst_86 = arith.constant 3.125000e-02 : f32
    %258 = vector.broadcast %cst_86 : f32 to vector<128x1xf32>
    %259 = arith.mulf %257, %258 : vector<128x1xf32>
    %cst_87 = arith.constant 9.99999974E-6 : f32
    %260 = vector.broadcast %cst_87 : f32 to vector<128x1xf32>
    %261 = arith.addf %259, %260 : vector<128x1xf32>
    %262 = math.rsqrt %261 : vector<128x1xf32>
    %263 = vector.broadcast %262 : vector<128x1xf32> to vector<128x128xf32>
    %264 = arith.mulf %254, %263 : vector<128x128xf32>
    %265 = vector.broadcast %1 : vector<1x128xf32> to vector<128x128xf32>
    %266 = arith.mulf %264, %265 : vector<128x128xf32>
    %267 = vector.broadcast %2 : vector<1x128xf32> to vector<128x128xf32>
    %268 = arith.addf %266, %267 : vector<128x128xf32>
    %269 = arith.truncf %268 : vector<128x128xf32> to vector<128x128xbf16>
    %270 = arith.index_cast %240 : i32 to index
    %c0_88 = arith.constant 0 : index
    %271 = vector.load %arg7[%270, %c0_88] : memref<1024x128xbf16, #tpu.memory_space<vmem>>, vector<128x128xbf16>
    tpu.vector_store %arg7[%270, %c0_88], %269 {strides = array<i32>} : memref<1024x128xbf16, #tpu.memory_space<vmem>>, vector<128x128xbf16>,
    %c8_i32 = arith.constant 8 : i32
    %272 = tpu.iota {dimensions = array<i32: 1>} : vector<1x128xi32>
    %c32_i32_89 = arith.constant 32 : i32
    %273 = vector.broadcast %c32_i32_89 : i32 to vector<1x128xi32>
    %274 = arith.cmpi slt, %272, %273 : vector<1x128xi32>
    %275 = vector.extract_strided_slice %0 {offsets = [2, 0], sizes = [1, 128], strides = [1, 1]} : vector<8x128xf32> to vector<1x128xf32>
    %c0_i32_90 = arith.constant 0 : i32
    %c64_i32 = arith.constant 64 : i32
    %276 = arith.muli %c0_i32_90, %c64_i32 : i32
    %277 = tpu.assume_multiple %276, 64 : i32
    %cst_91 = arith.constant 0.000000e+00 : f32
    %278 = vector.broadcast %cst_91 : f32 to vector<64x1xf32>
    %c0_i32_92 = arith.constant 0 : i32
    %279 = arith.addi %c0_i32_92, %277 : i32
    %280 = arith.index_cast %279 : i32 to index
    %c0_93 = arith.constant 0 : index
    %281 = vector.load %arg7[%280, %c0_93] : memref<1024x128xbf16, #tpu.memory_space<vmem>>, vector<64x128xbf16>
    %282 = arith.extf %281 : vector<64x128xbf16> to vector<64x128xf32>
    %cst_94 = arith.constant dense<0.000000e+00> : vector<64xf32>
    %283 = vector.multi_reduction <add>, %282, %cst_94 [1] : vector<64x128xf32> to vector<64xf32>
    %284 = vector.shape_cast %283 : vector<64xf32> to vector<64x1xf32>
    %285 = arith.addf %278, %284 : vector<64x1xf32>
    %c256_i32 = arith.constant 256 : i32
    %286 = arith.addi %c256_i32, %277 : i32
    %287 = arith.index_cast %286 : i32 to index
    %c0_95 = arith.constant 0 : index
    %288 = vector.load %arg7[%287, %c0_95] : memref<1024x128xbf16, #tpu.memory_space<vmem>>, vector<64x128xbf16>
    %289 = arith.extf %288 : vector<64x128xbf16> to vector<64x128xf32>
    %cst_96 = arith.constant dense<0.000000e+00> : vector<64xf32>
    %290 = vector.multi_reduction <add>, %289, %cst_96 [1] : vector<64x128xf32> to vector<64xf32>
    %291 = vector.shape_cast %290 : vector<64xf32> to vector<64x1xf32>
    %292 = arith.addf %285, %291 : vector<64x1xf32>
    %c512_i32 = arith.constant 512 : i32
    %293 = arith.addi %c512_i32, %277 : i32
    %294 = arith.index_cast %293 : i32 to index
    %c0_97 = arith.constant 0 : index
    %295 = vector.load %arg7[%294, %c0_97] : memref<1024x128xbf16, #tpu.memory_space<vmem>>, vector<64x128xbf16>
    %296 = arith.extf %295 : vector<64x128xbf16> to vector<64x128xf32>
    %cst_98 = arith.constant dense<0.000000e+00> : vector<64xf32>
    %297 = vector.multi_reduction <add>, %296, %cst_98 [1] : vector<64x128xf32> to vector<64xf32>
    %298 = vector.shape_cast %297 : vector<64xf32> to vector<64x1xf32>
    %299 = arith.addf %292, %298 : vector<64x1xf32>
    %c768_i32 = arith.constant 768 : i32
    %300 = arith.addi %c768_i32, %277 : i32
    %301 = arith.index_cast %300 : i32 to index
    %c0_99 = arith.constant 0 : index
    %302 = vector.load %arg7[%301, %c0_99] : memref<1024x128xbf16, #tpu.memory_space<vmem>>, vector<64x128xbf16>
    %303 = arith.extf %302 : vector<64x128xbf16> to vector<64x128xf32>
    %cst_100 = arith.constant dense<0.000000e+00> : vector<64xf32>
    %304 = vector.multi_reduction <add>, %303, %cst_100 [1] : vector<64x128xf32> to vector<64xf32>
    %305 = vector.shape_cast %304 : vector<64xf32> to vector<64x1xf32>
    %306 = arith.addf %299, %305 : vector<64x1xf32>
    %cst_101 = arith.constant 7.812500e-03 : f32
    %307 = vector.broadcast %cst_101 : f32 to vector<64x1xf32>
    %308 = arith.mulf %306, %307 : vector<64x1xf32>
    %cst_102 = arith.constant 0.000000e+00 : f32
    %309 = vector.broadcast %cst_102 : f32 to vector<64x1xf32>
    %c0_i32_103 = arith.constant 0 : i32
    %310 = arith.addi %c0_i32_103, %277 : i32
    %311 = arith.index_cast %310 : i32 to index
    %c0_104 = arith.constant 0 : index
    %312 = vector.load %arg7[%311, %c0_104] : memref<1024x128xbf16, #tpu.memory_space<vmem>>, vector<64x128xbf16>
    %313 = arith.extf %312 : vector<64x128xbf16> to vector<64x128xf32>
    %314 = vector.broadcast %308 : vector<64x1xf32> to vector<64x128xf32>
    %315 = arith.subf %313, %314 : vector<64x128xf32>
    %cst_105 = arith.constant 0.000000e+00 : f32
    %316 = vector.shape_cast %274 : vector<1x128xi1> to vector<1x128xi1>
    %317 = vector.broadcast %316 : vector<1x128xi1> to vector<64x128xi1>
    %318 = vector.broadcast %cst_105 : f32 to vector<64x128xf32>
    %319 = arith.select %317, %315, %318 : vector<64x128xi1>, vector<64x128xf32>
    %320 = arith.mulf %319, %319 : vector<64x128xf32>
    %cst_106 = arith.constant dense<0.000000e+00> : vector<64xf32>
    %321 = vector.multi_reduction <add>, %320, %cst_106 [1] : vector<64x128xf32> to vector<64xf32>
    %322 = vector.shape_cast %321 : vector<64xf32> to vector<64x1xf32>
    %323 = arith.addf %309, %322 : vector<64x1xf32>
    %c256_i32_107 = arith.constant 256 : i32
    %324 = arith.addi %c256_i32_107, %277 : i32
    %325 = arith.index_cast %324 : i32 to index
    %c0_108 = arith.constant 0 : index
    %326 = vector.load %arg7[%325, %c0_108] : memref<1024x128xbf16, #tpu.memory_space<vmem>>, vector<64x128xbf16>
    %327 = arith.extf %326 : vector<64x128xbf16> to vector<64x128xf32>
    %328 = vector.broadcast %308 : vector<64x1xf32> to vector<64x128xf32>
    %329 = arith.subf %327, %328 : vector<64x128xf32>
    %cst_109 = arith.constant 0.000000e+00 : f32
    %330 = vector.shape_cast %274 : vector<1x128xi1> to vector<1x128xi1>
    %331 = vector.broadcast %330 : vector<1x128xi1> to vector<64x128xi1>
    %332 = vector.broadcast %cst_109 : f32 to vector<64x128xf32>
    %333 = arith.select %331, %329, %332 : vector<64x128xi1>, vector<64x128xf32>
    %334 = arith.mulf %333, %333 : vector<64x128xf32>
    %cst_110 = arith.constant dense<0.000000e+00> : vector<64xf32>
    %335 = vector.multi_reduction <add>, %334, %cst_110 [1] : vector<64x128xf32> to vector<64xf32>
    %336 = vector.shape_cast %335 : vector<64xf32> to vector<64x1xf32>
    %337 = arith.addf %323, %336 : vector<64x1xf32>
    %c512_i32_111 = arith.constant 512 : i32
    %338 = arith.addi %c512_i32_111, %277 : i32
    %339 = arith.index_cast %338 : i32 to index
    %c0_112 = arith.constant 0 : index
    %340 = vector.load %arg7[%339, %c0_112] : memref<1024x128xbf16, #tpu.memory_space<vmem>>, vector<64x128xbf16>
    %341 = arith.extf %340 : vector<64x128xbf16> to vector<64x128xf32>
    %342 = vector.broadcast %308 : vector<64x1xf32> to vector<64x128xf32>
    %343 = arith.subf %341, %342 : vector<64x128xf32>
    %cst_113 = arith.constant 0.000000e+00 : f32
    %344 = vector.shape_cast %274 : vector<1x128xi1> to vector<1x128xi1>
    %345 = vector.broadcast %344 : vector<1x128xi1> to vector<64x128xi1>
    %346 = vector.broadcast %cst_113 : f32 to vector<64x128xf32>
    %347 = arith.select %345, %343, %346 : vector<64x128xi1>, vector<64x128xf32>
    %348 = arith.mulf %347, %347 : vector<64x128xf32>
    %cst_114 = arith.constant dense<0.000000e+00> : vector<64xf32>
    %349 = vector.multi_reduction <add>, %348, %cst_114 [1] : vector<64x128xf32> to vector<64xf32>
    %350 = vector.shape_cast %349 : vector<64xf32> to vector<64x1xf32>
    %351 = arith.addf %337, %350 : vector<64x1xf32>
    %c768_i32_115 = arith.constant 768 : i32
    %352 = arith.addi %c768_i32_115, %277 : i32
    %353 = arith.index_cast %352 : i32 to index
    %c0_116 = arith.constant 0 : index
    %354 = vector.load %arg7[%353, %c0_116] : memref<1024x128xbf16, #tpu.memory_space<vmem>>, vector<64x128xbf16>
    %355 = arith.extf %354 : vector<64x128xbf16> to vector<64x128xf32>
    %356 = vector.broadcast %308 : vector<64x1xf32> to vector<64x128xf32>
    %357 = arith.subf %355, %356 : vector<64x128xf32>
    %cst_117 = arith.constant 0.000000e+00 : f32
    %358 = vector.shape_cast %274 : vector<1x128xi1> to vector<1x128xi1>
    %359 = vector.broadcast %358 : vector<1x128xi1> to vector<64x128xi1>
    %360 = vector.broadcast %cst_117 : f32 to vector<64x128xf32>
    %361 = arith.select %359, %357, %360 : vector<64x128xi1>, vector<64x128xf32>
    %362 = arith.mulf %361, %361 : vector<64x128xf32>
    %cst_118 = arith.constant dense<0.000000e+00> : vector<64xf32>
    %363 = vector.multi_reduction <add>, %362, %cst_118 [1] : vector<64x128xf32> to vector<64xf32>
    %364 = vector.shape_cast %363 : vector<64xf32> to vector<64x1xf32>
    %365 = arith.addf %351, %364 : vector<64x1xf32>
    %cst_119 = arith.constant 7.812500e-03 : f32
    %366 = vector.broadcast %cst_119 : f32 to vector<64x1xf32>
    %367 = arith.mulf %365, %366 : vector<64x1xf32>
    %cst_120 = arith.constant 9.99999974E-6 : f32
    %368 = vector.broadcast %cst_120 : f32 to vector<64x1xf32>
    %369 = arith.addf %367, %368 : vector<64x1xf32>
    %370 = math.rsqrt %369 : vector<64x1xf32>
    %cst_121 = arith.constant 0.000000e+00 : f32
    %371 = vector.broadcast %cst_121 : f32 to vector<64x128xf32>
    %c0_i32_122 = arith.constant 0 : i32
    %372 = arith.addi %c0_i32_122, %277 : i32
    %373 = arith.index_cast %372 : i32 to index
    %c0_123 = arith.constant 0 : index
    %374 = vector.load %arg7[%373, %c0_123] : memref<1024x128xbf16, #tpu.memory_space<vmem>>, vector<64x128xbf16>
    %375 = arith.extf %374 : vector<64x128xbf16> to vector<64x128xf32>
    %376 = vector.broadcast %308 : vector<64x1xf32> to vector<64x128xf32>
    %377 = arith.subf %375, %376 : vector<64x128xf32>
    %378 = vector.broadcast %370 : vector<64x1xf32> to vector<64x128xf32>
    %379 = arith.mulf %377, %378 : vector<64x128xf32>
    %380 = arith.truncf %379 : vector<64x128xf32> to vector<64x128xbf16>
    %c0_124 = arith.constant 0 : index
    %c0_125 = arith.constant 0 : index
    %c0_126 = arith.constant 0 : index
    %381 = vector.load %arg3[%c0_124, %c0_125, %c0_126] : memref<3x512x128xbf16, #tpu.memory_space<vmem>>, vector<1x128x128xbf16>
    %382 = vector.shape_cast %381 : vector<1x128x128xbf16> to vector<128x128xbf16>
    %cst_127 = arith.constant dense<0.000000e+00> : vector<64x128xf32>
    %383 = tpu.matmul %380, %382, %cst_127 {dimension_numbers = #tpu.dot_dimension_numbers<[1], [0], [0], [1], [0, 0, 1, 1], [], []>} : vector<64x128xbf16>, vector<128x128xbf16>, vector<64x128xf32> -> vector<64x128xf32>
    %384 = arith.addf %371, %383 : vector<64x128xf32>
    %c256_i32_128 = arith.constant 256 : i32
    %385 = arith.addi %c256_i32_128, %277 : i32
    %386 = arith.index_cast %385 : i32 to index
    %c0_129 = arith.constant 0 : index
    %387 = vector.load %arg7[%386, %c0_129] : memref<1024x128xbf16, #tpu.memory_space<vmem>>, vector<64x128xbf16>
    %388 = arith.extf %387 : vector<64x128xbf16> to vector<64x128xf32>
    %389 = vector.broadcast %308 : vector<64x1xf32> to vector<64x128xf32>
    %390 = arith.subf %388, %389 : vector<64x128xf32>
    %391 = vector.broadcast %370 : vector<64x1xf32> to vector<64x128xf32>
    %392 = arith.mulf %390, %391 : vector<64x128xf32>
    %393 = arith.truncf %392 : vector<64x128xf32> to vector<64x128xbf16>
    %c0_130 = arith.constant 0 : index
    %c128 = arith.constant 128 : index
    %c0_131 = arith.constant 0 : index
    %394 = vector.load %arg3[%c0_130, %c128, %c0_131] : memref<3x512x128xbf16, #tpu.memory_space<vmem>>, vector<1x128x128xbf16>
    %395 = vector.shape_cast %394 : vector<1x128x128xbf16> to vector<128x128xbf16>
    %cst_132 = arith.constant dense<0.000000e+00> : vector<64x128xf32>
    %396 = tpu.matmul %393, %395, %cst_132 {dimension_numbers = #tpu.dot_dimension_numbers<[1], [0], [0], [1], [0, 0, 1, 1], [], []>} : vector<64x128xbf16>, vector<128x128xbf16>, vector<64x128xf32> -> vector<64x128xf32>
    %397 = arith.addf %384, %396 : vector<64x128xf32>
    %c512_i32_133 = arith.constant 512 : i32
    %398 = arith.addi %c512_i32_133, %277 : i32
    %399 = arith.index_cast %398 : i32 to index
    %c0_134 = arith.constant 0 : index
    %400 = vector.load %arg7[%399, %c0_134] : memref<1024x128xbf16, #tpu.memory_space<vmem>>, vector<64x128xbf16>
    %401 = arith.extf %400 : vector<64x128xbf16> to vector<64x128xf32>
    %402 = vector.broadcast %308 : vector<64x1xf32> to vector<64x128xf32>
    %403 = arith.subf %401, %402 : vector<64x128xf32>
    %404 = vector.broadcast %370 : vector<64x1xf32> to vector<64x128xf32>
    %405 = arith.mulf %403, %404 : vector<64x128xf32>
    %406 = arith.truncf %405 : vector<64x128xf32> to vector<64x128xbf16>
    %c0_135 = arith.constant 0 : index
    %c256 = arith.constant 256 : index
    %c0_136 = arith.constant 0 : index
    %407 = vector.load %arg3[%c0_135, %c256, %c0_136] : memref<3x512x128xbf16, #tpu.memory_space<vmem>>, vector<1x128x128xbf16>
    %408 = vector.shape_cast %407 : vector<1x128x128xbf16> to vector<128x128xbf16>
    %cst_137 = arith.constant dense<0.000000e+00> : vector<64x128xf32>
    %409 = tpu.matmul %406, %408, %cst_137 {dimension_numbers = #tpu.dot_dimension_numbers<[1], [0], [0], [1], [0, 0, 1, 1], [], []>} : vector<64x128xbf16>, vector<128x128xbf16>, vector<64x128xf32> -> vector<64x128xf32>
    %410 = arith.addf %397, %409 : vector<64x128xf32>
    %c768_i32_138 = arith.constant 768 : i32
    %411 = arith.addi %c768_i32_138, %277 : i32
    %412 = arith.index_cast %411 : i32 to index
    %c0_139 = arith.constant 0 : index
    %413 = vector.load %arg7[%412, %c0_139] : memref<1024x128xbf16, #tpu.memory_space<vmem>>, vector<64x128xbf16>
    %414 = arith.extf %413 : vector<64x128xbf16> to vector<64x128xf32>
    %415 = vector.broadcast %308 : vector<64x1xf32> to vector<64x128xf32>
    %416 = arith.subf %414, %415 : vector<64x128xf32>
    %417 = vector.broadcast %370 : vector<64x1xf32> to vector<64x128xf32>
    %418 = arith.mulf %416, %417 : vector<64x128xf32>
    %419 = arith.truncf %418 : vector<64x128xf32> to vector<64x128xbf16>
    %c0_140 = arith.constant 0 : index
    %c384 = arith.constant 384 : index
    %c0_141 = arith.constant 0 : index
    %420 = vector.load %arg3[%c0_140, %c384, %c0_141] : memref<3x512x128xbf16, #tpu.memory_space<vmem>>, vector<1x128x128xbf16>
    %421 = vector.shape_cast %420 : vector<1x128x128xbf16> to vector<128x128xbf16>
    %cst_142 = arith.constant dense<0.000000e+00> : vector<64x128xf32>
    %422 = tpu.matmul %419, %421, %cst_142 {dimension_numbers = #tpu.dot_dimension_numbers<[1], [0], [0], [1], [0, 0, 1, 1], [], []>} : vector<64x128xbf16>, vector<128x128xbf16>, vector<64x128xf32> -> vector<64x128xf32>
    %423 = arith.addf %410, %422 : vector<64x128xf32>
    %424 = vector.broadcast %275 : vector<1x128xf32> to vector<64x128xf32>
    %425 = arith.addf %423, %424 : vector<64x128xf32>
    %426 = arith.truncf %425 : vector<64x128xf32> to vector<64x128xbf16>
    %427 = arith.index_cast %277 : i32 to index
    %c0_143 = arith.constant 0 : index
    %428 = vector.load %arg8[%427, %c0_143] : memref<256x128xbf16, #tpu.memory_space<vmem>>, vector<64x128xbf16>
    tpu.vector_store %arg8[%427, %c0_143], %426 {strides = array<i32>} : memref<256x128xbf16, #tpu.memory_space<vmem>>, vector<64x128xbf16>,
    %c1_i32_144 = arith.constant 1 : i32
    %c64_i32_145 = arith.constant 64 : i32
    %429 = arith.muli %c1_i32_144, %c64_i32_145 : i32
    %430 = tpu.assume_multiple %429, 64 : i32
    %cst_146 = arith.constant 0.000000e+00 : f32
    %431 = vector.broadcast %cst_146 : f32 to vector<64x1xf32>
    %c0_i32_147 = arith.constant 0 : i32
    %432 = arith.addi %c0_i32_147, %430 : i32
    %433 = arith.index_cast %432 : i32 to index
    %c0_148 = arith.constant 0 : index
    %434 = vector.load %arg7[%433, %c0_148] : memref<1024x128xbf16, #tpu.memory_space<vmem>>, vector<64x128xbf16>
    %435 = arith.extf %434 : vector<64x128xbf16> to vector<64x128xf32>
    %cst_149 = arith.constant dense<0.000000e+00> : vector<64xf32>
    %436 = vector.multi_reduction <add>, %435, %cst_149 [1] : vector<64x128xf32> to vector<64xf32>
    %437 = vector.shape_cast %436 : vector<64xf32> to vector<64x1xf32>
    %438 = arith.addf %431, %437 : vector<64x1xf32>
    %c256_i32_150 = arith.constant 256 : i32
    %439 = arith.addi %c256_i32_150, %430 : i32
    %440 = arith.index_cast %439 : i32 to index
    %c0_151 = arith.constant 0 : index
    %441 = vector.load %arg7[%440, %c0_151] : memref<1024x128xbf16, #tpu.memory_space<vmem>>, vector<64x128xbf16>
    %442 = arith.extf %441 : vector<64x128xbf16> to vector<64x128xf32>
    %cst_152 = arith.constant dense<0.000000e+00> : vector<64xf32>
    %443 = vector.multi_reduction <add>, %442, %cst_152 [1] : vector<64x128xf32> to vector<64xf32>
    %444 = vector.shape_cast %443 : vector<64xf32> to vector<64x1xf32>
    %445 = arith.addf %438, %444 : vector<64x1xf32>
    %c512_i32_153 = arith.constant 512 : i32
    %446 = arith.addi %c512_i32_153, %430 : i32
    %447 = arith.index_cast %446 : i32 to index
    %c0_154 = arith.constant 0 : index
    %448 = vector.load %arg7[%447, %c0_154] : memref<1024x128xbf16, #tpu.memory_space<vmem>>, vector<64x128xbf16>
    %449 = arith.extf %448 : vector<64x128xbf16> to vector<64x128xf32>
    %cst_155 = arith.constant dense<0.000000e+00> : vector<64xf32>
    %450 = vector.multi_reduction <add>, %449, %cst_155 [1] : vector<64x128xf32> to vector<64xf32>
    %451 = vector.shape_cast %450 : vector<64xf32> to vector<64x1xf32>
    %452 = arith.addf %445, %451 : vector<64x1xf32>
    %c768_i32_156 = arith.constant 768 : i32
    %453 = arith.addi %c768_i32_156, %430 : i32
    %454 = arith.index_cast %453 : i32 to index
    %c0_157 = arith.constant 0 : index
    %455 = vector.load %arg7[%454, %c0_157] : memref<1024x128xbf16, #tpu.memory_space<vmem>>, vector<64x128xbf16>
    %456 = arith.extf %455 : vector<64x128xbf16> to vector<64x128xf32>
    %cst_158 = arith.constant dense<0.000000e+00> : vector<64xf32>
    %457 = vector.multi_reduction <add>, %456, %cst_158 [1] : vector<64x128xf32> to vector<64xf32>
    %458 = vector.shape_cast %457 : vector<64xf32> to vector<64x1xf32>
    %459 = arith.addf %452, %458 : vector<64x1xf32>
    %cst_159 = arith.constant 7.812500e-03 : f32
    %460 = vector.broadcast %cst_159 : f32 to vector<64x1xf32>
    %461 = arith.mulf %459, %460 : vector<64x1xf32>
    %cst_160 = arith.constant 0.000000e+00 : f32
    %462 = vector.broadcast %cst_160 : f32 to vector<64x1xf32>
    %c0_i32_161 = arith.constant 0 : i32
    %463 = arith.addi %c0_i32_161, %430 : i32
    %464 = arith.index_cast %463 : i32 to index
    %c0_162 = arith.constant 0 : index
    %465 = vector.load %arg7[%464, %c0_162] : memref<1024x128xbf16, #tpu.memory_space<vmem>>, vector<64x128xbf16>
    %466 = arith.extf %465 : vector<64x128xbf16> to vector<64x128xf32>
    %467 = vector.broadcast %461 : vector<64x1xf32> to vector<64x128xf32>
    %468 = arith.subf %466, %467 : vector<64x128xf32>
    %cst_163 = arith.constant 0.000000e+00 : f32
    %469 = vector.shape_cast %274 : vector<1x128xi1> to vector<1x128xi1>
    %470 = vector.broadcast %469 : vector<1x128xi1> to vector<64x128xi1>
    %471 = vector.broadcast %cst_163 : f32 to vector<64x128xf32>
    %472 = arith.select %470, %468, %471 : vector<64x128xi1>, vector<64x128xf32>
    %473 = arith.mulf %472, %472 : vector<64x128xf32>
    %cst_164 = arith.constant dense<0.000000e+00> : vector<64xf32>
    %474 = vector.multi_reduction <add>, %473, %cst_164 [1] : vector<64x128xf32> to vector<64xf32>
    %475 = vector.shape_cast %474 : vector<64xf32> to vector<64x1xf32>
    %476 = arith.addf %462, %475 : vector<64x1xf32>
    %c256_i32_165 = arith.constant 256 : i32
    %477 = arith.addi %c256_i32_165, %430 : i32
    %478 = arith.index_cast %477 : i32 to index
    %c0_166 = arith.constant 0 : index
    %479 = vector.load %arg7[%478, %c0_166] : memref<1024x128xbf16, #tpu.memory_space<vmem>>, vector<64x128xbf16>
    %480 = arith.extf %479 : vector<64x128xbf16> to vector<64x128xf32>
    %481 = vector.broadcast %461 : vector<64x1xf32> to vector<64x128xf32>
    %482 = arith.subf %480, %481 : vector<64x128xf32>
    %cst_167 = arith.constant 0.000000e+00 : f32
    %483 = vector.shape_cast %274 : vector<1x128xi1> to vector<1x128xi1>
    %484 = vector.broadcast %483 : vector<1x128xi1> to vector<64x128xi1>
    %485 = vector.broadcast %cst_167 : f32 to vector<64x128xf32>
    %486 = arith.select %484, %482, %485 : vector<64x128xi1>, vector<64x128xf32>
    %487 = arith.mulf %486, %486 : vector<64x128xf32>
    %cst_168 = arith.constant dense<0.000000e+00> : vector<64xf32>
    %488 = vector.multi_reduction <add>, %487, %cst_168 [1] : vector<64x128xf32> to vector<64xf32>
    %489 = vector.shape_cast %488 : vector<64xf32> to vector<64x1xf32>
    %490 = arith.addf %476, %489 : vector<64x1xf32>
    %c512_i32_169 = arith.constant 512 : i32
    %491 = arith.addi %c512_i32_169, %430 : i32
    %492 = arith.index_cast %491 : i32 to index
    %c0_170 = arith.constant 0 : index
    %493 = vector.load %arg7[%492, %c0_170] : memref<1024x128xbf16, #tpu.memory_space<vmem>>, vector<64x128xbf16>
    %494 = arith.extf %493 : vector<64x128xbf16> to vector<64x128xf32>
    %495 = vector.broadcast %461 : vector<64x1xf32> to vector<64x128xf32>
    %496 = arith.subf %494, %495 : vector<64x128xf32>
    %cst_171 = arith.constant 0.000000e+00 : f32
    %497 = vector.shape_cast %274 : vector<1x128xi1> to vector<1x128xi1>
    %498 = vector.broadcast %497 : vector<1x128xi1> to vector<64x128xi1>
    %499 = vector.broadcast %cst_171 : f32 to vector<64x128xf32>
    %500 = arith.select %498, %496, %499 : vector<64x128xi1>, vector<64x128xf32>
    %501 = arith.mulf %500, %500 : vector<64x128xf32>
    %cst_172 = arith.constant dense<0.000000e+00> : vector<64xf32>
    %502 = vector.multi_reduction <add>, %501, %cst_172 [1] : vector<64x128xf32> to vector<64xf32>
    %503 = vector.shape_cast %502 : vector<64xf32> to vector<64x1xf32>
    %504 = arith.addf %490, %503 : vector<64x1xf32>
    %c768_i32_173 = arith.constant 768 : i32
    %505 = arith.addi %c768_i32_173, %430 : i32
    %506 = arith.index_cast %505 : i32 to index
    %c0_174 = arith.constant 0 : index
    %507 = vector.load %arg7[%506, %c0_174] : memref<1024x128xbf16, #tpu.memory_space<vmem>>, vector<64x128xbf16>
    %508 = arith.extf %507 : vector<64x128xbf16> to vector<64x128xf32>
    %509 = vector.broadcast %461 : vector<64x1xf32> to vector<64x128xf32>
    %510 = arith.subf %508, %509 : vector<64x128xf32>
    %cst_175 = arith.constant 0.000000e+00 : f32
    %511 = vector.shape_cast %274 : vector<1x128xi1> to vector<1x128xi1>
    %512 = vector.broadcast %511 : vector<1x128xi1> to vector<64x128xi1>
    %513 = vector.broadcast %cst_175 : f32 to vector<64x128xf32>
    %514 = arith.select %512, %510, %513 : vector<64x128xi1>, vector<64x128xf32>
    %515 = arith.mulf %514, %514 : vector<64x128xf32>
    %cst_176 = arith.constant dense<0.000000e+00> : vector<64xf32>
    %516 = vector.multi_reduction <add>, %515, %cst_176 [1] : vector<64x128xf32> to vector<64xf32>
    %517 = vector.shape_cast %516 : vector<64xf32> to vector<64x1xf32>
    %518 = arith.addf %504, %517 : vector<64x1xf32>
    %cst_177 = arith.constant 7.812500e-03 : f32
    %519 = vector.broadcast %cst_177 : f32 to vector<64x1xf32>
    %520 = arith.mulf %518, %519 : vector<64x1xf32>
    %cst_178 = arith.constant 9.99999974E-6 : f32
    %521 = vector.broadcast %cst_178 : f32 to vector<64x1xf32>
    %522 = arith.addf %520, %521 : vector<64x1xf32>
    %523 = math.rsqrt %522 : vector<64x1xf32>
    %cst_179 = arith.constant 0.000000e+00 : f32
    %524 = vector.broadcast %cst_179 : f32 to vector<64x128xf32>
    %c0_i32_180 = arith.constant 0 : i32
    %525 = arith.addi %c0_i32_180, %430 : i32
    %526 = arith.index_cast %525 : i32 to index
    %c0_181 = arith.constant 0 : index
    %527 = vector.load %arg7[%526, %c0_181] : memref<1024x128xbf16, #tpu.memory_space<vmem>>, vector<64x128xbf16>
    %528 = arith.extf %527 : vector<64x128xbf16> to vector<64x128xf32>
    %529 = vector.broadcast %461 : vector<64x1xf32> to vector<64x128xf32>
    %530 = arith.subf %528, %529 : vector<64x128xf32>
    %531 = vector.broadcast %523 : vector<64x1xf32> to vector<64x128xf32>
    %532 = arith.mulf %530, %531 : vector<64x128xf32>
    %533 = arith.truncf %532 : vector<64x128xf32> to vector<64x128xbf16>
    %c0_182 = arith.constant 0 : index
    %c0_183 = arith.constant 0 : index
    %c0_184 = arith.constant 0 : index
    %534 = vector.load %arg3[%c0_182, %c0_183, %c0_184] : memref<3x512x128xbf16, #tpu.memory_space<vmem>>, vector<1x128x128xbf16>
    %535 = vector.shape_cast %534 : vector<1x128x128xbf16> to vector<128x128xbf16>
    %cst_185 = arith.constant dense<0.000000e+00> : vector<64x128xf32>
    %536 = tpu.matmul %533, %535, %cst_185 {dimension_numbers = #tpu.dot_dimension_numbers<[1], [0], [0], [1], [0, 0, 1, 1], [], []>} : vector<64x128xbf16>, vector<128x128xbf16>, vector<64x128xf32> -> vector<64x128xf32>
    %537 = arith.addf %524, %536 : vector<64x128xf32>
    %c256_i32_186 = arith.constant 256 : i32
    %538 = arith.addi %c256_i32_186, %430 : i32
    %539 = arith.index_cast %538 : i32 to index
    %c0_187 = arith.constant 0 : index
    %540 = vector.load %arg7[%539, %c0_187] : memref<1024x128xbf16, #tpu.memory_space<vmem>>, vector<64x128xbf16>
    %541 = arith.extf %540 : vector<64x128xbf16> to vector<64x128xf32>
    %542 = vector.broadcast %461 : vector<64x1xf32> to vector<64x128xf32>
    %543 = arith.subf %541, %542 : vector<64x128xf32>
    %544 = vector.broadcast %523 : vector<64x1xf32> to vector<64x128xf32>
    %545 = arith.mulf %543, %544 : vector<64x128xf32>
    %546 = arith.truncf %545 : vector<64x128xf32> to vector<64x128xbf16>
    %c0_188 = arith.constant 0 : index
    %c128_189 = arith.constant 128 : index
    %c0_190 = arith.constant 0 : index
    %547 = vector.load %arg3[%c0_188, %c128_189, %c0_190] : memref<3x512x128xbf16, #tpu.memory_space<vmem>>, vector<1x128x128xbf16>
    %548 = vector.shape_cast %547 : vector<1x128x128xbf16> to vector<128x128xbf16>
    %cst_191 = arith.constant dense<0.000000e+00> : vector<64x128xf32>
    %549 = tpu.matmul %546, %548, %cst_191 {dimension_numbers = #tpu.dot_dimension_numbers<[1], [0], [0], [1], [0, 0, 1, 1], [], []>} : vector<64x128xbf16>, vector<128x128xbf16>, vector<64x128xf32> -> vector<64x128xf32>
    %550 = arith.addf %537, %549 : vector<64x128xf32>
    %c512_i32_192 = arith.constant 512 : i32
    %551 = arith.addi %c512_i32_192, %430 : i32
    %552 = arith.index_cast %551 : i32 to index
    %c0_193 = arith.constant 0 : index
    %553 = vector.load %arg7[%552, %c0_193] : memref<1024x128xbf16, #tpu.memory_space<vmem>>, vector<64x128xbf16>
    %554 = arith.extf %553 : vector<64x128xbf16> to vector<64x128xf32>
    %555 = vector.broadcast %461 : vector<64x1xf32> to vector<64x128xf32>
    %556 = arith.subf %554, %555 : vector<64x128xf32>
    %557 = vector.broadcast %523 : vector<64x1xf32> to vector<64x128xf32>
    %558 = arith.mulf %556, %557 : vector<64x128xf32>
    %559 = arith.truncf %558 : vector<64x128xf32> to vector<64x128xbf16>
    %c0_194 = arith.constant 0 : index
    %c256_195 = arith.constant 256 : index
    %c0_196 = arith.constant 0 : index
    %560 = vector.load %arg3[%c0_194, %c256_195, %c0_196] : memref<3x512x128xbf16, #tpu.memory_space<vmem>>, vector<1x128x128xbf16>
    %561 = vector.shape_cast %560 : vector<1x128x128xbf16> to vector<128x128xbf16>
    %cst_197 = arith.constant dense<0.000000e+00> : vector<64x128xf32>
    %562 = tpu.matmul %559, %561, %cst_197 {dimension_numbers = #tpu.dot_dimension_numbers<[1], [0], [0], [1], [0, 0, 1, 1], [], []>} : vector<64x128xbf16>, vector<128x128xbf16>, vector<64x128xf32> -> vector<64x128xf32>
    %563 = arith.addf %550, %562 : vector<64x128xf32>
    %c768_i32_198 = arith.constant 768 : i32
    %564 = arith.addi %c768_i32_198, %430 : i32
    %565 = arith.index_cast %564 : i32 to index
    %c0_199 = arith.constant 0 : index
    %566 = vector.load %arg7[%565, %c0_199] : memref<1024x128xbf16, #tpu.memory_space<vmem>>, vector<64x128xbf16>
    %567 = arith.extf %566 : vector<64x128xbf16> to vector<64x128xf32>
    %568 = vector.broadcast %461 : vector<64x1xf32> to vector<64x128xf32>
    %569 = arith.subf %567, %568 : vector<64x128xf32>
    %570 = vector.broadcast %523 : vector<64x1xf32> to vector<64x128xf32>
    %571 = arith.mulf %569, %570 : vector<64x128xf32>
    %572 = arith.truncf %571 : vector<64x128xf32> to vector<64x128xbf16>
    %c0_200 = arith.constant 0 : index
    %c384_201 = arith.constant 384 : index
    %c0_202 = arith.constant 0 : index
    %573 = vector.load %arg3[%c0_200, %c384_201, %c0_202] : memref<3x512x128xbf16, #tpu.memory_space<vmem>>, vector<1x128x128xbf16>
    %574 = vector.shape_cast %573 : vector<1x128x128xbf16> to vector<128x128xbf16>
    %cst_203 = arith.constant dense<0.000000e+00> : vector<64x128xf32>
    %575 = tpu.matmul %572, %574, %cst_203 {dimension_numbers = #tpu.dot_dimension_numbers<[1], [0], [0], [1], [0, 0, 1, 1], [], []>} : vector<64x128xbf16>, vector<128x128xbf16>, vector<64x128xf32> -> vector<64x128xf32>
    %576 = arith.addf %563, %575 : vector<64x128xf32>
    %577 = vector.broadcast %275 : vector<1x128xf32> to vector<64x128xf32>
    %578 = arith.addf %576, %577 : vector<64x128xf32>
    %579 = arith.truncf %578 : vector<64x128xf32> to vector<64x128xbf16>
    %580 = arith.index_cast %430 : i32 to index
    %c0_204 = arith.constant 0 : index
    %581 = vector.load %arg8[%580, %c0_204] : memref<256x128xbf16, #tpu.memory_space<vmem>>, vector<64x128xbf16>
    tpu.vector_store %arg8[%580, %c0_204], %579 {strides = array<i32>} : memref<256x128xbf16, #tpu.memory_space<vmem>>, vector<64x128xbf16>,
    %c2_i32_205 = arith.constant 2 : i32
    %c64_i32_206 = arith.constant 64 : i32
    %582 = arith.muli %c2_i32_205, %c64_i32_206 : i32
    %583 = tpu.assume_multiple %582, 64 : i32
    %cst_207 = arith.constant 0.000000e+00 : f32
    %584 = vector.broadcast %cst_207 : f32 to vector<64x1xf32>
    %c0_i32_208 = arith.constant 0 : i32
    %585 = arith.addi %c0_i32_208, %583 : i32
    %586 = arith.index_cast %585 : i32 to index
    %c0_209 = arith.constant 0 : index
    %587 = vector.load %arg7[%586, %c0_209] : memref<1024x128xbf16, #tpu.memory_space<vmem>>, vector<64x128xbf16>
    %588 = arith.extf %587 : vector<64x128xbf16> to vector<64x128xf32>
    %cst_210 = arith.constant dense<0.000000e+00> : vector<64xf32>
    %589 = vector.multi_reduction <add>, %588, %cst_210 [1] : vector<64x128xf32> to vector<64xf32>
    %590 = vector.shape_cast %589 : vector<64xf32> to vector<64x1xf32>
    %591 = arith.addf %584, %590 : vector<64x1xf32>
    %c256_i32_211 = arith.constant 256 : i32
    %592 = arith.addi %c256_i32_211, %583 : i32
    %593 = arith.index_cast %592 : i32 to index
    %c0_212 = arith.constant 0 : index
    %594 = vector.load %arg7[%593, %c0_212] : memref<1024x128xbf16, #tpu.memory_space<vmem>>, vector<64x128xbf16>
    %595 = arith.extf %594 : vector<64x128xbf16> to vector<64x128xf32>
    %cst_213 = arith.constant dense<0.000000e+00> : vector<64xf32>
    %596 = vector.multi_reduction <add>, %595, %cst_213 [1] : vector<64x128xf32> to vector<64xf32>
    %597 = vector.shape_cast %596 : vector<64xf32> to vector<64x1xf32>
    %598 = arith.addf %591, %597 : vector<64x1xf32>
    %c512_i32_214 = arith.constant 512 : i32
    %599 = arith.addi %c512_i32_214, %583 : i32
    %600 = arith.index_cast %599 : i32 to index
    %c0_215 = arith.constant 0 : index
    %601 = vector.load %arg7[%600, %c0_215] : memref<1024x128xbf16, #tpu.memory_space<vmem>>, vector<64x128xbf16>
    %602 = arith.extf %601 : vector<64x128xbf16> to vector<64x128xf32>
    %cst_216 = arith.constant dense<0.000000e+00> : vector<64xf32>
    %603 = vector.multi_reduction <add>, %602, %cst_216 [1] : vector<64x128xf32> to vector<64xf32>
    %604 = vector.shape_cast %603 : vector<64xf32> to vector<64x1xf32>
    %605 = arith.addf %598, %604 : vector<64x1xf32>
    %c768_i32_217 = arith.constant 768 : i32
    %606 = arith.addi %c768_i32_217, %583 : i32
    %607 = arith.index_cast %606 : i32 to index
    %c0_218 = arith.constant 0 : index
    %608 = vector.load %arg7[%607, %c0_218] : memref<1024x128xbf16, #tpu.memory_space<vmem>>, vector<64x128xbf16>
    %609 = arith.extf %608 : vector<64x128xbf16> to vector<64x128xf32>
    %cst_219 = arith.constant dense<0.000000e+00> : vector<64xf32>
    %610 = vector.multi_reduction <add>, %609, %cst_219 [1] : vector<64x128xf32> to vector<64xf32>
    %611 = vector.shape_cast %610 : vector<64xf32> to vector<64x1xf32>
    %612 = arith.addf %605, %611 : vector<64x1xf32>
    %cst_220 = arith.constant 7.812500e-03 : f32
    %613 = vector.broadcast %cst_220 : f32 to vector<64x1xf32>
    %614 = arith.mulf %612, %613 : vector<64x1xf32>
    %cst_221 = arith.constant 0.000000e+00 : f32
    %615 = vector.broadcast %cst_221 : f32 to vector<64x1xf32>
    %c0_i32_222 = arith.constant 0 : i32
    %616 = arith.addi %c0_i32_222, %583 : i32
    %617 = arith.index_cast %616 : i32 to index
    %c0_223 = arith.constant 0 : index
    %618 = vector.load %arg7[%617, %c0_223] : memref<1024x128xbf16, #tpu.memory_space<vmem>>, vector<64x128xbf16>
    %619 = arith.extf %618 : vector<64x128xbf16> to vector<64x128xf32>
    %620 = vector.broadcast %614 : vector<64x1xf32> to vector<64x128xf32>
    %621 = arith.subf %619, %620 : vector<64x128xf32>
    %cst_224 = arith.constant 0.000000e+00 : f32
    %622 = vector.shape_cast %274 : vector<1x128xi1> to vector<1x128xi1>
    %623 = vector.broadcast %622 : vector<1x128xi1> to vector<64x128xi1>
    %624 = vector.broadcast %cst_224 : f32 to vector<64x128xf32>
    %625 = arith.select %623, %621, %624 : vector<64x128xi1>, vector<64x128xf32>
    %626 = arith.mulf %625, %625 : vector<64x128xf32>
    %cst_225 = arith.constant dense<0.000000e+00> : vector<64xf32>
    %627 = vector.multi_reduction <add>, %626, %cst_225 [1] : vector<64x128xf32> to vector<64xf32>
    %628 = vector.shape_cast %627 : vector<64xf32> to vector<64x1xf32>
    %629 = arith.addf %615, %628 : vector<64x1xf32>
    %c256_i32_226 = arith.constant 256 : i32
    %630 = arith.addi %c256_i32_226, %583 : i32
    %631 = arith.index_cast %630 : i32 to index
    %c0_227 = arith.constant 0 : index
    %632 = vector.load %arg7[%631, %c0_227] : memref<1024x128xbf16, #tpu.memory_space<vmem>>, vector<64x128xbf16>
    %633 = arith.extf %632 : vector<64x128xbf16> to vector<64x128xf32>
    %634 = vector.broadcast %614 : vector<64x1xf32> to vector<64x128xf32>
    %635 = arith.subf %633, %634 : vector<64x128xf32>
    %cst_228 = arith.constant 0.000000e+00 : f32
    %636 = vector.shape_cast %274 : vector<1x128xi1> to vector<1x128xi1>
    %637 = vector.broadcast %636 : vector<1x128xi1> to vector<64x128xi1>
    %638 = vector.broadcast %cst_228 : f32 to vector<64x128xf32>
    %639 = arith.select %637, %635, %638 : vector<64x128xi1>, vector<64x128xf32>
    %640 = arith.mulf %639, %639 : vector<64x128xf32>
    %cst_229 = arith.constant dense<0.000000e+00> : vector<64xf32>
    %641 = vector.multi_reduction <add>, %640, %cst_229 [1] : vector<64x128xf32> to vector<64xf32>
    %642 = vector.shape_cast %641 : vector<64xf32> to vector<64x1xf32>
    %643 = arith.addf %629, %642 : vector<64x1xf32>
    %c512_i32_230 = arith.constant 512 : i32
    %644 = arith.addi %c512_i32_230, %583 : i32
    %645 = arith.index_cast %644 : i32 to index
    %c0_231 = arith.constant 0 : index
    %646 = vector.load %arg7[%645, %c0_231] : memref<1024x128xbf16, #tpu.memory_space<vmem>>, vector<64x128xbf16>
    %647 = arith.extf %646 : vector<64x128xbf16> to vector<64x128xf32>
    %648 = vector.broadcast %614 : vector<64x1xf32> to vector<64x128xf32>
    %649 = arith.subf %647, %648 : vector<64x128xf32>
    %cst_232 = arith.constant 0.000000e+00 : f32
    %650 = vector.shape_cast %274 : vector<1x128xi1> to vector<1x128xi1>
    %651 = vector.broadcast %650 : vector<1x128xi1> to vector<64x128xi1>
    %652 = vector.broadcast %cst_232 : f32 to vector<64x128xf32>
    %653 = arith.select %651, %649, %652 : vector<64x128xi1>, vector<64x128xf32>
    %654 = arith.mulf %653, %653 : vector<64x128xf32>
    %cst_233 = arith.constant dense<0.000000e+00> : vector<64xf32>
    %655 = vector.multi_reduction <add>, %654, %cst_233 [1] : vector<64x128xf32> to vector<64xf32>
    %656 = vector.shape_cast %655 : vector<64xf32> to vector<64x1xf32>
    %657 = arith.addf %643, %656 : vector<64x1xf32>
    %c768_i32_234 = arith.constant 768 : i32
    %658 = arith.addi %c768_i32_234, %583 : i32
    %659 = arith.index_cast %658 : i32 to index
    %c0_235 = arith.constant 0 : index
    %660 = vector.load %arg7[%659, %c0_235] : memref<1024x128xbf16, #tpu.memory_space<vmem>>, vector<64x128xbf16>
    %661 = arith.extf %660 : vector<64x128xbf16> to vector<64x128xf32>
    %662 = vector.broadcast %614 : vector<64x1xf32> to vector<64x128xf32>
    %663 = arith.subf %661, %662 : vector<64x128xf32>
    %cst_236 = arith.constant 0.000000e+00 : f32
    %664 = vector.shape_cast %274 : vector<1x128xi1> to vector<1x128xi1>
    %665 = vector.broadcast %664 : vector<1x128xi1> to vector<64x128xi1>
    %666 = vector.broadcast %cst_236 : f32 to vector<64x128xf32>
    %667 = arith.select %665, %663, %666 : vector<64x128xi1>, vector<64x128xf32>
    %668 = arith.mulf %667, %667 : vector<64x128xf32>
    %cst_237 = arith.constant dense<0.000000e+00> : vector<64xf32>
    %669 = vector.multi_reduction <add>, %668, %cst_237 [1] : vector<64x128xf32> to vector<64xf32>
    %670 = vector.shape_cast %669 : vector<64xf32> to vector<64x1xf32>
    %671 = arith.addf %657, %670 : vector<64x1xf32>
    %cst_238 = arith.constant 7.812500e-03 : f32
    %672 = vector.broadcast %cst_238 : f32 to vector<64x1xf32>
    %673 = arith.mulf %671, %672 : vector<64x1xf32>
    %cst_239 = arith.constant 9.99999974E-6 : f32
    %674 = vector.broadcast %cst_239 : f32 to vector<64x1xf32>
    %675 = arith.addf %673, %674 : vector<64x1xf32>
    %676 = math.rsqrt %675 : vector<64x1xf32>
    %cst_240 = arith.constant 0.000000e+00 : f32
    %677 = vector.broadcast %cst_240 : f32 to vector<64x128xf32>
    %c0_i32_241 = arith.constant 0 : i32
    %678 = arith.addi %c0_i32_241, %583 : i32
    %679 = arith.index_cast %678 : i32 to index
    %c0_242 = arith.constant 0 : index
    %680 = vector.load %arg7[%679, %c0_242] : memref<1024x128xbf16, #tpu.memory_space<vmem>>, vector<64x128xbf16>
    %681 = arith.extf %680 : vector<64x128xbf16> to vector<64x128xf32>
    %682 = vector.broadcast %614 : vector<64x1xf32> to vector<64x128xf32>
    %683 = arith.subf %681, %682 : vector<64x128xf32>
    %684 = vector.broadcast %676 : vector<64x1xf32> to vector<64x128xf32>
    %685 = arith.mulf %683, %684 : vector<64x128xf32>
    %686 = arith.truncf %685 : vector<64x128xf32> to vector<64x128xbf16>
    %c0_243 = arith.constant 0 : index
    %c0_244 = arith.constant 0 : index
    %c0_245 = arith.constant 0 : index
    %687 = vector.load %arg3[%c0_243, %c0_244, %c0_245] : memref<3x512x128xbf16, #tpu.memory_space<vmem>>, vector<1x128x128xbf16>
    %688 = vector.shape_cast %687 : vector<1x128x128xbf16> to vector<128x128xbf16>
    %cst_246 = arith.constant dense<0.000000e+00> : vector<64x128xf32>
    %689 = tpu.matmul %686, %688, %cst_246 {dimension_numbers = #tpu.dot_dimension_numbers<[1], [0], [0], [1], [0, 0, 1, 1], [], []>} : vector<64x128xbf16>, vector<128x128xbf16>, vector<64x128xf32> -> vector<64x128xf32>
    %690 = arith.addf %677, %689 : vector<64x128xf32>
    %c256_i32_247 = arith.constant 256 : i32
    %691 = arith.addi %c256_i32_247, %583 : i32
    %692 = arith.index_cast %691 : i32 to index
    %c0_248 = arith.constant 0 : index
    %693 = vector.load %arg7[%692, %c0_248] : memref<1024x128xbf16, #tpu.memory_space<vmem>>, vector<64x128xbf16>
    %694 = arith.extf %693 : vector<64x128xbf16> to vector<64x128xf32>
    %695 = vector.broadcast %614 : vector<64x1xf32> to vector<64x128xf32>
    %696 = arith.subf %694, %695 : vector<64x128xf32>
    %697 = vector.broadcast %676 : vector<64x1xf32> to vector<64x128xf32>
    %698 = arith.mulf %696, %697 : vector<64x128xf32>
    %699 = arith.truncf %698 : vector<64x128xf32> to vector<64x128xbf16>
    %c0_249 = arith.constant 0 : index
    %c128_250 = arith.constant 128 : index
    %c0_251 = arith.constant 0 : index
    %700 = vector.load %arg3[%c0_249, %c128_250, %c0_251] : memref<3x512x128xbf16, #tpu.memory_space<vmem>>, vector<1x128x128xbf16>
    %701 = vector.shape_cast %700 : vector<1x128x128xbf16> to vector<128x128xbf16>
    %cst_252 = arith.constant dense<0.000000e+00> : vector<64x128xf32>
    %702 = tpu.matmul %699, %701, %cst_252 {dimension_numbers = #tpu.dot_dimension_numbers<[1], [0], [0], [1], [0, 0, 1, 1], [], []>} : vector<64x128xbf16>, vector<128x128xbf16>, vector<64x128xf32> -> vector<64x128xf32>
    %703 = arith.addf %690, %702 : vector<64x128xf32>
    %c512_i32_253 = arith.constant 512 : i32
    %704 = arith.addi %c512_i32_253, %583 : i32
    %705 = arith.index_cast %704 : i32 to index
    %c0_254 = arith.constant 0 : index
    %706 = vector.load %arg7[%705, %c0_254] : memref<1024x128xbf16, #tpu.memory_space<vmem>>, vector<64x128xbf16>
    %707 = arith.extf %706 : vector<64x128xbf16> to vector<64x128xf32>
    %708 = vector.broadcast %614 : vector<64x1xf32> to vector<64x128xf32>
    %709 = arith.subf %707, %708 : vector<64x128xf32>
    %710 = vector.broadcast %676 : vector<64x1xf32> to vector<64x128xf32>
    %711 = arith.mulf %709, %710 : vector<64x128xf32>
    %712 = arith.truncf %711 : vector<64x128xf32> to vector<64x128xbf16>
    %c0_255 = arith.constant 0 : index
    %c256_256 = arith.constant 256 : index
    %c0_257 = arith.constant 0 : index
    %713 = vector.load %arg3[%c0_255, %c256_256, %c0_257] : memref<3x512x128xbf16, #tpu.memory_space<vmem>>, vector<1x128x128xbf16>
    %714 = vector.shape_cast %713 : vector<1x128x128xbf16> to vector<128x128xbf16>
    %cst_258 = arith.constant dense<0.000000e+00> : vector<64x128xf32>
    %715 = tpu.matmul %712, %714, %cst_258 {dimension_numbers = #tpu.dot_dimension_numbers<[1], [0], [0], [1], [0, 0, 1, 1], [], []>} : vector<64x128xbf16>, vector<128x128xbf16>, vector<64x128xf32> -> vector<64x128xf32>
    %716 = arith.addf %703, %715 : vector<64x128xf32>
    %c768_i32_259 = arith.constant 768 : i32
    %717 = arith.addi %c768_i32_259, %583 : i32
    %718 = arith.index_cast %717 : i32 to index
    %c0_260 = arith.constant 0 : index
    %719 = vector.load %arg7[%718, %c0_260] : memref<1024x128xbf16, #tpu.memory_space<vmem>>, vector<64x128xbf16>
    %720 = arith.extf %719 : vector<64x128xbf16> to vector<64x128xf32>
    %721 = vector.broadcast %614 : vector<64x1xf32> to vector<64x128xf32>
    %722 = arith.subf %720, %721 : vector<64x128xf32>
    %723 = vector.broadcast %676 : vector<64x1xf32> to vector<64x128xf32>
    %724 = arith.mulf %722, %723 : vector<64x128xf32>
    %725 = arith.truncf %724 : vector<64x128xf32> to vector<64x128xbf16>
    %c0_261 = arith.constant 0 : index
    %c384_262 = arith.constant 384 : index
    %c0_263 = arith.constant 0 : index
    %726 = vector.load %arg3[%c0_261, %c384_262, %c0_263] : memref<3x512x128xbf16, #tpu.memory_space<vmem>>, vector<1x128x128xbf16>
    %727 = vector.shape_cast %726 : vector<1x128x128xbf16> to vector<128x128xbf16>
    %cst_264 = arith.constant dense<0.000000e+00> : vector<64x128xf32>
    %728 = tpu.matmul %725, %727, %cst_264 {dimension_numbers = #tpu.dot_dimension_numbers<[1], [0], [0], [1], [0, 0, 1, 1], [], []>} : vector<64x128xbf16>, vector<128x128xbf16>, vector<64x128xf32> -> vector<64x128xf32>
    %729 = arith.addf %716, %728 : vector<64x128xf32>
    %730 = vector.broadcast %275 : vector<1x128xf32> to vector<64x128xf32>
    %731 = arith.addf %729, %730 : vector<64x128xf32>
    %732 = arith.truncf %731 : vector<64x128xf32> to vector<64x128xbf16>
    %733 = arith.index_cast %583 : i32 to index
    %c0_265 = arith.constant 0 : index
    %734 = vector.load %arg8[%733, %c0_265] : memref<256x128xbf16, #tpu.memory_space<vmem>>, vector<64x128xbf16>
    tpu.vector_store %arg8[%733, %c0_265], %732 {strides = array<i32>} : memref<256x128xbf16, #tpu.memory_space<vmem>>, vector<64x128xbf16>,
    %c3_i32_266 = arith.constant 3 : i32
    %c64_i32_267 = arith.constant 64 : i32
    %735 = arith.muli %c3_i32_266, %c64_i32_267 : i32
    %736 = tpu.assume_multiple %735, 64 : i32
    %cst_268 = arith.constant 0.000000e+00 : f32
    %737 = vector.broadcast %cst_268 : f32 to vector<64x1xf32>
    %c0_i32_269 = arith.constant 0 : i32
    %738 = arith.addi %c0_i32_269, %736 : i32
    %739 = arith.index_cast %738 : i32 to index
    %c0_270 = arith.constant 0 : index
    %740 = vector.load %arg7[%739, %c0_270] : memref<1024x128xbf16, #tpu.memory_space<vmem>>, vector<64x128xbf16>
    %741 = arith.extf %740 : vector<64x128xbf16> to vector<64x128xf32>
    %cst_271 = arith.constant dense<0.000000e+00> : vector<64xf32>
    %742 = vector.multi_reduction <add>, %741, %cst_271 [1] : vector<64x128xf32> to vector<64xf32>
    %743 = vector.shape_cast %742 : vector<64xf32> to vector<64x1xf32>
    %744 = arith.addf %737, %743 : vector<64x1xf32>
    %c256_i32_272 = arith.constant 256 : i32
    %745 = arith.addi %c256_i32_272, %736 : i32
    %746 = arith.index_cast %745 : i32 to index
    %c0_273 = arith.constant 0 : index
    %747 = vector.load %arg7[%746, %c0_273] : memref<1024x128xbf16, #tpu.memory_space<vmem>>, vector<64x128xbf16>
    %748 = arith.extf %747 : vector<64x128xbf16> to vector<64x128xf32>
    %cst_274 = arith.constant dense<0.000000e+00> : vector<64xf32>
    %749 = vector.multi_reduction <add>, %748, %cst_274 [1] : vector<64x128xf32> to vector<64xf32>
    %750 = vector.shape_cast %749 : vector<64xf32> to vector<64x1xf32>
    %751 = arith.addf %744, %750 : vector<64x1xf32>
    %c512_i32_275 = arith.constant 512 : i32
    %752 = arith.addi %c512_i32_275, %736 : i32
    %753 = arith.index_cast %752 : i32 to index
    %c0_276 = arith.constant 0 : index
    %754 = vector.load %arg7[%753, %c0_276] : memref<1024x128xbf16, #tpu.memory_space<vmem>>, vector<64x128xbf16>
    %755 = arith.extf %754 : vector<64x128xbf16> to vector<64x128xf32>
    %cst_277 = arith.constant dense<0.000000e+00> : vector<64xf32>
    %756 = vector.multi_reduction <add>, %755, %cst_277 [1] : vector<64x128xf32> to vector<64xf32>
    %757 = vector.shape_cast %756 : vector<64xf32> to vector<64x1xf32>
    %758 = arith.addf %751, %757 : vector<64x1xf32>
    %c768_i32_278 = arith.constant 768 : i32
    %759 = arith.addi %c768_i32_278, %736 : i32
    %760 = arith.index_cast %759 : i32 to index
    %c0_279 = arith.constant 0 : index
    %761 = vector.load %arg7[%760, %c0_279] : memref<1024x128xbf16, #tpu.memory_space<vmem>>, vector<64x128xbf16>
    %762 = arith.extf %761 : vector<64x128xbf16> to vector<64x128xf32>
    %cst_280 = arith.constant dense<0.000000e+00> : vector<64xf32>
    %763 = vector.multi_reduction <add>, %762, %cst_280 [1] : vector<64x128xf32> to vector<64xf32>
    %764 = vector.shape_cast %763 : vector<64xf32> to vector<64x1xf32>
    %765 = arith.addf %758, %764 : vector<64x1xf32>
    %cst_281 = arith.constant 7.812500e-03 : f32
    %766 = vector.broadcast %cst_281 : f32 to vector<64x1xf32>
    %767 = arith.mulf %765, %766 : vector<64x1xf32>
    %cst_282 = arith.constant 0.000000e+00 : f32
    %768 = vector.broadcast %cst_282 : f32 to vector<64x1xf32>
    %c0_i32_283 = arith.constant 0 : i32
    %769 = arith.addi %c0_i32_283, %736 : i32
    %770 = arith.index_cast %769 : i32 to index
    %c0_284 = arith.constant 0 : index
    %771 = vector.load %arg7[%770, %c0_284] : memref<1024x128xbf16, #tpu.memory_space<vmem>>, vector<64x128xbf16>
    %772 = arith.extf %771 : vector<64x128xbf16> to vector<64x128xf32>
    %773 = vector.broadcast %767 : vector<64x1xf32> to vector<64x128xf32>
    %774 = arith.subf %772, %773 : vector<64x128xf32>
    %cst_285 = arith.constant 0.000000e+00 : f32
    %775 = vector.shape_cast %274 : vector<1x128xi1> to vector<1x128xi1>
    %776 = vector.broadcast %775 : vector<1x128xi1> to vector<64x128xi1>
    %777 = vector.broadcast %cst_285 : f32 to vector<64x128xf32>
    %778 = arith.select %776, %774, %777 : vector<64x128xi1>, vector<64x128xf32>
    %779 = arith.mulf %778, %778 : vector<64x128xf32>
    %cst_286 = arith.constant dense<0.000000e+00> : vector<64xf32>
    %780 = vector.multi_reduction <add>, %779, %cst_286 [1] : vector<64x128xf32> to vector<64xf32>
    %781 = vector.shape_cast %780 : vector<64xf32> to vector<64x1xf32>
    %782 = arith.addf %768, %781 : vector<64x1xf32>
    %c256_i32_287 = arith.constant 256 : i32
    %783 = arith.addi %c256_i32_287, %736 : i32
    %784 = arith.index_cast %783 : i32 to index
    %c0_288 = arith.constant 0 : index
    %785 = vector.load %arg7[%784, %c0_288] : memref<1024x128xbf16, #tpu.memory_space<vmem>>, vector<64x128xbf16>
    %786 = arith.extf %785 : vector<64x128xbf16> to vector<64x128xf32>
    %787 = vector.broadcast %767 : vector<64x1xf32> to vector<64x128xf32>
    %788 = arith.subf %786, %787 : vector<64x128xf32>
    %cst_289 = arith.constant 0.000000e+00 : f32
    %789 = vector.shape_cast %274 : vector<1x128xi1> to vector<1x128xi1>
    %790 = vector.broadcast %789 : vector<1x128xi1> to vector<64x128xi1>
    %791 = vector.broadcast %cst_289 : f32 to vector<64x128xf32>
    %792 = arith.select %790, %788, %791 : vector<64x128xi1>, vector<64x128xf32>
    %793 = arith.mulf %792, %792 : vector<64x128xf32>
    %cst_290 = arith.constant dense<0.000000e+00> : vector<64xf32>
    %794 = vector.multi_reduction <add>, %793, %cst_290 [1] : vector<64x128xf32> to vector<64xf32>
    %795 = vector.shape_cast %794 : vector<64xf32> to vector<64x1xf32>
    %796 = arith.addf %782, %795 : vector<64x1xf32>
    %c512_i32_291 = arith.constant 512 : i32
    %797 = arith.addi %c512_i32_291, %736 : i32
    %798 = arith.index_cast %797 : i32 to index
    %c0_292 = arith.constant 0 : index
    %799 = vector.load %arg7[%798, %c0_292] : memref<1024x128xbf16, #tpu.memory_space<vmem>>, vector<64x128xbf16>
    %800 = arith.extf %799 : vector<64x128xbf16> to vector<64x128xf32>
    %801 = vector.broadcast %767 : vector<64x1xf32> to vector<64x128xf32>
    %802 = arith.subf %800, %801 : vector<64x128xf32>
    %cst_293 = arith.constant 0.000000e+00 : f32
    %803 = vector.shape_cast %274 : vector<1x128xi1> to vector<1x128xi1>
    %804 = vector.broadcast %803 : vector<1x128xi1> to vector<64x128xi1>
    %805 = vector.broadcast %cst_293 : f32 to vector<64x128xf32>
    %806 = arith.select %804, %802, %805 : vector<64x128xi1>, vector<64x128xf32>
    %807 = arith.mulf %806, %806 : vector<64x128xf32>
    %cst_294 = arith.constant dense<0.000000e+00> : vector<64xf32>
    %808 = vector.multi_reduction <add>, %807, %cst_294 [1] : vector<64x128xf32> to vector<64xf32>
    %809 = vector.shape_cast %808 : vector<64xf32> to vector<64x1xf32>
    %810 = arith.addf %796, %809 : vector<64x1xf32>
    %c768_i32_295 = arith.constant 768 : i32
    %811 = arith.addi %c768_i32_295, %736 : i32
    %812 = arith.index_cast %811 : i32 to index
    %c0_296 = arith.constant 0 : index
    %813 = vector.load %arg7[%812, %c0_296] : memref<1024x128xbf16, #tpu.memory_space<vmem>>, vector<64x128xbf16>
    %814 = arith.extf %813 : vector<64x128xbf16> to vector<64x128xf32>
    %815 = vector.broadcast %767 : vector<64x1xf32> to vector<64x128xf32>
    %816 = arith.subf %814, %815 : vector<64x128xf32>
    %cst_297 = arith.constant 0.000000e+00 : f32
    %817 = vector.shape_cast %274 : vector<1x128xi1> to vector<1x128xi1>
    %818 = vector.broadcast %817 : vector<1x128xi1> to vector<64x128xi1>
    %819 = vector.broadcast %cst_297 : f32 to vector<64x128xf32>
    %820 = arith.select %818, %816, %819 : vector<64x128xi1>, vector<64x128xf32>
    %821 = arith.mulf %820, %820 : vector<64x128xf32>
    %cst_298 = arith.constant dense<0.000000e+00> : vector<64xf32>
    %822 = vector.multi_reduction <add>, %821, %cst_298 [1] : vector<64x128xf32> to vector<64xf32>
    %823 = vector.shape_cast %822 : vector<64xf32> to vector<64x1xf32>
    %824 = arith.addf %810, %823 : vector<64x1xf32>
    %cst_299 = arith.constant 7.812500e-03 : f32
    %825 = vector.broadcast %cst_299 : f32 to vector<64x1xf32>
    %826 = arith.mulf %824, %825 : vector<64x1xf32>
    %cst_300 = arith.constant 9.99999974E-6 : f32
    %827 = vector.broadcast %cst_300 : f32 to vector<64x1xf32>
    %828 = arith.addf %826, %827 : vector<64x1xf32>
    %829 = math.rsqrt %828 : vector<64x1xf32>
    %cst_301 = arith.constant 0.000000e+00 : f32
    %830 = vector.broadcast %cst_301 : f32 to vector<64x128xf32>
    %c0_i32_302 = arith.constant 0 : i32
    %831 = arith.addi %c0_i32_302, %736 : i32
    %832 = arith.index_cast %831 : i32 to index
    %c0_303 = arith.constant 0 : index
    %833 = vector.load %arg7[%832, %c0_303] : memref<1024x128xbf16, #tpu.memory_space<vmem>>, vector<64x128xbf16>
    %834 = arith.extf %833 : vector<64x128xbf16> to vector<64x128xf32>
    %835 = vector.broadcast %767 : vector<64x1xf32> to vector<64x128xf32>
    %836 = arith.subf %834, %835 : vector<64x128xf32>
    %837 = vector.broadcast %829 : vector<64x1xf32> to vector<64x128xf32>
    %838 = arith.mulf %836, %837 : vector<64x128xf32>
    %839 = arith.truncf %838 : vector<64x128xf32> to vector<64x128xbf16>
    %c0_304 = arith.constant 0 : index
    %c0_305 = arith.constant 0 : index
    %c0_306 = arith.constant 0 : index
    %840 = vector.load %arg3[%c0_304, %c0_305, %c0_306] : memref<3x512x128xbf16, #tpu.memory_space<vmem>>, vector<1x128x128xbf16>
    %841 = vector.shape_cast %840 : vector<1x128x128xbf16> to vector<128x128xbf16>
    %cst_307 = arith.constant dense<0.000000e+00> : vector<64x128xf32>
    %842 = tpu.matmul %839, %841, %cst_307 {dimension_numbers = #tpu.dot_dimension_numbers<[1], [0], [0], [1], [0, 0, 1, 1], [], []>} : vector<64x128xbf16>, vector<128x128xbf16>, vector<64x128xf32> -> vector<64x128xf32>
    %843 = arith.addf %830, %842 : vector<64x128xf32>
    %c256_i32_308 = arith.constant 256 : i32
    %844 = arith.addi %c256_i32_308, %736 : i32
    %845 = arith.index_cast %844 : i32 to index
    %c0_309 = arith.constant 0 : index
    %846 = vector.load %arg7[%845, %c0_309] : memref<1024x128xbf16, #tpu.memory_space<vmem>>, vector<64x128xbf16>
    %847 = arith.extf %846 : vector<64x128xbf16> to vector<64x128xf32>
    %848 = vector.broadcast %767 : vector<64x1xf32> to vector<64x128xf32>
    %849 = arith.subf %847, %848 : vector<64x128xf32>
    %850 = vector.broadcast %829 : vector<64x1xf32> to vector<64x128xf32>
    %851 = arith.mulf %849, %850 : vector<64x128xf32>
    %852 = arith.truncf %851 : vector<64x128xf32> to vector<64x128xbf16>
    %c0_310 = arith.constant 0 : index
    %c128_311 = arith.constant 128 : index
    %c0_312 = arith.constant 0 : index
    %853 = vector.load %arg3[%c0_310, %c128_311, %c0_312] : memref<3x512x128xbf16, #tpu.memory_space<vmem>>, vector<1x128x128xbf16>
    %854 = vector.shape_cast %853 : vector<1x128x128xbf16> to vector<128x128xbf16>
    %cst_313 = arith.constant dense<0.000000e+00> : vector<64x128xf32>
    %855 = tpu.matmul %852, %854, %cst_313 {dimension_numbers = #tpu.dot_dimension_numbers<[1], [0], [0], [1], [0, 0, 1, 1], [], []>} : vector<64x128xbf16>, vector<128x128xbf16>, vector<64x128xf32> -> vector<64x128xf32>
    %856 = arith.addf %843, %855 : vector<64x128xf32>
    %c512_i32_314 = arith.constant 512 : i32
    %857 = arith.addi %c512_i32_314, %736 : i32
    %858 = arith.index_cast %857 : i32 to index
    %c0_315 = arith.constant 0 : index
    %859 = vector.load %arg7[%858, %c0_315] : memref<1024x128xbf16, #tpu.memory_space<vmem>>, vector<64x128xbf16>
    %860 = arith.extf %859 : vector<64x128xbf16> to vector<64x128xf32>
    %861 = vector.broadcast %767 : vector<64x1xf32> to vector<64x128xf32>
    %862 = arith.subf %860, %861 : vector<64x128xf32>
    %863 = vector.broadcast %829 : vector<64x1xf32> to vector<64x128xf32>
    %864 = arith.mulf %862, %863 : vector<64x128xf32>
    %865 = arith.truncf %864 : vector<64x128xf32> to vector<64x128xbf16>
    %c0_316 = arith.constant 0 : index
    %c256_317 = arith.constant 256 : index
    %c0_318 = arith.constant 0 : index
    %866 = vector.load %arg3[%c0_316, %c256_317, %c0_318] : memref<3x512x128xbf16, #tpu.memory_space<vmem>>, vector<1x128x128xbf16>
    %867 = vector.shape_cast %866 : vector<1x128x128xbf16> to vector<128x128xbf16>
    %cst_319 = arith.constant dense<0.000000e+00> : vector<64x128xf32>
    %868 = tpu.matmul %865, %867, %cst_319 {dimension_numbers = #tpu.dot_dimension_numbers<[1], [0], [0], [1], [0, 0, 1, 1], [], []>} : vector<64x128xbf16>, vector<128x128xbf16>, vector<64x128xf32> -> vector<64x128xf32>
    %869 = arith.addf %856, %868 : vector<64x128xf32>
    %c768_i32_320 = arith.constant 768 : i32
    %870 = arith.addi %c768_i32_320, %736 : i32
    %871 = arith.index_cast %870 : i32 to index
    %c0_321 = arith.constant 0 : index
    %872 = vector.load %arg7[%871, %c0_321] : memref<1024x128xbf16, #tpu.memory_space<vmem>>, vector<64x128xbf16>
    %873 = arith.extf %872 : vector<64x128xbf16> to vector<64x128xf32>
    %874 = vector.broadcast %767 : vector<64x1xf32> to vector<64x128xf32>
    %875 = arith.subf %873, %874 : vector<64x128xf32>
    %876 = vector.broadcast %829 : vector<64x1xf32> to vector<64x128xf32>
    %877 = arith.mulf %875, %876 : vector<64x128xf32>
    %878 = arith.truncf %877 : vector<64x128xf32> to vector<64x128xbf16>
    %c0_322 = arith.constant 0 : index
    %c384_323 = arith.constant 384 : index
    %c0_324 = arith.constant 0 : index
    %879 = vector.load %arg3[%c0_322, %c384_323, %c0_324] : memref<3x512x128xbf16, #tpu.memory_space<vmem>>, vector<1x128x128xbf16>
    %880 = vector.shape_cast %879 : vector<1x128x128xbf16> to vector<128x128xbf16>
    %cst_325 = arith.constant dense<0.000000e+00> : vector<64x128xf32>
    %881 = tpu.matmul %878, %880, %cst_325 {dimension_numbers = #tpu.dot_dimension_numbers<[1], [0], [0], [1], [0, 0, 1, 1], [], []>} : vector<64x128xbf16>, vector<128x128xbf16>, vector<64x128xf32> -> vector<64x128xf32>
    %882 = arith.addf %869, %881 : vector<64x128xf32>
    %883 = vector.broadcast %275 : vector<1x128xf32> to vector<64x128xf32>
    %884 = arith.addf %882, %883 : vector<64x128xf32>
    %885 = arith.truncf %884 : vector<64x128xf32> to vector<64x128xbf16>
    %886 = arith.index_cast %736 : i32 to index
    %c0_326 = arith.constant 0 : index
    %887 = vector.load %arg8[%886, %c0_326] : memref<256x128xbf16, #tpu.memory_space<vmem>>, vector<64x128xbf16>
    tpu.vector_store %arg8[%886, %c0_326], %885 {strides = array<i32>} : memref<256x128xbf16, #tpu.memory_space<vmem>>, vector<64x128xbf16>,
    %c4_i32_327 = arith.constant 4 : i32
    %888 = tpu.iota {dimensions = array<i32: 1>} : vector<1x128xi32>
    %c64_i32_328 = arith.constant 64 : i32
    %889 = vector.broadcast %c64_i32_328 : i32 to vector<1x128xi32>
    %890 = arith.cmpi slt, %888, %889 : vector<1x128xi32>
    %891 = vector.extract_strided_slice %0 {offsets = [3, 0], sizes = [1, 128], strides = [1, 1]} : vector<8x128xf32> to vector<1x128xf32>
    %c0_i32_329 = arith.constant 0 : i32
    %c64_i32_330 = arith.constant 64 : i32
    %892 = arith.muli %c0_i32_329, %c64_i32_330 : i32
    %893 = tpu.assume_multiple %892, 64 : i32
    %cst_331 = arith.constant 0.000000e+00 : f32
    %894 = vector.broadcast %cst_331 : f32 to vector<64x1xf32>
    %c0_i32_332 = arith.constant 0 : i32
    %895 = arith.addi %c0_i32_332, %893 : i32
    %896 = arith.index_cast %895 : i32 to index
    %c0_333 = arith.constant 0 : index
    %897 = vector.load %arg8[%896, %c0_333] : memref<256x128xbf16, #tpu.memory_space<vmem>>, vector<64x128xbf16>
    %898 = arith.extf %897 : vector<64x128xbf16> to vector<64x128xf32>
    %cst_334 = arith.constant dense<0.000000e+00> : vector<64xf32>
    %899 = vector.multi_reduction <add>, %898, %cst_334 [1] : vector<64x128xf32> to vector<64xf32>
    %900 = vector.shape_cast %899 : vector<64xf32> to vector<64x1xf32>
    %901 = arith.addf %894, %900 : vector<64x1xf32>
    %c64_i32_335 = arith.constant 64 : i32
    %902 = arith.addi %c64_i32_335, %893 : i32
    %903 = arith.index_cast %902 : i32 to index
    %c0_336 = arith.constant 0 : index
    %904 = vector.load %arg8[%903, %c0_336] : memref<256x128xbf16, #tpu.memory_space<vmem>>, vector<64x128xbf16>
    %905 = arith.extf %904 : vector<64x128xbf16> to vector<64x128xf32>
    %cst_337 = arith.constant dense<0.000000e+00> : vector<64xf32>
    %906 = vector.multi_reduction <add>, %905, %cst_337 [1] : vector<64x128xf32> to vector<64xf32>
    %907 = vector.shape_cast %906 : vector<64xf32> to vector<64x1xf32>
    %908 = arith.addf %901, %907 : vector<64x1xf32>
    %c128_i32_338 = arith.constant 128 : i32
    %909 = arith.addi %c128_i32_338, %893 : i32
    %910 = arith.index_cast %909 : i32 to index
    %c0_339 = arith.constant 0 : index
    %911 = vector.load %arg8[%910, %c0_339] : memref<256x128xbf16, #tpu.memory_space<vmem>>, vector<64x128xbf16>
    %912 = arith.extf %911 : vector<64x128xbf16> to vector<64x128xf32>
    %cst_340 = arith.constant dense<0.000000e+00> : vector<64xf32>
    %913 = vector.multi_reduction <add>, %912, %cst_340 [1] : vector<64x128xf32> to vector<64xf32>
    %914 = vector.shape_cast %913 : vector<64xf32> to vector<64x1xf32>
    %915 = arith.addf %908, %914 : vector<64x1xf32>
    %c192_i32 = arith.constant 192 : i32
    %916 = arith.addi %c192_i32, %893 : i32
    %917 = arith.index_cast %916 : i32 to index
    %c0_341 = arith.constant 0 : index
    %918 = vector.load %arg8[%917, %c0_341] : memref<256x128xbf16, #tpu.memory_space<vmem>>, vector<64x128xbf16>
    %919 = arith.extf %918 : vector<64x128xbf16> to vector<64x128xf32>
    %cst_342 = arith.constant dense<0.000000e+00> : vector<64xf32>
    %920 = vector.multi_reduction <add>, %919, %cst_342 [1] : vector<64x128xf32> to vector<64xf32>
    %921 = vector.shape_cast %920 : vector<64xf32> to vector<64x1xf32>
    %922 = arith.addf %915, %921 : vector<64x1xf32>
    %cst_343 = arith.constant 3.906250e-03 : f32
    %923 = vector.broadcast %cst_343 : f32 to vector<64x1xf32>
    %924 = arith.mulf %922, %923 : vector<64x1xf32>
    %cst_344 = arith.constant 0.000000e+00 : f32
    %925 = vector.broadcast %cst_344 : f32 to vector<64x1xf32>
    %c0_i32_345 = arith.constant 0 : i32
    %926 = arith.addi %c0_i32_345, %893 : i32
    %927 = arith.index_cast %926 : i32 to index
    %c0_346 = arith.constant 0 : index
    %928 = vector.load %arg8[%927, %c0_346] : memref<256x128xbf16, #tpu.memory_space<vmem>>, vector<64x128xbf16>
    %929 = arith.extf %928 : vector<64x128xbf16> to vector<64x128xf32>
    %930 = vector.broadcast %924 : vector<64x1xf32> to vector<64x128xf32>
    %931 = arith.subf %929, %930 : vector<64x128xf32>
    %cst_347 = arith.constant 0.000000e+00 : f32
    %932 = vector.shape_cast %890 : vector<1x128xi1> to vector<1x128xi1>
    %933 = vector.broadcast %932 : vector<1x128xi1> to vector<64x128xi1>
    %934 = vector.broadcast %cst_347 : f32 to vector<64x128xf32>
    %935 = arith.select %933, %931, %934 : vector<64x128xi1>, vector<64x128xf32>
    %936 = arith.mulf %935, %935 : vector<64x128xf32>
    %cst_348 = arith.constant dense<0.000000e+00> : vector<64xf32>
    %937 = vector.multi_reduction <add>, %936, %cst_348 [1] : vector<64x128xf32> to vector<64xf32>
    %938 = vector.shape_cast %937 : vector<64xf32> to vector<64x1xf32>
    %939 = arith.addf %925, %938 : vector<64x1xf32>
    %c64_i32_349 = arith.constant 64 : i32
    %940 = arith.addi %c64_i32_349, %893 : i32
    %941 = arith.index_cast %940 : i32 to index
    %c0_350 = arith.constant 0 : index
    %942 = vector.load %arg8[%941, %c0_350] : memref<256x128xbf16, #tpu.memory_space<vmem>>, vector<64x128xbf16>
    %943 = arith.extf %942 : vector<64x128xbf16> to vector<64x128xf32>
    %944 = vector.broadcast %924 : vector<64x1xf32> to vector<64x128xf32>
    %945 = arith.subf %943, %944 : vector<64x128xf32>
    %cst_351 = arith.constant 0.000000e+00 : f32
    %946 = vector.shape_cast %890 : vector<1x128xi1> to vector<1x128xi1>
    %947 = vector.broadcast %946 : vector<1x128xi1> to vector<64x128xi1>
    %948 = vector.broadcast %cst_351 : f32 to vector<64x128xf32>
    %949 = arith.select %947, %945, %948 : vector<64x128xi1>, vector<64x128xf32>
    %950 = arith.mulf %949, %949 : vector<64x128xf32>
    %cst_352 = arith.constant dense<0.000000e+00> : vector<64xf32>
    %951 = vector.multi_reduction <add>, %950, %cst_352 [1] : vector<64x128xf32> to vector<64xf32>
    %952 = vector.shape_cast %951 : vector<64xf32> to vector<64x1xf32>
    %953 = arith.addf %939, %952 : vector<64x1xf32>
    %c128_i32_353 = arith.constant 128 : i32
    %954 = arith.addi %c128_i32_353, %893 : i32
    %955 = arith.index_cast %954 : i32 to index
    %c0_354 = arith.constant 0 : index
    %956 = vector.load %arg8[%955, %c0_354] : memref<256x128xbf16, #tpu.memory_space<vmem>>, vector<64x128xbf16>
    %957 = arith.extf %956 : vector<64x128xbf16> to vector<64x128xf32>
    %958 = vector.broadcast %924 : vector<64x1xf32> to vector<64x128xf32>
    %959 = arith.subf %957, %958 : vector<64x128xf32>
    %cst_355 = arith.constant 0.000000e+00 : f32
    %960 = vector.shape_cast %890 : vector<1x128xi1> to vector<1x128xi1>
    %961 = vector.broadcast %960 : vector<1x128xi1> to vector<64x128xi1>
    %962 = vector.broadcast %cst_355 : f32 to vector<64x128xf32>
    %963 = arith.select %961, %959, %962 : vector<64x128xi1>, vector<64x128xf32>
    %964 = arith.mulf %963, %963 : vector<64x128xf32>
    %cst_356 = arith.constant dense<0.000000e+00> : vector<64xf32>
    %965 = vector.multi_reduction <add>, %964, %cst_356 [1] : vector<64x128xf32> to vector<64xf32>
    %966 = vector.shape_cast %965 : vector<64xf32> to vector<64x1xf32>
    %967 = arith.addf %953, %966 : vector<64x1xf32>
    %c192_i32_357 = arith.constant 192 : i32
    %968 = arith.addi %c192_i32_357, %893 : i32
    %969 = arith.index_cast %968 : i32 to index
    %c0_358 = arith.constant 0 : index
    %970 = vector.load %arg8[%969, %c0_358] : memref<256x128xbf16, #tpu.memory_space<vmem>>, vector<64x128xbf16>
    %971 = arith.extf %970 : vector<64x128xbf16> to vector<64x128xf32>
    %972 = vector.broadcast %924 : vector<64x1xf32> to vector<64x128xf32>
    %973 = arith.subf %971, %972 : vector<64x128xf32>
    %cst_359 = arith.constant 0.000000e+00 : f32
    %974 = vector.shape_cast %890 : vector<1x128xi1> to vector<1x128xi1>
    %975 = vector.broadcast %974 : vector<1x128xi1> to vector<64x128xi1>
    %976 = vector.broadcast %cst_359 : f32 to vector<64x128xf32>
    %977 = arith.select %975, %973, %976 : vector<64x128xi1>, vector<64x128xf32>
    %978 = arith.mulf %977, %977 : vector<64x128xf32>
    %cst_360 = arith.constant dense<0.000000e+00> : vector<64xf32>
    %979 = vector.multi_reduction <add>, %978, %cst_360 [1] : vector<64x128xf32> to vector<64xf32>
    %980 = vector.shape_cast %979 : vector<64xf32> to vector<64x1xf32>
    %981 = arith.addf %967, %980 : vector<64x1xf32>
    %cst_361 = arith.constant 3.906250e-03 : f32
    %982 = vector.broadcast %cst_361 : f32 to vector<64x1xf32>
    %983 = arith.mulf %981, %982 : vector<64x1xf32>
    %cst_362 = arith.constant 9.99999974E-6 : f32
    %984 = vector.broadcast %cst_362 : f32 to vector<64x1xf32>
    %985 = arith.addf %983, %984 : vector<64x1xf32>
    %986 = math.rsqrt %985 : vector<64x1xf32>
    %cst_363 = arith.constant 0.000000e+00 : f32
    %987 = vector.broadcast %cst_363 : f32 to vector<64x128xf32>
    %c0_i32_364 = arith.constant 0 : i32
    %988 = arith.addi %c0_i32_364, %893 : i32
    %989 = arith.index_cast %988 : i32 to index
    %c0_365 = arith.constant 0 : index
    %990 = vector.load %arg8[%989, %c0_365] : memref<256x128xbf16, #tpu.memory_space<vmem>>, vector<64x128xbf16>
    %991 = arith.extf %990 : vector<64x128xbf16> to vector<64x128xf32>
    %992 = vector.broadcast %924 : vector<64x1xf32> to vector<64x128xf32>
    %993 = arith.subf %991, %992 : vector<64x128xf32>
    %994 = vector.broadcast %986 : vector<64x1xf32> to vector<64x128xf32>
    %995 = arith.mulf %993, %994 : vector<64x128xf32>
    %996 = arith.truncf %995 : vector<64x128xf32> to vector<64x128xbf16>
    %c1 = arith.constant 1 : index
    %c0_366 = arith.constant 0 : index
    %c0_367 = arith.constant 0 : index
    %997 = vector.load %arg3[%c1, %c0_366, %c0_367] : memref<3x512x128xbf16, #tpu.memory_space<vmem>>, vector<1x128x128xbf16>
    %998 = vector.shape_cast %997 : vector<1x128x128xbf16> to vector<128x128xbf16>
    %cst_368 = arith.constant dense<0.000000e+00> : vector<64x128xf32>
    %999 = tpu.matmul %996, %998, %cst_368 {dimension_numbers = #tpu.dot_dimension_numbers<[1], [0], [0], [1], [0, 0, 1, 1], [], []>} : vector<64x128xbf16>, vector<128x128xbf16>, vector<64x128xf32> -> vector<64x128xf32>
    %1000 = arith.addf %987, %999 : vector<64x128xf32>
    %c64_i32_369 = arith.constant 64 : i32
    %1001 = arith.addi %c64_i32_369, %893 : i32
    %1002 = arith.index_cast %1001 : i32 to index
    %c0_370 = arith.constant 0 : index
    %1003 = vector.load %arg8[%1002, %c0_370] : memref<256x128xbf16, #tpu.memory_space<vmem>>, vector<64x128xbf16>
    %1004 = arith.extf %1003 : vector<64x128xbf16> to vector<64x128xf32>
    %1005 = vector.broadcast %924 : vector<64x1xf32> to vector<64x128xf32>
    %1006 = arith.subf %1004, %1005 : vector<64x128xf32>
    %1007 = vector.broadcast %986 : vector<64x1xf32> to vector<64x128xf32>
    %1008 = arith.mulf %1006, %1007 : vector<64x128xf32>
    %1009 = arith.truncf %1008 : vector<64x128xf32> to vector<64x128xbf16>
    %c1_371 = arith.constant 1 : index
    %c128_372 = arith.constant 128 : index
    %c0_373 = arith.constant 0 : index
    %1010 = vector.load %arg3[%c1_371, %c128_372, %c0_373] : memref<3x512x128xbf16, #tpu.memory_space<vmem>>, vector<1x128x128xbf16>
    %1011 = vector.shape_cast %1010 : vector<1x128x128xbf16> to vector<128x128xbf16>
    %cst_374 = arith.constant dense<0.000000e+00> : vector<64x128xf32>
    %1012 = tpu.matmul %1009, %1011, %cst_374 {dimension_numbers = #tpu.dot_dimension_numbers<[1], [0], [0], [1], [0, 0, 1, 1], [], []>} : vector<64x128xbf16>, vector<128x128xbf16>, vector<64x128xf32> -> vector<64x128xf32>
    %1013 = arith.addf %1000, %1012 : vector<64x128xf32>
    %c128_i32_375 = arith.constant 128 : i32
    %1014 = arith.addi %c128_i32_375, %893 : i32
    %1015 = arith.index_cast %1014 : i32 to index
    %c0_376 = arith.constant 0 : index
    %1016 = vector.load %arg8[%1015, %c0_376] : memref<256x128xbf16, #tpu.memory_space<vmem>>, vector<64x128xbf16>
    %1017 = arith.extf %1016 : vector<64x128xbf16> to vector<64x128xf32>
    %1018 = vector.broadcast %924 : vector<64x1xf32> to vector<64x128xf32>
    %1019 = arith.subf %1017, %1018 : vector<64x128xf32>
    %1020 = vector.broadcast %986 : vector<64x1xf32> to vector<64x128xf32>
    %1021 = arith.mulf %1019, %1020 : vector<64x128xf32>
    %1022 = arith.truncf %1021 : vector<64x128xf32> to vector<64x128xbf16>
    %c1_377 = arith.constant 1 : index
    %c256_378 = arith.constant 256 : index
    %c0_379 = arith.constant 0 : index
    %1023 = vector.load %arg3[%c1_377, %c256_378, %c0_379] : memref<3x512x128xbf16, #tpu.memory_space<vmem>>, vector<1x128x128xbf16>
    %1024 = vector.shape_cast %1023 : vector<1x128x128xbf16> to vector<128x128xbf16>
    %cst_380 = arith.constant dense<0.000000e+00> : vector<64x128xf32>
    %1025 = tpu.matmul %1022, %1024, %cst_380 {dimension_numbers = #tpu.dot_dimension_numbers<[1], [0], [0], [1], [0, 0, 1, 1], [], []>} : vector<64x128xbf16>, vector<128x128xbf16>, vector<64x128xf32> -> vector<64x128xf32>
    %1026 = arith.addf %1013, %1025 : vector<64x128xf32>
    %c192_i32_381 = arith.constant 192 : i32
    %1027 = arith.addi %c192_i32_381, %893 : i32
    %1028 = arith.index_cast %1027 : i32 to index
    %c0_382 = arith.constant 0 : index
    %1029 = vector.load %arg8[%1028, %c0_382] : memref<256x128xbf16, #tpu.memory_space<vmem>>, vector<64x128xbf16>
    %1030 = arith.extf %1029 : vector<64x128xbf16> to vector<64x128xf32>
    %1031 = vector.broadcast %924 : vector<64x1xf32> to vector<64x128xf32>
    %1032 = arith.subf %1030, %1031 : vector<64x128xf32>
    %1033 = vector.broadcast %986 : vector<64x1xf32> to vector<64x128xf32>
    %1034 = arith.mulf %1032, %1033 : vector<64x128xf32>
    %1035 = arith.truncf %1034 : vector<64x128xf32> to vector<64x128xbf16>
    %c1_383 = arith.constant 1 : index
    %c384_384 = arith.constant 384 : index
    %c0_385 = arith.constant 0 : index
    %1036 = vector.load %arg3[%c1_383, %c384_384, %c0_385] : memref<3x512x128xbf16, #tpu.memory_space<vmem>>, vector<1x128x128xbf16>
    %1037 = vector.shape_cast %1036 : vector<1x128x128xbf16> to vector<128x128xbf16>
    %cst_386 = arith.constant dense<0.000000e+00> : vector<64x128xf32>
    %1038 = tpu.matmul %1035, %1037, %cst_386 {dimension_numbers = #tpu.dot_dimension_numbers<[1], [0], [0], [1], [0, 0, 1, 1], [], []>} : vector<64x128xbf16>, vector<128x128xbf16>, vector<64x128xf32> -> vector<64x128xf32>
    %1039 = arith.addf %1026, %1038 : vector<64x128xf32>
    %1040 = vector.broadcast %891 : vector<1x128xf32> to vector<64x128xf32>
    %1041 = arith.addf %1039, %1040 : vector<64x128xf32>
    %1042 = arith.truncf %1041 : vector<64x128xf32> to vector<64x128xbf16>
    %1043 = arith.index_cast %893 : i32 to index
    %c0_387 = arith.constant 0 : index
    %1044 = vector.load %arg9[%1043, %c0_387] : memref<64x128xbf16, #tpu.memory_space<vmem>>, vector<64x128xbf16>
    tpu.vector_store %arg9[%1043, %c0_387], %1042 {strides = array<i32>} : memref<64x128xbf16, #tpu.memory_space<vmem>>, vector<64x128xbf16>,
    %c1_i32_388 = arith.constant 1 : i32
    %1045 = tpu.iota {dimensions = array<i32: 1>} : vector<1x128xi32>
    %c96_i32 = arith.constant 96 : i32
    %1046 = vector.broadcast %c96_i32 : i32 to vector<1x128xi32>
    %1047 = arith.cmpi slt, %1045, %1046 : vector<1x128xi32>
    %1048 = vector.extract_strided_slice %0 {offsets = [4, 0], sizes = [1, 128], strides = [1, 1]} : vector<8x128xf32> to vector<1x128xf32>
    %c0_i32_389 = arith.constant 0 : i32
    %c16_i32 = arith.constant 16 : i32
    %1049 = arith.muli %c0_i32_389, %c16_i32 : i32
    %1050 = tpu.assume_multiple %1049, 16 : i32
    %cst_390 = arith.constant 0.000000e+00 : f32
    %1051 = vector.broadcast %cst_390 : f32 to vector<16x1xf32>
    %c0_i32_391 = arith.constant 0 : i32
    %1052 = arith.addi %c0_i32_391, %1050 : i32
    %1053 = arith.index_cast %1052 : i32 to index
    %c0_392 = arith.constant 0 : index
    %1054 = vector.load %arg9[%1053, %c0_392] : memref<64x128xbf16, #tpu.memory_space<vmem>>, vector<16x128xbf16>
    %1055 = arith.extf %1054 : vector<16x128xbf16> to vector<16x128xf32>
    %cst_393 = arith.constant dense<0.000000e+00> : vector<16xf32>
    %1056 = vector.multi_reduction <add>, %1055, %cst_393 [1] : vector<16x128xf32> to vector<16xf32>
    %1057 = vector.shape_cast %1056 : vector<16xf32> to vector<16x1xf32>
    %1058 = arith.addf %1051, %1057 : vector<16x1xf32>
    %c16_i32_394 = arith.constant 16 : i32
    %1059 = arith.addi %c16_i32_394, %1050 : i32
    %1060 = arith.index_cast %1059 : i32 to index
    %c0_395 = arith.constant 0 : index
    %1061 = vector.load %arg9[%1060, %c0_395] : memref<64x128xbf16, #tpu.memory_space<vmem>>, vector<16x128xbf16>
    %1062 = arith.extf %1061 : vector<16x128xbf16> to vector<16x128xf32>
    %cst_396 = arith.constant dense<0.000000e+00> : vector<16xf32>
    %1063 = vector.multi_reduction <add>, %1062, %cst_396 [1] : vector<16x128xf32> to vector<16xf32>
    %1064 = vector.shape_cast %1063 : vector<16xf32> to vector<16x1xf32>
    %1065 = arith.addf %1058, %1064 : vector<16x1xf32>
    %c32_i32_397 = arith.constant 32 : i32
    %1066 = arith.addi %c32_i32_397, %1050 : i32
    %1067 = arith.index_cast %1066 : i32 to index
    %c0_398 = arith.constant 0 : index
    %1068 = vector.load %arg9[%1067, %c0_398] : memref<64x128xbf16, #tpu.memory_space<vmem>>, vector<16x128xbf16>
    %1069 = arith.extf %1068 : vector<16x128xbf16> to vector<16x128xf32>
    %cst_399 = arith.constant dense<0.000000e+00> : vector<16xf32>
    %1070 = vector.multi_reduction <add>, %1069, %cst_399 [1] : vector<16x128xf32> to vector<16xf32>
    %1071 = vector.shape_cast %1070 : vector<16xf32> to vector<16x1xf32>
    %1072 = arith.addf %1065, %1071 : vector<16x1xf32>
    %c48_i32 = arith.constant 48 : i32
    %1073 = arith.addi %c48_i32, %1050 : i32
    %1074 = arith.index_cast %1073 : i32 to index
    %c0_400 = arith.constant 0 : index
    %1075 = vector.load %arg9[%1074, %c0_400] : memref<64x128xbf16, #tpu.memory_space<vmem>>, vector<16x128xbf16>
    %1076 = arith.extf %1075 : vector<16x128xbf16> to vector<16x128xf32>
    %cst_401 = arith.constant dense<0.000000e+00> : vector<16xf32>
    %1077 = vector.multi_reduction <add>, %1076, %cst_401 [1] : vector<16x128xf32> to vector<16xf32>
    %1078 = vector.shape_cast %1077 : vector<16xf32> to vector<16x1xf32>
    %1079 = arith.addf %1072, %1078 : vector<16x1xf32>
    %cst_402 = arith.constant 0.00260416674 : f32
    %1080 = vector.broadcast %cst_402 : f32 to vector<16x1xf32>
    %1081 = arith.mulf %1079, %1080 : vector<16x1xf32>
    %cst_403 = arith.constant 0.000000e+00 : f32
    %1082 = vector.broadcast %cst_403 : f32 to vector<16x1xf32>
    %c0_i32_404 = arith.constant 0 : i32
    %1083 = arith.addi %c0_i32_404, %1050 : i32
    %1084 = arith.index_cast %1083 : i32 to index
    %c0_405 = arith.constant 0 : index
    %1085 = vector.load %arg9[%1084, %c0_405] : memref<64x128xbf16, #tpu.memory_space<vmem>>, vector<16x128xbf16>
    %1086 = arith.extf %1085 : vector<16x128xbf16> to vector<16x128xf32>
    %1087 = vector.broadcast %1081 : vector<16x1xf32> to vector<16x128xf32>
    %1088 = arith.subf %1086, %1087 : vector<16x128xf32>
    %cst_406 = arith.constant 0.000000e+00 : f32
    %1089 = vector.shape_cast %1047 : vector<1x128xi1> to vector<1x128xi1>
    %1090 = vector.broadcast %1089 : vector<1x128xi1> to vector<16x128xi1>
    %1091 = vector.broadcast %cst_406 : f32 to vector<16x128xf32>
    %1092 = arith.select %1090, %1088, %1091 : vector<16x128xi1>, vector<16x128xf32>
    %1093 = arith.mulf %1092, %1092 : vector<16x128xf32>
    %cst_407 = arith.constant dense<0.000000e+00> : vector<16xf32>
    %1094 = vector.multi_reduction <add>, %1093, %cst_407 [1] : vector<16x128xf32> to vector<16xf32>
    %1095 = vector.shape_cast %1094 : vector<16xf32> to vector<16x1xf32>
    %1096 = arith.addf %1082, %1095 : vector<16x1xf32>
    %c16_i32_408 = arith.constant 16 : i32
    %1097 = arith.addi %c16_i32_408, %1050 : i32
    %1098 = arith.index_cast %1097 : i32 to index
    %c0_409 = arith.constant 0 : index
    %1099 = vector.load %arg9[%1098, %c0_409] : memref<64x128xbf16, #tpu.memory_space<vmem>>, vector<16x128xbf16>
    %1100 = arith.extf %1099 : vector<16x128xbf16> to vector<16x128xf32>
    %1101 = vector.broadcast %1081 : vector<16x1xf32> to vector<16x128xf32>
    %1102 = arith.subf %1100, %1101 : vector<16x128xf32>
    %cst_410 = arith.constant 0.000000e+00 : f32
    %1103 = vector.shape_cast %1047 : vector<1x128xi1> to vector<1x128xi1>
    %1104 = vector.broadcast %1103 : vector<1x128xi1> to vector<16x128xi1>
    %1105 = vector.broadcast %cst_410 : f32 to vector<16x128xf32>
    %1106 = arith.select %1104, %1102, %1105 : vector<16x128xi1>, vector<16x128xf32>
    %1107 = arith.mulf %1106, %1106 : vector<16x128xf32>
    %cst_411 = arith.constant dense<0.000000e+00> : vector<16xf32>
    %1108 = vector.multi_reduction <add>, %1107, %cst_411 [1] : vector<16x128xf32> to vector<16xf32>
    %1109 = vector.shape_cast %1108 : vector<16xf32> to vector<16x1xf32>
    %1110 = arith.addf %1096, %1109 : vector<16x1xf32>
    %c32_i32_412 = arith.constant 32 : i32
    %1111 = arith.addi %c32_i32_412, %1050 : i32
    %1112 = arith.index_cast %1111 : i32 to index
    %c0_413 = arith.constant 0 : index
    %1113 = vector.load %arg9[%1112, %c0_413] : memref<64x128xbf16, #tpu.memory_space<vmem>>, vector<16x128xbf16>
    %1114 = arith.extf %1113 : vector<16x128xbf16> to vector<16x128xf32>
    %1115 = vector.broadcast %1081 : vector<16x1xf32> to vector<16x128xf32>
    %1116 = arith.subf %1114, %1115 : vector<16x128xf32>
    %cst_414 = arith.constant 0.000000e+00 : f32
    %1117 = vector.shape_cast %1047 : vector<1x128xi1> to vector<1x128xi1>
    %1118 = vector.broadcast %1117 : vector<1x128xi1> to vector<16x128xi1>
    %1119 = vector.broadcast %cst_414 : f32 to vector<16x128xf32>
    %1120 = arith.select %1118, %1116, %1119 : vector<16x128xi1>, vector<16x128xf32>
    %1121 = arith.mulf %1120, %1120 : vector<16x128xf32>
    %cst_415 = arith.constant dense<0.000000e+00> : vector<16xf32>
    %1122 = vector.multi_reduction <add>, %1121, %cst_415 [1] : vector<16x128xf32> to vector<16xf32>
    %1123 = vector.shape_cast %1122 : vector<16xf32> to vector<16x1xf32>
    %1124 = arith.addf %1110, %1123 : vector<16x1xf32>
    %c48_i32_416 = arith.constant 48 : i32
    %1125 = arith.addi %c48_i32_416, %1050 : i32
    %1126 = arith.index_cast %1125 : i32 to index
    %c0_417 = arith.constant 0 : index
    %1127 = vector.load %arg9[%1126, %c0_417] : memref<64x128xbf16, #tpu.memory_space<vmem>>, vector<16x128xbf16>
    %1128 = arith.extf %1127 : vector<16x128xbf16> to vector<16x128xf32>
    %1129 = vector.broadcast %1081 : vector<16x1xf32> to vector<16x128xf32>
    %1130 = arith.subf %1128, %1129 : vector<16x128xf32>
    %cst_418 = arith.constant 0.000000e+00 : f32
    %1131 = vector.shape_cast %1047 : vector<1x128xi1> to vector<1x128xi1>
    %1132 = vector.broadcast %1131 : vector<1x128xi1> to vector<16x128xi1>
    %1133 = vector.broadcast %cst_418 : f32 to vector<16x128xf32>
    %1134 = arith.select %1132, %1130, %1133 : vector<16x128xi1>, vector<16x128xf32>
    %1135 = arith.mulf %1134, %1134 : vector<16x128xf32>
    %cst_419 = arith.constant dense<0.000000e+00> : vector<16xf32>
    %1136 = vector.multi_reduction <add>, %1135, %cst_419 [1] : vector<16x128xf32> to vector<16xf32>
    %1137 = vector.shape_cast %1136 : vector<16xf32> to vector<16x1xf32>
    %1138 = arith.addf %1124, %1137 : vector<16x1xf32>
    %cst_420 = arith.constant 0.00260416674 : f32
    %1139 = vector.broadcast %cst_420 : f32 to vector<16x1xf32>
    %1140 = arith.mulf %1138, %1139 : vector<16x1xf32>
    %cst_421 = arith.constant 9.99999974E-6 : f32
    %1141 = vector.broadcast %cst_421 : f32 to vector<16x1xf32>
    %1142 = arith.addf %1140, %1141 : vector<16x1xf32>
    %1143 = math.rsqrt %1142 : vector<16x1xf32>
    %cst_422 = arith.constant 0.000000e+00 : f32
    %1144 = vector.broadcast %cst_422 : f32 to vector<16x128xf32>
    %c0_i32_423 = arith.constant 0 : i32
    %1145 = arith.addi %c0_i32_423, %1050 : i32
    %1146 = arith.index_cast %1145 : i32 to index
    %c0_424 = arith.constant 0 : index
    %1147 = vector.load %arg9[%1146, %c0_424] : memref<64x128xbf16, #tpu.memory_space<vmem>>, vector<16x128xbf16>
    %1148 = arith.extf %1147 : vector<16x128xbf16> to vector<16x128xf32>
    %1149 = vector.broadcast %1081 : vector<16x1xf32> to vector<16x128xf32>
    %1150 = arith.subf %1148, %1149 : vector<16x128xf32>
    %1151 = vector.broadcast %1143 : vector<16x1xf32> to vector<16x128xf32>
    %1152 = arith.mulf %1150, %1151 : vector<16x128xf32>
    %1153 = arith.truncf %1152 : vector<16x128xf32> to vector<16x128xbf16>
    %c2 = arith.constant 2 : index
    %c0_425 = arith.constant 0 : index
    %c0_426 = arith.constant 0 : index
    %1154 = vector.load %arg3[%c2, %c0_425, %c0_426] : memref<3x512x128xbf16, #tpu.memory_space<vmem>>, vector<1x128x128xbf16>
    %1155 = vector.shape_cast %1154 : vector<1x128x128xbf16> to vector<128x128xbf16>
    %cst_427 = arith.constant dense<0.000000e+00> : vector<16x128xf32>
    %1156 = tpu.matmul %1153, %1155, %cst_427 {dimension_numbers = #tpu.dot_dimension_numbers<[1], [0], [0], [1], [0, 0, 1, 1], [], []>} : vector<16x128xbf16>, vector<128x128xbf16>, vector<16x128xf32> -> vector<16x128xf32>
    %1157 = arith.addf %1144, %1156 : vector<16x128xf32>
    %c16_i32_428 = arith.constant 16 : i32
    %1158 = arith.addi %c16_i32_428, %1050 : i32
    %1159 = arith.index_cast %1158 : i32 to index
    %c0_429 = arith.constant 0 : index
    %1160 = vector.load %arg9[%1159, %c0_429] : memref<64x128xbf16, #tpu.memory_space<vmem>>, vector<16x128xbf16>
    %1161 = arith.extf %1160 : vector<16x128xbf16> to vector<16x128xf32>
    %1162 = vector.broadcast %1081 : vector<16x1xf32> to vector<16x128xf32>
    %1163 = arith.subf %1161, %1162 : vector<16x128xf32>
    %1164 = vector.broadcast %1143 : vector<16x1xf32> to vector<16x128xf32>
    %1165 = arith.mulf %1163, %1164 : vector<16x128xf32>
    %1166 = arith.truncf %1165 : vector<16x128xf32> to vector<16x128xbf16>
    %c2_430 = arith.constant 2 : index
    %c128_431 = arith.constant 128 : index
    %c0_432 = arith.constant 0 : index
    %1167 = vector.load %arg3[%c2_430, %c128_431, %c0_432] : memref<3x512x128xbf16, #tpu.memory_space<vmem>>, vector<1x128x128xbf16>
    %1168 = vector.shape_cast %1167 : vector<1x128x128xbf16> to vector<128x128xbf16>
    %cst_433 = arith.constant dense<0.000000e+00> : vector<16x128xf32>
    %1169 = tpu.matmul %1166, %1168, %cst_433 {dimension_numbers = #tpu.dot_dimension_numbers<[1], [0], [0], [1], [0, 0, 1, 1], [], []>} : vector<16x128xbf16>, vector<128x128xbf16>, vector<16x128xf32> -> vector<16x128xf32>
    %1170 = arith.addf %1157, %1169 : vector<16x128xf32>
    %c32_i32_434 = arith.constant 32 : i32
    %1171 = arith.addi %c32_i32_434, %1050 : i32
    %1172 = arith.index_cast %1171 : i32 to index
    %c0_435 = arith.constant 0 : index
    %1173 = vector.load %arg9[%1172, %c0_435] : memref<64x128xbf16, #tpu.memory_space<vmem>>, vector<16x128xbf16>
    %1174 = arith.extf %1173 : vector<16x128xbf16> to vector<16x128xf32>
    %1175 = vector.broadcast %1081 : vector<16x1xf32> to vector<16x128xf32>
    %1176 = arith.subf %1174, %1175 : vector<16x128xf32>
    %1177 = vector.broadcast %1143 : vector<16x1xf32> to vector<16x128xf32>
    %1178 = arith.mulf %1176, %1177 : vector<16x128xf32>
    %1179 = arith.truncf %1178 : vector<16x128xf32> to vector<16x128xbf16>
    %c2_436 = arith.constant 2 : index
    %c256_437 = arith.constant 256 : index
    %c0_438 = arith.constant 0 : index
    %1180 = vector.load %arg3[%c2_436, %c256_437, %c0_438] : memref<3x512x128xbf16, #tpu.memory_space<vmem>>, vector<1x128x128xbf16>
    %1181 = vector.shape_cast %1180 : vector<1x128x128xbf16> to vector<128x128xbf16>
    %cst_439 = arith.constant dense<0.000000e+00> : vector<16x128xf32>
    %1182 = tpu.matmul %1179, %1181, %cst_439 {dimension_numbers = #tpu.dot_dimension_numbers<[1], [0], [0], [1], [0, 0, 1, 1], [], []>} : vector<16x128xbf16>, vector<128x128xbf16>, vector<16x128xf32> -> vector<16x128xf32>
    %1183 = arith.addf %1170, %1182 : vector<16x128xf32>
    %c48_i32_440 = arith.constant 48 : i32
    %1184 = arith.addi %c48_i32_440, %1050 : i32
    %1185 = arith.index_cast %1184 : i32 to index
    %c0_441 = arith.constant 0 : index
    %1186 = vector.load %arg9[%1185, %c0_441] : memref<64x128xbf16, #tpu.memory_space<vmem>>, vector<16x128xbf16>
    %1187 = arith.extf %1186 : vector<16x128xbf16> to vector<16x128xf32>
    %1188 = vector.broadcast %1081 : vector<16x1xf32> to vector<16x128xf32>
    %1189 = arith.subf %1187, %1188 : vector<16x128xf32>
    %1190 = vector.broadcast %1143 : vector<16x1xf32> to vector<16x128xf32>
    %1191 = arith.mulf %1189, %1190 : vector<16x128xf32>
    %1192 = arith.truncf %1191 : vector<16x128xf32> to vector<16x128xbf16>
    %c2_442 = arith.constant 2 : index
    %c384_443 = arith.constant 384 : index
    %c0_444 = arith.constant 0 : index
    %1193 = vector.load %arg3[%c2_442, %c384_443, %c0_444] : memref<3x512x128xbf16, #tpu.memory_space<vmem>>, vector<1x128x128xbf16>
    %1194 = vector.shape_cast %1193 : vector<1x128x128xbf16> to vector<128x128xbf16>
    %cst_445 = arith.constant dense<0.000000e+00> : vector<16x128xf32>
    %1195 = tpu.matmul %1192, %1194, %cst_445 {dimension_numbers = #tpu.dot_dimension_numbers<[1], [0], [0], [1], [0, 0, 1, 1], [], []>} : vector<16x128xbf16>, vector<128x128xbf16>, vector<16x128xf32> -> vector<16x128xf32>
    %1196 = arith.addf %1183, %1195 : vector<16x128xf32>
    %1197 = vector.broadcast %1048 : vector<1x128xf32> to vector<16x128xf32>
    %1198 = arith.addf %1196, %1197 : vector<16x128xf32>
    %1199 = arith.index_cast %1050 : i32 to index
    %c0_446 = arith.constant 0 : index
    %1200 = vector.load %arg10[%1199, %c0_446] : memref<16x128xf32, #tpu.memory_space<vmem>>, vector<16x128xf32>
    tpu.vector_store %arg10[%1199, %c0_446], %1198 {strides = array<i32>} : memref<16x128xf32, #tpu.memory_space<vmem>>, vector<16x128xf32>,
    %c1_i32_447 = arith.constant 1 : i32
    %c0_448 = arith.constant 0 : index
    %c0_449 = arith.constant 0 : index
    %1201 = vector.load %arg10[%c0_448, %c0_449] : memref<16x128xf32, #tpu.memory_space<vmem>>, vector<16x128xf32>
    %1202 = arith.truncf %1201 : vector<16x128xf32> to vector<16x128xbf16>
    %c0_450 = arith.constant 0 : index
    %c0_451 = arith.constant 0 : index
    %1203 = vector.load %arg4[%c0_450, %c0_451] : memref<128x128xbf16, #tpu.memory_space<vmem>>, vector<128x128xbf16>
    %cst_452 = arith.constant dense<0.000000e+00> : vector<16x128xf32>
    %1204 = tpu.matmul %1202, %1203, %cst_452 {dimension_numbers = #tpu.dot_dimension_numbers<[1], [0], [0], [1], [0, 0, 1, 1], [], []>} : vector<16x128xbf16>, vector<128x128xbf16>, vector<16x128xf32> -> vector<16x128xf32>
    %1205 = vector.broadcast %3 : vector<1x128xf32> to vector<16x128xf32>
    %1206 = arith.addf %1204, %1205 : vector<16x128xf32>
    %c0_453 = arith.constant 0 : index
    %c0_454 = arith.constant 0 : index
    %c0_455 = arith.constant 0 : index
    %1207 = vector.load %arg6[%c0_453, %c0_454, %c0_455] : memref<1x16x128xf32, #tpu.memory_space<vmem>>, vector<1x16x128xf32>
    %1208 = vector.shape_cast %1207 : vector<1x16x128xf32> to vector<16x128xf32>
    %1209 = vector.shape_cast %1206 : vector<16x128xf32> to vector<1x16x128xf32>
    tpu.vector_store %arg6[%c0_453, %c0_454, %c0_455], %1209 {strides = array<i32>} : memref<1x16x128xf32, #tpu.memory_space<vmem>>, vector<1x16x128xf32>,
    return
  }
  func.func @transform_0(%arg0: i32) -> (i32, i32, i32) {
    %c0_i32 = arith.constant 0 : i32
    %c0_i32_0 = arith.constant 0 : i32
    %c0_i32_1 = arith.constant 0 : i32
    return %arg0, %c0_i32, %c0_i32_0 : i32, i32, i32
  }
  func.func @transform_1(%arg0: i32) -> (i32, i32) {
    %c0_i32 = arith.constant 0 : i32
    %c0_i32_0 = arith.constant 0 : i32
    %c0_i32_1 = arith.constant 0 : i32
    return %c0_i32, %c0_i32_0 : i32, i32
  }
  func.func @transform_2(%arg0: i32) -> (i32, i32, i32) {
    %c0_i32 = arith.constant 0 : i32
    %c0_i32_0 = arith.constant 0 : i32
    %c0_i32_1 = arith.constant 0 : i32
    %c0_i32_2 = arith.constant 0 : i32
    return %c0_i32, %c0_i32_0, %c0_i32_1 : i32, i32, i32
  }
  func.func @transform_3(%arg0: i32) -> (i32, i32) {
    %c0_i32 = arith.constant 0 : i32
    %c0_i32_0 = arith.constant 0 : i32
    %c0_i32_1 = arith.constant 0 : i32
    return %c0_i32, %c0_i32_0 : i32, i32
  }
  func.func @transform_4(%arg0: i32) -> (i32, i32) {
    %c0_i32 = arith.constant 0 : i32
    %c0_i32_0 = arith.constant 0 : i32
    %c0_i32_1 = arith.constant 0 : i32
    return %c0_i32, %c0_i32_0 : i32, i32
  }
  func.func @transform_5(%arg0: i32) -> (i32, i32, i32) {
    %c0_i32 = arith.constant 0 : i32
    %c0_i32_0 = arith.constant 0 : i32
    %c0_i32_1 = arith.constant 0 : i32
    return %arg0, %c0_i32, %c0_i32_0 : i32, i32, i32
  }
}

</mosaic_0001>

<llo_original>
// kernel: mamba_encoder_forward.1
$region0: #{mamba_encoder_forward.1}
  #allocation0 [shape = 'u32[]', space=smem, size = 0x4, offset = 0x4, fixed_abs, tag = 'smem constant byte address 0x4 - core index']
  #allocation1 [shape = 'u32[144,128]{1,0:T(1,128)}', space=vmem, size = 0x12000, scoped, tag = 'internal scratch']
  #allocation2 [shape = 'bf16[1024,128]{1,0:T(16,128)(2,1)}', space=vmem, size = 0x40000, scoped, tag = 'scratch operand']
  #allocation3 [shape = 'bf16[256,128]{1,0:T(16,128)(2,1)}', space=vmem, size = 0x10000, scoped, tag = 'scratch operand']
  #allocation4 [shape = 'bf16[64,128]{1,0:T(16,128)(2,1)}', space=vmem, size = 0x4000, scoped, tag = 'scratch operand']
  #allocation5 [shape = 'f32[16,128]{1,0:T(8,128)}', space=vmem, size = 0x2000, scoped, tag = 'scratch operand']
  %s0 = inlined_call_operand.vmem [shape: bf16[2,1024,128], index: 0, kind: input, shape index: {}]
  %s1 = inlined_call_operand.vmem [shape: bf16[128,128], index: 1, kind: input, shape index: {}]
  %s2 = inlined_call_operand.vmem [shape: bf16[3,512,128], index: 2, kind: input, shape index: {}]
  %s3 = inlined_call_operand.vmem [shape: bf16[128,128], index: 3, kind: input, shape index: {}]
  %s4 = inlined_call_operand.vmem [shape: f32[8,128], index: 4, kind: input, shape index: {}]
  %s5 = inlined_call_operand.hbm [shape: f32[2,16,128], index: 5, kind: output, shape index: {}]
  %s6 = sld [smem:[#allocation0]]
  $region53: #{mamba_encoder_forward.1} parent=0
    _
  %s8 = ssub.s32 1, %s6
  %s9 = scalar_select 0, %s8, %s6
  $region1: #{mamba_encoder_forward.1} parent=0
    #allocation6 [shape = 'u8[16384]{0}', space=vmem, size = 0x4000, scoped, tag = 'output window, operand 0']
    #allocation7 [shape = 's32[2]{0}', space=sflag, size = 0x8, scoped, tag = 'scoped memory for mamba_encoder_forward.1']
    %10 = vsyncpa [#allocation7], 0
    %s11 = scalar_lea.sflag [#allocation7], 1
    %12 = vsyncpa %s11, 0
    loop: start=0, step=1, limit=4
    $region2: #{mamba_encoder_forward.1} parent=1 // loop_pre_header
      _
    $region3: #{mamba_encoder_forward.1} parent=1 // loop_header
      %s14 = sphi 0, %s18
      %p15 = scmp.ge.s32.totalorder %s14, 4
      %s24 = sphi 0, %s26
      %s27 = sphi 0, %s24
      %s28 = sphi 0, %s27
      %s44 = sphi 0, %s28
      %s48 = sphi 0, %s48
      %s50 = sphi 0, %s48
      %s51 = sphi 0, %s50
      %s65 = sphi 0, %s51
      %s69 = sphi 0, %s69
      %s71 = sphi 0, %s69
      %s72 = sphi 0, %s71
      %s86 = sphi 0, %s72
      %s90 = sphi 0, %s90
      %s92 = sphi 0, %s90
      %s93 = sphi 0, %s92
      %s107 = sphi 0, %s93
      %s111 = sphi 0, %s111
      %s113 = sphi 0, %s111
      %s114 = sphi 0, %s113
      %s128 = sphi 0, %s114
      %s134 = sphi 0, %s136
      %s137 = sphi 0, %s134
      %s138 = sphi 0, %s137
      %s154 = sphi 0, %s138
    $region4: #{mamba_encoder_forward.1} parent=1 // loop_header_branch
      %17 = sbr.rel (%p15) target = $region8
    $region5: #{mamba_encoder_forward.1} parent=1 // loop_body
      %s19 = ssub.s32 %s14, 1
      %s20 = ssub.s32 %s14, 2
      %s21 = sadd.s32 %s14, 1
      %s22 = ssub.s32 %s14, %s21
      %p23 = scmp.eq.s32.totalorder %s22, 0
      %s25 = sadd.s32 %s24, 1
      %s26 = scalar_select %p23, %s24, %s25
      %p29 = pneg %p23
      %p30 = scmp.eq.s32.totalorder %s14, 1
      %p31 = por %p29, %p30
      %p32 = scmp.ne.s32.totalorder %s24, %s27
      %p33 = scmp.eq.s32.totalorder %s14, 0
      %p34 = por %p32, %p33
      %p35 = scmp.ne.s32.totalorder %s24, %s27
      %p36 = scmp.eq.s32.totalorder %s19, 1
      %p37 = por %p35, %p36
      %p38 = scmp.ne.s32.totalorder %s27, %s28
      %p39 = scmp.eq.s32.totalorder %s19, 0
      %p40 = por %p38, %p39
      %p41 = scmp.ne.s32.totalorder %s27, %s28
      %p42 = scmp.eq.s32.totalorder %s20, 1
      %p43 = por %p41, %p42
      %p45 = scmp.ne.s32.totalorder %s28, %s44
      %p46 = scmp.eq.s32.totalorder %s20, 0
      %p47 = por %p45, %p46
      %s49 = sadd.s32 %s48, 1
      %p52 = scmp.eq.s32.totalorder %s14, 1
      %p53 = scmp.ne.s32.totalorder %s48, %s50
      %p54 = scmp.eq.s32.totalorder %s14, 0
      %p55 = por %p53, %p54
      %p56 = scmp.ne.s32.totalorder %s48, %s50
      %p57 = scmp.eq.s32.totalorder %s19, 1
      %p58 = por %p56, %p57
      %p59 = scmp.ne.s32.totalorder %s50, %s51
      %p60 = scmp.eq.s32.totalorder %s19, 0
      %p61 = por %p59, %p60
      %p62 = scmp.ne.s32.totalorder %s50, %s51
      %p63 = scmp.eq.s32.totalorder %s20, 1
      %p64 = por %p62, %p63
      %p66 = scmp.ne.s32.totalorder %s51, %s65
      %p67 = scmp.eq.s32.totalorder %s20, 0
      %p68 = por %p66, %p67
      %s70 = sadd.s32 %s69, 1
      %p73 = scmp.eq.s32.totalorder %s14, 1
      %p74 = scmp.ne.s32.totalorder %s69, %s71
      %p75 = scmp.eq.s32.totalorder %s14, 0
      %p76 = por %p74, %p75
      %p77 = scmp.ne.s32.totalorder %s69, %s71
      %p78 = scmp.eq.s32.totalorder %s19, 1
      %p79 = por %p77, %p78
      %p80 = scmp.ne.s32.totalorder %s71, %s72
      %p81 = scmp.eq.s32.totalorder %s19, 0
      %p82 = por %p80, %p81
      %p83 = scmp.ne.s32.totalorder %s71, %s72
      %p84 = scmp.eq.s32.totalorder %s20, 1
      %p85 = por %p83, %p84
      %p87 = scmp.ne.s32.totalorder %s72, %s86
      %p88 = scmp.eq.s32.totalorder %s20, 0
      %p89 = por %p87, %p88
      %s91 = sadd.s32 %s90, 1
      %p94 = scmp.eq.s32.totalorder %s14, 1
      %p95 = scmp.ne.s32.totalorder %s90, %s92
      %p96 = scmp.eq.s32.totalorder %s14, 0
      %p97 = por %p95, %p96
      %p98 = scmp.ne.s32.totalorder %s90, %s92
      %p99 = scmp.eq.s32.totalorder %s19, 1
      %p100 = por %p98, %p99
      %p101 = scmp.ne.s32.totalorder %s92, %s93
      %p102 = scmp.eq.s32.totalorder %s19, 0
      %p103 = por %p101, %p102
      %p104 = scmp.ne.s32.totalorder %s92, %s93
      %p105 = scmp.eq.s32.totalorder %s20, 1
      %p106 = por %p104, %p105
      %p108 = scmp.ne.s32.totalorder %s93, %s107
      %p109 = scmp.eq.s32.totalorder %s20, 0
      %p110 = por %p108, %p109
      %s112 = sadd.s32 %s111, 1
      %p115 = scmp.eq.s32.totalorder %s14, 1
      %p116 = scmp.ne.s32.totalorder %s111, %s113
      %p117 = scmp.eq.s32.totalorder %s14, 0
      %p118 = por %p116, %p117
      %p119 = scmp.ne.s32.totalorder %s111, %s113
      %p120 = scmp.eq.s32.totalorder %s19, 1
      %p121 = por %p119, %p120
      %p122 = scmp.ne.s32.totalorder %s113, %s114
      %p123 = scmp.eq.s32.totalorder %s19, 0
      %p124 = por %p122, %p123
      %p125 = scmp.ne.s32.totalorder %s113, %s114
      %p126 = scmp.eq.s32.totalorder %s20, 1
      %p127 = por %p125, %p126
      %p129 = scmp.ne.s32.totalorder %s114, %s128
      %p130 = scmp.eq.s32.totalorder %s20, 0
      %p131 = por %p129, %p130
      %s132 = ssub.s32 %s14, %s21
      %p133 = scmp.eq.s32.totalorder %s132, 0
      %s135 = sadd.s32 %s134, 1
      %s136 = scalar_select %p133, %s134, %s135
      %p139 = pneg %p133
      %p140 = scmp.eq.s32.totalorder %s14, 1
      %p141 = por %p139, %p140
      %p142 = scmp.ne.s32.totalorder %s134, %s137
      %p143 = scmp.eq.s32.totalorder %s14, 0
      %p144 = por %p142, %p143
      %p145 = scmp.ne.s32.totalorder %s134, %s137
      %p146 = scmp.eq.s32.totalorder %s19, 1
      %p147 = por %p145, %p146
      %p148 = scmp.ne.s32.totalorder %s137, %s138
      %p149 = scmp.eq.s32.totalorder %s19, 0
      %p150 = por %p148, %p149
      %p151 = scmp.ne.s32.totalorder %s137, %s138
      %p152 = scmp.eq.s32.totalorder %s20, 1
      %p153 = por %p151, %p152
      %p155 = scmp.ne.s32.totalorder %s138, %s154
      %p156 = scmp.eq.s32.totalorder %s20, 0
      %p157 = por %p155, %p156
      %p158 = scmp.le.s32.totalorder 1, %s14
      %p159 = scmp.lt.s32.totalorder %s14, 3
      %p160 = pnand %p158, %p159
      %p161 = pneg %p160
      // Predicated region
      $region9: #{mamba_encoder_forward.1} parent=5 // pred_check
        _
      $region10: #{mamba_encoder_forward.1} parent=5 // pred_check_branch
        %163 = sbr.rel (%p160) target = $region12
      $region11: #{mamba_encoder_forward.1} parent=5 // pred_region
        %s164 = ssub.s32 %s14, 1
        // Predicated region
        $region13: #{mamba_encoder_forward.1} parent=11 // pred_check
          %p165 = pneg %p61
        $region14: #{mamba_encoder_forward.1} parent=11 // pred_check_branch
          %167 = sbr.rel (%p165) target = $region16
        $region15: #{mamba_encoder_forward.1} parent=11 // pred_region
          _
        $region16: #{mamba_encoder_forward.1} parent=11 // pred_fallthru
          _
        // Predicated region
        $region17: #{mamba_encoder_forward.1} parent=11 // pred_check
          %p168 = pneg %p82
        $region18: #{mamba_encoder_forward.1} parent=11 // pred_check_branch
          %170 = sbr.rel (%p168) target = $region20
        $region19: #{mamba_encoder_forward.1} parent=11 // pred_region
          _
        $region20: #{mamba_encoder_forward.1} parent=11 // pred_fallthru
          _
        // Predicated region
        $region21: #{mamba_encoder_forward.1} parent=11 // pred_check
          %p171 = pneg %p103
        $region22: #{mamba_encoder_forward.1} parent=11 // pred_check_branch
          %173 = sbr.rel (%p171) target = $region24
        $region23: #{mamba_encoder_forward.1} parent=11 // pred_region
          _
        $region24: #{mamba_encoder_forward.1} parent=11 // pred_fallthru
          _
        // Predicated region
        $region25: #{mamba_encoder_forward.1} parent=11 // pred_check
          %p174 = pneg %p124
        $region26: #{mamba_encoder_forward.1} parent=11 // pred_check_branch
          %176 = sbr.rel (%p174) target = $region28
        $region27: #{mamba_encoder_forward.1} parent=11 // pred_region
          _
        $region28: #{mamba_encoder_forward.1} parent=11 // pred_fallthru
          _
      $region12: #{mamba_encoder_forward.1} parent=5 // pred_fallthru
        _
      %p177 = scmp.lt.s32.totalorder %s14, 2
      // Predicated region
      $region29: #{mamba_encoder_forward.1} parent=5 // pred_check
        %p178 = pneg %p177
      $region30: #{mamba_encoder_forward.1} parent=5 // pred_check_branch
        %180 = sbr.rel (%p178) target = $region32
      $region31: #{mamba_encoder_forward.1} parent=5 // pred_region
        // Predicated region
        $region33: #{mamba_encoder_forward.1} parent=31 // pred_check
          %p181 = pneg %p34
        $region34: #{mamba_encoder_forward.1} parent=31 // pred_check_branch
          %183 = sbr.rel (%p181) target = $region36
        $region35: #{mamba_encoder_forward.1} parent=31 // pred_region
          %p184 = scmp.lt.s32.totalorder %s14, 1
          %s185 = scalar_select %p184, %s14, 1
          %s186 = smul.addr %s185, 128
          %s187 = smul.addr %s186, 4
          %s188 = scalar_lea.vmem %s0, %s187
        $region36: #{mamba_encoder_forward.1} parent=31 // pred_fallthru
          _
      $region32: #{mamba_encoder_forward.1} parent=5 // pred_fallthru
        _
      %p189 = scmp.le.s32.totalorder 1, %s14
      %p190 = scmp.lt.s32.totalorder %s14, 3
      %p191 = pnand %p189, %p190
      %p192 = pneg %p191
      // Predicated region
      $region37: #{mamba_encoder_forward.1} parent=5 // pred_check
        _
      $region38: #{mamba_encoder_forward.1} parent=5 // pred_check_branch
        %194 = sbr.rel (%p191) target = $region40
      $region39: #{mamba_encoder_forward.1} parent=5 // pred_region
        %s195 = ssub.s32 %s14, 1
        %p196 = scmp.lt.s32.totalorder %s19, 1
        %s197 = scalar_select %p196, %s19, 1
        %s198 = smul.addr %s197, 128
        %s199 = smul.addr %s198, 4
        %s200 = scalar_lea.vmem %s0, %s199
        %p201 = pneg %p40
        %p202 = pneg %p37
        %p203 = pneg %p61
        %p204 = pneg %p58
        %p205 = pneg %p82
        %p206 = pneg %p79
        %p207 = pneg %p103
        %p208 = pneg %p100
        %p209 = pneg %p124
        %p210 = pneg %p121
        %p211 = pneg %p150
        %p212 = pneg %p147
        %s213 = sand.u32 %s137, 1
        %s214 = scalar_lea.sflag [#allocation7], %s213
        %s215 = sand.u32 %s137, 1
        %s216 = smul.addr %s215, 16
        %s217 = scalar_lea.vmem [#allocation6], %s216
        %p218 = scmp.lt.s32.totalorder %s19, 1
        %s219 = scalar_select %p218, %s19, 1
        %s220 = smul.addr %s219, 128
        %s221 = smul.addr %s220, 4
        %s222 = scalar_lea.vmem %s0, %s221
        %v224 = vld [vmem:[%s4] sm:$0xff]
        %v225 = vld [vmem:[%s1] sm:$0xf]
        %v226 = vld [vmem:[%s1 + $0x4] sm:$0xf]
        %v227 = vld [vmem:[%s1 + $0x8] sm:$0xf]
        %v228 = vld [vmem:[%s1 + $0xc] sm:$0xf]
        %v229 = vld [vmem:[%s1 + $0x10] sm:$0xf]
        %v230 = vld [vmem:[%s1 + $0x14] sm:$0xf]
        %v231 = vld [vmem:[%s1 + $0x18] sm:$0xf]
        %v232 = vld [vmem:[%s1 + $0x1c] sm:$0xf]
        %v233 = vld [vmem:[%s1 + $0x20] sm:$0xf]
        %v234 = vld [vmem:[%s1 + $0x24] sm:$0xf]
        %v235 = vld [vmem:[%s1 + $0x28] sm:$0xf]
        %v236 = vld [vmem:[%s1 + $0x2c] sm:$0xf]
        %v237 = vld [vmem:[%s1 + $0x30] sm:$0xf]
        %v238 = vld [vmem:[%s1 + $0x34] sm:$0xf]
        %v239 = vld [vmem:[%s1 + $0x38] sm:$0xf]
        %v240 = vld [vmem:[%s1 + $0x3c] sm:$0xf]
        %v241 = vlaneseq
        %v242 = vand.u32 %v241, 127
        %vm243 = vcmp.lt.s32.totalorder %v242, 32
        %v244 = vld [vmem:[%s222] sm:$0xf]
        %v245 = vld [vmem:[%s222 + $0x4] sm:$0xf]
        %v246 = vld [vmem:[%s222 + $0x8] sm:$0xf]
        %v247 = vld [vmem:[%s222 + $0xc] sm:$0xf]
        %v248 = vld [vmem:[%s222 + $0x10] sm:$0xf]
        %v249 = vld [vmem:[%s222 + $0x14] sm:$0xf]
        %v250 = vld [vmem:[%s222 + $0x18] sm:$0xf]
        %v251 = vld [vmem:[%s222 + $0x1c] sm:$0xf]
        %v252 = vld [vmem:[%s222 + $0x20] sm:$0xf]
        %v253 = vld [vmem:[%s222 + $0x24] sm:$0xf]
        %v254 = vld [vmem:[%s222 + $0x28] sm:$0xf]
        %v255 = vld [vmem:[%s222 + $0x2c] sm:$0xf]
        %v256 = vld [vmem:[%s222 + $0x30] sm:$0xf]
        %v257 = vld [vmem:[%s222 + $0x34] sm:$0xf]
        %v258 = vld [vmem:[%s222 + $0x38] sm:$0xf]
        %v259 = vld [vmem:[%s222 + $0x3c] sm:$0xf]
        %v276 = vunpack.c.l.b16 %v244
        %v277 = vunpack.c.l.b16 %v245
        %v278 = vunpack.c.l.b16 %v246
        %v279 = vunpack.c.l.b16 %v247
        %v280 = vunpack.c.l.b16 %v248
        %v281 = vunpack.c.l.b16 %v249
        %v282 = vunpack.c.l.b16 %v250
        %v283 = vunpack.c.l.b16 %v251
        %v284 = vunpack.c.l.b16 %v252
        %v285 = vunpack.c.l.b16 %v253
        %v286 = vunpack.c.l.b16 %v254
        %v287 = vunpack.c.l.b16 %v255
        %v288 = vunpack.c.l.b16 %v256
        %v289 = vunpack.c.l.b16 %v257
        %v290 = vunpack.c.l.b16 %v258
        %v291 = vunpack.c.l.b16 %v259
        %v292 = vpack.c.b16 %v277, %v276
        %v293 = vpack.c.b16 %v279, %v278
        %v294 = vpack.c.b16 %v281, %v280
        %v295 = vpack.c.b16 %v283, %v282
        %v296 = vpack.c.b16 %v285, %v284
        %v297 = vpack.c.b16 %v287, %v286
        %v298 = vpack.c.b16 %v289, %v288
        %v299 = vpack.c.b16 %v291, %v290
        %v324 = vunpack.c.l.b16 %v225
        %v325 = vunpack.c.l.b16 %v226
        %v326 = vunpack.c.l.b16 %v227
        %v327 = vunpack.c.l.b16 %v228
        %v328 = vunpack.c.l.b16 %v229
        %v329 = vunpack.c.l.b16 %v230
        %v330 = vunpack.c.l.b16 %v231
        %v331 = vunpack.c.l.b16 %v232
        %v332 = vunpack.c.l.b16 %v233
        %v333 = vunpack.c.l.b16 %v234
        %v334 = vunpack.c.l.b16 %v235
        %v335 = vunpack.c.l.b16 %v236
        %v336 = vunpack.c.l.b16 %v237
        %v337 = vunpack.c.l.b16 %v238
        %v338 = vunpack.c.l.b16 %v239
        %v339 = vunpack.c.l.b16 %v240
        %v340 = vpack.c.b16 %v325, %v324
        %v341 = vpack.c.b16 %v327, %v326
        %v342 = vpack.c.b16 %v329, %v328
        %v343 = vpack.c.b16 %v331, %v330
        %v344 = vpack.c.b16 %v333, %v332
        %v345 = vpack.c.b16 %v335, %v334
        %v346 = vpack.c.b16 %v337, %v336
        %v347 = vpack.c.b16 %v339, %v338
        %356 = vmatprep.subr.bf16.mxu0 0
        %357 = vmatpush1.bf16.msra.mxu0 %v340
        %358 = vmatprep.subr.bf16.mxu0 0
        %359 = vmatpush1.bf16.msra.mxu0 %v341
        %360 = vmatprep.subr.bf16.mxu0 0
        %361 = vmatpush1.bf16.msra.mxu0 %v342
        %362 = vmatprep.subr.bf16.mxu0 0
        %363 = vmatpush1.bf16.msra.mxu0 %v343
        %364 = vmatprep.subr.bf16.mxu0 0
        %365 = vmatpush1.bf16.msra.mxu0 %v344
        %366 = vmatprep.subr.bf16.mxu0 0
        %367 = vmatpush1.bf16.msra.mxu0 %v345
        %368 = vmatprep.subr.bf16.mxu0 0
        %369 = vmatpush1.bf16.msra.mxu0 %v346
        %370 = vmatprep.subr.bf16.mxu0 0
        %371 = vmatpush1.bf16.msra.mxu0 %v347
        %372 = vmatprep.subr.bf16.mxu0 0
        %373 = vmatpush1.bf16.msra.mxu0 0
        %374 = vmatprep.subr.bf16.mxu0 0
        %375 = vmatpush1.bf16.msra.mxu0 0
        %376 = vmatprep.subr.bf16.mxu0 0
        %377 = vmatpush1.bf16.msra.mxu0 0
        %378 = vmatprep.subr.bf16.mxu0 0
        %379 = vmatpush1.bf16.msra.mxu0 0
        %380 = vmatprep.subr.bf16.mxu0 0
        %381 = vmatpush1.bf16.msra.mxu0 0
        %382 = vmatprep.subr.bf16.mxu0 0
        %383 = vmatpush1.bf16.msra.mxu0 0
        %384 = vmatprep.subr.bf16.mxu0 0
        %385 = vmatpush1.bf16.msra.mxu0 0
        %386 = vmatprep.subr.bf16.mxu0 0
        %387 = vmatpush1.bf16.msra.mxu0 0
        %388 = vmatprep.mubr.bf16.mxu0 0
        %389 = vmatmul.mubr.bf16.gmra.mrb[0].mxu0 %v292
        %v390 = vpop.f32.mrb[0].mxu0
        %v391 = vadd.f32 0.0, %v390
        %v392 = vpop.f32.mrb[0].mxu0
        %v393 = vpop.f32.mrb[0].mxu0
        %v394 = vadd.f32 0.0, %v393
        %v395 = vpop.f32.mrb[0].mxu0
        %396 = vmatprep.mubr.bf16.mxu0 0
        %397 = vmatmul.mubr.bf16.gmra.mrb[0].mxu0 %v293
        %v398 = vpop.f32.mrb[0].mxu0
        %v399 = vadd.f32 0.0, %v398
        %v400 = vpop.f32.mrb[0].mxu0
        %v401 = vpop.f32.mrb[0].mxu0
        %v402 = vadd.f32 0.0, %v401
        %v403 = vpop.f32.mrb[0].mxu0
        %404 = vmatprep.mubr.bf16.mxu0 0
        %405 = vmatmul.mubr.bf16.gmra.mrb[0].mxu0 %v294
        %v406 = vpop.f32.mrb[0].mxu0
        %v407 = vadd.f32 0.0, %v406
        %v408 = vpop.f32.mrb[0].mxu0
        %v409 = vpop.f32.mrb[0].mxu0
        %v410 = vadd.f32 0.0, %v409
        %v411 = vpop.f32.mrb[0].mxu0
        %412 = vmatprep.mubr.bf16.mxu0 0
        %413 = vmatmul.mubr.bf16.gmra.mrb[0].mxu0 %v295
        %v414 = vpop.f32.mrb[0].mxu0
        %v415 = vadd.f32 0.0, %v414
        %v416 = vpop.f32.mrb[0].mxu0
        %v417 = vpop.f32.mrb[0].mxu0
        %v418 = vadd.f32 0.0, %v417
        %v419 = vpop.f32.mrb[0].mxu0
        %420 = vmatprep.mubr.bf16.mxu0 0
        %421 = vmatmul.mubr.bf16.gmra.mrb[0].mxu0 %v296
        %v422 = vpop.f32.mrb[0].mxu0
        %v423 = vadd.f32 0.0, %v422
        %v424 = vpop.f32.mrb[0].mxu0
        %v425 = vpop.f32.mrb[0].mxu0
        %v426 = vadd.f32 0.0, %v425
        %v427 = vpop.f32.mrb[0].mxu0
        %428 = vmatprep.mubr.bf16.mxu0 0
        %429 = vmatmul.mubr.bf16.gmra.mrb[0].mxu0 %v297
        %v430 = vpop.f32.mrb[0].mxu0
        %v431 = vadd.f32 0.0, %v430
        %v432 = vpop.f32.mrb[0].mxu0
        %v433 = vpop.f32.mrb[0].mxu0
        %v434 = vadd.f32 0.0, %v433
        %v435 = vpop.f32.mrb[0].mxu0
        %436 = vmatprep.mubr.bf16.mxu0 0
        %437 = vmatmul.mubr.bf16.gmra.mrb[0].mxu0 %v298
        %v438 = vpop.f32.mrb[0].mxu0
        %v439 = vadd.f32 0.0, %v438
        %v440 = vpop.f32.mrb[0].mxu0
        %v441 = vpop.f32.mrb[0].mxu0
        %v442 = vadd.f32 0.0, %v441
        %v443 = vpop.f32.mrb[0].mxu0
        %444 = vmatprep.mubr.bf16.mxu0 0
        %445 = vmatmul.mubr.bf16.gmra.mrb[0].mxu0 %v299
        %v446 = vpop.f32.mrb[0].mxu0
        %v447 = vadd.f32 0.0, %v446
        %v448 = vpop.f32.mrb[0].mxu0
        %v449 = vpop.f32.mrb[0].mxu0
        %v450 = vadd.f32 0.0, %v449
        %v451 = vpop.f32.mrb[0].mxu0
        %452 = vdwg.mxu0
        %453 = vadd.xlane.f32.xlu0 %v391
        %v454 = vpop.xlane.xlu0 %453
        %455 = vadd.xlane.f32.xlu0 %v394
        %v456 = vpop.xlane.xlu0 %455
        %457 = vadd.xlane.f32.xlu0 %v399
        %v458 = vpop.xlane.xlu0 %457
        %459 = vadd.xlane.f32.xlu0 %v402
        %v460 = vpop.xlane.xlu0 %459
        %461 = vadd.xlane.f32.xlu0 %v407
        %v462 = vpop.xlane.xlu0 %461
        %463 = vadd.xlane.f32.xlu0 %v410
        %v464 = vpop.xlane.xlu0 %463
        %465 = vadd.xlane.f32.xlu0 %v415
        %v466 = vpop.xlane.xlu0 %465
        %467 = vadd.xlane.f32.xlu0 %v418
        %v468 = vpop.xlane.xlu0 %467
        %469 = vadd.xlane.f32.xlu0 %v423
        %v470 = vpop.xlane.xlu0 %469
        %471 = vadd.xlane.f32.xlu0 %v426
        %v472 = vpop.xlane.xlu0 %471
        %473 = vadd.xlane.f32.xlu0 %v431
        %v474 = vpop.xlane.xlu0 %473
        %475 = vadd.xlane.f32.xlu0 %v434
        %v476 = vpop.xlane.xlu0 %475
        %477 = vadd.xlane.f32.xlu0 %v439
        %v478 = vpop.xlane.xlu0 %477
        %479 = vadd.xlane.f32.xlu0 %v442
        %v480 = vpop.xlane.xlu0 %479
        %481 = vadd.xlane.f32.xlu0 %v447
        %v482 = vpop.xlane.xlu0 %481
        %483 = vadd.xlane.f32.xlu0 %v450
        %v484 = vpop.xlane.xlu0 %483
        %v485 = vmul.f32 %v454, 0.03125
        %v486 = vmul.f32 %v456, 0.03125
        %v487 = vmul.f32 %v458, 0.03125
        %v488 = vmul.f32 %v460, 0.03125
        %v489 = vmul.f32 %v462, 0.03125
        %v490 = vmul.f32 %v464, 0.03125
        %v491 = vmul.f32 %v466, 0.03125
        %v492 = vmul.f32 %v468, 0.03125
        %v493 = vmul.f32 %v470, 0.03125
        %v494 = vmul.f32 %v472, 0.03125
        %v495 = vmul.f32 %v474, 0.03125
        %v496 = vmul.f32 %v476, 0.03125
        %v497 = vmul.f32 %v478, 0.03125
        %v498 = vmul.f32 %v480, 0.03125
        %v499 = vmul.f32 %v482, 0.03125
        %v500 = vmul.f32 %v484, 0.03125
        %v501 = vsub.f32 %v391, %v485
        %v502 = vsub.f32 %v394, %v486
        %v503 = vsub.f32 %v399, %v487
        %v504 = vsub.f32 %v402, %v488
        %v505 = vsub.f32 %v407, %v489
        %v506 = vsub.f32 %v410, %v490
        %v507 = vsub.f32 %v415, %v491
        %v508 = vsub.f32 %v418, %v492
        %v509 = vsub.f32 %v423, %v493
        %v510 = vsub.f32 %v426, %v494
        %v511 = vsub.f32 %v431, %v495
        %v512 = vsub.f32 %v434, %v496
        %v513 = vsub.f32 %v439, %v497
        %v514 = vsub.f32 %v442, %v498
        %v515 = vsub.f32 %v447, %v499
        %v516 = vsub.f32 %v450, %v500
        %v517 = vsel %vm243, 1, 0
        %vm518 = vcmp.eq.s32.totalorder %v517, 1
        %v519 = vsel %vm518, %v501, 0.0
        %v520 = vsel %vm518, %v502, 0.0
        %v521 = vsel %vm518, %v503, 0.0
        %v522 = vsel %vm518, %v504, 0.0
        %v523 = vsel %vm518, %v505, 0.0
        %v524 = vsel %vm518, %v506, 0.0
        %v525 = vsel %vm518, %v507, 0.0
        %v526 = vsel %vm518, %v508, 0.0
        %v527 = vsel %vm518, %v509, 0.0
        %v528 = vsel %vm518, %v510, 0.0
        %v529 = vsel %vm518, %v511, 0.0
        %v530 = vsel %vm518, %v512, 0.0
        %v531 = vsel %vm518, %v513, 0.0
        %v532 = vsel %vm518, %v514, 0.0
        %v533 = vsel %vm518, %v515, 0.0
        %v534 = vsel %vm518, %v516, 0.0
        %v535 = vmul.f32 %v519, %v519
        %v536 = vmul.f32 %v520, %v520
        %v537 = vmul.f32 %v521, %v521
        %v538 = vmul.f32 %v522, %v522
        %v539 = vmul.f32 %v523, %v523
        %v540 = vmul.f32 %v524, %v524
        %v541 = vmul.f32 %v525, %v525
        %v542 = vmul.f32 %v526, %v526
        %v543 = vmul.f32 %v527, %v527
        %v544 = vmul.f32 %v528, %v528
        %v545 = vmul.f32 %v529, %v529
        %v546 = vmul.f32 %v530, %v530
        %v547 = vmul.f32 %v531, %v531
        %v548 = vmul.f32 %v532, %v532
        %v549 = vmul.f32 %v533, %v533
        %v550 = vmul.f32 %v534, %v534
        %551 = vadd.xlane.f32.xlu0 %v535
        %v552 = vpop.xlane.xlu0 %551
        %553 = vadd.xlane.f32.xlu0 %v536
        %v554 = vpop.xlane.xlu0 %553
        %555 = vadd.xlane.f32.xlu0 %v537
        %v556 = vpop.xlane.xlu0 %555
        %557 = vadd.xlane.f32.xlu0 %v538
        %v558 = vpop.xlane.xlu0 %557
        %559 = vadd.xlane.f32.xlu0 %v539
        %v560 = vpop.xlane.xlu0 %559
        %561 = vadd.xlane.f32.xlu0 %v540
        %v562 = vpop.xlane.xlu0 %561
        %563 = vadd.xlane.f32.xlu0 %v541
        %v564 = vpop.xlane.xlu0 %563
        %565 = vadd.xlane.f32.xlu0 %v542
        %v566 = vpop.xlane.xlu0 %565
        %567 = vadd.xlane.f32.xlu0 %v543
        %v568 = vpop.xlane.xlu0 %567
        %569 = vadd.xlane.f32.xlu0 %v544
        %v570 = vpop.xlane.xlu0 %569
        %571 = vadd.xlane.f32.xlu0 %v545
        %v572 = vpop.xlane.xlu0 %571
        %573 = vadd.xlane.f32.xlu0 %v546
        %v574 = vpop.xlane.xlu0 %573
        %575 = vadd.xlane.f32.xlu0 %v547
        %v576 = vpop.xlane.xlu0 %575
        %577 = vadd.xlane.f32.xlu0 %v548
        %v578 = vpop.xlane.xlu0 %577
        %579 = vadd.xlane.f32.xlu0 %v549
        %v580 = vpop.xlane.xlu0 %579
        %581 = vadd.xlane.f32.xlu0 %v550
        %v582 = vpop.xlane.xlu0 %581
        %v583 = vmul.f32 %v552, 0.03125
        %v584 = vmul.f32 %v554, 0.03125
        %v585 = vmul.f32 %v556, 0.03125
        %v586 = vmul.f32 %v558, 0.03125
        %v587 = vmul.f32 %v560, 0.03125
        %v588 = vmul.f32 %v562, 0.03125
        %v589 = vmul.f32 %v564, 0.03125
        %v590 = vmul.f32 %v566, 0.03125
        %v591 = vmul.f32 %v568, 0.03125
        %v592 = vmul.f32 %v570, 0.03125
        %v593 = vmul.f32 %v572, 0.03125
        %v594 = vmul.f32 %v574, 0.03125
        %v595 = vmul.f32 %v576, 0.03125
        %v596 = vmul.f32 %v578, 0.03125
        %v597 = vmul.f32 %v580, 0.03125
        %v598 = vmul.f32 %v582, 0.03125
        %v599 = vadd.f32 %v583, 1e-05
        %v600 = vadd.f32 %v584, 1e-05
        %v601 = vadd.f32 %v585, 1e-05
        %v602 = vadd.f32 %v586, 1e-05
        %v603 = vadd.f32 %v587, 1e-05
        %v604 = vadd.f32 %v588, 1e-05
        %v605 = vadd.f32 %v589, 1e-05
        %v606 = vadd.f32 %v590, 1e-05
        %v607 = vadd.f32 %v591, 1e-05
        %v608 = vadd.f32 %v592, 1e-05
        %v609 = vadd.f32 %v593, 1e-05
        %v610 = vadd.f32 %v594, 1e-05
        %v611 = vadd.f32 %v595, 1e-05
        %v612 = vadd.f32 %v596, 1e-05
        %v613 = vadd.f32 %v597, 1e-05
        %v614 = vadd.f32 %v598, 1e-05
        %v615 = vrsqrt.pop %v599
        %v616 = vrsqrt.pop %v600
        %v617 = vrsqrt.pop %v601
        %v618 = vrsqrt.pop %v602
        %v619 = vrsqrt.pop %v603
        %v620 = vrsqrt.pop %v604
        %v621 = vrsqrt.pop %v605
        %v622 = vrsqrt.pop %v606
        %v623 = vrsqrt.pop %v607
        %v624 = vrsqrt.pop %v608
        %v625 = vrsqrt.pop %v609
        %v626 = vrsqrt.pop %v610
        %v627 = vrsqrt.pop %v611
        %v628 = vrsqrt.pop %v612
        %v629 = vrsqrt.pop %v613
        %v630 = vrsqrt.pop %v614
        %v631 = vmul.f32 %v519, %v615
        %v632 = vmul.f32 %v520, %v616
        %v633 = vmul.f32 %v521, %v617
        %v634 = vmul.f32 %v522, %v618
        %v635 = vmul.f32 %v523, %v619
        %v636 = vmul.f32 %v524, %v620
        %v637 = vmul.f32 %v525, %v621
        %v638 = vmul.f32 %v526, %v622
        %v639 = vmul.f32 %v527, %v623
        %v640 = vmul.f32 %v528, %v624
        %v641 = vmul.f32 %v529, %v625
        %v642 = vmul.f32 %v530, %v626
        %v643 = vmul.f32 %v531, %v627
        %v644 = vmul.f32 %v532, %v628
        %v645 = vmul.f32 %v533, %v629
        %v646 = vmul.f32 %v534, %v630
        %v647 = vlaneseq
        %v648 = vshrl.u32 %v647, 7
        %v649 = vsub.s32 0, %v648
        %v650 = vrot.slane %v224, %v649
        %v651 = vmul.f32 %v631, %v650
        %v652 = vmul.f32 %v632, %v650
        %v653 = vmul.f32 %v633, %v650
        %v654 = vmul.f32 %v634, %v650
        %v655 = vmul.f32 %v635, %v650
        %v656 = vmul.f32 %v636, %v650
        %v657 = vmul.f32 %v637, %v650
        %v658 = vmul.f32 %v638, %v650
        %v659 = vmul.f32 %v639, %v650
        %v660 = vmul.f32 %v640, %v650
        %v661 = vmul.f32 %v641, %v650
        %v662 = vmul.f32 %v642, %v650
        %v663 = vmul.f32 %v643, %v650
        %v664 = vmul.f32 %v644, %v650
        %v665 = vmul.f32 %v645, %v650
        %v666 = vmul.f32 %v646, %v650
        %v667 = vlaneseq
        %v668 = vshrl.u32 %v667, 7
        %v669 = vsub.s32 1, %v668
        %v670 = vrot.slane %v224, %v669
        %v671 = vadd.f32 %v651, %v670
        %v672 = vadd.f32 %v652, %v670
        %v673 = vadd.f32 %v653, %v670
        %v674 = vadd.f32 %v654, %v670
        %v675 = vadd.f32 %v655, %v670
        %v676 = vadd.f32 %v656, %v670
        %v677 = vadd.f32 %v657, %v670
        %v678 = vadd.f32 %v658, %v670
        %v679 = vadd.f32 %v659, %v670
        %v680 = vadd.f32 %v660, %v670
        %v681 = vadd.f32 %v661, %v670
        %v682 = vadd.f32 %v662, %v670
        %v683 = vadd.f32 %v663, %v670
        %v684 = vadd.f32 %v664, %v670
        %v685 = vadd.f32 %v665, %v670
        %v686 = vadd.f32 %v666, %v670
        %v687 = vpack.c.bf16 %v672, %v671
        %v688 = vpack.c.bf16 %v674, %v673
        %v689 = vpack.c.bf16 %v676, %v675
        %v690 = vpack.c.bf16 %v678, %v677
        %v691 = vpack.c.bf16 %v680, %v679
        %v692 = vpack.c.bf16 %v682, %v681
        %v693 = vpack.c.bf16 %v684, %v683
        %v694 = vpack.c.bf16 %v686, %v685
        %695 = vst [vmem:[#allocation2] sm:$0xff] %v687
        %696 = vst [vmem:[#allocation2 + $0x8] sm:$0xff] %v688
        %697 = vst [vmem:[#allocation2 + $0x10] sm:$0xff] %v689
        %698 = vst [vmem:[#allocation2 + $0x18] sm:$0xff] %v690
        %699 = vst [vmem:[#allocation2 + $0x20] sm:$0xff] %v691
        %700 = vst [vmem:[#allocation2 + $0x28] sm:$0xff] %v692
        %701 = vst [vmem:[#allocation2 + $0x30] sm:$0xff] %v693
        %702 = vst [vmem:[#allocation2 + $0x38] sm:$0xff] %v694
        %s703 = scalar_lea.vmem %s222, 64
        %v704 = vld [vmem:[%s703] sm:$0xf]
        %v705 = vld [vmem:[%s703 + $0x4] sm:$0xf]
        %v706 = vld [vmem:[%s703 + $0x8] sm:$0xf]
        %v707 = vld [vmem:[%s703 + $0xc] sm:$0xf]
        %v708 = vld [vmem:[%s703 + $0x10] sm:$0xf]
        %v709 = vld [vmem:[%s703 + $0x14] sm:$0xf]
        %v710 = vld [vmem:[%s703 + $0x18] sm:$0xf]
        %v711 = vld [vmem:[%s703 + $0x1c] sm:$0xf]
        %v712 = vld [vmem:[%s703 + $0x20] sm:$0xf]
        %v713 = vld [vmem:[%s703 + $0x24] sm:$0xf]
        %v714 = vld [vmem:[%s703 + $0x28] sm:$0xf]
        %v715 = vld [vmem:[%s703 + $0x2c] sm:$0xf]
        %v716 = vld [vmem:[%s703 + $0x30] sm:$0xf]
        %v717 = vld [vmem:[%s703 + $0x34] sm:$0xf]
        %v718 = vld [vmem:[%s703 + $0x38] sm:$0xf]
        %v719 = vld [vmem:[%s703 + $0x3c] sm:$0xf]
        %v736 = vunpack.c.l.b16 %v704
        %v737 = vunpack.c.l.b16 %v705
        %v738 = vunpack.c.l.b16 %v706
        %v739 = vunpack.c.l.b16 %v707
        %v740 = vunpack.c.l.b16 %v708
        %v741 = vunpack.c.l.b16 %v709
        %v742 = vunpack.c.l.b16 %v710
        %v743 = vunpack.c.l.b16 %v711
        %v744 = vunpack.c.l.b16 %v712
        %v745 = vunpack.c.l.b16 %v713
        %v746 = vunpack.c.l.b16 %v714
        %v747 = vunpack.c.l.b16 %v715
        %v748 = vunpack.c.l.b16 %v716
        %v749 = vunpack.c.l.b16 %v717
        %v750 = vunpack.c.l.b16 %v718
        %v751 = vunpack.c.l.b16 %v719
        %v752 = vpack.c.b16 %v737, %v736
        %v753 = vpack.c.b16 %v739, %v738
        %v754 = vpack.c.b16 %v741, %v740
        %v755 = vpack.c.b16 %v743, %v742
        %v756 = vpack.c.b16 %v745, %v744
        %v757 = vpack.c.b16 %v747, %v746
        %v758 = vpack.c.b16 %v749, %v748
        %v759 = vpack.c.b16 %v751, %v750
        %768 = vmatprep.subr.bf16.mxu0 0
        %769 = vmatpush1.bf16.msra.mxu0 %v340
        %770 = vmatprep.subr.bf16.mxu0 0
        %771 = vmatpush1.bf16.msra.mxu0 %v341
        %772 = vmatprep.subr.bf16.mxu0 0
        %773 = vmatpush1.bf16.msra.mxu0 %v342
        %774 = vmatprep.subr.bf16.mxu0 0
        %775 = vmatpush1.bf16.msra.mxu0 %v343
        %776 = vmatprep.subr.bf16.mxu0 0
        %777 = vmatpush1.bf16.msra.mxu0 %v344
        %778 = vmatprep.subr.bf16.mxu0 0
        %779 = vmatpush1.bf16.msra.mxu0 %v345
        %780 = vmatprep.subr.bf16.mxu0 0
        %781 = vmatpush1.bf16.msra.mxu0 %v346
        %782 = vmatprep.subr.bf16.mxu0 0
        %783 = vmatpush1.bf16.msra.mxu0 %v347
        %784 = vmatprep.subr.bf16.mxu0 0
        %785 = vmatpush1.bf16.msra.mxu0 0
        %786 = vmatprep.subr.bf16.mxu0 0
        %787 = vmatpush1.bf16.msra.mxu0 0
        %788 = vmatprep.subr.bf16.mxu0 0
        %789 = vmatpush1.bf16.msra.mxu0 0
        %790 = vmatprep.subr.bf16.mxu0 0
        %791 = vmatpush1.bf16.msra.mxu0 0
        %792 = vmatprep.subr.bf16.mxu0 0
        %793 = vmatpush1.bf16.msra.mxu0 0
        %794 = vmatprep.subr.bf16.mxu0 0
        %795 = vmatpush1.bf16.msra.mxu0 0
        %796 = vmatprep.subr.bf16.mxu0 0
        %797 = vmatpush1.bf16.msra.mxu0 0
        %798 = vmatprep.subr.bf16.mxu0 0
        %799 = vmatpush1.bf16.msra.mxu0 0
        %800 = vmatprep.mubr.bf16.mxu0 0
        %801 = vmatmul.mubr.bf16.gmra.mrb[0].mxu0 %v752
        %v802 = vpop.f32.mrb[0].mxu0
        %v803 = vadd.f32 0.0, %v802
        %v804 = vpop.f32.mrb[0].mxu0
        %v805 = vpop.f32.mrb[0].mxu0
        %v806 = vadd.f32 0.0, %v805
        %v807 = vpop.f32.mrb[0].mxu0
        %808 = vmatprep.mubr.bf16.mxu0 0
        %809 = vmatmul.mubr.bf16.gmra.mrb[0].mxu0 %v753
        %v810 = vpop.f32.mrb[0].mxu0
        %v811 = vadd.f32 0.0, %v810
        %v812 = vpop.f32.mrb[0].mxu0
        %v813 = vpop.f32.mrb[0].mxu0
        %v814 = vadd.f32 0.0, %v813
        %v815 = vpop.f32.mrb[0].mxu0
        %816 = vmatprep.mubr.bf16.mxu0 0
        %817 = vmatmul.mubr.bf16.gmra.mrb[0].mxu0 %v754
        %v818 = vpop.f32.mrb[0].mxu0
        %v819 = vadd.f32 0.0, %v818
        %v820 = vpop.f32.mrb[0].mxu0
        %v821 = vpop.f32.mrb[0].mxu0
        %v822 = vadd.f32 0.0, %v821
        %v823 = vpop.f32.mrb[0].mxu0
        %824 = vmatprep.mubr.bf16.mxu0 0
        %825 = vmatmul.mubr.bf16.gmra.mrb[0].mxu0 %v755
        %v826 = vpop.f32.mrb[0].mxu0
        %v827 = vadd.f32 0.0, %v826
        %v828 = vpop.f32.mrb[0].mxu0
        %v829 = vpop.f32.mrb[0].mxu0
        %v830 = vadd.f32 0.0, %v829
        %v831 = vpop.f32.mrb[0].mxu0
        %832 = vmatprep.mubr.bf16.mxu0 0
        %833 = vmatmul.mubr.bf16.gmra.mrb[0].mxu0 %v756
        %v834 = vpop.f32.mrb[0].mxu0
        %v835 = vadd.f32 0.0, %v834
        %v836 = vpop.f32.mrb[0].mxu0
        %v837 = vpop.f32.mrb[0].mxu0
        %v838 = vadd.f32 0.0, %v837
        %v839 = vpop.f32.mrb[0].mxu0
        %840 = vmatprep.mubr.bf16.mxu0 0
        %841 = vmatmul.mubr.bf16.gmra.mrb[0].mxu0 %v757
        %v842 = vpop.f32.mrb[0].mxu0
        %v843 = vadd.f32 0.0, %v842
        %v844 = vpop.f32.mrb[0].mxu0
        %v845 = vpop.f32.mrb[0].mxu0
        %v846 = vadd.f32 0.0, %v845
        %v847 = vpop.f32.mrb[0].mxu0
        %848 = vmatprep.mubr.bf16.mxu0 0
        %849 = vmatmul.mubr.bf16.gmra.mrb[0].mxu0 %v758
        %v850 = vpop.f32.mrb[0].mxu0
        %v851 = vadd.f32 0.0, %v850
        %v852 = vpop.f32.mrb[0].mxu0
        %v853 = vpop.f32.mrb[0].mxu0
        %v854 = vadd.f32 0.0, %v853
        %v855 = vpop.f32.mrb[0].mxu0
        %856 = vmatprep.mubr.bf16.mxu0 0
        %857 = vmatmul.mubr.bf16.gmra.mrb[0].mxu0 %v759
        %v858 = vpop.f32.mrb[0].mxu0
        %v859 = vadd.f32 0.0, %v858
        %v860 = vpop.f32.mrb[0].mxu0
        %v861 = vpop.f32.mrb[0].mxu0
        %v862 = vadd.f32 0.0, %v861
        %v863 = vpop.f32.mrb[0].mxu0
        %864 = vdwg.mxu0
        %865 = vadd.xlane.f32.xlu0 %v803
        %v866 = vpop.xlane.xlu0 %865
        %867 = vadd.xlane.f32.xlu0 %v806
        %v868 = vpop.xlane.xlu0 %867
        %869 = vadd.xlane.f32.xlu0 %v811
        %v870 = vpop.xlane.xlu0 %869
        %871 = vadd.xlane.f32.xlu0 %v814
        %v872 = vpop.xlane.xlu0 %871
        %873 = vadd.xlane.f32.xlu0 %v819
        %v874 = vpop.xlane.xlu0 %873
        %875 = vadd.xlane.f32.xlu0 %v822
        %v876 = vpop.xlane.xlu0 %875
        %877 = vadd.xlane.f32.xlu0 %v827
        %v878 = vpop.xlane.xlu0 %877
        %879 = vadd.xlane.f32.xlu0 %v830
        %v880 = vpop.xlane.xlu0 %879
        %881 = vadd.xlane.f32.xlu0 %v835
        %v882 = vpop.xlane.xlu0 %881
        %883 = vadd.xlane.f32.xlu0 %v838
        %v884 = vpop.xlane.xlu0 %883
        %885 = vadd.xlane.f32.xlu0 %v843
        %v886 = vpop.xlane.xlu0 %885
        %887 = vadd.xlane.f32.xlu0 %v846
        %v888 = vpop.xlane.xlu0 %887
        %889 = vadd.xlane.f32.xlu0 %v851
        %v890 = vpop.xlane.xlu0 %889
        %891 = vadd.xlane.f32.xlu0 %v854
        %v892 = vpop.xlane.xlu0 %891
        %893 = vadd.xlane.f32.xlu0 %v859
        %v894 = vpop.xlane.xlu0 %893
        %895 = vadd.xlane.f32.xlu0 %v862
        %v896 = vpop.xlane.xlu0 %895
        %v897 = vmul.f32 %v866, 0.03125
        %v898 = vmul.f32 %v868, 0.03125
        %v899 = vmul.f32 %v870, 0.03125
        %v900 = vmul.f32 %v872, 0.03125
        %v901 = vmul.f32 %v874, 0.03125
        %v902 = vmul.f32 %v876, 0.03125
        %v903 = vmul.f32 %v878, 0.03125
        %v904 = vmul.f32 %v880, 0.03125
        %v905 = vmul.f32 %v882, 0.03125
        %v906 = vmul.f32 %v884, 0.03125
        %v907 = vmul.f32 %v886, 0.03125
        %v908 = vmul.f32 %v888, 0.03125
        %v909 = vmul.f32 %v890, 0.03125
        %v910 = vmul.f32 %v892, 0.03125
        %v911 = vmul.f32 %v894, 0.03125
        %v912 = vmul.f32 %v896, 0.03125
        %v913 = vsub.f32 %v803, %v897
        %v914 = vsub.f32 %v806, %v898
        %v915 = vsub.f32 %v811, %v899
        %v916 = vsub.f32 %v814, %v900
        %v917 = vsub.f32 %v819, %v901
        %v918 = vsub.f32 %v822, %v902
        %v919 = vsub.f32 %v827, %v903
        %v920 = vsub.f32 %v830, %v904
        %v921 = vsub.f32 %v835, %v905
        %v922 = vsub.f32 %v838, %v906
        %v923 = vsub.f32 %v843, %v907
        %v924 = vsub.f32 %v846, %v908
        %v925 = vsub.f32 %v851, %v909
        %v926 = vsub.f32 %v854, %v910
        %v927 = vsub.f32 %v859, %v911
        %v928 = vsub.f32 %v862, %v912
        %v929 = vsel %vm518, %v913, 0.0
        %v930 = vsel %vm518, %v914, 0.0
        %v931 = vsel %vm518, %v915, 0.0
        %v932 = vsel %vm518, %v916, 0.0
        %v933 = vsel %vm518, %v917, 0.0
        %v934 = vsel %vm518, %v918, 0.0
        %v935 = vsel %vm518, %v919, 0.0
        %v936 = vsel %vm518, %v920, 0.0
        %v937 = vsel %vm518, %v921, 0.0
        %v938 = vsel %vm518, %v922, 0.0
        %v939 = vsel %vm518, %v923, 0.0
        %v940 = vsel %vm518, %v924, 0.0
        %v941 = vsel %vm518, %v925, 0.0
        %v942 = vsel %vm518, %v926, 0.0
        %v943 = vsel %vm518, %v927, 0.0
        %v944 = vsel %vm518, %v928, 0.0
        %v945 = vmul.f32 %v929, %v929
        %v946 = vmul.f32 %v930, %v930
        %v947 = vmul.f32 %v931, %v931
        %v948 = vmul.f32 %v932, %v932
        %v949 = vmul.f32 %v933, %v933
        %v950 = vmul.f32 %v934, %v934
        %v951 = vmul.f32 %v935, %v935
        %v952 = vmul.f32 %v936, %v936
        %v953 = vmul.f32 %v937, %v937
        %v954 = vmul.f32 %v938, %v938
        %v955 = vmul.f32 %v939, %v939
        %v956 = vmul.f32 %v940, %v940
        %v957 = vmul.f32 %v941, %v941
        %v958 = vmul.f32 %v942, %v942
        %v959 = vmul.f32 %v943, %v943
        %v960 = vmul.f32 %v944, %v944
        %961 = vadd.xlane.f32.xlu0 %v945
        %v962 = vpop.xlane.xlu0 %961
        %963 = vadd.xlane.f32.xlu0 %v946
        %v964 = vpop.xlane.xlu0 %963
        %965 = vadd.xlane.f32.xlu0 %v947
        %v966 = vpop.xlane.xlu0 %965
        %967 = vadd.xlane.f32.xlu0 %v948
        %v968 = vpop.xlane.xlu0 %967
        %969 = vadd.xlane.f32.xlu0 %v949
        %v970 = vpop.xlane.xlu0 %969
        %971 = vadd.xlane.f32.xlu0 %v950
        %v972 = vpop.xlane.xlu0 %971
        %973 = vadd.xlane.f32.xlu0 %v951
        %v974 = vpop.xlane.xlu0 %973
        %975 = vadd.xlane.f32.xlu0 %v952
        %v976 = vpop.xlane.xlu0 %975
        %977 = vadd.xlane.f32.xlu0 %v953
        %v978 = vpop.xlane.xlu0 %977
        %979 = vadd.xlane.f32.xlu0 %v954
        %v980 = vpop.xlane.xlu0 %979
        %981 = vadd.xlane.f32.xlu0 %v955
        %v982 = vpop.xlane.xlu0 %981
        %983 = vadd.xlane.f32.xlu0 %v956
        %v984 = vpop.xlane.xlu0 %983
        %985 = vadd.xlane.f32.xlu0 %v957
        %v986 = vpop.xlane.xlu0 %985
        %987 = vadd.xlane.f32.xlu0 %v958
        %v988 = vpop.xlane.xlu0 %987
        %989 = vadd.xlane.f32.xlu0 %v959
        %v990 = vpop.xlane.xlu0 %989
        %991 = vadd.xlane.f32.xlu0 %v960
        %v992 = vpop.xlane.xlu0 %991
        %v993 = vmul.f32 %v962, 0.03125
        %v994 = vmul.f32 %v964, 0.03125
        %v995 = vmul.f32 %v966, 0.03125
        %v996 = vmul.f32 %v968, 0.03125
        %v997 = vmul.f32 %v970, 0.03125
        %v998 = vmul.f32 %v972, 0.03125
        %v999 = vmul.f32 %v974, 0.03125
        %v1000 = vmul.f32 %v976, 0.03125
        %v1001 = vmul.f32 %v978, 0.03125
        %v1002 = vmul.f32 %v980, 0.03125
        %v1003 = vmul.f32 %v982, 0.03125
        %v1004 = vmul.f32 %v984, 0.03125
        %v1005 = vmul.f32 %v986, 0.03125
        %v1006 = vmul.f32 %v988, 0.03125
        %v1007 = vmul.f32 %v990, 0.03125
        %v1008 = vmul.f32 %v992, 0.03125
        %v1009 = vadd.f32 %v993, 1e-05
        %v1010 = vadd.f32 %v994, 1e-05
        %v1011 = vadd.f32 %v995, 1e-05
        %v1012 = vadd.f32 %v996, 1e-05
        %v1013 = vadd.f32 %v997, 1e-05
        %v1014 = vadd.f32 %v998, 1e-05
        %v1015 = vadd.f32 %v999, 1e-05
        %v1016 = vadd.f32 %v1000, 1e-05
        %v1017 = vadd.f32 %v1001, 1e-05
        %v1018 = vadd.f32 %v1002, 1e-05
        %v1019 = vadd.f32 %v1003, 1e-05
        %v1020 = vadd.f32 %v1004, 1e-05
        %v1021 = vadd.f32 %v1005, 1e-05
        %v1022 = vadd.f32 %v1006, 1e-05
        %v1023 = vadd.f32 %v1007, 1e-05
        %v1024 = vadd.f32 %v1008, 1e-05
        %v1025 = vrsqrt.pop %v1009
        %v1026 = vrsqrt.pop %v1010
        %v1027 = vrsqrt.pop %v1011
        %v1028 = vrsqrt.pop %v1012
        %v1029 = vrsqrt.pop %v1013
        %v1030 = vrsqrt.pop %v1014
        %v1031 = vrsqrt.pop %v1015
        %v1032 = vrsqrt.pop %v1016
        %v1033 = vrsqrt.pop %v1017
        %v1034 = vrsqrt.pop %v1018
        %v1035 = vrsqrt.pop %v1019
        %v1036 = vrsqrt.pop %v1020
        %v1037 = vrsqrt.pop %v1021
        %v1038 = vrsqrt.pop %v1022
        %v1039 = vrsqrt.pop %v1023
        %v1040 = vrsqrt.pop %v1024
        %v1041 = vmul.f32 %v929, %v1025
        %v1042 = vmul.f32 %v930, %v1026
        %v1043 = vmul.f32 %v931, %v1027
        %v1044 = vmul.f32 %v932, %v1028
        %v1045 = vmul.f32 %v933, %v1029
        %v1046 = vmul.f32 %v934, %v1030
        %v1047 = vmul.f32 %v935, %v1031
        %v1048 = vmul.f32 %v936, %v1032
        %v1049 = vmul.f32 %v937, %v1033
        %v1050 = vmul.f32 %v938, %v1034
        %v1051 = vmul.f32 %v939, %v1035
        %v1052 = vmul.f32 %v940, %v1036
        %v1053 = vmul.f32 %v941, %v1037
        %v1054 = vmul.f32 %v942, %v1038
        %v1055 = vmul.f32 %v943, %v1039
        %v1056 = vmul.f32 %v944, %v1040
        %v1057 = vmul.f32 %v1041, %v650
        %v1058 = vmul.f32 %v1042, %v650
        %v1059 = vmul.f32 %v1043, %v650
        %v1060 = vmul.f32 %v1044, %v650
        %v1061 = vmul.f32 %v1045, %v650
        %v1062 = vmul.f32 %v1046, %v650
        %v1063 = vmul.f32 %v1047, %v650
        %v1064 = vmul.f32 %v1048, %v650
        %v1065 = vmul.f32 %v1049, %v650
        %v1066 = vmul.f32 %v1050, %v650
        %v1067 = vmul.f32 %v1051, %v650
        %v1068 = vmul.f32 %v1052, %v650
        %v1069 = vmul.f32 %v1053, %v650
        %v1070 = vmul.f32 %v1054, %v650
        %v1071 = vmul.f32 %v1055, %v650
        %v1072 = vmul.f32 %v1056, %v650
        %v1073 = vadd.f32 %v1057, %v670
        %v1074 = vadd.f32 %v1058, %v670
        %v1075 = vadd.f32 %v1059, %v670
        %v1076 = vadd.f32 %v1060, %v670
        %v1077 = vadd.f32 %v1061, %v670
        %v1078 = vadd.f32 %v1062, %v670
        %v1079 = vadd.f32 %v1063, %v670
        %v1080 = vadd.f32 %v1064, %v670
        %v1081 = vadd.f32 %v1065, %v670
        %v1082 = vadd.f32 %v1066, %v670
        %v1083 = vadd.f32 %v1067, %v670
        %v1084 = vadd.f32 %v1068, %v670
        %v1085 = vadd.f32 %v1069, %v670
        %v1086 = vadd.f32 %v1070, %v670
        %v1087 = vadd.f32 %v1071, %v670
        %v1088 = vadd.f32 %v1072, %v670
        %v1089 = vpack.c.bf16 %v1074, %v1073
        %v1090 = vpack.c.bf16 %v1076, %v1075
        %v1091 = vpack.c.bf16 %v1078, %v1077
        %v1092 = vpack.c.bf16 %v1080, %v1079
        %v1093 = vpack.c.bf16 %v1082, %v1081
        %v1094 = vpack.c.bf16 %v1084, %v1083
        %v1095 = vpack.c.bf16 %v1086, %v1085
        %v1096 = vpack.c.bf16 %v1088, %v1087
        %s1097 = scalar_lea.vmem [#allocation2], 64
        %1098 = vst [vmem:[%s1097] sm:$0xff] %v1089
        %1099 = vst [vmem:[%s1097 + $0x8] sm:$0xff] %v1090
        %1100 = vst [vmem:[%s1097 + $0x10] sm:$0xff] %v1091
        %1101 = vst [vmem:[%s1097 + $0x18] sm:$0xff] %v1092
        %1102 = vst [vmem:[%s1097 + $0x20] sm:$0xff] %v1093
        %1103 = vst [vmem:[%s1097 + $0x28] sm:$0xff] %v1094
        %1104 = vst [vmem:[%s1097 + $0x30] sm:$0xff] %v1095
        %1105 = vst [vmem:[%s1097 + $0x38] sm:$0xff] %v1096
        %s1106 = scalar_lea.vmem %s222, 128
        %v1107 = vld [vmem:[%s1106] sm:$0xf]
        %v1108 = vld [vmem:[%s1106 + $0x4] sm:$0xf]
        %v1109 = vld [vmem:[%s1106 + $0x8] sm:$0xf]
        %v1110 = vld [vmem:[%s1106 + $0xc] sm:$0xf]
        %v1111 = vld [vmem:[%s1106 + $0x10] sm:$0xf]
        %v1112 = vld [vmem:[%s1106 + $0x14] sm:$0xf]
        %v1113 = vld [vmem:[%s1106 + $0x18] sm:$0xf]
        %v1114 = vld [vmem:[%s1106 + $0x1c] sm:$0xf]
        %v1115 = vld [vmem:[%s1106 + $0x20] sm:$0xf]
        %v1116 = vld [vmem:[%s1106 + $0x24] sm:$0xf]
        %v1117 = vld [vmem:[%s1106 + $0x28] sm:$0xf]
        %v1118 = vld [vmem:[%s1106 + $0x2c] sm:$0xf]
        %v1119 = vld [vmem:[%s1106 + $0x30] sm:$0xf]
        %v1120 = vld [vmem:[%s1106 + $0x34] sm:$0xf]
        %v1121 = vld [vmem:[%s1106 + $0x38] sm:$0xf]
        %v1122 = vld [vmem:[%s1106 + $0x3c] sm:$0xf]
        %v1139 = vunpack.c.l.b16 %v1107
        %v1140 = vunpack.c.l.b16 %v1108
        %v1141 = vunpack.c.l.b16 %v1109
        %v1142 = vunpack.c.l.b16 %v1110
        %v1143 = vunpack.c.l.b16 %v1111
        %v1144 = vunpack.c.l.b16 %v1112
        %v1145 = vunpack.c.l.b16 %v1113
        %v1146 = vunpack.c.l.b16 %v1114
        %v1147 = vunpack.c.l.b16 %v1115
        %v1148 = vunpack.c.l.b16 %v1116
        %v1149 = vunpack.c.l.b16 %v1117
        %v1150 = vunpack.c.l.b16 %v1118
        %v1151 = vunpack.c.l.b16 %v1119
        %v1152 = vunpack.c.l.b16 %v1120
        %v1153 = vunpack.c.l.b16 %v1121
        %v1154 = vunpack.c.l.b16 %v1122
        %v1155 = vpack.c.b16 %v1140, %v1139
        %v1156 = vpack.c.b16 %v1142, %v1141
        %v1157 = vpack.c.b16 %v1144, %v1143
        %v1158 = vpack.c.b16 %v1146, %v1145
        %v1159 = vpack.c.b16 %v1148, %v1147
        %v1160 = vpack.c.b16 %v1150, %v1149
        %v1161 = vpack.c.b16 %v1152, %v1151
        %v1162 = vpack.c.b16 %v1154, %v1153
        %1171 = vmatprep.subr.bf16.mxu0 0
        %1172 = vmatpush1.bf16.msra.mxu0 %v340
        %1173 = vmatprep.subr.bf16.mxu0 0
        %1174 = vmatpush1.bf16.msra.mxu0 %v341
        %1175 = vmatprep.subr.bf16.mxu0 0
        %1176 = vmatpush1.bf16.msra.mxu0 %v342
        %1177 = vmatprep.subr.bf16.mxu0 0
        %1178 = vmatpush1.bf16.msra.mxu0 %v343
        %1179 = vmatprep.subr.bf16.mxu0 0
        %1180 = vmatpush1.bf16.msra.mxu0 %v344
        %1181 = vmatprep.subr.bf16.mxu0 0
        %1182 = vmatpush1.bf16.msra.mxu0 %v345
        %1183 = vmatprep.subr.bf16.mxu0 0
        %1184 = vmatpush1.bf16.msra.mxu0 %v346
        %1185 = vmatprep.subr.bf16.mxu0 0
        %1186 = vmatpush1.bf16.msra.mxu0 %v347
        %1187 = vmatprep.subr.bf16.mxu0 0
        %1188 = vmatpush1.bf16.msra.mxu0 0
        %1189 = vmatprep.subr.bf16.mxu0 0
        %1190 = vmatpush1.bf16.msra.mxu0 0
        %1191 = vmatprep.subr.bf16.mxu0 0
        %1192 = vmatpush1.bf16.msra.mxu0 0
        %1193 = vmatprep.subr.bf16.mxu0 0
        %1194 = vmatpush1.bf16.msra.mxu0 0
        %1195 = vmatprep.subr.bf16.mxu0 0
        %1196 = vmatpush1.bf16.msra.mxu0 0
        %1197 = vmatprep.subr.bf16.mxu0 0
        %1198 = vmatpush1.bf16.msra.mxu0 0
        %1199 = vmatprep.subr.bf16.mxu0 0
        %1200 = vmatpush1.bf16.msra.mxu0 0
        %1201 = vmatprep.subr.bf16.mxu0 0
        %1202 = vmatpush1.bf16.msra.mxu0 0
        %1203 = vmatprep.mubr.bf16.mxu0 0
        %1204 = vmatmul.mubr.bf16.gmra.mrb[0].mxu0 %v1155
        %v1205 = vpop.f32.mrb[0].mxu0
        %v1206 = vadd.f32 0.0, %v1205
        %v1207 = vpop.f32.mrb[0].mxu0
        %v1208 = vpop.f32.mrb[0].mxu0
        %v1209 = vadd.f32 0.0, %v1208
        %v1210 = vpop.f32.mrb[0].mxu0
        %1211 = vmatprep.mubr.bf16.mxu0 0
        %1212 = vmatmul.mubr.bf16.gmra.mrb[0].mxu0 %v1156
        %v1213 = vpop.f32.mrb[0].mxu0
        %v1214 = vadd.f32 0.0, %v1213
        %v1215 = vpop.f32.mrb[0].mxu0
        %v1216 = vpop.f32.mrb[0].mxu0
        %v1217 = vadd.f32 0.0, %v1216
        %v1218 = vpop.f32.mrb[0].mxu0
        %1219 = vmatprep.mubr.bf16.mxu0 0
        %1220 = vmatmul.mubr.bf16.gmra.mrb[0].mxu0 %v1157
        %v1221 = vpop.f32.mrb[0].mxu0
        %v1222 = vadd.f32 0.0, %v1221
        %v1223 = vpop.f32.mrb[0].mxu0
        %v1224 = vpop.f32.mrb[0].mxu0
        %v1225 = vadd.f32 0.0, %v1224
        %v1226 = vpop.f32.mrb[0].mxu0
        %1227 = vmatprep.mubr.bf16.mxu0 0
        %1228 = vmatmul.mubr.bf16.gmra.mrb[0].mxu0 %v1158
        %v1229 = vpop.f32.mrb[0].mxu0
        %v1230 = vadd.f32 0.0, %v1229
        %v1231 = vpop.f32.mrb[0].mxu0
        %v1232 = vpop.f32.mrb[0].mxu0
        %v1233 = vadd.f32 0.0, %v1232
        %v1234 = vpop.f32.mrb[0].mxu0
        %1235 = vmatprep.mubr.bf16.mxu0 0
        %1236 = vmatmul.mubr.bf16.gmra.mrb[0].mxu0 %v1159
        %v1237 = vpop.f32.mrb[0].mxu0
        %v1238 = vadd.f32 0.0, %v1237
        %v1239 = vpop.f32.mrb[0].mxu0
        %v1240 = vpop.f32.mrb[0].mxu0
        %v1241 = vadd.f32 0.0, %v1240
        %v1242 = vpop.f32.mrb[0].mxu0
        %1243 = vmatprep.mubr.bf16.mxu0 0
        %1244 = vmatmul.mubr.bf16.gmra.mrb[0].mxu0 %v1160
        %v1245 = vpop.f32.mrb[0].mxu0
        %v1246 = vadd.f32 0.0, %v1245
        %v1247 = vpop.f32.mrb[0].mxu0
        %v1248 = vpop.f32.mrb[0].mxu0
        %v1249 = vadd.f32 0.0, %v1248
        %v1250 = vpop.f32.mrb[0].mxu0
        %1251 = vmatprep.mubr.bf16.mxu0 0
        %1252 = vmatmul.mubr.bf16.gmra.mrb[0].mxu0 %v1161
        %v1253 = vpop.f32.mrb[0].mxu0
        %v1254 = vadd.f32 0.0, %v1253
        %v1255 = vpop.f32.mrb[0].mxu0
        %v1256 = vpop.f32.mrb[0].mxu0
        %v1257 = vadd.f32 0.0, %v1256
        %v1258 = vpop.f32.mrb[0].mxu0
        %1259 = vmatprep.mubr.bf16.mxu0 0
        %1260 = vmatmul.mubr.bf16.gmra.mrb[0].mxu0 %v1162
        %v1261 = vpop.f32.mrb[0].mxu0
        %v1262 = vadd.f32 0.0, %v1261
        %v1263 = vpop.f32.mrb[0].mxu0
        %v1264 = vpop.f32.mrb[0].mxu0
        %v1265 = vadd.f32 0.0, %v1264
        %v1266 = vpop.f32.mrb[0].mxu0
        %1267 = vdwg.mxu0
        %1268 = vadd.xlane.f32.xlu0 %v1206
        %v1269 = vpop.xlane.xlu0 %1268
        %1270 = vadd.xlane.f32.xlu0 %v1209
        %v1271 = vpop.xlane.xlu0 %1270
        %1272 = vadd.xlane.f32.xlu0 %v1214
        %v1273 = vpop.xlane.xlu0 %1272
        %1274 = vadd.xlane.f32.xlu0 %v1217
        %v1275 = vpop.xlane.xlu0 %1274
        %1276 = vadd.xlane.f32.xlu0 %v1222
        %v1277 = vpop.xlane.xlu0 %1276
        %1278 = vadd.xlane.f32.xlu0 %v1225
        %v1279 = vpop.xlane.xlu0 %1278
        %1280 = vadd.xlane.f32.xlu0 %v1230
        %v1281 = vpop.xlane.xlu0 %1280
        %1282 = vadd.xlane.f32.xlu0 %v1233
        %v1283 = vpop.xlane.xlu0 %1282
        %1284 = vadd.xlane.f32.xlu0 %v1238
        %v1285 = vpop.xlane.xlu0 %1284
        %1286 = vadd.xlane.f32.xlu0 %v1241
        %v1287 = vpop.xlane.xlu0 %1286
        %1288 = vadd.xlane.f32.xlu0 %v1246
        %v1289 = vpop.xlane.xlu0 %1288
        %1290 = vadd.xlane.f32.xlu0 %v1249
        %v1291 = vpop.xlane.xlu0 %1290
        %1292 = vadd.xlane.f32.xlu0 %v1254
        %v1293 = vpop.xlane.xlu0 %1292
        %1294 = vadd.xlane.f32.xlu0 %v1257
        %v1295 = vpop.xlane.xlu0 %1294
        %1296 = vadd.xlane.f32.xlu0 %v1262
        %v1297 = vpop.xlane.xlu0 %1296
        %1298 = vadd.xlane.f32.xlu0 %v1265
        %v1299 = vpop.xlane.xlu0 %1298
        %v1300 = vmul.f32 %v1269, 0.03125
        %v1301 = vmul.f32 %v1271, 0.03125
        %v1302 = vmul.f32 %v1273, 0.03125
        %v1303 = vmul.f32 %v1275, 0.03125
        %v1304 = vmul.f32 %v1277, 0.03125
        %v1305 = vmul.f32 %v1279, 0.03125
        %v1306 = vmul.f32 %v1281, 0.03125
        %v1307 = vmul.f32 %v1283, 0.03125
        %v1308 = vmul.f32 %v1285, 0.03125
        %v1309 = vmul.f32 %v1287, 0.03125
        %v1310 = vmul.f32 %v1289, 0.03125
        %v1311 = vmul.f32 %v1291, 0.03125
        %v1312 = vmul.f32 %v1293, 0.03125
        %v1313 = vmul.f32 %v1295, 0.03125
        %v1314 = vmul.f32 %v1297, 0.03125
        %v1315 = vmul.f32 %v1299, 0.03125
        %v1316 = vsub.f32 %v1206, %v1300
        %v1317 = vsub.f32 %v1209, %v1301
        %v1318 = vsub.f32 %v1214, %v1302
        %v1319 = vsub.f32 %v1217, %v1303
        %v1320 = vsub.f32 %v1222, %v1304
        %v1321 = vsub.f32 %v1225, %v1305
        %v1322 = vsub.f32 %v1230, %v1306
        %v1323 = vsub.f32 %v1233, %v1307
        %v1324 = vsub.f32 %v1238, %v1308
        %v1325 = vsub.f32 %v1241, %v1309
        %v1326 = vsub.f32 %v1246, %v1310
        %v1327 = vsub.f32 %v1249, %v1311
        %v1328 = vsub.f32 %v1254, %v1312
        %v1329 = vsub.f32 %v1257, %v1313
        %v1330 = vsub.f32 %v1262, %v1314
        %v1331 = vsub.f32 %v1265, %v1315
        %v1332 = vsel %vm518, %v1316, 0.0
        %v1333 = vsel %vm518, %v1317, 0.0
        %v1334 = vsel %vm518, %v1318, 0.0
        %v1335 = vsel %vm518, %v1319, 0.0
        %v1336 = vsel %vm518, %v1320, 0.0
        %v1337 = vsel %vm518, %v1321, 0.0
        %v1338 = vsel %vm518, %v1322, 0.0
        %v1339 = vsel %vm518, %v1323, 0.0
        %v1340 = vsel %vm518, %v1324, 0.0
        %v1341 = vsel %vm518, %v1325, 0.0
        %v1342 = vsel %vm518, %v1326, 0.0
        %v1343 = vsel %vm518, %v1327, 0.0
        %v1344 = vsel %vm518, %v1328, 0.0
        %v1345 = vsel %vm518, %v1329, 0.0
        %v1346 = vsel %vm518, %v1330, 0.0
        %v1347 = vsel %vm518, %v1331, 0.0
        %v1348 = vmul.f32 %v1332, %v1332
        %v1349 = vmul.f32 %v1333, %v1333
        %v1350 = vmul.f32 %v1334, %v1334
        %v1351 = vmul.f32 %v1335, %v1335
        %v1352 = vmul.f32 %v1336, %v1336
        %v1353 = vmul.f32 %v1337, %v1337
        %v1354 = vmul.f32 %v1338, %v1338
        %v1355 = vmul.f32 %v1339, %v1339
        %v1356 = vmul.f32 %v1340, %v1340
        %v1357 = vmul.f32 %v1341, %v1341
        %v1358 = vmul.f32 %v1342, %v1342
        %v1359 = vmul.f32 %v1343, %v1343
        %v1360 = vmul.f32 %v1344, %v1344
        %v1361 = vmul.f32 %v1345, %v1345
        %v1362 = vmul.f32 %v1346, %v1346
        %v1363 = vmul.f32 %v1347, %v1347
        %1364 = vadd.xlane.f32.xlu0 %v1348
        %v1365 = vpop.xlane.xlu0 %1364
        %1366 = vadd.xlane.f32.xlu0 %v1349
        %v1367 = vpop.xlane.xlu0 %1366
        %1368 = vadd.xlane.f32.xlu0 %v1350
        %v1369 = vpop.xlane.xlu0 %1368
        %1370 = vadd.xlane.f32.xlu0 %v1351
        %v1371 = vpop.xlane.xlu0 %1370
        %1372 = vadd.xlane.f32.xlu0 %v1352
        %v1373 = vpop.xlane.xlu0 %1372
        %1374 = vadd.xlane.f32.xlu0 %v1353
        %v1375 = vpop.xlane.xlu0 %1374
        %1376 = vadd.xlane.f32.xlu0 %v1354
        %v1377 = vpop.xlane.xlu0 %1376
        %1378 = vadd.xlane.f32.xlu0 %v1355
        %v1379 = vpop.xlane.xlu0 %1378
        %1380 = vadd.xlane.f32.xlu0 %v1356
        %v1381 = vpop.xlane.xlu0 %1380
        %1382 = vadd.xlane.f32.xlu0 %v1357
        %v1383 = vpop.xlane.xlu0 %1382
        %1384 = vadd.xlane.f32.xlu0 %v1358
        %v1385 = vpop.xlane.xlu0 %1384
        %1386 = vadd.xlane.f32.xlu0 %v1359
        %v1387 = vpop.xlane.xlu0 %1386
        %1388 = vadd.xlane.f32.xlu0 %v1360
        %v1389 = vpop.xlane.xlu0 %1388
        %1390 = vadd.xlane.f32.xlu0 %v1361
        %v1391 = vpop.xlane.xlu0 %1390
        %1392 = vadd.xlane.f32.xlu0 %v1362
        %v1393 = vpop.xlane.xlu0 %1392
        %1394 = vadd.xlane.f32.xlu0 %v1363
        %v1395 = vpop.xlane.xlu0 %1394
        %v1396 = vmul.f32 %v1365, 0.03125
        %v1397 = vmul.f32 %v1367, 0.03125
        %v1398 = vmul.f32 %v1369, 0.03125
        %v1399 = vmul.f32 %v1371, 0.03125
        %v1400 = vmul.f32 %v1373, 0.03125
        %v1401 = vmul.f32 %v1375, 0.03125
        %v1402 = vmul.f32 %v1377, 0.03125
        %v1403 = vmul.f32 %v1379, 0.03125
        %v1404 = vmul.f32 %v1381, 0.03125
        %v1405 = vmul.f32 %v1383, 0.03125
        %v1406 = vmul.f32 %v1385, 0.03125
        %v1407 = vmul.f32 %v1387, 0.03125
        %v1408 = vmul.f32 %v1389, 0.03125
        %v1409 = vmul.f32 %v1391, 0.03125
        %v1410 = vmul.f32 %v1393, 0.03125
        %v1411 = vmul.f32 %v1395, 0.03125
        %v1412 = vadd.f32 %v1396, 1e-05
        %v1413 = vadd.f32 %v1397, 1e-05
        %v1414 = vadd.f32 %v1398, 1e-05
        %v1415 = vadd.f32 %v1399, 1e-05
        %v1416 = vadd.f32 %v1400, 1e-05
        %v1417 = vadd.f32 %v1401, 1e-05
        %v1418 = vadd.f32 %v1402, 1e-05
        %v1419 = vadd.f32 %v1403, 1e-05
        %v1420 = vadd.f32 %v1404, 1e-05
        %v1421 = vadd.f32 %v1405, 1e-05
        %v1422 = vadd.f32 %v1406, 1e-05
        %v1423 = vadd.f32 %v1407, 1e-05
        %v1424 = vadd.f32 %v1408, 1e-05
        %v1425 = vadd.f32 %v1409, 1e-05
        %v1426 = vadd.f32 %v1410, 1e-05
        %v1427 = vadd.f32 %v1411, 1e-05
        %v1428 = vrsqrt.pop %v1412
        %v1429 = vrsqrt.pop %v1413
        %v1430 = vrsqrt.pop %v1414
        %v1431 = vrsqrt.pop %v1415
        %v1432 = vrsqrt.pop %v1416
        %v1433 = vrsqrt.pop %v1417
        %v1434 = vrsqrt.pop %v1418
        %v1435 = vrsqrt.pop %v1419
        %v1436 = vrsqrt.pop %v1420
        %v1437 = vrsqrt.pop %v1421
        %v1438 = vrsqrt.pop %v1422
        %v1439 = vrsqrt.pop %v1423
        %v1440 = vrsqrt.pop %v1424
        %v1441 = vrsqrt.pop %v1425
        %v1442 = vrsqrt.pop %v1426
        %v1443 = vrsqrt.pop %v1427
        %v1444 = vmul.f32 %v1332, %v1428
        %v1445 = vmul.f32 %v1333, %v1429
        %v1446 = vmul.f32 %v1334, %v1430
        %v1447 = vmul.f32 %v1335, %v1431
        %v1448 = vmul.f32 %v1336, %v1432
        %v1449 = vmul.f32 %v1337, %v1433
        %v1450 = vmul.f32 %v1338, %v1434
        %v1451 = vmul.f32 %v1339, %v1435
        %v1452 = vmul.f32 %v1340, %v1436
        %v1453 = vmul.f32 %v1341, %v1437
        %v1454 = vmul.f32 %v1342, %v1438
        %v1455 = vmul.f32 %v1343, %v1439
        %v1456 = vmul.f32 %v1344, %v1440
        %v1457 = vmul.f32 %v1345, %v1441
        %v1458 = vmul.f32 %v1346, %v1442
        %v1459 = vmul.f32 %v1347, %v1443
        %v1460 = vmul.f32 %v1444, %v650
        %v1461 = vmul.f32 %v1445, %v650
        %v1462 = vmul.f32 %v1446, %v650
        %v1463 = vmul.f32 %v1447, %v650
        %v1464 = vmul.f32 %v1448, %v650
        %v1465 = vmul.f32 %v1449, %v650
        %v1466 = vmul.f32 %v1450, %v650
        %v1467 = vmul.f32 %v1451, %v650
        %v1468 = vmul.f32 %v1452, %v650
        %v1469 = vmul.f32 %v1453, %v650
        %v1470 = vmul.f32 %v1454, %v650
        %v1471 = vmul.f32 %v1455, %v650
        %v1472 = vmul.f32 %v1456, %v650
        %v1473 = vmul.f32 %v1457, %v650
        %v1474 = vmul.f32 %v1458, %v650
        %v1475 = vmul.f32 %v1459, %v650
        %v1476 = vadd.f32 %v1460, %v670
        %v1477 = vadd.f32 %v1461, %v670
        %v1478 = vadd.f32 %v1462, %v670
        %v1479 = vadd.f32 %v1463, %v670
        %v1480 = vadd.f32 %v1464, %v670
        %v1481 = vadd.f32 %v1465, %v670
        %v1482 = vadd.f32 %v1466, %v670
        %v1483 = vadd.f32 %v1467, %v670
        %v1484 = vadd.f32 %v1468, %v670
        %v1485 = vadd.f32 %v1469, %v670
        %v1486 = vadd.f32 %v1470, %v670
        %v1487 = vadd.f32 %v1471, %v670
        %v1488 = vadd.f32 %v1472, %v670
        %v1489 = vadd.f32 %v1473, %v670
        %v1490 = vadd.f32 %v1474, %v670
        %v1491 = vadd.f32 %v1475, %v670
        %v1492 = vpack.c.bf16 %v1477, %v1476
        %v1493 = vpack.c.bf16 %v1479, %v1478
        %v1494 = vpack.c.bf16 %v1481, %v1480
        %v1495 = vpack.c.bf16 %v1483, %v1482
        %v1496 = vpack.c.bf16 %v1485, %v1484
        %v1497 = vpack.c.bf16 %v1487, %v1486
        %v1498 = vpack.c.bf16 %v1489, %v1488
        %v1499 = vpack.c.bf16 %v1491, %v1490
        %s1500 = scalar_lea.vmem [#allocation2], 128
        %1501 = vst [vmem:[%s1500] sm:$0xff] %v1492
        %1502 = vst [vmem:[%s1500 + $0x8] sm:$0xff] %v1493
        %1503 = vst [vmem:[%s1500 + $0x10] sm:$0xff] %v1494
        %1504 = vst [vmem:[%s1500 + $0x18] sm:$0xff] %v1495
        %1505 = vst [vmem:[%s1500 + $0x20] sm:$0xff] %v1496
        %1506 = vst [vmem:[%s1500 + $0x28] sm:$0xff] %v1497
        %1507 = vst [vmem:[%s1500 + $0x30] sm:$0xff] %v1498
        %1508 = vst [vmem:[%s1500 + $0x38] sm:$0xff] %v1499
        %s1509 = scalar_lea.vmem %s222, 192
        %v1510 = vld [vmem:[%s1509] sm:$0xf]
        %v1511 = vld [vmem:[%s1509 + $0x4] sm:$0xf]
        %v1512 = vld [vmem:[%s1509 + $0x8] sm:$0xf]
        %v1513 = vld [vmem:[%s1509 + $0xc] sm:$0xf]
        %v1514 = vld [vmem:[%s1509 + $0x10] sm:$0xf]
        %v1515 = vld [vmem:[%s1509 + $0x14] sm:$0xf]
        %v1516 = vld [vmem:[%s1509 + $0x18] sm:$0xf]
        %v1517 = vld [vmem:[%s1509 + $0x1c] sm:$0xf]
        %v1518 = vld [vmem:[%s1509 + $0x20] sm:$0xf]
        %v1519 = vld [vmem:[%s1509 + $0x24] sm:$0xf]
        %v1520 = vld [vmem:[%s1509 + $0x28] sm:$0xf]
        %v1521 = vld [vmem:[%s1509 + $0x2c] sm:$0xf]
        %v1522 = vld [vmem:[%s1509 + $0x30] sm:$0xf]
        %v1523 = vld [vmem:[%s1509 + $0x34] sm:$0xf]
        %v1524 = vld [vmem:[%s1509 + $0x38] sm:$0xf]
        %v1525 = vld [vmem:[%s1509 + $0x3c] sm:$0xf]
        %v1542 = vunpack.c.l.b16 %v1510
        %v1543 = vunpack.c.l.b16 %v1511
        %v1544 = vunpack.c.l.b16 %v1512
        %v1545 = vunpack.c.l.b16 %v1513
        %v1546 = vunpack.c.l.b16 %v1514
        %v1547 = vunpack.c.l.b16 %v1515
        %v1548 = vunpack.c.l.b16 %v1516
        %v1549 = vunpack.c.l.b16 %v1517
        %v1550 = vunpack.c.l.b16 %v1518
        %v1551 = vunpack.c.l.b16 %v1519
        %v1552 = vunpack.c.l.b16 %v1520
        %v1553 = vunpack.c.l.b16 %v1521
        %v1554 = vunpack.c.l.b16 %v1522
        %v1555 = vunpack.c.l.b16 %v1523
        %v1556 = vunpack.c.l.b16 %v1524
        %v1557 = vunpack.c.l.b16 %v1525
        %v1558 = vpack.c.b16 %v1543, %v1542
        %v1559 = vpack.c.b16 %v1545, %v1544
        %v1560 = vpack.c.b16 %v1547, %v1546
        %v1561 = vpack.c.b16 %v1549, %v1548
        %v1562 = vpack.c.b16 %v1551, %v1550
        %v1563 = vpack.c.b16 %v1553, %v1552
        %v1564 = vpack.c.b16 %v1555, %v1554
        %v1565 = vpack.c.b16 %v1557, %v1556
        %1574 = vmatprep.subr.bf16.mxu0 0
        %1575 = vmatpush1.bf16.msra.mxu0 %v340
        %1576 = vmatprep.subr.bf16.mxu0 0
        %1577 = vmatpush1.bf16.msra.mxu0 %v341
        %1578 = vmatprep.subr.bf16.mxu0 0
        %1579 = vmatpush1.bf16.msra.mxu0 %v342
        %1580 = vmatprep.subr.bf16.mxu0 0
        %1581 = vmatpush1.bf16.msra.mxu0 %v343
        %1582 = vmatprep.subr.bf16.mxu0 0
        %1583 = vmatpush1.bf16.msra.mxu0 %v344
        %1584 = vmatprep.subr.bf16.mxu0 0
        %1585 = vmatpush1.bf16.msra.mxu0 %v345
        %1586 = vmatprep.subr.bf16.mxu0 0
        %1587 = vmatpush1.bf16.msra.mxu0 %v346
        %1588 = vmatprep.subr.bf16.mxu0 0
        %1589 = vmatpush1.bf16.msra.mxu0 %v347
        %1590 = vmatprep.subr.bf16.mxu0 0
        %1591 = vmatpush1.bf16.msra.mxu0 0
        %1592 = vmatprep.subr.bf16.mxu0 0
        %1593 = vmatpush1.bf16.msra.mxu0 0
        %1594 = vmatprep.subr.bf16.mxu0 0
        %1595 = vmatpush1.bf16.msra.mxu0 0
        %1596 = vmatprep.subr.bf16.mxu0 0
        %1597 = vmatpush1.bf16.msra.mxu0 0
        %1598 = vmatprep.subr.bf16.mxu0 0
        %1599 = vmatpush1.bf16.msra.mxu0 0
        %1600 = vmatprep.subr.bf16.mxu0 0
        %1601 = vmatpush1.bf16.msra.mxu0 0
        %1602 = vmatprep.subr.bf16.mxu0 0
        %1603 = vmatpush1.bf16.msra.mxu0 0
        %1604 = vmatprep.subr.bf16.mxu0 0
        %1605 = vmatpush1.bf16.msra.mxu0 0
        %1606 = vmatprep.mubr.bf16.mxu0 0
        %1607 = vmatmul.mubr.bf16.gmra.mrb[0].mxu0 %v1558
        %v1608 = vpop.f32.mrb[0].mxu0
        %v1609 = vadd.f32 0.0, %v1608
        %v1610 = vpop.f32.mrb[0].mxu0
        %v1611 = vpop.f32.mrb[0].mxu0
        %v1612 = vadd.f32 0.0, %v1611
        %v1613 = vpop.f32.mrb[0].mxu0
        %1614 = vmatprep.mubr.bf16.mxu0 0
        %1615 = vmatmul.mubr.bf16.gmra.mrb[0].mxu0 %v1559
        %v1616 = vpop.f32.mrb[0].mxu0
        %v1617 = vadd.f32 0.0, %v1616
        %v1618 = vpop.f32.mrb[0].mxu0
        %v1619 = vpop.f32.mrb[0].mxu0
        %v1620 = vadd.f32 0.0, %v1619
        %v1621 = vpop.f32.mrb[0].mxu0
        %1622 = vmatprep.mubr.bf16.mxu0 0
        %1623 = vmatmul.mubr.bf16.gmra.mrb[0].mxu0 %v1560
        %v1624 = vpop.f32.mrb[0].mxu0
        %v1625 = vadd.f32 0.0, %v1624
        %v1626 = vpop.f32.mrb[0].mxu0
        %v1627 = vpop.f32.mrb[0].mxu0
        %v1628 = vadd.f32 0.0, %v1627
        %v1629 = vpop.f32.mrb[0].mxu0
        %1630 = vmatprep.mubr.bf16.mxu0 0
        %1631 = vmatmul.mubr.bf16.gmra.mrb[0].mxu0 %v1561
        %v1632 = vpop.f32.mrb[0].mxu0
        %v1633 = vadd.f32 0.0, %v1632
        %v1634 = vpop.f32.mrb[0].mxu0
        %v1635 = vpop.f32.mrb[0].mxu0
        %v1636 = vadd.f32 0.0, %v1635
        %v1637 = vpop.f32.mrb[0].mxu0
        %1638 = vmatprep.mubr.bf16.mxu0 0
        %1639 = vmatmul.mubr.bf16.gmra.mrb[0].mxu0 %v1562
        %v1640 = vpop.f32.mrb[0].mxu0
        %v1641 = vadd.f32 0.0, %v1640
        %v1642 = vpop.f32.mrb[0].mxu0
        %v1643 = vpop.f32.mrb[0].mxu0
        %v1644 = vadd.f32 0.0, %v1643
        %v1645 = vpop.f32.mrb[0].mxu0
        %1646 = vmatprep.mubr.bf16.mxu0 0
        %1647 = vmatmul.mubr.bf16.gmra.mrb[0].mxu0 %v1563
        %v1648 = vpop.f32.mrb[0].mxu0
        %v1649 = vadd.f32 0.0, %v1648
        %v1650 = vpop.f32.mrb[0].mxu0
        %v1651 = vpop.f32.mrb[0].mxu0
        %v1652 = vadd.f32 0.0, %v1651
        %v1653 = vpop.f32.mrb[0].mxu0
        %1654 = vmatprep.mubr.bf16.mxu0 0
        %1655 = vmatmul.mubr.bf16.gmra.mrb[0].mxu0 %v1564
        %v1656 = vpop.f32.mrb[0].mxu0
        %v1657 = vadd.f32 0.0, %v1656
        %v1658 = vpop.f32.mrb[0].mxu0
        %v1659 = vpop.f32.mrb[0].mxu0
        %v1660 = vadd.f32 0.0, %v1659
        %v1661 = vpop.f32.mrb[0].mxu0
        %1662 = vmatprep.mubr.bf16.mxu0 0
        %1663 = vmatmul.mubr.bf16.gmra.mrb[0].mxu0 %v1565
        %v1664 = vpop.f32.mrb[0].mxu0
        %v1665 = vadd.f32 0.0, %v1664
        %v1666 = vpop.f32.mrb[0].mxu0
        %v1667 = vpop.f32.mrb[0].mxu0
        %v1668 = vadd.f32 0.0, %v1667
        %v1669 = vpop.f32.mrb[0].mxu0
        %1670 = vdwg.mxu0
        %1671 = vadd.xlane.f32.xlu0 %v1609
        %v1672 = vpop.xlane.xlu0 %1671
        %1673 = vadd.xlane.f32.xlu0 %v1612
        %v1674 = vpop.xlane.xlu0 %1673
        %1675 = vadd.xlane.f32.xlu0 %v1617
        %v1676 = vpop.xlane.xlu0 %1675
        %1677 = vadd.xlane.f32.xlu0 %v1620
        %v1678 = vpop.xlane.xlu0 %1677
        %1679 = vadd.xlane.f32.xlu0 %v1625
        %v1680 = vpop.xlane.xlu0 %1679
        %1681 = vadd.xlane.f32.xlu0 %v1628
        %v1682 = vpop.xlane.xlu0 %1681
        %1683 = vadd.xlane.f32.xlu0 %v1633
        %v1684 = vpop.xlane.xlu0 %1683
        %1685 = vadd.xlane.f32.xlu0 %v1636
        %v1686 = vpop.xlane.xlu0 %1685
        %1687 = vadd.xlane.f32.xlu0 %v1641
        %v1688 = vpop.xlane.xlu0 %1687
        %1689 = vadd.xlane.f32.xlu0 %v1644
        %v1690 = vpop.xlane.xlu0 %1689
        %1691 = vadd.xlane.f32.xlu0 %v1649
        %v1692 = vpop.xlane.xlu0 %1691
        %1693 = vadd.xlane.f32.xlu0 %v1652
        %v1694 = vpop.xlane.xlu0 %1693
        %1695 = vadd.xlane.f32.xlu0 %v1657
        %v1696 = vpop.xlane.xlu0 %1695
        %1697 = vadd.xlane.f32.xlu0 %v1660
        %v1698 = vpop.xlane.xlu0 %1697
        %1699 = vadd.xlane.f32.xlu0 %v1665
        %v1700 = vpop.xlane.xlu0 %1699
        %1701 = vadd.xlane.f32.xlu0 %v1668
        %v1702 = vpop.xlane.xlu0 %1701
        %v1703 = vmul.f32 %v1672, 0.03125
        %v1704 = vmul.f32 %v1674, 0.03125
        %v1705 = vmul.f32 %v1676, 0.03125
        %v1706 = vmul.f32 %v1678, 0.03125
        %v1707 = vmul.f32 %v1680, 0.03125
        %v1708 = vmul.f32 %v1682, 0.03125
        %v1709 = vmul.f32 %v1684, 0.03125
        %v1710 = vmul.f32 %v1686, 0.03125
        %v1711 = vmul.f32 %v1688, 0.03125
        %v1712 = vmul.f32 %v1690, 0.03125
        %v1713 = vmul.f32 %v1692, 0.03125
        %v1714 = vmul.f32 %v1694, 0.03125
        %v1715 = vmul.f32 %v1696, 0.03125
        %v1716 = vmul.f32 %v1698, 0.03125
        %v1717 = vmul.f32 %v1700, 0.03125
        %v1718 = vmul.f32 %v1702, 0.03125
        %v1719 = vsub.f32 %v1609, %v1703
        %v1720 = vsub.f32 %v1612, %v1704
        %v1721 = vsub.f32 %v1617, %v1705
        %v1722 = vsub.f32 %v1620, %v1706
        %v1723 = vsub.f32 %v1625, %v1707
        %v1724 = vsub.f32 %v1628, %v1708
        %v1725 = vsub.f32 %v1633, %v1709
        %v1726 = vsub.f32 %v1636, %v1710
        %v1727 = vsub.f32 %v1641, %v1711
        %v1728 = vsub.f32 %v1644, %v1712
        %v1729 = vsub.f32 %v1649, %v1713
        %v1730 = vsub.f32 %v1652, %v1714
        %v1731 = vsub.f32 %v1657, %v1715
        %v1732 = vsub.f32 %v1660, %v1716
        %v1733 = vsub.f32 %v1665, %v1717
        %v1734 = vsub.f32 %v1668, %v1718
        %v1735 = vsel %vm518, %v1719, 0.0
        %v1736 = vsel %vm518, %v1720, 0.0
        %v1737 = vsel %vm518, %v1721, 0.0
        %v1738 = vsel %vm518, %v1722, 0.0
        %v1739 = vsel %vm518, %v1723, 0.0
        %v1740 = vsel %vm518, %v1724, 0.0
        %v1741 = vsel %vm518, %v1725, 0.0
        %v1742 = vsel %vm518, %v1726, 0.0
        %v1743 = vsel %vm518, %v1727, 0.0
        %v1744 = vsel %vm518, %v1728, 0.0
        %v1745 = vsel %vm518, %v1729, 0.0
        %v1746 = vsel %vm518, %v1730, 0.0
        %v1747 = vsel %vm518, %v1731, 0.0
        %v1748 = vsel %vm518, %v1732, 0.0
        %v1749 = vsel %vm518, %v1733, 0.0
        %v1750 = vsel %vm518, %v1734, 0.0
        %v1751 = vmul.f32 %v1735, %v1735
        %v1752 = vmul.f32 %v1736, %v1736
        %v1753 = vmul.f32 %v1737, %v1737
        %v1754 = vmul.f32 %v1738, %v1738
        %v1755 = vmul.f32 %v1739, %v1739
        %v1756 = vmul.f32 %v1740, %v1740
        %v1757 = vmul.f32 %v1741, %v1741
        %v1758 = vmul.f32 %v1742, %v1742
        %v1759 = vmul.f32 %v1743, %v1743
        %v1760 = vmul.f32 %v1744, %v1744
        %v1761 = vmul.f32 %v1745, %v1745
        %v1762 = vmul.f32 %v1746, %v1746
        %v1763 = vmul.f32 %v1747, %v1747
        %v1764 = vmul.f32 %v1748, %v1748
        %v1765 = vmul.f32 %v1749, %v1749
        %v1766 = vmul.f32 %v1750, %v1750
        %1767 = vadd.xlane.f32.xlu0 %v1751
        %v1768 = vpop.xlane.xlu0 %1767
        %1769 = vadd.xlane.f32.xlu0 %v1752
        %v1770 = vpop.xlane.xlu0 %1769
        %1771 = vadd.xlane.f32.xlu0 %v1753
        %v1772 = vpop.xlane.xlu0 %1771
        %1773 = vadd.xlane.f32.xlu0 %v1754
        %v1774 = vpop.xlane.xlu0 %1773
        %1775 = vadd.xlane.f32.xlu0 %v1755
        %v1776 = vpop.xlane.xlu0 %1775
        %1777 = vadd.xlane.f32.xlu0 %v1756
        %v1778 = vpop.xlane.xlu0 %1777
        %1779 = vadd.xlane.f32.xlu0 %v1757
        %v1780 = vpop.xlane.xlu0 %1779
        %1781 = vadd.xlane.f32.xlu0 %v1758
        %v1782 = vpop.xlane.xlu0 %1781
        %1783 = vadd.xlane.f32.xlu0 %v1759
        %v1784 = vpop.xlane.xlu0 %1783
        %1785 = vadd.xlane.f32.xlu0 %v1760
        %v1786 = vpop.xlane.xlu0 %1785
        %1787 = vadd.xlane.f32.xlu0 %v1761
        %v1788 = vpop.xlane.xlu0 %1787
        %1789 = vadd.xlane.f32.xlu0 %v1762
        %v1790 = vpop.xlane.xlu0 %1789
        %1791 = vadd.xlane.f32.xlu0 %v1763
        %v1792 = vpop.xlane.xlu0 %1791
        %1793 = vadd.xlane.f32.xlu0 %v1764
        %v1794 = vpop.xlane.xlu0 %1793
        %1795 = vadd.xlane.f32.xlu0 %v1765
        %v1796 = vpop.xlane.xlu0 %1795
        %1797 = vadd.xlane.f32.xlu0 %v1766
        %v1798 = vpop.xlane.xlu0 %1797
        %v1799 = vmul.f32 %v1768, 0.03125
        %v1800 = vmul.f32 %v1770, 0.03125
        %v1801 = vmul.f32 %v1772, 0.03125
        %v1802 = vmul.f32 %v1774, 0.03125
        %v1803 = vmul.f32 %v1776, 0.03125
        %v1804 = vmul.f32 %v1778, 0.03125
        %v1805 = vmul.f32 %v1780, 0.03125
        %v1806 = vmul.f32 %v1782, 0.03125
        %v1807 = vmul.f32 %v1784, 0.03125
        %v1808 = vmul.f32 %v1786, 0.03125
        %v1809 = vmul.f32 %v1788, 0.03125
        %v1810 = vmul.f32 %v1790, 0.03125
        %v1811 = vmul.f32 %v1792, 0.03125
        %v1812 = vmul.f32 %v1794, 0.03125
        %v1813 = vmul.f32 %v1796, 0.03125
        %v1814 = vmul.f32 %v1798, 0.03125
        %v1815 = vadd.f32 %v1799, 1e-05
        %v1816 = vadd.f32 %v1800, 1e-05
        %v1817 = vadd.f32 %v1801, 1e-05
        %v1818 = vadd.f32 %v1802, 1e-05
        %v1819 = vadd.f32 %v1803, 1e-05
        %v1820 = vadd.f32 %v1804, 1e-05
        %v1821 = vadd.f32 %v1805, 1e-05
        %v1822 = vadd.f32 %v1806, 1e-05
        %v1823 = vadd.f32 %v1807, 1e-05
        %v1824 = vadd.f32 %v1808, 1e-05
        %v1825 = vadd.f32 %v1809, 1e-05
        %v1826 = vadd.f32 %v1810, 1e-05
        %v1827 = vadd.f32 %v1811, 1e-05
        %v1828 = vadd.f32 %v1812, 1e-05
        %v1829 = vadd.f32 %v1813, 1e-05
        %v1830 = vadd.f32 %v1814, 1e-05
        %v1831 = vrsqrt.pop %v1815
        %v1832 = vrsqrt.pop %v1816
        %v1833 = vrsqrt.pop %v1817
        %v1834 = vrsqrt.pop %v1818
        %v1835 = vrsqrt.pop %v1819
        %v1836 = vrsqrt.pop %v1820
        %v1837 = vrsqrt.pop %v1821
        %v1838 = vrsqrt.pop %v1822
        %v1839 = vrsqrt.pop %v1823
        %v1840 = vrsqrt.pop %v1824
        %v1841 = vrsqrt.pop %v1825
        %v1842 = vrsqrt.pop %v1826
        %v1843 = vrsqrt.pop %v1827
        %v1844 = vrsqrt.pop %v1828
        %v1845 = vrsqrt.pop %v1829
        %v1846 = vrsqrt.pop %v1830
        %v1847 = vmul.f32 %v1735, %v1831
        %v1848 = vmul.f32 %v1736, %v1832
        %v1849 = vmul.f32 %v1737, %v1833
        %v1850 = vmul.f32 %v1738, %v1834
        %v1851 = vmul.f32 %v1739, %v1835
        %v1852 = vmul.f32 %v1740, %v1836
        %v1853 = vmul.f32 %v1741, %v1837
        %v1854 = vmul.f32 %v1742, %v1838
        %v1855 = vmul.f32 %v1743, %v1839
        %v1856 = vmul.f32 %v1744, %v1840
        %v1857 = vmul.f32 %v1745, %v1841
        %v1858 = vmul.f32 %v1746, %v1842
        %v1859 = vmul.f32 %v1747, %v1843
        %v1860 = vmul.f32 %v1748, %v1844
        %v1861 = vmul.f32 %v1749, %v1845
        %v1862 = vmul.f32 %v1750, %v1846
        %v1863 = vmul.f32 %v1847, %v650
        %v1864 = vmul.f32 %v1848, %v650
        %v1865 = vmul.f32 %v1849, %v650
        %v1866 = vmul.f32 %v1850, %v650
        %v1867 = vmul.f32 %v1851, %v650
        %v1868 = vmul.f32 %v1852, %v650
        %v1869 = vmul.f32 %v1853, %v650
        %v1870 = vmul.f32 %v1854, %v650
        %v1871 = vmul.f32 %v1855, %v650
        %v1872 = vmul.f32 %v1856, %v650
        %v1873 = vmul.f32 %v1857, %v650
        %v1874 = vmul.f32 %v1858, %v650
        %v1875 = vmul.f32 %v1859, %v650
        %v1876 = vmul.f32 %v1860, %v650
        %v1877 = vmul.f32 %v1861, %v650
        %v1878 = vmul.f32 %v1862, %v650
        %v1879 = vadd.f32 %v1863, %v670
        %v1880 = vadd.f32 %v1864, %v670
        %v1881 = vadd.f32 %v1865, %v670
        %v1882 = vadd.f32 %v1866, %v670
        %v1883 = vadd.f32 %v1867, %v670
        %v1884 = vadd.f32 %v1868, %v670
        %v1885 = vadd.f32 %v1869, %v670
        %v1886 = vadd.f32 %v1870, %v670
        %v1887 = vadd.f32 %v1871, %v670
        %v1888 = vadd.f32 %v1872, %v670
        %v1889 = vadd.f32 %v1873, %v670
        %v1890 = vadd.f32 %v1874, %v670
        %v1891 = vadd.f32 %v1875, %v670
        %v1892 = vadd.f32 %v1876, %v670
        %v1893 = vadd.f32 %v1877, %v670
        %v1894 = vadd.f32 %v1878, %v670
        %v1895 = vpack.c.bf16 %v1880, %v1879
        %v1896 = vpack.c.bf16 %v1882, %v1881
        %v1897 = vpack.c.bf16 %v1884, %v1883
        %v1898 = vpack.c.bf16 %v1886, %v1885
        %v1899 = vpack.c.bf16 %v1888, %v1887
        %v1900 = vpack.c.bf16 %v1890, %v1889
        %v1901 = vpack.c.bf16 %v1892, %v1891
        %v1902 = vpack.c.bf16 %v1894, %v1893
        %s1903 = scalar_lea.vmem [#allocation2], 192
        %1904 = vst [vmem:[%s1903] sm:$0xff] %v1895
        %1905 = vst [vmem:[%s1903 + $0x8] sm:$0xff] %v1896
        %1906 = vst [vmem:[%s1903 + $0x10] sm:$0xff] %v1897
        %1907 = vst [vmem:[%s1903 + $0x18] sm:$0xff] %v1898
        %1908 = vst [vmem:[%s1903 + $0x20] sm:$0xff] %v1899
        %1909 = vst [vmem:[%s1903 + $0x28] sm:$0xff] %v1900
        %1910 = vst [vmem:[%s1903 + $0x30] sm:$0xff] %v1901
        %1911 = vst [vmem:[%s1903 + $0x38] sm:$0xff] %v1902
        %s1912 = scalar_lea.vmem %s222, 256
        %v1913 = vld [vmem:[%s1912] sm:$0xf]
        %v1914 = vld [vmem:[%s1912 + $0x4] sm:$0xf]
        %v1915 = vld [vmem:[%s1912 + $0x8] sm:$0xf]
        %v1916 = vld [vmem:[%s1912 + $0xc] sm:$0xf]
        %v1917 = vld [vmem:[%s1912 + $0x10] sm:$0xf]
        %v1918 = vld [vmem:[%s1912 + $0x14] sm:$0xf]
        %v1919 = vld [vmem:[%s1912 + $0x18] sm:$0xf]
        %v1920 = vld [vmem:[%s1912 + $0x1c] sm:$0xf]
        %v1921 = vld [vmem:[%s1912 + $0x20] sm:$0xf]
        %v1922 = vld [vmem:[%s1912 + $0x24] sm:$0xf]
        %v1923 = vld [vmem:[%s1912 + $0x28] sm:$0xf]
        %v1924 = vld [vmem:[%s1912 + $0x2c] sm:$0xf]
        %v1925 = vld [vmem:[%s1912 + $0x30] sm:$0xf]
        %v1926 = vld [vmem:[%s1912 + $0x34] sm:$0xf]
        %v1927 = vld [vmem:[%s1912 + $0x38] sm:$0xf]
        %v1928 = vld [vmem:[%s1912 + $0x3c] sm:$0xf]
        %v1945 = vunpack.c.l.b16 %v1913
        %v1946 = vunpack.c.l.b16 %v1914
        %v1947 = vunpack.c.l.b16 %v1915
        %v1948 = vunpack.c.l.b16 %v1916
        %v1949 = vunpack.c.l.b16 %v1917
        %v1950 = vunpack.c.l.b16 %v1918
        %v1951 = vunpack.c.l.b16 %v1919
        %v1952 = vunpack.c.l.b16 %v1920
        %v1953 = vunpack.c.l.b16 %v1921
        %v1954 = vunpack.c.l.b16 %v1922
        %v1955 = vunpack.c.l.b16 %v1923
        %v1956 = vunpack.c.l.b16 %v1924
        %v1957 = vunpack.c.l.b16 %v1925
        %v1958 = vunpack.c.l.b16 %v1926
        %v1959 = vunpack.c.l.b16 %v1927
        %v1960 = vunpack.c.l.b16 %v1928
        %v1961 = vpack.c.b16 %v1946, %v1945
        %v1962 = vpack.c.b16 %v1948, %v1947
        %v1963 = vpack.c.b16 %v1950, %v1949
        %v1964 = vpack.c.b16 %v1952, %v1951
        %v1965 = vpack.c.b16 %v1954, %v1953
        %v1966 = vpack.c.b16 %v1956, %v1955
        %v1967 = vpack.c.b16 %v1958, %v1957
        %v1968 = vpack.c.b16 %v1960, %v1959
        %1977 = vmatprep.subr.bf16.mxu0 0
        %1978 = vmatpush1.bf16.msra.mxu0 %v340
        %1979 = vmatprep.subr.bf16.mxu0 0
        %1980 = vmatpush1.bf16.msra.mxu0 %v341
        %1981 = vmatprep.subr.bf16.mxu0 0
        %1982 = vmatpush1.bf16.msra.mxu0 %v342
        %1983 = vmatprep.subr.bf16.mxu0 0
        %1984 = vmatpush1.bf16.msra.mxu0 %v343
        %1985 = vmatprep.subr.bf16.mxu0 0
        %1986 = vmatpush1.bf16.msra.mxu0 %v344
        %1987 = vmatprep.subr.bf16.mxu0 0
        %1988 = vmatpush1.bf16.msra.mxu0 %v345
        %1989 = vmatprep.subr.bf16.mxu0 0
        %1990 = vmatpush1.bf16.msra.mxu0 %v346
        %1991 = vmatprep.subr.bf16.mxu0 0
        %1992 = vmatpush1.bf16.msra.mxu0 %v347
        %1993 = vmatprep.subr.bf16.mxu0 0
        %1994 = vmatpush1.bf16.msra.mxu0 0
        %1995 = vmatprep.subr.bf16.mxu0 0
        %1996 = vmatpush1.bf16.msra.mxu0 0
        %1997 = vmatprep.subr.bf16.mxu0 0
        %1998 = vmatpush1.bf16.msra.mxu0 0
        %1999 = vmatprep.subr.bf16.mxu0 0
        %2000 = vmatpush1.bf16.msra.mxu0 0
        %2001 = vmatprep.subr.bf16.mxu0 0
        %2002 = vmatpush1.bf16.msra.mxu0 0
        %2003 = vmatprep.subr.bf16.mxu0 0
        %2004 = vmatpush1.bf16.msra.mxu0 0
        %2005 = vmatprep.subr.bf16.mxu0 0
        %2006 = vmatpush1.bf16.msra.mxu0 0
        %2007 = vmatprep.subr.bf16.mxu0 0
        %2008 = vmatpush1.bf16.msra.mxu0 0
        %2009 = vmatprep.mubr.bf16.mxu0 0
        %2010 = vmatmul.mubr.bf16.gmra.mrb[0].mxu0 %v1961
        %v2011 = vpop.f32.mrb[0].mxu0
        %v2012 = vadd.f32 0.0, %v2011
        %v2013 = vpop.f32.mrb[0].mxu0
        %v2014 = vpop.f32.mrb[0].mxu0
        %v2015 = vadd.f32 0.0, %v2014
        %v2016 = vpop.f32.mrb[0].mxu0
        %2017 = vmatprep.mubr.bf16.mxu0 0
        %2018 = vmatmul.mubr.bf16.gmra.mrb[0].mxu0 %v1962
        %v2019 = vpop.f32.mrb[0].mxu0
        %v2020 = vadd.f32 0.0, %v2019
        %v2021 = vpop.f32.mrb[0].mxu0
        %v2022 = vpop.f32.mrb[0].mxu0
        %v2023 = vadd.f32 0.0, %v2022
        %v2024 = vpop.f32.mrb[0].mxu0
        %2025 = vmatprep.mubr.bf16.mxu0 0
        %2026 = vmatmul.mubr.bf16.gmra.mrb[0].mxu0 %v1963
        %v2027 = vpop.f32.mrb[0].mxu0
        %v2028 = vadd.f32 0.0, %v2027
        %v2029 = vpop.f32.mrb[0].mxu0
        %v2030 = vpop.f32.mrb[0].mxu0
        %v2031 = vadd.f32 0.0, %v2030
        %v2032 = vpop.f32.mrb[0].mxu0
        %2033 = vmatprep.mubr.bf16.mxu0 0
        %2034 = vmatmul.mubr.bf16.gmra.mrb[0].mxu0 %v1964
        %v2035 = vpop.f32.mrb[0].mxu0
        %v2036 = vadd.f32 0.0, %v2035
        %v2037 = vpop.f32.mrb[0].mxu0
        %v2038 = vpop.f32.mrb[0].mxu0
        %v2039 = vadd.f32 0.0, %v2038
        %v2040 = vpop.f32.mrb[0].mxu0
        %2041 = vmatprep.mubr.bf16.mxu0 0
        %2042 = vmatmul.mubr.bf16.gmra.mrb[0].mxu0 %v1965
        %v2043 = vpop.f32.mrb[0].mxu0
        %v2044 = vadd.f32 0.0, %v2043
        %v2045 = vpop.f32.mrb[0].mxu0
        %v2046 = vpop.f32.mrb[0].mxu0
        %v2047 = vadd.f32 0.0, %v2046
        %v2048 = vpop.f32.mrb[0].mxu0
        %2049 = vmatprep.mubr.bf16.mxu0 0
        %2050 = vmatmul.mubr.bf16.gmra.mrb[0].mxu0 %v1966
        %v2051 = vpop.f32.mrb[0].mxu0
        %v2052 = vadd.f32 0.0, %v2051
        %v2053 = vpop.f32.mrb[0].mxu0
        %v2054 = vpop.f32.mrb[0].mxu0
        %v2055 = vadd.f32 0.0, %v2054
        %v2056 = vpop.f32.mrb[0].mxu0
        %2057 = vmatprep.mubr.bf16.mxu0 0
        %2058 = vmatmul.mubr.bf16.gmra.mrb[0].mxu0 %v1967
        %v2059 = vpop.f32.mrb[0].mxu0
        %v2060 = vadd.f32 0.0, %v2059
        %v2061 = vpop.f32.mrb[0].mxu0
        %v2062 = vpop.f32.mrb[0].mxu0
        %v2063 = vadd.f32 0.0, %v2062
        %v2064 = vpop.f32.mrb[0].mxu0
        %2065 = vmatprep.mubr.bf16.mxu0 0
        %2066 = vmatmul.mubr.bf16.gmra.mrb[0].mxu0 %v1968
        %v2067 = vpop.f32.mrb[0].mxu0
        %v2068 = vadd.f32 0.0, %v2067
        %v2069 = vpop.f32.mrb[0].mxu0
        %v2070 = vpop.f32.mrb[0].mxu0
        %v2071 = vadd.f32 0.0, %v2070
        %v2072 = vpop.f32.mrb[0].mxu0
        %2073 = vdwg.mxu0
        %2074 = vadd.xlane.f32.xlu0 %v2012
        %v2075 = vpop.xlane.xlu0 %2074
        %2076 = vadd.xlane.f32.xlu0 %v2015
        %v2077 = vpop.xlane.xlu0 %2076
        %2078 = vadd.xlane.f32.xlu0 %v2020
        %v2079 = vpop.xlane.xlu0 %2078
        %2080 = vadd.xlane.f32.xlu0 %v2023
        %v2081 = vpop.xlane.xlu0 %2080
        %2082 = vadd.xlane.f32.xlu0 %v2028
        %v2083 = vpop.xlane.xlu0 %2082
        %2084 = vadd.xlane.f32.xlu0 %v2031
        %v2085 = vpop.xlane.xlu0 %2084
        %2086 = vadd.xlane.f32.xlu0 %v2036
        %v2087 = vpop.xlane.xlu0 %2086
        %2088 = vadd.xlane.f32.xlu0 %v2039
        %v2089 = vpop.xlane.xlu0 %2088
        %2090 = vadd.xlane.f32.xlu0 %v2044
        %v2091 = vpop.xlane.xlu0 %2090
        %2092 = vadd.xlane.f32.xlu0 %v2047
        %v2093 = vpop.xlane.xlu0 %2092
        %2094 = vadd.xlane.f32.xlu0 %v2052
        %v2095 = vpop.xlane.xlu0 %2094
        %2096 = vadd.xlane.f32.xlu0 %v2055
        %v2097 = vpop.xlane.xlu0 %2096
        %2098 = vadd.xlane.f32.xlu0 %v2060
        %v2099 = vpop.xlane.xlu0 %2098
        %2100 = vadd.xlane.f32.xlu0 %v2063
        %v2101 = vpop.xlane.xlu0 %2100
        %2102 = vadd.xlane.f32.xlu0 %v2068
        %v2103 = vpop.xlane.xlu0 %2102
        %2104 = vadd.xlane.f32.xlu0 %v2071
        %v2105 = vpop.xlane.xlu0 %2104
        %v2106 = vmul.f32 %v2075, 0.03125
        %v2107 = vmul.f32 %v2077, 0.03125
        %v2108 = vmul.f32 %v2079, 0.03125
        %v2109 = vmul.f32 %v2081, 0.03125
        %v2110 = vmul.f32 %v2083, 0.03125
        %v2111 = vmul.f32 %v2085, 0.03125
        %v2112 = vmul.f32 %v2087, 0.03125
        %v2113 = vmul.f32 %v2089, 0.03125
        %v2114 = vmul.f32 %v2091, 0.03125
        %v2115 = vmul.f32 %v2093, 0.03125
        %v2116 = vmul.f32 %v2095, 0.03125
        %v2117 = vmul.f32 %v2097, 0.03125
        %v2118 = vmul.f32 %v2099, 0.03125
        %v2119 = vmul.f32 %v2101, 0.03125
        %v2120 = vmul.f32 %v2103, 0.03125
        %v2121 = vmul.f32 %v2105, 0.03125
        %v2122 = vsub.f32 %v2012, %v2106
        %v2123 = vsub.f32 %v2015, %v2107
        %v2124 = vsub.f32 %v2020, %v2108
        %v2125 = vsub.f32 %v2023, %v2109
        %v2126 = vsub.f32 %v2028, %v2110
        %v2127 = vsub.f32 %v2031, %v2111
        %v2128 = vsub.f32 %v2036, %v2112
        %v2129 = vsub.f32 %v2039, %v2113
        %v2130 = vsub.f32 %v2044, %v2114
        %v2131 = vsub.f32 %v2047, %v2115
        %v2132 = vsub.f32 %v2052, %v2116
        %v2133 = vsub.f32 %v2055, %v2117
        %v2134 = vsub.f32 %v2060, %v2118
        %v2135 = vsub.f32 %v2063, %v2119
        %v2136 = vsub.f32 %v2068, %v2120
        %v2137 = vsub.f32 %v2071, %v2121
        %v2138 = vsel %vm518, %v2122, 0.0
        %v2139 = vsel %vm518, %v2123, 0.0
        %v2140 = vsel %vm518, %v2124, 0.0
        %v2141 = vsel %vm518, %v2125, 0.0
        %v2142 = vsel %vm518, %v2126, 0.0
        %v2143 = vsel %vm518, %v2127, 0.0
        %v2144 = vsel %vm518, %v2128, 0.0
        %v2145 = vsel %vm518, %v2129, 0.0
        %v2146 = vsel %vm518, %v2130, 0.0
        %v2147 = vsel %vm518, %v2131, 0.0
        %v2148 = vsel %vm518, %v2132, 0.0
        %v2149 = vsel %vm518, %v2133, 0.0
        %v2150 = vsel %vm518, %v2134, 0.0
        %v2151 = vsel %vm518, %v2135, 0.0
        %v2152 = vsel %vm518, %v2136, 0.0
        %v2153 = vsel %vm518, %v2137, 0.0
        %v2154 = vmul.f32 %v2138, %v2138
        %v2155 = vmul.f32 %v2139, %v2139
        %v2156 = vmul.f32 %v2140, %v2140
        %v2157 = vmul.f32 %v2141, %v2141
        %v2158 = vmul.f32 %v2142, %v2142
        %v2159 = vmul.f32 %v2143, %v2143
        %v2160 = vmul.f32 %v2144, %v2144
        %v2161 = vmul.f32 %v2145, %v2145
        %v2162 = vmul.f32 %v2146, %v2146
        %v2163 = vmul.f32 %v2147, %v2147
        %v2164 = vmul.f32 %v2148, %v2148
        %v2165 = vmul.f32 %v2149, %v2149
        %v2166 = vmul.f32 %v2150, %v2150
        %v2167 = vmul.f32 %v2151, %v2151
        %v2168 = vmul.f32 %v2152, %v2152
        %v2169 = vmul.f32 %v2153, %v2153
        %2170 = vadd.xlane.f32.xlu0 %v2154
        %v2171 = vpop.xlane.xlu0 %2170
        %2172 = vadd.xlane.f32.xlu0 %v2155
        %v2173 = vpop.xlane.xlu0 %2172
        %2174 = vadd.xlane.f32.xlu0 %v2156
        %v2175 = vpop.xlane.xlu0 %2174
        %2176 = vadd.xlane.f32.xlu0 %v2157
        %v2177 = vpop.xlane.xlu0 %2176
        %2178 = vadd.xlane.f32.xlu0 %v2158
        %v2179 = vpop.xlane.xlu0 %2178
        %2180 = vadd.xlane.f32.xlu0 %v2159
        %v2181 = vpop.xlane.xlu0 %2180
        %2182 = vadd.xlane.f32.xlu0 %v2160
        %v2183 = vpop.xlane.xlu0 %2182
        %2184 = vadd.xlane.f32.xlu0 %v2161
        %v2185 = vpop.xlane.xlu0 %2184
        %2186 = vadd.xlane.f32.xlu0 %v2162
        %v2187 = vpop.xlane.xlu0 %2186
        %2188 = vadd.xlane.f32.xlu0 %v2163
        %v2189 = vpop.xlane.xlu0 %2188
        %2190 = vadd.xlane.f32.xlu0 %v2164
        %v2191 = vpop.xlane.xlu0 %2190
        %2192 = vadd.xlane.f32.xlu0 %v2165
        %v2193 = vpop.xlane.xlu0 %2192
        %2194 = vadd.xlane.f32.xlu0 %v2166
        %v2195 = vpop.xlane.xlu0 %2194
        %2196 = vadd.xlane.f32.xlu0 %v2167
        %v2197 = vpop.xlane.xlu0 %2196
        %2198 = vadd.xlane.f32.xlu0 %v2168
        %v2199 = vpop.xlane.xlu0 %2198
        %2200 = vadd.xlane.f32.xlu0 %v2169
        %v2201 = vpop.xlane.xlu0 %2200
        %v2202 = vmul.f32 %v2171, 0.03125
        %v2203 = vmul.f32 %v2173, 0.03125
        %v2204 = vmul.f32 %v2175, 0.03125
        %v2205 = vmul.f32 %v2177, 0.03125
        %v2206 = vmul.f32 %v2179, 0.03125
        %v2207 = vmul.f32 %v2181, 0.03125
        %v2208 = vmul.f32 %v2183, 0.03125
        %v2209 = vmul.f32 %v2185, 0.03125
        %v2210 = vmul.f32 %v2187, 0.03125
        %v2211 = vmul.f32 %v2189, 0.03125
        %v2212 = vmul.f32 %v2191, 0.03125
        %v2213 = vmul.f32 %v2193, 0.03125
        %v2214 = vmul.f32 %v2195, 0.03125
        %v2215 = vmul.f32 %v2197, 0.03125
        %v2216 = vmul.f32 %v2199, 0.03125
        %v2217 = vmul.f32 %v2201, 0.03125
        %v2218 = vadd.f32 %v2202, 1e-05
        %v2219 = vadd.f32 %v2203, 1e-05
        %v2220 = vadd.f32 %v2204, 1e-05
        %v2221 = vadd.f32 %v2205, 1e-05
        %v2222 = vadd.f32 %v2206, 1e-05
        %v2223 = vadd.f32 %v2207, 1e-05
        %v2224 = vadd.f32 %v2208, 1e-05
        %v2225 = vadd.f32 %v2209, 1e-05
        %v2226 = vadd.f32 %v2210, 1e-05
        %v2227 = vadd.f32 %v2211, 1e-05
        %v2228 = vadd.f32 %v2212, 1e-05
        %v2229 = vadd.f32 %v2213, 1e-05
        %v2230 = vadd.f32 %v2214, 1e-05
        %v2231 = vadd.f32 %v2215, 1e-05
        %v2232 = vadd.f32 %v2216, 1e-05
        %v2233 = vadd.f32 %v2217, 1e-05
        %v2234 = vrsqrt.pop %v2218
        %v2235 = vrsqrt.pop %v2219
        %v2236 = vrsqrt.pop %v2220
        %v2237 = vrsqrt.pop %v2221
        %v2238 = vrsqrt.pop %v2222
        %v2239 = vrsqrt.pop %v2223
        %v2240 = vrsqrt.pop %v2224
        %v2241 = vrsqrt.pop %v2225
        %v2242 = vrsqrt.pop %v2226
        %v2243 = vrsqrt.pop %v2227
        %v2244 = vrsqrt.pop %v2228
        %v2245 = vrsqrt.pop %v2229
        %v2246 = vrsqrt.pop %v2230
        %v2247 = vrsqrt.pop %v2231
        %v2248 = vrsqrt.pop %v2232
        %v2249 = vrsqrt.pop %v2233
        %v2250 = vmul.f32 %v2138, %v2234
        %v2251 = vmul.f32 %v2139, %v2235
        %v2252 = vmul.f32 %v2140, %v2236
        %v2253 = vmul.f32 %v2141, %v2237
        %v2254 = vmul.f32 %v2142, %v2238
        %v2255 = vmul.f32 %v2143, %v2239
        %v2256 = vmul.f32 %v2144, %v2240
        %v2257 = vmul.f32 %v2145, %v2241
        %v2258 = vmul.f32 %v2146, %v2242
        %v2259 = vmul.f32 %v2147, %v2243
        %v2260 = vmul.f32 %v2148, %v2244
        %v2261 = vmul.f32 %v2149, %v2245
        %v2262 = vmul.f32 %v2150, %v2246
        %v2263 = vmul.f32 %v2151, %v2247
        %v2264 = vmul.f32 %v2152, %v2248
        %v2265 = vmul.f32 %v2153, %v2249
        %v2266 = vmul.f32 %v2250, %v650
        %v2267 = vmul.f32 %v2251, %v650
        %v2268 = vmul.f32 %v2252, %v650
        %v2269 = vmul.f32 %v2253, %v650
        %v2270 = vmul.f32 %v2254, %v650
        %v2271 = vmul.f32 %v2255, %v650
        %v2272 = vmul.f32 %v2256, %v650
        %v2273 = vmul.f32 %v2257, %v650
        %v2274 = vmul.f32 %v2258, %v650
        %v2275 = vmul.f32 %v2259, %v650
        %v2276 = vmul.f32 %v2260, %v650
        %v2277 = vmul.f32 %v2261, %v650
        %v2278 = vmul.f32 %v2262, %v650
        %v2279 = vmul.f32 %v2263, %v650
        %v2280 = vmul.f32 %v2264, %v650
        %v2281 = vmul.f32 %v2265, %v650
        %v2282 = vadd.f32 %v2266, %v670
        %v2283 = vadd.f32 %v2267, %v670
        %v2284 = vadd.f32 %v2268, %v670
        %v2285 = vadd.f32 %v2269, %v670
        %v2286 = vadd.f32 %v2270, %v670
        %v2287 = vadd.f32 %v2271, %v670
        %v2288 = vadd.f32 %v2272, %v670
        %v2289 = vadd.f32 %v2273, %v670
        %v2290 = vadd.f32 %v2274, %v670
        %v2291 = vadd.f32 %v2275, %v670
        %v2292 = vadd.f32 %v2276, %v670
        %v2293 = vadd.f32 %v2277, %v670
        %v2294 = vadd.f32 %v2278, %v670
        %v2295 = vadd.f32 %v2279, %v670
        %v2296 = vadd.f32 %v2280, %v670
        %v2297 = vadd.f32 %v2281, %v670
        %v2298 = vpack.c.bf16 %v2283, %v2282
        %v2299 = vpack.c.bf16 %v2285, %v2284
        %v2300 = vpack.c.bf16 %v2287, %v2286
        %v2301 = vpack.c.bf16 %v2289, %v2288
        %v2302 = vpack.c.bf16 %v2291, %v2290
        %v2303 = vpack.c.bf16 %v2293, %v2292
        %v2304 = vpack.c.bf16 %v2295, %v2294
        %v2305 = vpack.c.bf16 %v2297, %v2296
        %s2306 = scalar_lea.vmem [#allocation2], 256
        %2307 = vst [vmem:[%s2306] sm:$0xff] %v2298
        %2308 = vst [vmem:[%s2306 + $0x8] sm:$0xff] %v2299
        %2309 = vst [vmem:[%s2306 + $0x10] sm:$0xff] %v2300
        %2310 = vst [vmem:[%s2306 + $0x18] sm:$0xff] %v2301
        %2311 = vst [vmem:[%s2306 + $0x20] sm:$0xff] %v2302
        %2312 = vst [vmem:[%s2306 + $0x28] sm:$0xff] %v2303
        %2313 = vst [vmem:[%s2306 + $0x30] sm:$0xff] %v2304
        %2314 = vst [vmem:[%s2306 + $0x38] sm:$0xff] %v2305
        %s2315 = scalar_lea.vmem %s222, 320
        %v2316 = vld [vmem:[%s2315] sm:$0xf]
        %v2317 = vld [vmem:[%s2315 + $0x4] sm:$0xf]
        %v2318 = vld [vmem:[%s2315 + $0x8] sm:$0xf]
        %v2319 = vld [vmem:[%s2315 + $0xc] sm:$0xf]
        %v2320 = vld [vmem:[%s2315 + $0x10] sm:$0xf]
        %v2321 = vld [vmem:[%s2315 + $0x14] sm:$0xf]
        %v2322 = vld [vmem:[%s2315 + $0x18] sm:$0xf]
        %v2323 = vld [vmem:[%s2315 + $0x1c] sm:$0xf]
        %v2324 = vld [vmem:[%s2315 + $0x20] sm:$0xf]
        %v2325 = vld [vmem:[%s2315 + $0x24] sm:$0xf]
        %v2326 = vld [vmem:[%s2315 + $0x28] sm:$0xf]
        %v2327 = vld [vmem:[%s2315 + $0x2c] sm:$0xf]
        %v2328 = vld [vmem:[%s2315 + $0x30] sm:$0xf]
        %v2329 = vld [vmem:[%s2315 + $0x34] sm:$0xf]
        %v2330 = vld [vmem:[%s2315 + $0x38] sm:$0xf]
        %v2331 = vld [vmem:[%s2315 + $0x3c] sm:$0xf]
        %v2348 = vunpack.c.l.b16 %v2316
        %v2349 = vunpack.c.l.b16 %v2317
        %v2350 = vunpack.c.l.b16 %v2318
        %v2351 = vunpack.c.l.b16 %v2319
        %v2352 = vunpack.c.l.b16 %v2320
        %v2353 = vunpack.c.l.b16 %v2321
        %v2354 = vunpack.c.l.b16 %v2322
        %v2355 = vunpack.c.l.b16 %v2323
        %v2356 = vunpack.c.l.b16 %v2324
        %v2357 = vunpack.c.l.b16 %v2325
        %v2358 = vunpack.c.l.b16 %v2326
        %v2359 = vunpack.c.l.b16 %v2327
        %v2360 = vunpack.c.l.b16 %v2328
        %v2361 = vunpack.c.l.b16 %v2329
        %v2362 = vunpack.c.l.b16 %v2330
        %v2363 = vunpack.c.l.b16 %v2331
        %v2364 = vpack.c.b16 %v2349, %v2348
        %v2365 = vpack.c.b16 %v2351, %v2350
        %v2366 = vpack.c.b16 %v2353, %v2352
        %v2367 = vpack.c.b16 %v2355, %v2354
        %v2368 = vpack.c.b16 %v2357, %v2356
        %v2369 = vpack.c.b16 %v2359, %v2358
        %v2370 = vpack.c.b16 %v2361, %v2360
        %v2371 = vpack.c.b16 %v2363, %v2362
        %2380 = vmatprep.subr.bf16.mxu0 0
        %2381 = vmatpush1.bf16.msra.mxu0 %v340
        %2382 = vmatprep.subr.bf16.mxu0 0
        %2383 = vmatpush1.bf16.msra.mxu0 %v341
        %2384 = vmatprep.subr.bf16.mxu0 0
        %2385 = vmatpush1.bf16.msra.mxu0 %v342
        %2386 = vmatprep.subr.bf16.mxu0 0
        %2387 = vmatpush1.bf16.msra.mxu0 %v343
        %2388 = vmatprep.subr.bf16.mxu0 0
        %2389 = vmatpush1.bf16.msra.mxu0 %v344
        %2390 = vmatprep.subr.bf16.mxu0 0
        %2391 = vmatpush1.bf16.msra.mxu0 %v345
        %2392 = vmatprep.subr.bf16.mxu0 0
        %2393 = vmatpush1.bf16.msra.mxu0 %v346
        %2394 = vmatprep.subr.bf16.mxu0 0
        %2395 = vmatpush1.bf16.msra.mxu0 %v347
        %2396 = vmatprep.subr.bf16.mxu0 0
        %2397 = vmatpush1.bf16.msra.mxu0 0
        %2398 = vmatprep.subr.bf16.mxu0 0
        %2399 = vmatpush1.bf16.msra.mxu0 0
        %2400 = vmatprep.subr.bf16.mxu0 0
        %2401 = vmatpush1.bf16.msra.mxu0 0
        %2402 = vmatprep.subr.bf16.mxu0 0
        %2403 = vmatpush1.bf16.msra.mxu0 0
        %2404 = vmatprep.subr.bf16.mxu0 0
        %2405 = vmatpush1.bf16.msra.mxu0 0
        %2406 = vmatprep.subr.bf16.mxu0 0
        %2407 = vmatpush1.bf16.msra.mxu0 0
        %2408 = vmatprep.subr.bf16.mxu0 0
        %2409 = vmatpush1.bf16.msra.mxu0 0
        %2410 = vmatprep.subr.bf16.mxu0 0
        %2411 = vmatpush1.bf16.msra.mxu0 0
        %2412 = vmatprep.mubr.bf16.mxu0 0
        %2413 = vmatmul.mubr.bf16.gmra.mrb[0].mxu0 %v2364
        %v2414 = vpop.f32.mrb[0].mxu0
        %v2415 = vadd.f32 0.0, %v2414
        %v2416 = vpop.f32.mrb[0].mxu0
        %v2417 = vpop.f32.mrb[0].mxu0
        %v2418 = vadd.f32 0.0, %v2417
        %v2419 = vpop.f32.mrb[0].mxu0
        %2420 = vmatprep.mubr.bf16.mxu0 0
        %2421 = vmatmul.mubr.bf16.gmra.mrb[0].mxu0 %v2365
        %v2422 = vpop.f32.mrb[0].mxu0
        %v2423 = vadd.f32 0.0, %v2422
        %v2424 = vpop.f32.mrb[0].mxu0
        %v2425 = vpop.f32.mrb[0].mxu0
        %v2426 = vadd.f32 0.0, %v2425
        %v2427 = vpop.f32.mrb[0].mxu0
        %2428 = vmatprep.mubr.bf16.mxu0 0
        %2429 = vmatmul.mubr.bf16.gmra.mrb[0].mxu0 %v2366
        %v2430 = vpop.f32.mrb[0].mxu0
        %v2431 = vadd.f32 0.0, %v2430
        %v2432 = vpop.f32.mrb[0].mxu0
        %v2433 = vpop.f32.mrb[0].mxu0
        %v2434 = vadd.f32 0.0, %v2433
        %v2435 = vpop.f32.mrb[0].mxu0
        %2436 = vmatprep.mubr.bf16.mxu0 0
        %2437 = vmatmul.mubr.bf16.gmra.mrb[0].mxu0 %v2367
        %v2438 = vpop.f32.mrb[0].mxu0
        %v2439 = vadd.f32 0.0, %v2438
        %v2440 = vpop.f32.mrb[0].mxu0
        %v2441 = vpop.f32.mrb[0].mxu0
        %v2442 = vadd.f32 0.0, %v2441
        %v2443 = vpop.f32.mrb[0].mxu0
        %2444 = vmatprep.mubr.bf16.mxu0 0
        %2445 = vmatmul.mubr.bf16.gmra.mrb[0].mxu0 %v2368
        %v2446 = vpop.f32.mrb[0].mxu0
        %v2447 = vadd.f32 0.0, %v2446
        %v2448 = vpop.f32.mrb[0].mxu0
        %v2449 = vpop.f32.mrb[0].mxu0
        %v2450 = vadd.f32 0.0, %v2449
        %v2451 = vpop.f32.mrb[0].mxu0
        %2452 = vmatprep.mubr.bf16.mxu0 0
        %2453 = vmatmul.mubr.bf16.gmra.mrb[0].mxu0 %v2369
        %v2454 = vpop.f32.mrb[0].mxu0
        %v2455 = vadd.f32 0.0, %v2454
        %v2456 = vpop.f32.mrb[0].mxu0
        %v2457 = vpop.f32.mrb[0].mxu0
        %v2458 = vadd.f32 0.0, %v2457
        %v2459 = vpop.f32.mrb[0].mxu0
        %2460 = vmatprep.mubr.bf16.mxu0 0
        %2461 = vmatmul.mubr.bf16.gmra.mrb[0].mxu0 %v2370
        %v2462 = vpop.f32.mrb[0].mxu0
        %v2463 = vadd.f32 0.0, %v2462
        %v2464 = vpop.f32.mrb[0].mxu0
        %v2465 = vpop.f32.mrb[0].mxu0
        %v2466 = vadd.f32 0.0, %v2465
        %v2467 = vpop.f32.mrb[0].mxu0
        %2468 = vmatprep.mubr.bf16.mxu0 0
        %2469 = vmatmul.mubr.bf16.gmra.mrb[0].mxu0 %v2371
        %v2470 = vpop.f32.mrb[0].mxu0
        %v2471 = vadd.f32 0.0, %v2470
        %v2472 = vpop.f32.mrb[0].mxu0
        %v2473 = vpop.f32.mrb[0].mxu0
        %v2474 = vadd.f32 0.0, %v2473
        %v2475 = vpop.f32.mrb[0].mxu0
        %2476 = vdwg.mxu0
        %2477 = vadd.xlane.f32.xlu0 %v2415
        %v2478 = vpop.xlane.xlu0 %2477
        %2479 = vadd.xlane.f32.xlu0 %v2418
        %v2480 = vpop.xlane.xlu0 %2479
        %2481 = vadd.xlane.f32.xlu0 %v2423
        %v2482 = vpop.xlane.xlu0 %2481
        %2483 = vadd.xlane.f32.xlu0 %v2426
        %v2484 = vpop.xlane.xlu0 %2483
        %2485 = vadd.xlane.f32.xlu0 %v2431
        %v2486 = vpop.xlane.xlu0 %2485
        %2487 = vadd.xlane.f32.xlu0 %v2434
        %v2488 = vpop.xlane.xlu0 %2487
        %2489 = vadd.xlane.f32.xlu0 %v2439
        %v2490 = vpop.xlane.xlu0 %2489
        %2491 = vadd.xlane.f32.xlu0 %v2442
        %v2492 = vpop.xlane.xlu0 %2491
        %2493 = vadd.xlane.f32.xlu0 %v2447
        %v2494 = vpop.xlane.xlu0 %2493
        %2495 = vadd.xlane.f32.xlu0 %v2450
        %v2496 = vpop.xlane.xlu0 %2495
        %2497 = vadd.xlane.f32.xlu0 %v2455
        %v2498 = vpop.xlane.xlu0 %2497
        %2499 = vadd.xlane.f32.xlu0 %v2458
        %v2500 = vpop.xlane.xlu0 %2499
        %2501 = vadd.xlane.f32.xlu0 %v2463
        %v2502 = vpop.xlane.xlu0 %2501
        %2503 = vadd.xlane.f32.xlu0 %v2466
        %v2504 = vpop.xlane.xlu0 %2503
        %2505 = vadd.xlane.f32.xlu0 %v2471
        %v2506 = vpop.xlane.xlu0 %2505
        %2507 = vadd.xlane.f32.xlu0 %v2474
        %v2508 = vpop.xlane.xlu0 %2507
        %v2509 = vmul.f32 %v2478, 0.03125
        %v2510 = vmul.f32 %v2480, 0.03125
        %v2511 = vmul.f32 %v2482, 0.03125
        %v2512 = vmul.f32 %v2484, 0.03125
        %v2513 = vmul.f32 %v2486, 0.03125
        %v2514 = vmul.f32 %v2488, 0.03125
        %v2515 = vmul.f32 %v2490, 0.03125
        %v2516 = vmul.f32 %v2492, 0.03125
        %v2517 = vmul.f32 %v2494, 0.03125
        %v2518 = vmul.f32 %v2496, 0.03125
        %v2519 = vmul.f32 %v2498, 0.03125
        %v2520 = vmul.f32 %v2500, 0.03125
        %v2521 = vmul.f32 %v2502, 0.03125
        %v2522 = vmul.f32 %v2504, 0.03125
        %v2523 = vmul.f32 %v2506, 0.03125
        %v2524 = vmul.f32 %v2508, 0.03125
        %v2525 = vsub.f32 %v2415, %v2509
        %v2526 = vsub.f32 %v2418, %v2510
        %v2527 = vsub.f32 %v2423, %v2511
        %v2528 = vsub.f32 %v2426, %v2512
        %v2529 = vsub.f32 %v2431, %v2513
        %v2530 = vsub.f32 %v2434, %v2514
        %v2531 = vsub.f32 %v2439, %v2515
        %v2532 = vsub.f32 %v2442, %v2516
        %v2533 = vsub.f32 %v2447, %v2517
        %v2534 = vsub.f32 %v2450, %v2518
        %v2535 = vsub.f32 %v2455, %v2519
        %v2536 = vsub.f32 %v2458, %v2520
        %v2537 = vsub.f32 %v2463, %v2521
        %v2538 = vsub.f32 %v2466, %v2522
        %v2539 = vsub.f32 %v2471, %v2523
        %v2540 = vsub.f32 %v2474, %v2524
        %v2541 = vsel %vm518, %v2525, 0.0
        %v2542 = vsel %vm518, %v2526, 0.0
        %v2543 = vsel %vm518, %v2527, 0.0
        %v2544 = vsel %vm518, %v2528, 0.0
        %v2545 = vsel %vm518, %v2529, 0.0
        %v2546 = vsel %vm518, %v2530, 0.0
        %v2547 = vsel %vm518, %v2531, 0.0
        %v2548 = vsel %vm518, %v2532, 0.0
        %v2549 = vsel %vm518, %v2533, 0.0
        %v2550 = vsel %vm518, %v2534, 0.0
        %v2551 = vsel %vm518, %v2535, 0.0
        %v2552 = vsel %vm518, %v2536, 0.0
        %v2553 = vsel %vm518, %v2537, 0.0
        %v2554 = vsel %vm518, %v2538, 0.0
        %v2555 = vsel %vm518, %v2539, 0.0
        %v2556 = vsel %vm518, %v2540, 0.0
        %v2557 = vmul.f32 %v2541, %v2541
        %v2558 = vmul.f32 %v2542, %v2542
        %v2559 = vmul.f32 %v2543, %v2543
        %v2560 = vmul.f32 %v2544, %v2544
        %v2561 = vmul.f32 %v2545, %v2545
        %v2562 = vmul.f32 %v2546, %v2546
        %v2563 = vmul.f32 %v2547, %v2547
        %v2564 = vmul.f32 %v2548, %v2548
        %v2565 = vmul.f32 %v2549, %v2549
        %v2566 = vmul.f32 %v2550, %v2550
        %v2567 = vmul.f32 %v2551, %v2551
        %v2568 = vmul.f32 %v2552, %v2552
        %v2569 = vmul.f32 %v2553, %v2553
        %v2570 = vmul.f32 %v2554, %v2554
        %v2571 = vmul.f32 %v2555, %v2555
        %v2572 = vmul.f32 %v2556, %v2556
        %2573 = vadd.xlane.f32.xlu0 %v2557
        %v2574 = vpop.xlane.xlu0 %2573
        %2575 = vadd.xlane.f32.xlu0 %v2558
        %v2576 = vpop.xlane.xlu0 %2575
        %2577 = vadd.xlane.f32.xlu0 %v2559
        %v2578 = vpop.xlane.xlu0 %2577
        %2579 = vadd.xlane.f32.xlu0 %v2560
        %v2580 = vpop.xlane.xlu0 %2579
        %2581 = vadd.xlane.f32.xlu0 %v2561
        %v2582 = vpop.xlane.xlu0 %2581
        %2583 = vadd.xlane.f32.xlu0 %v2562
        %v2584 = vpop.xlane.xlu0 %2583
        %2585 = vadd.xlane.f32.xlu0 %v2563
        %v2586 = vpop.xlane.xlu0 %2585
        %2587 = vadd.xlane.f32.xlu0 %v2564
        %v2588 = vpop.xlane.xlu0 %2587
        %2589 = vadd.xlane.f32.xlu0 %v2565
        %v2590 = vpop.xlane.xlu0 %2589
        %2591 = vadd.xlane.f32.xlu0 %v2566
        %v2592 = vpop.xlane.xlu0 %2591
        %2593 = vadd.xlane.f32.xlu0 %v2567
        %v2594 = vpop.xlane.xlu0 %2593
        %2595 = vadd.xlane.f32.xlu0 %v2568
        %v2596 = vpop.xlane.xlu0 %2595
        %2597 = vadd.xlane.f32.xlu0 %v2569
        %v2598 = vpop.xlane.xlu0 %2597
        %2599 = vadd.xlane.f32.xlu0 %v2570
        %v2600 = vpop.xlane.xlu0 %2599
        %2601 = vadd.xlane.f32.xlu0 %v2571
        %v2602 = vpop.xlane.xlu0 %2601
        %2603 = vadd.xlane.f32.xlu0 %v2572
        %v2604 = vpop.xlane.xlu0 %2603
        %v2605 = vmul.f32 %v2574, 0.03125
        %v2606 = vmul.f32 %v2576, 0.03125
        %v2607 = vmul.f32 %v2578, 0.03125
        %v2608 = vmul.f32 %v2580, 0.03125
        %v2609 = vmul.f32 %v2582, 0.03125
        %v2610 = vmul.f32 %v2584, 0.03125
        %v2611 = vmul.f32 %v2586, 0.03125
        %v2612 = vmul.f32 %v2588, 0.03125
        %v2613 = vmul.f32 %v2590, 0.03125
        %v2614 = vmul.f32 %v2592, 0.03125
        %v2615 = vmul.f32 %v2594, 0.03125
        %v2616 = vmul.f32 %v2596, 0.03125
        %v2617 = vmul.f32 %v2598, 0.03125
        %v2618 = vmul.f32 %v2600, 0.03125
        %v2619 = vmul.f32 %v2602, 0.03125
        %v2620 = vmul.f32 %v2604, 0.03125
        %v2621 = vadd.f32 %v2605, 1e-05
        %v2622 = vadd.f32 %v2606, 1e-05
        %v2623 = vadd.f32 %v2607, 1e-05
        %v2624 = vadd.f32 %v2608, 1e-05
        %v2625 = vadd.f32 %v2609, 1e-05
        %v2626 = vadd.f32 %v2610, 1e-05
        %v2627 = vadd.f32 %v2611, 1e-05
        %v2628 = vadd.f32 %v2612, 1e-05
        %v2629 = vadd.f32 %v2613, 1e-05
        %v2630 = vadd.f32 %v2614, 1e-05
        %v2631 = vadd.f32 %v2615, 1e-05
        %v2632 = vadd.f32 %v2616, 1e-05
        %v2633 = vadd.f32 %v2617, 1e-05
        %v2634 = vadd.f32 %v2618, 1e-05
        %v2635 = vadd.f32 %v2619, 1e-05
        %v2636 = vadd.f32 %v2620, 1e-05
        %v2637 = vrsqrt.pop %v2621
        %v2638 = vrsqrt.pop %v2622
        %v2639 = vrsqrt.pop %v2623
        %v2640 = vrsqrt.pop %v2624
        %v2641 = vrsqrt.pop %v2625
        %v2642 = vrsqrt.pop %v2626
        %v2643 = vrsqrt.pop %v2627
        %v2644 = vrsqrt.pop %v2628
        %v2645 = vrsqrt.pop %v2629
        %v2646 = vrsqrt.pop %v2630
        %v2647 = vrsqrt.pop %v2631
        %v2648 = vrsqrt.pop %v2632
        %v2649 = vrsqrt.pop %v2633
        %v2650 = vrsqrt.pop %v2634
        %v2651 = vrsqrt.pop %v2635
        %v2652 = vrsqrt.pop %v2636
        %v2653 = vmul.f32 %v2541, %v2637
        %v2654 = vmul.f32 %v2542, %v2638
        %v2655 = vmul.f32 %v2543, %v2639
        %v2656 = vmul.f32 %v2544, %v2640
        %v2657 = vmul.f32 %v2545, %v2641
        %v2658 = vmul.f32 %v2546, %v2642
        %v2659 = vmul.f32 %v2547, %v2643
        %v2660 = vmul.f32 %v2548, %v2644
        %v2661 = vmul.f32 %v2549, %v2645
        %v2662 = vmul.f32 %v2550, %v2646
        %v2663 = vmul.f32 %v2551, %v2647
        %v2664 = vmul.f32 %v2552, %v2648
        %v2665 = vmul.f32 %v2553, %v2649
        %v2666 = vmul.f32 %v2554, %v2650
        %v2667 = vmul.f32 %v2555, %v2651
        %v2668 = vmul.f32 %v2556, %v2652
        %v2669 = vmul.f32 %v2653, %v650
        %v2670 = vmul.f32 %v2654, %v650
        %v2671 = vmul.f32 %v2655, %v650
        %v2672 = vmul.f32 %v2656, %v650
        %v2673 = vmul.f32 %v2657, %v650
        %v2674 = vmul.f32 %v2658, %v650
        %v2675 = vmul.f32 %v2659, %v650
        %v2676 = vmul.f32 %v2660, %v650
        %v2677 = vmul.f32 %v2661, %v650
        %v2678 = vmul.f32 %v2662, %v650
        %v2679 = vmul.f32 %v2663, %v650
        %v2680 = vmul.f32 %v2664, %v650
        %v2681 = vmul.f32 %v2665, %v650
        %v2682 = vmul.f32 %v2666, %v650
        %v2683 = vmul.f32 %v2667, %v650
        %v2684 = vmul.f32 %v2668, %v650
        %v2685 = vadd.f32 %v2669, %v670
        %v2686 = vadd.f32 %v2670, %v670
        %v2687 = vadd.f32 %v2671, %v670
        %v2688 = vadd.f32 %v2672, %v670
        %v2689 = vadd.f32 %v2673, %v670
        %v2690 = vadd.f32 %v2674, %v670
        %v2691 = vadd.f32 %v2675, %v670
        %v2692 = vadd.f32 %v2676, %v670
        %v2693 = vadd.f32 %v2677, %v670
        %v2694 = vadd.f32 %v2678, %v670
        %v2695 = vadd.f32 %v2679, %v670
        %v2696 = vadd.f32 %v2680, %v670
        %v2697 = vadd.f32 %v2681, %v670
        %v2698 = vadd.f32 %v2682, %v670
        %v2699 = vadd.f32 %v2683, %v670
        %v2700 = vadd.f32 %v2684, %v670
        %v2701 = vpack.c.bf16 %v2686, %v2685
        %v2702 = vpack.c.bf16 %v2688, %v2687
        %v2703 = vpack.c.bf16 %v2690, %v2689
        %v2704 = vpack.c.bf16 %v2692, %v2691
        %v2705 = vpack.c.bf16 %v2694, %v2693
        %v2706 = vpack.c.bf16 %v2696, %v2695
        %v2707 = vpack.c.bf16 %v2698, %v2697
        %v2708 = vpack.c.bf16 %v2700, %v2699
        %s2709 = scalar_lea.vmem [#allocation2], 320
        %2710 = vst [vmem:[%s2709] sm:$0xff] %v2701
        %2711 = vst [vmem:[%s2709 + $0x8] sm:$0xff] %v2702
        %2712 = vst [vmem:[%s2709 + $0x10] sm:$0xff] %v2703
        %2713 = vst [vmem:[%s2709 + $0x18] sm:$0xff] %v2704
        %2714 = vst [vmem:[%s2709 + $0x20] sm:$0xff] %v2705
        %2715 = vst [vmem:[%s2709 + $0x28] sm:$0xff] %v2706
        %2716 = vst [vmem:[%s2709 + $0x30] sm:$0xff] %v2707
        %2717 = vst [vmem:[%s2709 + $0x38] sm:$0xff] %v2708
        %s2718 = scalar_lea.vmem %s222, 384
        %v2719 = vld [vmem:[%s2718] sm:$0xf]
        %v2720 = vld [vmem:[%s2718 + $0x4] sm:$0xf]
        %v2721 = vld [vmem:[%s2718 + $0x8] sm:$0xf]
        %v2722 = vld [vmem:[%s2718 + $0xc] sm:$0xf]
        %v2723 = vld [vmem:[%s2718 + $0x10] sm:$0xf]
        %v2724 = vld [vmem:[%s2718 + $0x14] sm:$0xf]
        %v2725 = vld [vmem:[%s2718 + $0x18] sm:$0xf]
        %v2726 = vld [vmem:[%s2718 + $0x1c] sm:$0xf]
        %v2727 = vld [vmem:[%s2718 + $0x20] sm:$0xf]
        %v2728 = vld [vmem:[%s2718 + $0x24] sm:$0xf]
        %v2729 = vld [vmem:[%s2718 + $0x28] sm:$0xf]
        %v2730 = vld [vmem:[%s2718 + $0x2c] sm:$0xf]
        %v2731 = vld [vmem:[%s2718 + $0x30] sm:$0xf]
        %v2732 = vld [vmem:[%s2718 + $0x34] sm:$0xf]
        %v2733 = vld [vmem:[%s2718 + $0x38] sm:$0xf]
        %v2734 = vld [vmem:[%s2718 + $0x3c] sm:$0xf]
        %v2751 = vunpack.c.l.b16 %v2719
        %v2752 = vunpack.c.l.b16 %v2720
        %v2753 = vunpack.c.l.b16 %v2721
        %v2754 = vunpack.c.l.b16 %v2722
        %v2755 = vunpack.c.l.b16 %v2723
        %v2756 = vunpack.c.l.b16 %v2724
        %v2757 = vunpack.c.l.b16 %v2725
        %v2758 = vunpack.c.l.b16 %v2726
        %v2759 = vunpack.c.l.b16 %v2727
        %v2760 = vunpack.c.l.b16 %v2728
        %v2761 = vunpack.c.l.b16 %v2729
        %v2762 = vunpack.c.l.b16 %v2730
        %v2763 = vunpack.c.l.b16 %v2731
        %v2764 = vunpack.c.l.b16 %v2732
        %v2765 = vunpack.c.l.b16 %v2733
        %v2766 = vunpack.c.l.b16 %v2734
        %v2767 = vpack.c.b16 %v2752, %v2751
        %v2768 = vpack.c.b16 %v2754, %v2753
        %v2769 = vpack.c.b16 %v2756, %v2755
        %v2770 = vpack.c.b16 %v2758, %v2757
        %v2771 = vpack.c.b16 %v2760, %v2759
        %v2772 = vpack.c.b16 %v2762, %v2761
        %v2773 = vpack.c.b16 %v2764, %v2763
        %v2774 = vpack.c.b16 %v2766, %v2765
        %2783 = vmatprep.subr.bf16.mxu0 0
        %2784 = vmatpush1.bf16.msra.mxu0 %v340
        %2785 = vmatprep.subr.bf16.mxu0 0
        %2786 = vmatpush1.bf16.msra.mxu0 %v341
        %2787 = vmatprep.subr.bf16.mxu0 0
        %2788 = vmatpush1.bf16.msra.mxu0 %v342
        %2789 = vmatprep.subr.bf16.mxu0 0
        %2790 = vmatpush1.bf16.msra.mxu0 %v343
        %2791 = vmatprep.subr.bf16.mxu0 0
        %2792 = vmatpush1.bf16.msra.mxu0 %v344
        %2793 = vmatprep.subr.bf16.mxu0 0
        %2794 = vmatpush1.bf16.msra.mxu0 %v345
        %2795 = vmatprep.subr.bf16.mxu0 0
        %2796 = vmatpush1.bf16.msra.mxu0 %v346
        %2797 = vmatprep.subr.bf16.mxu0 0
        %2798 = vmatpush1.bf16.msra.mxu0 %v347
        %2799 = vmatprep.subr.bf16.mxu0 0
        %2800 = vmatpush1.bf16.msra.mxu0 0
        %2801 = vmatprep.subr.bf16.mxu0 0
        %2802 = vmatpush1.bf16.msra.mxu0 0
        %2803 = vmatprep.subr.bf16.mxu0 0
        %2804 = vmatpush1.bf16.msra.mxu0 0
        %2805 = vmatprep.subr.bf16.mxu0 0
        %2806 = vmatpush1.bf16.msra.mxu0 0
        %2807 = vmatprep.subr.bf16.mxu0 0
        %2808 = vmatpush1.bf16.msra.mxu0 0
        %2809 = vmatprep.subr.bf16.mxu0 0
        %2810 = vmatpush1.bf16.msra.mxu0 0
        %2811 = vmatprep.subr.bf16.mxu0 0
        %2812 = vmatpush1.bf16.msra.mxu0 0
        %2813 = vmatprep.subr.bf16.mxu0 0
        %2814 = vmatpush1.bf16.msra.mxu0 0
        %2815 = vmatprep.mubr.bf16.mxu0 0
        %2816 = vmatmul.mubr.bf16.gmra.mrb[0].mxu0 %v2767
        %v2817 = vpop.f32.mrb[0].mxu0
        %v2818 = vadd.f32 0.0, %v2817
        %v2819 = vpop.f32.mrb[0].mxu0
        %v2820 = vpop.f32.mrb[0].mxu0
        %v2821 = vadd.f32 0.0, %v2820
        %v2822 = vpop.f32.mrb[0].mxu0
        %2823 = vmatprep.mubr.bf16.mxu0 0
        %2824 = vmatmul.mubr.bf16.gmra.mrb[0].mxu0 %v2768
        %v2825 = vpop.f32.mrb[0].mxu0
        %v2826 = vadd.f32 0.0, %v2825
        %v2827 = vpop.f32.mrb[0].mxu0
        %v2828 = vpop.f32.mrb[0].mxu0
        %v2829 = vadd.f32 0.0, %v2828
        %v2830 = vpop.f32.mrb[0].mxu0
        %2831 = vmatprep.mubr.bf16.mxu0 0
        %2832 = vmatmul.mubr.bf16.gmra.mrb[0].mxu0 %v2769
        %v2833 = vpop.f32.mrb[0].mxu0
        %v2834 = vadd.f32 0.0, %v2833
        %v2835 = vpop.f32.mrb[0].mxu0
        %v2836 = vpop.f32.mrb[0].mxu0
        %v2837 = vadd.f32 0.0, %v2836
        %v2838 = vpop.f32.mrb[0].mxu0
        %2839 = vmatprep.mubr.bf16.mxu0 0
        %2840 = vmatmul.mubr.bf16.gmra.mrb[0].mxu0 %v2770
        %v2841 = vpop.f32.mrb[0].mxu0
        %v2842 = vadd.f32 0.0, %v2841
        %v2843 = vpop.f32.mrb[0].mxu0
        %v2844 = vpop.f32.mrb[0].mxu0
        %v2845 = vadd.f32 0.0, %v2844
        %v2846 = vpop.f32.mrb[0].mxu0
        %2847 = vmatprep.mubr.bf16.mxu0 0
        %2848 = vmatmul.mubr.bf16.gmra.mrb[0].mxu0 %v2771
        %v2849 = vpop.f32.mrb[0].mxu0
        %v2850 = vadd.f32 0.0, %v2849
        %v2851 = vpop.f32.mrb[0].mxu0
        %v2852 = vpop.f32.mrb[0].mxu0
        %v2853 = vadd.f32 0.0, %v2852
        %v2854 = vpop.f32.mrb[0].mxu0
        %2855 = vmatprep.mubr.bf16.mxu0 0
        %2856 = vmatmul.mubr.bf16.gmra.mrb[0].mxu0 %v2772
        %v2857 = vpop.f32.mrb[0].mxu0
        %v2858 = vadd.f32 0.0, %v2857
        %v2859 = vpop.f32.mrb[0].mxu0
        %v2860 = vpop.f32.mrb[0].mxu0
        %v2861 = vadd.f32 0.0, %v2860
        %v2862 = vpop.f32.mrb[0].mxu0
        %2863 = vmatprep.mubr.bf16.mxu0 0
        %2864 = vmatmul.mubr.bf16.gmra.mrb[0].mxu0 %v2773
        %v2865 = vpop.f32.mrb[0].mxu0
        %v2866 = vadd.f32 0.0, %v2865
        %v2867 = vpop.f32.mrb[0].mxu0
        %v2868 = vpop.f32.mrb[0].mxu0
        %v2869 = vadd.f32 0.0, %v2868
        %v2870 = vpop.f32.mrb[0].mxu0
        %2871 = vmatprep.mubr.bf16.mxu0 0
        %2872 = vmatmul.mubr.bf16.gmra.mrb[0].mxu0 %v2774
        %v2873 = vpop.f32.mrb[0].mxu0
        %v2874 = vadd.f32 0.0, %v2873
        %v2875 = vpop.f32.mrb[0].mxu0
        %v2876 = vpop.f32.mrb[0].mxu0
        %v2877 = vadd.f32 0.0, %v2876
        %v2878 = vpop.f32.mrb[0].mxu0
        %2879 = vdwg.mxu0
        %2880 = vadd.xlane.f32.xlu0 %v2818
        %v2881 = vpop.xlane.xlu0 %2880
        %2882 = vadd.xlane.f32.xlu0 %v2821
        %v2883 = vpop.xlane.xlu0 %2882
        %2884 = vadd.xlane.f32.xlu0 %v2826
        %v2885 = vpop.xlane.xlu0 %2884
        %2886 = vadd.xlane.f32.xlu0 %v2829
        %v2887 = vpop.xlane.xlu0 %2886
        %2888 = vadd.xlane.f32.xlu0 %v2834
        %v2889 = vpop.xlane.xlu0 %2888
        %2890 = vadd.xlane.f32.xlu0 %v2837
        %v2891 = vpop.xlane.xlu0 %2890
        %2892 = vadd.xlane.f32.xlu0 %v2842
        %v2893 = vpop.xlane.xlu0 %2892
        %2894 = vadd.xlane.f32.xlu0 %v2845
        %v2895 = vpop.xlane.xlu0 %2894
        %2896 = vadd.xlane.f32.xlu0 %v2850
        %v2897 = vpop.xlane.xlu0 %2896
        %2898 = vadd.xlane.f32.xlu0 %v2853
        %v2899 = vpop.xlane.xlu0 %2898
        %2900 = vadd.xlane.f32.xlu0 %v2858
        %v2901 = vpop.xlane.xlu0 %2900
        %2902 = vadd.xlane.f32.xlu0 %v2861
        %v2903 = vpop.xlane.xlu0 %2902
        %2904 = vadd.xlane.f32.xlu0 %v2866
        %v2905 = vpop.xlane.xlu0 %2904
        %2906 = vadd.xlane.f32.xlu0 %v2869
        %v2907 = vpop.xlane.xlu0 %2906
        %2908 = vadd.xlane.f32.xlu0 %v2874
        %v2909 = vpop.xlane.xlu0 %2908
        %2910 = vadd.xlane.f32.xlu0 %v2877
        %v2911 = vpop.xlane.xlu0 %2910
        %v2912 = vmul.f32 %v2881, 0.03125
        %v2913 = vmul.f32 %v2883, 0.03125
        %v2914 = vmul.f32 %v2885, 0.03125
        %v2915 = vmul.f32 %v2887, 0.03125
        %v2916 = vmul.f32 %v2889, 0.03125
        %v2917 = vmul.f32 %v2891, 0.03125
        %v2918 = vmul.f32 %v2893, 0.03125
        %v2919 = vmul.f32 %v2895, 0.03125
        %v2920 = vmul.f32 %v2897, 0.03125
        %v2921 = vmul.f32 %v2899, 0.03125
        %v2922 = vmul.f32 %v2901, 0.03125
        %v2923 = vmul.f32 %v2903, 0.03125
        %v2924 = vmul.f32 %v2905, 0.03125
        %v2925 = vmul.f32 %v2907, 0.03125
        %v2926 = vmul.f32 %v2909, 0.03125
        %v2927 = vmul.f32 %v2911, 0.03125
        %v2928 = vsub.f32 %v2818, %v2912
        %v2929 = vsub.f32 %v2821, %v2913
        %v2930 = vsub.f32 %v2826, %v2914
        %v2931 = vsub.f32 %v2829, %v2915
        %v2932 = vsub.f32 %v2834, %v2916
        %v2933 = vsub.f32 %v2837, %v2917
        %v2934 = vsub.f32 %v2842, %v2918
        %v2935 = vsub.f32 %v2845, %v2919
        %v2936 = vsub.f32 %v2850, %v2920
        %v2937 = vsub.f32 %v2853, %v2921
        %v2938 = vsub.f32 %v2858, %v2922
        %v2939 = vsub.f32 %v2861, %v2923
        %v2940 = vsub.f32 %v2866, %v2924
        %v2941 = vsub.f32 %v2869, %v2925
        %v2942 = vsub.f32 %v2874, %v2926
        %v2943 = vsub.f32 %v2877, %v2927
        %v2944 = vsel %vm518, %v2928, 0.0
        %v2945 = vsel %vm518, %v2929, 0.0
        %v2946 = vsel %vm518, %v2930, 0.0
        %v2947 = vsel %vm518, %v2931, 0.0
        %v2948 = vsel %vm518, %v2932, 0.0
        %v2949 = vsel %vm518, %v2933, 0.0
        %v2950 = vsel %vm518, %v2934, 0.0
        %v2951 = vsel %vm518, %v2935, 0.0
        %v2952 = vsel %vm518, %v2936, 0.0
        %v2953 = vsel %vm518, %v2937, 0.0
        %v2954 = vsel %vm518, %v2938, 0.0
        %v2955 = vsel %vm518, %v2939, 0.0
        %v2956 = vsel %vm518, %v2940, 0.0
        %v2957 = vsel %vm518, %v2941, 0.0
        %v2958 = vsel %vm518, %v2942, 0.0
        %v2959 = vsel %vm518, %v2943, 0.0
        %v2960 = vmul.f32 %v2944, %v2944
        %v2961 = vmul.f32 %v2945, %v2945
        %v2962 = vmul.f32 %v2946, %v2946
        %v2963 = vmul.f32 %v2947, %v2947
        %v2964 = vmul.f32 %v2948, %v2948
        %v2965 = vmul.f32 %v2949, %v2949
        %v2966 = vmul.f32 %v2950, %v2950
        %v2967 = vmul.f32 %v2951, %v2951
        %v2968 = vmul.f32 %v2952, %v2952
        %v2969 = vmul.f32 %v2953, %v2953
        %v2970 = vmul.f32 %v2954, %v2954
        %v2971 = vmul.f32 %v2955, %v2955
        %v2972 = vmul.f32 %v2956, %v2956
        %v2973 = vmul.f32 %v2957, %v2957
        %v2974 = vmul.f32 %v2958, %v2958
        %v2975 = vmul.f32 %v2959, %v2959
        %2976 = vadd.xlane.f32.xlu0 %v2960
        %v2977 = vpop.xlane.xlu0 %2976
        %2978 = vadd.xlane.f32.xlu0 %v2961
        %v2979 = vpop.xlane.xlu0 %2978
        %2980 = vadd.xlane.f32.xlu0 %v2962
        %v2981 = vpop.xlane.xlu0 %2980
        %2982 = vadd.xlane.f32.xlu0 %v2963
        %v2983 = vpop.xlane.xlu0 %2982
        %2984 = vadd.xlane.f32.xlu0 %v2964
        %v2985 = vpop.xlane.xlu0 %2984
        %2986 = vadd.xlane.f32.xlu0 %v2965
        %v2987 = vpop.xlane.xlu0 %2986
        %2988 = vadd.xlane.f32.xlu0 %v2966
        %v2989 = vpop.xlane.xlu0 %2988
        %2990 = vadd.xlane.f32.xlu0 %v2967
        %v2991 = vpop.xlane.xlu0 %2990
        %2992 = vadd.xlane.f32.xlu0 %v2968
        %v2993 = vpop.xlane.xlu0 %2992
        %2994 = vadd.xlane.f32.xlu0 %v2969
        %v2995 = vpop.xlane.xlu0 %2994
        %2996 = vadd.xlane.f32.xlu0 %v2970
        %v2997 = vpop.xlane.xlu0 %2996
        %2998 = vadd.xlane.f32.xlu0 %v2971
        %v2999 = vpop.xlane.xlu0 %2998
        %3000 = vadd.xlane.f32.xlu0 %v2972
        %v3001 = vpop.xlane.xlu0 %3000
        %3002 = vadd.xlane.f32.xlu0 %v2973
        %v3003 = vpop.xlane.xlu0 %3002
        %3004 = vadd.xlane.f32.xlu0 %v2974
        %v3005 = vpop.xlane.xlu0 %3004
        %3006 = vadd.xlane.f32.xlu0 %v2975
        %v3007 = vpop.xlane.xlu0 %3006
        %v3008 = vmul.f32 %v2977, 0.03125
        %v3009 = vmul.f32 %v2979, 0.03125
        %v3010 = vmul.f32 %v2981, 0.03125
        %v3011 = vmul.f32 %v2983, 0.03125
        %v3012 = vmul.f32 %v2985, 0.03125
        %v3013 = vmul.f32 %v2987, 0.03125
        %v3014 = vmul.f32 %v2989, 0.03125
        %v3015 = vmul.f32 %v2991, 0.03125
        %v3016 = vmul.f32 %v2993, 0.03125
        %v3017 = vmul.f32 %v2995, 0.03125
        %v3018 = vmul.f32 %v2997, 0.03125
        %v3019 = vmul.f32 %v2999, 0.03125
        %v3020 = vmul.f32 %v3001, 0.03125
        %v3021 = vmul.f32 %v3003, 0.03125
        %v3022 = vmul.f32 %v3005, 0.03125
        %v3023 = vmul.f32 %v3007, 0.03125
        %v3024 = vadd.f32 %v3008, 1e-05
        %v3025 = vadd.f32 %v3009, 1e-05
        %v3026 = vadd.f32 %v3010, 1e-05
        %v3027 = vadd.f32 %v3011, 1e-05
        %v3028 = vadd.f32 %v3012, 1e-05
        %v3029 = vadd.f32 %v3013, 1e-05
        %v3030 = vadd.f32 %v3014, 1e-05
        %v3031 = vadd.f32 %v3015, 1e-05
        %v3032 = vadd.f32 %v3016, 1e-05
        %v3033 = vadd.f32 %v3017, 1e-05
        %v3034 = vadd.f32 %v3018, 1e-05
        %v3035 = vadd.f32 %v3019, 1e-05
        %v3036 = vadd.f32 %v3020, 1e-05
        %v3037 = vadd.f32 %v3021, 1e-05
        %v3038 = vadd.f32 %v3022, 1e-05
        %v3039 = vadd.f32 %v3023, 1e-05
        %v3040 = vrsqrt.pop %v3024
        %v3041 = vrsqrt.pop %v3025
        %v3042 = vrsqrt.pop %v3026
        %v3043 = vrsqrt.pop %v3027
        %v3044 = vrsqrt.pop %v3028
        %v3045 = vrsqrt.pop %v3029
        %v3046 = vrsqrt.pop %v3030
        %v3047 = vrsqrt.pop %v3031
        %v3048 = vrsqrt.pop %v3032
        %v3049 = vrsqrt.pop %v3033
        %v3050 = vrsqrt.pop %v3034
        %v3051 = vrsqrt.pop %v3035
        %v3052 = vrsqrt.pop %v3036
        %v3053 = vrsqrt.pop %v3037
        %v3054 = vrsqrt.pop %v3038
        %v3055 = vrsqrt.pop %v3039
        %v3056 = vmul.f32 %v2944, %v3040
        %v3057 = vmul.f32 %v2945, %v3041
        %v3058 = vmul.f32 %v2946, %v3042
        %v3059 = vmul.f32 %v2947, %v3043
        %v3060 = vmul.f32 %v2948, %v3044
        %v3061 = vmul.f32 %v2949, %v3045
        %v3062 = vmul.f32 %v2950, %v3046
        %v3063 = vmul.f32 %v2951, %v3047
        %v3064 = vmul.f32 %v2952, %v3048
        %v3065 = vmul.f32 %v2953, %v3049
        %v3066 = vmul.f32 %v2954, %v3050
        %v3067 = vmul.f32 %v2955, %v3051
        %v3068 = vmul.f32 %v2956, %v3052
        %v3069 = vmul.f32 %v2957, %v3053
        %v3070 = vmul.f32 %v2958, %v3054
        %v3071 = vmul.f32 %v2959, %v3055
        %v3072 = vmul.f32 %v3056, %v650
        %v3073 = vmul.f32 %v3057, %v650
        %v3074 = vmul.f32 %v3058, %v650
        %v3075 = vmul.f32 %v3059, %v650
        %v3076 = vmul.f32 %v3060, %v650
        %v3077 = vmul.f32 %v3061, %v650
        %v3078 = vmul.f32 %v3062, %v650
        %v3079 = vmul.f32 %v3063, %v650
        %v3080 = vmul.f32 %v3064, %v650
        %v3081 = vmul.f32 %v3065, %v650
        %v3082 = vmul.f32 %v3066, %v650
        %v3083 = vmul.f32 %v3067, %v650
        %v3084 = vmul.f32 %v3068, %v650
        %v3085 = vmul.f32 %v3069, %v650
        %v3086 = vmul.f32 %v3070, %v650
        %v3087 = vmul.f32 %v3071, %v650
        %v3088 = vadd.f32 %v3072, %v670
        %v3089 = vadd.f32 %v3073, %v670
        %v3090 = vadd.f32 %v3074, %v670
        %v3091 = vadd.f32 %v3075, %v670
        %v3092 = vadd.f32 %v3076, %v670
        %v3093 = vadd.f32 %v3077, %v670
        %v3094 = vadd.f32 %v3078, %v670
        %v3095 = vadd.f32 %v3079, %v670
        %v3096 = vadd.f32 %v3080, %v670
        %v3097 = vadd.f32 %v3081, %v670
        %v3098 = vadd.f32 %v3082, %v670
        %v3099 = vadd.f32 %v3083, %v670
        %v3100 = vadd.f32 %v3084, %v670
        %v3101 = vadd.f32 %v3085, %v670
        %v3102 = vadd.f32 %v3086, %v670
        %v3103 = vadd.f32 %v3087, %v670
        %v3104 = vpack.c.bf16 %v3089, %v3088
        %v3105 = vpack.c.bf16 %v3091, %v3090
        %v3106 = vpack.c.bf16 %v3093, %v3092
        %v3107 = vpack.c.bf16 %v3095, %v3094
        %v3108 = vpack.c.bf16 %v3097, %v3096
        %v3109 = vpack.c.bf16 %v3099, %v3098
        %v3110 = vpack.c.bf16 %v3101, %v3100
        %v3111 = vpack.c.bf16 %v3103, %v3102
        %s3112 = scalar_lea.vmem [#allocation2], 384
        %3113 = vst [vmem:[%s3112] sm:$0xff] %v3104
        %3114 = vst [vmem:[%s3112 + $0x8] sm:$0xff] %v3105
        %3115 = vst [vmem:[%s3112 + $0x10] sm:$0xff] %v3106
        %3116 = vst [vmem:[%s3112 + $0x18] sm:$0xff] %v3107
        %3117 = vst [vmem:[%s3112 + $0x20] sm:$0xff] %v3108
        %3118 = vst [vmem:[%s3112 + $0x28] sm:$0xff] %v3109
        %3119 = vst [vmem:[%s3112 + $0x30] sm:$0xff] %v3110
        %3120 = vst [vmem:[%s3112 + $0x38] sm:$0xff] %v3111
        %s3121 = scalar_lea.vmem %s222, 448
        %v3122 = vld [vmem:[%s3121] sm:$0xf]
        %v3123 = vld [vmem:[%s3121 + $0x4] sm:$0xf]
        %v3124 = vld [vmem:[%s3121 + $0x8] sm:$0xf]
        %v3125 = vld [vmem:[%s3121 + $0xc] sm:$0xf]
        %v3126 = vld [vmem:[%s3121 + $0x10] sm:$0xf]
        %v3127 = vld [vmem:[%s3121 + $0x14] sm:$0xf]
        %v3128 = vld [vmem:[%s3121 + $0x18] sm:$0xf]
        %v3129 = vld [vmem:[%s3121 + $0x1c] sm:$0xf]
        %v3130 = vld [vmem:[%s3121 + $0x20] sm:$0xf]
        %v3131 = vld [vmem:[%s3121 + $0x24] sm:$0xf]
        %v3132 = vld [vmem:[%s3121 + $0x28] sm:$0xf]
        %v3133 = vld [vmem:[%s3121 + $0x2c] sm:$0xf]
        %v3134 = vld [vmem:[%s3121 + $0x30] sm:$0xf]
        %v3135 = vld [vmem:[%s3121 + $0x34] sm:$0xf]
        %v3136 = vld [vmem:[%s3121 + $0x38] sm:$0xf]
        %v3137 = vld [vmem:[%s3121 + $0x3c] sm:$0xf]
        %v3154 = vunpack.c.l.b16 %v3122
        %v3155 = vunpack.c.l.b16 %v3123
        %v3156 = vunpack.c.l.b16 %v3124
        %v3157 = vunpack.c.l.b16 %v3125
        %v3158 = vunpack.c.l.b16 %v3126
        %v3159 = vunpack.c.l.b16 %v3127
        %v3160 = vunpack.c.l.b16 %v3128
        %v3161 = vunpack.c.l.b16 %v3129
        %v3162 = vunpack.c.l.b16 %v3130
        %v3163 = vunpack.c.l.b16 %v3131
        %v3164 = vunpack.c.l.b16 %v3132
        %v3165 = vunpack.c.l.b16 %v3133
        %v3166 = vunpack.c.l.b16 %v3134
        %v3167 = vunpack.c.l.b16 %v3135
        %v3168 = vunpack.c.l.b16 %v3136
        %v3169 = vunpack.c.l.b16 %v3137
        %v3170 = vpack.c.b16 %v3155, %v3154
        %v3171 = vpack.c.b16 %v3157, %v3156
        %v3172 = vpack.c.b16 %v3159, %v3158
        %v3173 = vpack.c.b16 %v3161, %v3160
        %v3174 = vpack.c.b16 %v3163, %v3162
        %v3175 = vpack.c.b16 %v3165, %v3164
        %v3176 = vpack.c.b16 %v3167, %v3166
        %v3177 = vpack.c.b16 %v3169, %v3168
        %3186 = vmatprep.subr.bf16.mxu0 0
        %3187 = vmatpush1.bf16.msra.mxu0 %v340
        %3188 = vmatprep.subr.bf16.mxu0 0
        %3189 = vmatpush1.bf16.msra.mxu0 %v341
        %3190 = vmatprep.subr.bf16.mxu0 0
        %3191 = vmatpush1.bf16.msra.mxu0 %v342
        %3192 = vmatprep.subr.bf16.mxu0 0
        %3193 = vmatpush1.bf16.msra.mxu0 %v343
        %3194 = vmatprep.subr.bf16.mxu0 0
        %3195 = vmatpush1.bf16.msra.mxu0 %v344
        %3196 = vmatprep.subr.bf16.mxu0 0
        %3197 = vmatpush1.bf16.msra.mxu0 %v345
        %3198 = vmatprep.subr.bf16.mxu0 0
        %3199 = vmatpush1.bf16.msra.mxu0 %v346
        %3200 = vmatprep.subr.bf16.mxu0 0
        %3201 = vmatpush1.bf16.msra.mxu0 %v347
        %3202 = vmatprep.subr.bf16.mxu0 0
        %3203 = vmatpush1.bf16.msra.mxu0 0
        %3204 = vmatprep.subr.bf16.mxu0 0
        %3205 = vmatpush1.bf16.msra.mxu0 0
        %3206 = vmatprep.subr.bf16.mxu0 0
        %3207 = vmatpush1.bf16.msra.mxu0 0
        %3208 = vmatprep.subr.bf16.mxu0 0
        %3209 = vmatpush1.bf16.msra.mxu0 0
        %3210 = vmatprep.subr.bf16.mxu0 0
        %3211 = vmatpush1.bf16.msra.mxu0 0
        %3212 = vmatprep.subr.bf16.mxu0 0
        %3213 = vmatpush1.bf16.msra.mxu0 0
        %3214 = vmatprep.subr.bf16.mxu0 0
        %3215 = vmatpush1.bf16.msra.mxu0 0
        %3216 = vmatprep.subr.bf16.mxu0 0
        %3217 = vmatpush1.bf16.msra.mxu0 0
        %3218 = vmatprep.mubr.bf16.mxu0 0
        %3219 = vmatmul.mubr.bf16.gmra.mrb[0].mxu0 %v3170
        %v3220 = vpop.f32.mrb[0].mxu0
        %v3221 = vadd.f32 0.0, %v3220
        %v3222 = vpop.f32.mrb[0].mxu0
        %v3223 = vpop.f32.mrb[0].mxu0
        %v3224 = vadd.f32 0.0, %v3223
        %v3225 = vpop.f32.mrb[0].mxu0
        %3226 = vmatprep.mubr.bf16.mxu0 0
        %3227 = vmatmul.mubr.bf16.gmra.mrb[0].mxu0 %v3171
        %v3228 = vpop.f32.mrb[0].mxu0
        %v3229 = vadd.f32 0.0, %v3228
        %v3230 = vpop.f32.mrb[0].mxu0
        %v3231 = vpop.f32.mrb[0].mxu0
        %v3232 = vadd.f32 0.0, %v3231
        %v3233 = vpop.f32.mrb[0].mxu0
        %3234 = vmatprep.mubr.bf16.mxu0 0
        %3235 = vmatmul.mubr.bf16.gmra.mrb[0].mxu0 %v3172
        %v3236 = vpop.f32.mrb[0].mxu0
        %v3237 = vadd.f32 0.0, %v3236
        %v3238 = vpop.f32.mrb[0].mxu0
        %v3239 = vpop.f32.mrb[0].mxu0
        %v3240 = vadd.f32 0.0, %v3239
        %v3241 = vpop.f32.mrb[0].mxu0
        %3242 = vmatprep.mubr.bf16.mxu0 0
        %3243 = vmatmul.mubr.bf16.gmra.mrb[0].mxu0 %v3173
        %v3244 = vpop.f32.mrb[0].mxu0
        %v3245 = vadd.f32 0.0, %v3244
        %v3246 = vpop.f32.mrb[0].mxu0
        %v3247 = vpop.f32.mrb[0].mxu0
        %v3248 = vadd.f32 0.0, %v3247
        %v3249 = vpop.f32.mrb[0].mxu0
        %3250 = vmatprep.mubr.bf16.mxu0 0
        %3251 = vmatmul.mubr.bf16.gmra.mrb[0].mxu0 %v3174
        %v3252 = vpop.f32.mrb[0].mxu0
        %v3253 = vadd.f32 0.0, %v3252
        %v3254 = vpop.f32.mrb[0].mxu0
        %v3255 = vpop.f32.mrb[0].mxu0
        %v3256 = vadd.f32 0.0, %v3255
        %v3257 = vpop.f32.mrb[0].mxu0
        %3258 = vmatprep.mubr.bf16.mxu0 0
        %3259 = vmatmul.mubr.bf16.gmra.mrb[0].mxu0 %v3175
        %v3260 = vpop.f32.mrb[0].mxu0
        %v3261 = vadd.f32 0.0, %v3260
        %v3262 = vpop.f32.mrb[0].mxu0
        %v3263 = vpop.f32.mrb[0].mxu0
        %v3264 = vadd.f32 0.0, %v3263
        %v3265 = vpop.f32.mrb[0].mxu0
        %3266 = vmatprep.mubr.bf16.mxu0 0
        %3267 = vmatmul.mubr.bf16.gmra.mrb[0].mxu0 %v3176
        %v3268 = vpop.f32.mrb[0].mxu0
        %v3269 = vadd.f32 0.0, %v3268
        %v3270 = vpop.f32.mrb[0].mxu0
        %v3271 = vpop.f32.mrb[0].mxu0
        %v3272 = vadd.f32 0.0, %v3271
        %v3273 = vpop.f32.mrb[0].mxu0
        %3274 = vmatprep.mubr.bf16.mxu0 0
        %3275 = vmatmul.mubr.bf16.gmra.mrb[0].mxu0 %v3177
        %v3276 = vpop.f32.mrb[0].mxu0
        %v3277 = vadd.f32 0.0, %v3276
        %v3278 = vpop.f32.mrb[0].mxu0
        %v3279 = vpop.f32.mrb[0].mxu0
        %v3280 = vadd.f32 0.0, %v3279
        %v3281 = vpop.f32.mrb[0].mxu0
        %3282 = vdwg.mxu0
        %3283 = vadd.xlane.f32.xlu0 %v3221
        %v3284 = vpop.xlane.xlu0 %3283
        %3285 = vadd.xlane.f32.xlu0 %v3224
        %v3286 = vpop.xlane.xlu0 %3285
        %3287 = vadd.xlane.f32.xlu0 %v3229
        %v3288 = vpop.xlane.xlu0 %3287
        %3289 = vadd.xlane.f32.xlu0 %v3232
        %v3290 = vpop.xlane.xlu0 %3289
        %3291 = vadd.xlane.f32.xlu0 %v3237
        %v3292 = vpop.xlane.xlu0 %3291
        %3293 = vadd.xlane.f32.xlu0 %v3240
        %v3294 = vpop.xlane.xlu0 %3293
        %3295 = vadd.xlane.f32.xlu0 %v3245
        %v3296 = vpop.xlane.xlu0 %3295
        %3297 = vadd.xlane.f32.xlu0 %v3248
        %v3298 = vpop.xlane.xlu0 %3297
        %3299 = vadd.xlane.f32.xlu0 %v3253
        %v3300 = vpop.xlane.xlu0 %3299
        %3301 = vadd.xlane.f32.xlu0 %v3256
        %v3302 = vpop.xlane.xlu0 %3301
        %3303 = vadd.xlane.f32.xlu0 %v3261
        %v3304 = vpop.xlane.xlu0 %3303
        %3305 = vadd.xlane.f32.xlu0 %v3264
        %v3306 = vpop.xlane.xlu0 %3305
        %3307 = vadd.xlane.f32.xlu0 %v3269
        %v3308 = vpop.xlane.xlu0 %3307
        %3309 = vadd.xlane.f32.xlu0 %v3272
        %v3310 = vpop.xlane.xlu0 %3309
        %3311 = vadd.xlane.f32.xlu0 %v3277
        %v3312 = vpop.xlane.xlu0 %3311
        %3313 = vadd.xlane.f32.xlu0 %v3280
        %v3314 = vpop.xlane.xlu0 %3313
        %v3315 = vmul.f32 %v3284, 0.03125
        %v3316 = vmul.f32 %v3286, 0.03125
        %v3317 = vmul.f32 %v3288, 0.03125
        %v3318 = vmul.f32 %v3290, 0.03125
        %v3319 = vmul.f32 %v3292, 0.03125
        %v3320 = vmul.f32 %v3294, 0.03125
        %v3321 = vmul.f32 %v3296, 0.03125
        %v3322 = vmul.f32 %v3298, 0.03125
        %v3323 = vmul.f32 %v3300, 0.03125
        %v3324 = vmul.f32 %v3302, 0.03125
        %v3325 = vmul.f32 %v3304, 0.03125
        %v3326 = vmul.f32 %v3306, 0.03125
        %v3327 = vmul.f32 %v3308, 0.03125
        %v3328 = vmul.f32 %v3310, 0.03125
        %v3329 = vmul.f32 %v3312, 0.03125
        %v3330 = vmul.f32 %v3314, 0.03125
        %v3331 = vsub.f32 %v3221, %v3315
        %v3332 = vsub.f32 %v3224, %v3316
        %v3333 = vsub.f32 %v3229, %v3317
        %v3334 = vsub.f32 %v3232, %v3318
        %v3335 = vsub.f32 %v3237, %v3319
        %v3336 = vsub.f32 %v3240, %v3320
        %v3337 = vsub.f32 %v3245, %v3321
        %v3338 = vsub.f32 %v3248, %v3322
        %v3339 = vsub.f32 %v3253, %v3323
        %v3340 = vsub.f32 %v3256, %v3324
        %v3341 = vsub.f32 %v3261, %v3325
        %v3342 = vsub.f32 %v3264, %v3326
        %v3343 = vsub.f32 %v3269, %v3327
        %v3344 = vsub.f32 %v3272, %v3328
        %v3345 = vsub.f32 %v3277, %v3329
        %v3346 = vsub.f32 %v3280, %v3330
        %v3347 = vsel %vm518, %v3331, 0.0
        %v3348 = vsel %vm518, %v3332, 0.0
        %v3349 = vsel %vm518, %v3333, 0.0
        %v3350 = vsel %vm518, %v3334, 0.0
        %v3351 = vsel %vm518, %v3335, 0.0
        %v3352 = vsel %vm518, %v3336, 0.0
        %v3353 = vsel %vm518, %v3337, 0.0
        %v3354 = vsel %vm518, %v3338, 0.0
        %v3355 = vsel %vm518, %v3339, 0.0
        %v3356 = vsel %vm518, %v3340, 0.0
        %v3357 = vsel %vm518, %v3341, 0.0
        %v3358 = vsel %vm518, %v3342, 0.0
        %v3359 = vsel %vm518, %v3343, 0.0
        %v3360 = vsel %vm518, %v3344, 0.0
        %v3361 = vsel %vm518, %v3345, 0.0
        %v3362 = vsel %vm518, %v3346, 0.0
        %v3363 = vmul.f32 %v3347, %v3347
        %v3364 = vmul.f32 %v3348, %v3348
        %v3365 = vmul.f32 %v3349, %v3349
        %v3366 = vmul.f32 %v3350, %v3350
        %v3367 = vmul.f32 %v3351, %v3351
        %v3368 = vmul.f32 %v3352, %v3352
        %v3369 = vmul.f32 %v3353, %v3353
        %v3370 = vmul.f32 %v3354, %v3354
        %v3371 = vmul.f32 %v3355, %v3355
        %v3372 = vmul.f32 %v3356, %v3356
        %v3373 = vmul.f32 %v3357, %v3357
        %v3374 = vmul.f32 %v3358, %v3358
        %v3375 = vmul.f32 %v3359, %v3359
        %v3376 = vmul.f32 %v3360, %v3360
        %v3377 = vmul.f32 %v3361, %v3361
        %v3378 = vmul.f32 %v3362, %v3362
        %3379 = vadd.xlane.f32.xlu0 %v3363
        %v3380 = vpop.xlane.xlu0 %3379
        %3381 = vadd.xlane.f32.xlu0 %v3364
        %v3382 = vpop.xlane.xlu0 %3381
        %3383 = vadd.xlane.f32.xlu0 %v3365
        %v3384 = vpop.xlane.xlu0 %3383
        %3385 = vadd.xlane.f32.xlu0 %v3366
        %v3386 = vpop.xlane.xlu0 %3385
        %3387 = vadd.xlane.f32.xlu0 %v3367
        %v3388 = vpop.xlane.xlu0 %3387
        %3389 = vadd.xlane.f32.xlu0 %v3368
        %v3390 = vpop.xlane.xlu0 %3389
        %3391 = vadd.xlane.f32.xlu0 %v3369
        %v3392 = vpop.xlane.xlu0 %3391
        %3393 = vadd.xlane.f32.xlu0 %v3370
        %v3394 = vpop.xlane.xlu0 %3393
        %3395 = vadd.xlane.f32.xlu0 %v3371
        %v3396 = vpop.xlane.xlu0 %3395
        %3397 = vadd.xlane.f32.xlu0 %v3372
        %v3398 = vpop.xlane.xlu0 %3397
        %3399 = vadd.xlane.f32.xlu0 %v3373
        %v3400 = vpop.xlane.xlu0 %3399
        %3401 = vadd.xlane.f32.xlu0 %v3374
        %v3402 = vpop.xlane.xlu0 %3401
        %3403 = vadd.xlane.f32.xlu0 %v3375
        %v3404 = vpop.xlane.xlu0 %3403
        %3405 = vadd.xlane.f32.xlu0 %v3376
        %v3406 = vpop.xlane.xlu0 %3405
        %3407 = vadd.xlane.f32.xlu0 %v3377
        %v3408 = vpop.xlane.xlu0 %3407
        %3409 = vadd.xlane.f32.xlu0 %v3378
        %v3410 = vpop.xlane.xlu0 %3409
        %v3411 = vmul.f32 %v3380, 0.03125
        %v3412 = vmul.f32 %v3382, 0.03125
        %v3413 = vmul.f32 %v3384, 0.03125
        %v3414 = vmul.f32 %v3386, 0.03125
        %v3415 = vmul.f32 %v3388, 0.03125
        %v3416 = vmul.f32 %v3390, 0.03125
        %v3417 = vmul.f32 %v3392, 0.03125
        %v3418 = vmul.f32 %v3394, 0.03125
        %v3419 = vmul.f32 %v3396, 0.03125
        %v3420 = vmul.f32 %v3398, 0.03125
        %v3421 = vmul.f32 %v3400, 0.03125
        %v3422 = vmul.f32 %v3402, 0.03125
        %v3423 = vmul.f32 %v3404, 0.03125
        %v3424 = vmul.f32 %v3406, 0.03125
        %v3425 = vmul.f32 %v3408, 0.03125
        %v3426 = vmul.f32 %v3410, 0.03125
        %v3427 = vadd.f32 %v3411, 1e-05
        %v3428 = vadd.f32 %v3412, 1e-05
        %v3429 = vadd.f32 %v3413, 1e-05
        %v3430 = vadd.f32 %v3414, 1e-05
        %v3431 = vadd.f32 %v3415, 1e-05
        %v3432 = vadd.f32 %v3416, 1e-05
        %v3433 = vadd.f32 %v3417, 1e-05
        %v3434 = vadd.f32 %v3418, 1e-05
        %v3435 = vadd.f32 %v3419, 1e-05
        %v3436 = vadd.f32 %v3420, 1e-05
        %v3437 = vadd.f32 %v3421, 1e-05
        %v3438 = vadd.f32 %v3422, 1e-05
        %v3439 = vadd.f32 %v3423, 1e-05
        %v3440 = vadd.f32 %v3424, 1e-05
        %v3441 = vadd.f32 %v3425, 1e-05
        %v3442 = vadd.f32 %v3426, 1e-05
        %v3443 = vrsqrt.pop %v3427
        %v3444 = vrsqrt.pop %v3428
        %v3445 = vrsqrt.pop %v3429
        %v3446 = vrsqrt.pop %v3430
        %v3447 = vrsqrt.pop %v3431
        %v3448 = vrsqrt.pop %v3432
        %v3449 = vrsqrt.pop %v3433
        %v3450 = vrsqrt.pop %v3434
        %v3451 = vrsqrt.pop %v3435
        %v3452 = vrsqrt.pop %v3436
        %v3453 = vrsqrt.pop %v3437
        %v3454 = vrsqrt.pop %v3438
        %v3455 = vrsqrt.pop %v3439
        %v3456 = vrsqrt.pop %v3440
        %v3457 = vrsqrt.pop %v3441
        %v3458 = vrsqrt.pop %v3442
        %v3459 = vmul.f32 %v3347, %v3443
        %v3460 = vmul.f32 %v3348, %v3444
        %v3461 = vmul.f32 %v3349, %v3445
        %v3462 = vmul.f32 %v3350, %v3446
        %v3463 = vmul.f32 %v3351, %v3447
        %v3464 = vmul.f32 %v3352, %v3448
        %v3465 = vmul.f32 %v3353, %v3449
        %v3466 = vmul.f32 %v3354, %v3450
        %v3467 = vmul.f32 %v3355, %v3451
        %v3468 = vmul.f32 %v3356, %v3452
        %v3469 = vmul.f32 %v3357, %v3453
        %v3470 = vmul.f32 %v3358, %v3454
        %v3471 = vmul.f32 %v3359, %v3455
        %v3472 = vmul.f32 %v3360, %v3456
        %v3473 = vmul.f32 %v3361, %v3457
        %v3474 = vmul.f32 %v3362, %v3458
        %v3475 = vmul.f32 %v3459, %v650
        %v3476 = vmul.f32 %v3460, %v650
        %v3477 = vmul.f32 %v3461, %v650
        %v3478 = vmul.f32 %v3462, %v650
        %v3479 = vmul.f32 %v3463, %v650
        %v3480 = vmul.f32 %v3464, %v650
        %v3481 = vmul.f32 %v3465, %v650
        %v3482 = vmul.f32 %v3466, %v650
        %v3483 = vmul.f32 %v3467, %v650
        %v3484 = vmul.f32 %v3468, %v650
        %v3485 = vmul.f32 %v3469, %v650
        %v3486 = vmul.f32 %v3470, %v650
        %v3487 = vmul.f32 %v3471, %v650
        %v3488 = vmul.f32 %v3472, %v650
        %v3489 = vmul.f32 %v3473, %v650
        %v3490 = vmul.f32 %v3474, %v650
        %v3491 = vadd.f32 %v3475, %v670
        %v3492 = vadd.f32 %v3476, %v670
        %v3493 = vadd.f32 %v3477, %v670
        %v3494 = vadd.f32 %v3478, %v670
        %v3495 = vadd.f32 %v3479, %v670
        %v3496 = vadd.f32 %v3480, %v670
        %v3497 = vadd.f32 %v3481, %v670
        %v3498 = vadd.f32 %v3482, %v670
        %v3499 = vadd.f32 %v3483, %v670
        %v3500 = vadd.f32 %v3484, %v670
        %v3501 = vadd.f32 %v3485, %v670
        %v3502 = vadd.f32 %v3486, %v670
        %v3503 = vadd.f32 %v3487, %v670
        %v3504 = vadd.f32 %v3488, %v670
        %v3505 = vadd.f32 %v3489, %v670
        %v3506 = vadd.f32 %v3490, %v670
        %v3507 = vpack.c.bf16 %v3492, %v3491
        %v3508 = vpack.c.bf16 %v3494, %v3493
        %v3509 = vpack.c.bf16 %v3496, %v3495
        %v3510 = vpack.c.bf16 %v3498, %v3497
        %v3511 = vpack.c.bf16 %v3500, %v3499
        %v3512 = vpack.c.bf16 %v3502, %v3501
        %v3513 = vpack.c.bf16 %v3504, %v3503
        %v3514 = vpack.c.bf16 %v3506, %v3505
        %s3515 = scalar_lea.vmem [#allocation2], 448
        %3516 = vst [vmem:[%s3515] sm:$0xff] %v3507
        %3517 = vst [vmem:[%s3515 + $0x8] sm:$0xff] %v3508
        %3518 = vst [vmem:[%s3515 + $0x10] sm:$0xff] %v3509
        %3519 = vst [vmem:[%s3515 + $0x18] sm:$0xff] %v3510
        %3520 = vst [vmem:[%s3515 + $0x20] sm:$0xff] %v3511
        %3521 = vst [vmem:[%s3515 + $0x28] sm:$0xff] %v3512
        %3522 = vst [vmem:[%s3515 + $0x30] sm:$0xff] %v3513
        %3523 = vst [vmem:[%s3515 + $0x38] sm:$0xff] %v3514
        %v3524 = vld [vmem:[#allocation2] sm:$0xff]
        %v3525 = vld [vmem:[#allocation2 + $0x8] sm:$0xff]
        %v3526 = vld [vmem:[#allocation2 + $0x10] sm:$0xff]
        %v3527 = vld [vmem:[#allocation2 + $0x18] sm:$0xff]
        %v3528 = vunpack.c.l.bf16 %v3524
        %v3529 = vunpack.c.h.bf16 %v3524
        %v3530 = vunpack.c.l.bf16 %v3525
        %v3531 = vunpack.c.h.bf16 %v3525
        %v3532 = vunpack.c.l.bf16 %v3526
        %v3533 = vunpack.c.h.bf16 %v3526
        %v3534 = vunpack.c.l.bf16 %v3527
        %v3535 = vunpack.c.h.bf16 %v3527
        %3536 = vadd.xlane.f32.xlu0 %v3528
        %v3537 = vpop.xlane.xlu0 %3536
        %3538 = vadd.xlane.f32.xlu0 %v3529
        %v3539 = vpop.xlane.xlu0 %3538
        %3540 = vadd.xlane.f32.xlu0 %v3530
        %v3541 = vpop.xlane.xlu0 %3540
        %3542 = vadd.xlane.f32.xlu0 %v3531
        %v3543 = vpop.xlane.xlu0 %3542
        %3544 = vadd.xlane.f32.xlu0 %v3532
        %v3545 = vpop.xlane.xlu0 %3544
        %3546 = vadd.xlane.f32.xlu0 %v3533
        %v3547 = vpop.xlane.xlu0 %3546
        %3548 = vadd.xlane.f32.xlu0 %v3534
        %v3549 = vpop.xlane.xlu0 %3548
        %3550 = vadd.xlane.f32.xlu0 %v3535
        %v3551 = vpop.xlane.xlu0 %3550
        %v3552 = vadd.f32 %v3537, 0.0
        %v3553 = vadd.f32 %v3539, 0.0
        %v3554 = vadd.f32 %v3541, 0.0
        %v3555 = vadd.f32 %v3543, 0.0
        %v3556 = vadd.f32 %v3545, 0.0
        %v3557 = vadd.f32 %v3547, 0.0
        %v3558 = vadd.f32 %v3549, 0.0
        %v3559 = vadd.f32 %v3551, 0.0
        %s3560 = sadd.s32 0, 256
        %s3561 = sshra.s32 %s3560, 4
        %s3562 = sand.u32 %s3560, 15
        %s3563 = smul.addr %s3561, 8
        %s3564 = scalar_lea.vmem [#allocation2], %s3563
        %v3565 = vld [vmem:[%s3564] sm:$0xff]
        %v3566 = vld [vmem:[%s3564 + $0x8] sm:$0xff]
        %v3567 = vld [vmem:[%s3564 + $0x10] sm:$0xff]
        %v3568 = vld [vmem:[%s3564 + $0x18] sm:$0xff]
        %v3569 = vunpack.c.l.bf16 %v3565
        %v3570 = vunpack.c.h.bf16 %v3565
        %v3571 = vunpack.c.l.bf16 %v3566
        %v3572 = vunpack.c.h.bf16 %v3566
        %v3573 = vunpack.c.l.bf16 %v3567
        %v3574 = vunpack.c.h.bf16 %v3567
        %v3575 = vunpack.c.l.bf16 %v3568
        %v3576 = vunpack.c.h.bf16 %v3568
        %3577 = vadd.xlane.f32.xlu0 %v3569
        %v3578 = vpop.xlane.xlu0 %3577
        %3579 = vadd.xlane.f32.xlu0 %v3570
        %v3580 = vpop.xlane.xlu0 %3579
        %3581 = vadd.xlane.f32.xlu0 %v3571
        %v3582 = vpop.xlane.xlu0 %3581
        %3583 = vadd.xlane.f32.xlu0 %v3572
        %v3584 = vpop.xlane.xlu0 %3583
        %3585 = vadd.xlane.f32.xlu0 %v3573
        %v3586 = vpop.xlane.xlu0 %3585
        %3587 = vadd.xlane.f32.xlu0 %v3574
        %v3588 = vpop.xlane.xlu0 %3587
        %3589 = vadd.xlane.f32.xlu0 %v3575
        %v3590 = vpop.xlane.xlu0 %3589
        %3591 = vadd.xlane.f32.xlu0 %v3576
        %v3592 = vpop.xlane.xlu0 %3591
        %v3593 = vadd.f32 %v3552, %v3578
        %v3594 = vadd.f32 %v3553, %v3580
        %v3595 = vadd.f32 %v3554, %v3582
        %v3596 = vadd.f32 %v3555, %v3584
        %v3597 = vadd.f32 %v3556, %v3586
        %v3598 = vadd.f32 %v3557, %v3588
        %v3599 = vadd.f32 %v3558, %v3590
        %v3600 = vadd.f32 %v3559, %v3592
        %s3601 = sadd.s32 0, 512
        %s3602 = sshra.s32 %s3601, 4
        %s3603 = sand.u32 %s3601, 15
        %s3604 = smul.addr %s3602, 8
        %s3605 = scalar_lea.vmem [#allocation2], %s3604
        %v3606 = vld [vmem:[%s3605] sm:$0xff]
        %v3607 = vld [vmem:[%s3605 + $0x8] sm:$0xff]
        %v3608 = vld [vmem:[%s3605 + $0x10] sm:$0xff]
        %v3609 = vld [vmem:[%s3605 + $0x18] sm:$0xff]
        %v3610 = vunpack.c.l.bf16 %v3606
        %v3611 = vunpack.c.h.bf16 %v3606
        %v3612 = vunpack.c.l.bf16 %v3607
        %v3613 = vunpack.c.h.bf16 %v3607
        %v3614 = vunpack.c.l.bf16 %v3608
        %v3615 = vunpack.c.h.bf16 %v3608
        %v3616 = vunpack.c.l.bf16 %v3609
        %v3617 = vunpack.c.h.bf16 %v3609
        %3618 = vadd.xlane.f32.xlu0 %v3610
        %v3619 = vpop.xlane.xlu0 %3618
        %3620 = vadd.xlane.f32.xlu0 %v3611
        %v3621 = vpop.xlane.xlu0 %3620
        %3622 = vadd.xlane.f32.xlu0 %v3612
        %v3623 = vpop.xlane.xlu0 %3622
        %3624 = vadd.xlane.f32.xlu0 %v3613
        %v3625 = vpop.xlane.xlu0 %3624
        %3626 = vadd.xlane.f32.xlu0 %v3614
        %v3627 = vpop.xlane.xlu0 %3626
        %3628 = vadd.xlane.f32.xlu0 %v3615
        %v3629 = vpop.xlane.xlu0 %3628
        %3630 = vadd.xlane.f32.xlu0 %v3616
        %v3631 = vpop.xlane.xlu0 %3630
        %3632 = vadd.xlane.f32.xlu0 %v3617
        %v3633 = vpop.xlane.xlu0 %3632
        %v3634 = vadd.f32 %v3593, %v3619
        %v3635 = vadd.f32 %v3594, %v3621
        %v3636 = vadd.f32 %v3595, %v3623
        %v3637 = vadd.f32 %v3596, %v3625
        %v3638 = vadd.f32 %v3597, %v3627
        %v3639 = vadd.f32 %v3598, %v3629
        %v3640 = vadd.f32 %v3599, %v3631
        %v3641 = vadd.f32 %v3600, %v3633
        %s3642 = sadd.s32 0, 768
        %s3643 = sshra.s32 %s3642, 4
        %s3644 = sand.u32 %s3642, 15
        %s3645 = smul.addr %s3643, 8
        %s3646 = scalar_lea.vmem [#allocation2], %s3645
        %v3647 = vld [vmem:[%s3646] sm:$0xff]
        %v3648 = vld [vmem:[%s3646 + $0x8] sm:$0xff]
        %v3649 = vld [vmem:[%s3646 + $0x10] sm:$0xff]
        %v3650 = vld [vmem:[%s3646 + $0x18] sm:$0xff]
        %v3651 = vunpack.c.l.bf16 %v3647
        %v3652 = vunpack.c.h.bf16 %v3647
        %v3653 = vunpack.c.l.bf16 %v3648
        %v3654 = vunpack.c.h.bf16 %v3648
        %v3655 = vunpack.c.l.bf16 %v3649
        %v3656 = vunpack.c.h.bf16 %v3649
        %v3657 = vunpack.c.l.bf16 %v3650
        %v3658 = vunpack.c.h.bf16 %v3650
        %3659 = vadd.xlane.f32.xlu0 %v3651
        %v3660 = vpop.xlane.xlu0 %3659
        %3661 = vadd.xlane.f32.xlu0 %v3652
        %v3662 = vpop.xlane.xlu0 %3661
        %3663 = vadd.xlane.f32.xlu0 %v3653
        %v3664 = vpop.xlane.xlu0 %3663
        %3665 = vadd.xlane.f32.xlu0 %v3654
        %v3666 = vpop.xlane.xlu0 %3665
        %3667 = vadd.xlane.f32.xlu0 %v3655
        %v3668 = vpop.xlane.xlu0 %3667
        %3669 = vadd.xlane.f32.xlu0 %v3656
        %v3670 = vpop.xlane.xlu0 %3669
        %3671 = vadd.xlane.f32.xlu0 %v3657
        %v3672 = vpop.xlane.xlu0 %3671
        %3673 = vadd.xlane.f32.xlu0 %v3658
        %v3674 = vpop.xlane.xlu0 %3673
        %v3675 = vadd.f32 %v3634, %v3660
        %v3676 = vadd.f32 %v3635, %v3662
        %v3677 = vadd.f32 %v3636, %v3664
        %v3678 = vadd.f32 %v3637, %v3666
        %v3679 = vadd.f32 %v3638, %v3668
        %v3680 = vadd.f32 %v3639, %v3670
        %v3681 = vadd.f32 %v3640, %v3672
        %v3682 = vadd.f32 %v3641, %v3674
        %v3683 = vmul.f32 %v3675, 0.0078125
        %v3684 = vmul.f32 %v3676, 0.0078125
        %v3685 = vmul.f32 %v3677, 0.0078125
        %v3686 = vmul.f32 %v3678, 0.0078125
        %v3687 = vmul.f32 %v3679, 0.0078125
        %v3688 = vmul.f32 %v3680, 0.0078125
        %v3689 = vmul.f32 %v3681, 0.0078125
        %v3690 = vmul.f32 %v3682, 0.0078125
        %v3691 = vsub.f32 %v3528, %v3683
        %v3692 = vsub.f32 %v3529, %v3684
        %v3693 = vsub.f32 %v3530, %v3685
        %v3694 = vsub.f32 %v3531, %v3686
        %v3695 = vsub.f32 %v3532, %v3687
        %v3696 = vsub.f32 %v3533, %v3688
        %v3697 = vsub.f32 %v3534, %v3689
        %v3698 = vsub.f32 %v3535, %v3690
        %v3699 = vsel %vm518, %v3691, 0.0
        %v3700 = vsel %vm518, %v3692, 0.0
        %v3701 = vsel %vm518, %v3693, 0.0
        %v3702 = vsel %vm518, %v3694, 0.0
        %v3703 = vsel %vm518, %v3695, 0.0
        %v3704 = vsel %vm518, %v3696, 0.0
        %v3705 = vsel %vm518, %v3697, 0.0
        %v3706 = vsel %vm518, %v3698, 0.0
        %v3707 = vmul.f32 %v3699, %v3699
        %v3708 = vmul.f32 %v3700, %v3700
        %v3709 = vmul.f32 %v3701, %v3701
        %v3710 = vmul.f32 %v3702, %v3702
        %v3711 = vmul.f32 %v3703, %v3703
        %v3712 = vmul.f32 %v3704, %v3704
        %v3713 = vmul.f32 %v3705, %v3705
        %v3714 = vmul.f32 %v3706, %v3706
        %3715 = vadd.xlane.f32.xlu0 %v3707
        %v3716 = vpop.xlane.xlu0 %3715
        %3717 = vadd.xlane.f32.xlu0 %v3708
        %v3718 = vpop.xlane.xlu0 %3717
        %3719 = vadd.xlane.f32.xlu0 %v3709
        %v3720 = vpop.xlane.xlu0 %3719
        %3721 = vadd.xlane.f32.xlu0 %v3710
        %v3722 = vpop.xlane.xlu0 %3721
        %3723 = vadd.xlane.f32.xlu0 %v3711
        %v3724 = vpop.xlane.xlu0 %3723
        %3725 = vadd.xlane.f32.xlu0 %v3712
        %v3726 = vpop.xlane.xlu0 %3725
        %3727 = vadd.xlane.f32.xlu0 %v3713
        %v3728 = vpop.xlane.xlu0 %3727
        %3729 = vadd.xlane.f32.xlu0 %v3714
        %v3730 = vpop.xlane.xlu0 %3729
        %v3731 = vadd.f32 %v3716, 0.0
        %v3732 = vadd.f32 %v3718, 0.0
        %v3733 = vadd.f32 %v3720, 0.0
        %v3734 = vadd.f32 %v3722, 0.0
        %v3735 = vadd.f32 %v3724, 0.0
        %v3736 = vadd.f32 %v3726, 0.0
        %v3737 = vadd.f32 %v3728, 0.0
        %v3738 = vadd.f32 %v3730, 0.0
        %v3739 = vsub.f32 %v3569, %v3683
        %v3740 = vsub.f32 %v3570, %v3684
        %v3741 = vsub.f32 %v3571, %v3685
        %v3742 = vsub.f32 %v3572, %v3686
        %v3743 = vsub.f32 %v3573, %v3687
        %v3744 = vsub.f32 %v3574, %v3688
        %v3745 = vsub.f32 %v3575, %v3689
        %v3746 = vsub.f32 %v3576, %v3690
        %v3747 = vsel %vm518, %v3739, 0.0
        %v3748 = vsel %vm518, %v3740, 0.0
        %v3749 = vsel %vm518, %v3741, 0.0
        %v3750 = vsel %vm518, %v3742, 0.0
        %v3751 = vsel %vm518, %v3743, 0.0
        %v3752 = vsel %vm518, %v3744, 0.0
        %v3753 = vsel %vm518, %v3745, 0.0
        %v3754 = vsel %vm518, %v3746, 0.0
        %v3755 = vmul.f32 %v3747, %v3747
        %v3756 = vmul.f32 %v3748, %v3748
        %v3757 = vmul.f32 %v3749, %v3749
        %v3758 = vmul.f32 %v3750, %v3750
        %v3759 = vmul.f32 %v3751, %v3751
        %v3760 = vmul.f32 %v3752, %v3752
        %v3761 = vmul.f32 %v3753, %v3753
        %v3762 = vmul.f32 %v3754, %v3754
        %3763 = vadd.xlane.f32.xlu0 %v3755
        %v3764 = vpop.xlane.xlu0 %3763
        %3765 = vadd.xlane.f32.xlu0 %v3756
        %v3766 = vpop.xlane.xlu0 %3765
        %3767 = vadd.xlane.f32.xlu0 %v3757
        %v3768 = vpop.xlane.xlu0 %3767
        %3769 = vadd.xlane.f32.xlu0 %v3758
        %v3770 = vpop.xlane.xlu0 %3769
        %3771 = vadd.xlane.f32.xlu0 %v3759
        %v3772 = vpop.xlane.xlu0 %3771
        %3773 = vadd.xlane.f32.xlu0 %v3760
        %v3774 = vpop.xlane.xlu0 %3773
        %3775 = vadd.xlane.f32.xlu0 %v3761
        %v3776 = vpop.xlane.xlu0 %3775
        %3777 = vadd.xlane.f32.xlu0 %v3762
        %v3778 = vpop.xlane.xlu0 %3777
        %v3779 = vadd.f32 %v3731, %v3764
        %v3780 = vadd.f32 %v3732, %v3766
        %v3781 = vadd.f32 %v3733, %v3768
        %v3782 = vadd.f32 %v3734, %v3770
        %v3783 = vadd.f32 %v3735, %v3772
        %v3784 = vadd.f32 %v3736, %v3774
        %v3785 = vadd.f32 %v3737, %v3776
        %v3786 = vadd.f32 %v3738, %v3778
        %v3787 = vsub.f32 %v3610, %v3683
        %v3788 = vsub.f32 %v3611, %v3684
        %v3789 = vsub.f32 %v3612, %v3685
        %v3790 = vsub.f32 %v3613, %v3686
        %v3791 = vsub.f32 %v3614, %v3687
        %v3792 = vsub.f32 %v3615, %v3688
        %v3793 = vsub.f32 %v3616, %v3689
        %v3794 = vsub.f32 %v3617, %v3690
        %v3795 = vsel %vm518, %v3787, 0.0
        %v3796 = vsel %vm518, %v3788, 0.0
        %v3797 = vsel %vm518, %v3789, 0.0
        %v3798 = vsel %vm518, %v3790, 0.0
        %v3799 = vsel %vm518, %v3791, 0.0
        %v3800 = vsel %vm518, %v3792, 0.0
        %v3801 = vsel %vm518, %v3793, 0.0
        %v3802 = vsel %vm518, %v3794, 0.0
        %v3803 = vmul.f32 %v3795, %v3795
        %v3804 = vmul.f32 %v3796, %v3796
        %v3805 = vmul.f32 %v3797, %v3797
        %v3806 = vmul.f32 %v3798, %v3798
        %v3807 = vmul.f32 %v3799, %v3799
        %v3808 = vmul.f32 %v3800, %v3800
        %v3809 = vmul.f32 %v3801, %v3801
        %v3810 = vmul.f32 %v3802, %v3802
        %3811 = vadd.xlane.f32.xlu0 %v3803
        %v3812 = vpop.xlane.xlu0 %3811
        %3813 = vadd.xlane.f32.xlu0 %v3804
        %v3814 = vpop.xlane.xlu0 %3813
        %3815 = vadd.xlane.f32.xlu0 %v3805
        %v3816 = vpop.xlane.xlu0 %3815
        %3817 = vadd.xlane.f32.xlu0 %v3806
        %v3818 = vpop.xlane.xlu0 %3817
        %3819 = vadd.xlane.f32.xlu0 %v3807
        %v3820 = vpop.xlane.xlu0 %3819
        %3821 = vadd.xlane.f32.xlu0 %v3808
        %v3822 = vpop.xlane.xlu0 %3821
        %3823 = vadd.xlane.f32.xlu0 %v3809
        %v3824 = vpop.xlane.xlu0 %3823
        %3825 = vadd.xlane.f32.xlu0 %v3810
        %v3826 = vpop.xlane.xlu0 %3825
        %v3827 = vadd.f32 %v3779, %v3812
        %v3828 = vadd.f32 %v3780, %v3814
        %v3829 = vadd.f32 %v3781, %v3816
        %v3830 = vadd.f32 %v3782, %v3818
        %v3831 = vadd.f32 %v3783, %v3820
        %v3832 = vadd.f32 %v3784, %v3822
        %v3833 = vadd.f32 %v3785, %v3824
        %v3834 = vadd.f32 %v3786, %v3826
        %v3835 = vsub.f32 %v3651, %v3683
        %v3836 = vsub.f32 %v3652, %v3684
        %v3837 = vsub.f32 %v3653, %v3685
        %v3838 = vsub.f32 %v3654, %v3686
        %v3839 = vsub.f32 %v3655, %v3687
        %v3840 = vsub.f32 %v3656, %v3688
        %v3841 = vsub.f32 %v3657, %v3689
        %v3842 = vsub.f32 %v3658, %v3690
        %v3843 = vsel %vm518, %v3835, 0.0
        %v3844 = vsel %vm518, %v3836, 0.0
        %v3845 = vsel %vm518, %v3837, 0.0
        %v3846 = vsel %vm518, %v3838, 0.0
        %v3847 = vsel %vm518, %v3839, 0.0
        %v3848 = vsel %vm518, %v3840, 0.0
        %v3849 = vsel %vm518, %v3841, 0.0
        %v3850 = vsel %vm518, %v3842, 0.0
        %v3851 = vmul.f32 %v3843, %v3843
        %v3852 = vmul.f32 %v3844, %v3844
        %v3853 = vmul.f32 %v3845, %v3845
        %v3854 = vmul.f32 %v3846, %v3846
        %v3855 = vmul.f32 %v3847, %v3847
        %v3856 = vmul.f32 %v3848, %v3848
        %v3857 = vmul.f32 %v3849, %v3849
        %v3858 = vmul.f32 %v3850, %v3850
        %3859 = vadd.xlane.f32.xlu0 %v3851
        %v3860 = vpop.xlane.xlu0 %3859
        %3861 = vadd.xlane.f32.xlu0 %v3852
        %v3862 = vpop.xlane.xlu0 %3861
        %3863 = vadd.xlane.f32.xlu0 %v3853
        %v3864 = vpop.xlane.xlu0 %3863
        %3865 = vadd.xlane.f32.xlu0 %v3854
        %v3866 = vpop.xlane.xlu0 %3865
        %3867 = vadd.xlane.f32.xlu0 %v3855
        %v3868 = vpop.xlane.xlu0 %3867
        %3869 = vadd.xlane.f32.xlu0 %v3856
        %v3870 = vpop.xlane.xlu0 %3869
        %3871 = vadd.xlane.f32.xlu0 %v3857
        %v3872 = vpop.xlane.xlu0 %3871
        %3873 = vadd.xlane.f32.xlu0 %v3858
        %v3874 = vpop.xlane.xlu0 %3873
        %v3875 = vadd.f32 %v3827, %v3860
        %v3876 = vadd.f32 %v3828, %v3862
        %v3877 = vadd.f32 %v3829, %v3864
        %v3878 = vadd.f32 %v3830, %v3866
        %v3879 = vadd.f32 %v3831, %v3868
        %v3880 = vadd.f32 %v3832, %v3870
        %v3881 = vadd.f32 %v3833, %v3872
        %v3882 = vadd.f32 %v3834, %v3874
        %v3883 = vmul.f32 %v3875, 0.0078125
        %v3884 = vmul.f32 %v3876, 0.0078125
        %v3885 = vmul.f32 %v3877, 0.0078125
        %v3886 = vmul.f32 %v3878, 0.0078125
        %v3887 = vmul.f32 %v3879, 0.0078125
        %v3888 = vmul.f32 %v3880, 0.0078125
        %v3889 = vmul.f32 %v3881, 0.0078125
        %v3890 = vmul.f32 %v3882, 0.0078125
        %v3891 = vadd.f32 %v3883, 1e-05
        %v3892 = vadd.f32 %v3884, 1e-05
        %v3893 = vadd.f32 %v3885, 1e-05
        %v3894 = vadd.f32 %v3886, 1e-05
        %v3895 = vadd.f32 %v3887, 1e-05
        %v3896 = vadd.f32 %v3888, 1e-05
        %v3897 = vadd.f32 %v3889, 1e-05
        %v3898 = vadd.f32 %v3890, 1e-05
        %v3899 = vrsqrt.pop %v3891
        %v3900 = vrsqrt.pop %v3892
        %v3901 = vrsqrt.pop %v3893
        %v3902 = vrsqrt.pop %v3894
        %v3903 = vrsqrt.pop %v3895
        %v3904 = vrsqrt.pop %v3896
        %v3905 = vrsqrt.pop %v3897
        %v3906 = vrsqrt.pop %v3898
        %v3907 = vmul.f32 %v3691, %v3899
        %v3908 = vmul.f32 %v3692, %v3900
        %v3909 = vmul.f32 %v3693, %v3901
        %v3910 = vmul.f32 %v3694, %v3902
        %v3911 = vmul.f32 %v3695, %v3903
        %v3912 = vmul.f32 %v3696, %v3904
        %v3913 = vmul.f32 %v3697, %v3905
        %v3914 = vmul.f32 %v3698, %v3906
        %v3915 = vpack.c.bf16 %v3908, %v3907
        %v3916 = vpack.c.bf16 %v3910, %v3909
        %v3917 = vpack.c.bf16 %v3912, %v3911
        %v3918 = vpack.c.bf16 %v3914, %v3913
        %v3919 = vld [vmem:[%s2] sm:$0xf]
        %v3920 = vld [vmem:[%s2 + $0x4] sm:$0xf]
        %v3921 = vld [vmem:[%s2 + $0x8] sm:$0xf]
        %v3922 = vld [vmem:[%s2 + $0xc] sm:$0xf]
        %v3923 = vld [vmem:[%s2 + $0x10] sm:$0xf]
        %v3924 = vld [vmem:[%s2 + $0x14] sm:$0xf]
        %v3925 = vld [vmem:[%s2 + $0x18] sm:$0xf]
        %v3926 = vld [vmem:[%s2 + $0x1c] sm:$0xf]
        %v3927 = vld [vmem:[%s2 + $0x20] sm:$0xf]
        %v3928 = vld [vmem:[%s2 + $0x24] sm:$0xf]
        %v3929 = vld [vmem:[%s2 + $0x28] sm:$0xf]
        %v3930 = vld [vmem:[%s2 + $0x2c] sm:$0xf]
        %v3931 = vld [vmem:[%s2 + $0x30] sm:$0xf]
        %v3932 = vld [vmem:[%s2 + $0x34] sm:$0xf]
        %v3933 = vld [vmem:[%s2 + $0x38] sm:$0xf]
        %v3934 = vld [vmem:[%s2 + $0x3c] sm:$0xf]
        %v3935 = vmul.f32 %v3739, %v3899
        %v3936 = vmul.f32 %v3740, %v3900
        %v3937 = vmul.f32 %v3741, %v3901
        %v3938 = vmul.f32 %v3742, %v3902
        %v3939 = vmul.f32 %v3743, %v3903
        %v3940 = vmul.f32 %v3744, %v3904
        %v3941 = vmul.f32 %v3745, %v3905
        %v3942 = vmul.f32 %v3746, %v3906
        %v3943 = vpack.c.bf16 %v3936, %v3935
        %v3944 = vpack.c.bf16 %v3938, %v3937
        %v3945 = vpack.c.bf16 %v3940, %v3939
        %v3946 = vpack.c.bf16 %v3942, %v3941
        %v3947 = vld [vmem:[%s2 + $0x40] sm:$0xf]
        %v3948 = vld [vmem:[%s2 + $0x44] sm:$0xf]
        %v3949 = vld [vmem:[%s2 + $0x48] sm:$0xf]
        %v3950 = vld [vmem:[%s2 + $0x4c] sm:$0xf]
        %v3951 = vld [vmem:[%s2 + $0x50] sm:$0xf]
        %v3952 = vld [vmem:[%s2 + $0x54] sm:$0xf]
        %v3953 = vld [vmem:[%s2 + $0x58] sm:$0xf]
        %v3954 = vld [vmem:[%s2 + $0x5c] sm:$0xf]
        %v3955 = vld [vmem:[%s2 + $0x60] sm:$0xf]
        %v3956 = vld [vmem:[%s2 + $0x64] sm:$0xf]
        %v3957 = vld [vmem:[%s2 + $0x68] sm:$0xf]
        %v3958 = vld [vmem:[%s2 + $0x6c] sm:$0xf]
        %v3959 = vld [vmem:[%s2 + $0x70] sm:$0xf]
        %v3960 = vld [vmem:[%s2 + $0x74] sm:$0xf]
        %v3961 = vld [vmem:[%s2 + $0x78] sm:$0xf]
        %v3962 = vld [vmem:[%s2 + $0x7c] sm:$0xf]
        %v3979 = vunpack.c.l.b16 %v3947
        %v3980 = vunpack.c.l.b16 %v3948
        %v3981 = vunpack.c.l.b16 %v3949
        %v3982 = vunpack.c.l.b16 %v3950
        %v3983 = vunpack.c.l.b16 %v3951
        %v3984 = vunpack.c.l.b16 %v3952
        %v3985 = vunpack.c.l.b16 %v3953
        %v3986 = vunpack.c.l.b16 %v3954
        %v3987 = vunpack.c.l.b16 %v3955
        %v3988 = vunpack.c.l.b16 %v3956
        %v3989 = vunpack.c.l.b16 %v3957
        %v3990 = vunpack.c.l.b16 %v3958
        %v3991 = vunpack.c.l.b16 %v3959
        %v3992 = vunpack.c.l.b16 %v3960
        %v3993 = vunpack.c.l.b16 %v3961
        %v3994 = vunpack.c.l.b16 %v3962
        %v3995 = vpack.c.b16 %v3980, %v3979
        %v3996 = vpack.c.b16 %v3982, %v3981
        %v3997 = vpack.c.b16 %v3984, %v3983
        %v3998 = vpack.c.b16 %v3986, %v3985
        %v3999 = vpack.c.b16 %v3988, %v3987
        %v4000 = vpack.c.b16 %v3990, %v3989
        %v4001 = vpack.c.b16 %v3992, %v3991
        %v4002 = vpack.c.b16 %v3994, %v3993
        %4011 = vmatprep.subr.bf16.mxu0 0
        %4012 = vmatpush1.bf16.msra.mxu0 %v3995
        %4013 = vmatprep.subr.bf16.mxu0 0
        %4014 = vmatpush1.bf16.msra.mxu0 %v3996
        %4015 = vmatprep.subr.bf16.mxu0 0
        %4016 = vmatpush1.bf16.msra.mxu0 %v3997
        %4017 = vmatprep.subr.bf16.mxu0 0
        %4018 = vmatpush1.bf16.msra.mxu0 %v3998
        %4019 = vmatprep.subr.bf16.mxu0 0
        %4020 = vmatpush1.bf16.msra.mxu0 %v3999
        %4021 = vmatprep.subr.bf16.mxu0 0
        %4022 = vmatpush1.bf16.msra.mxu0 %v4000
        %4023 = vmatprep.subr.bf16.mxu0 0
        %4024 = vmatpush1.bf16.msra.mxu0 %v4001
        %4025 = vmatprep.subr.bf16.mxu0 0
        %4026 = vmatpush1.bf16.msra.mxu0 %v4002
        %4027 = vmatprep.subr.bf16.mxu0 0
        %4028 = vmatpush1.bf16.msra.mxu0 0
        %4029 = vmatprep.subr.bf16.mxu0 0
        %4030 = vmatpush1.bf16.msra.mxu0 0
        %4031 = vmatprep.subr.bf16.mxu0 0
        %4032 = vmatpush1.bf16.msra.mxu0 0
        %4033 = vmatprep.subr.bf16.mxu0 0
        %4034 = vmatpush1.bf16.msra.mxu0 0
        %4035 = vmatprep.subr.bf16.mxu0 0
        %4036 = vmatpush1.bf16.msra.mxu0 0
        %4037 = vmatprep.subr.bf16.mxu0 0
        %4038 = vmatpush1.bf16.msra.mxu0 0
        %4039 = vmatprep.subr.bf16.mxu0 0
        %4040 = vmatpush1.bf16.msra.mxu0 0
        %4041 = vmatprep.subr.bf16.mxu0 0
        %4042 = vmatpush1.bf16.msra.mxu0 0
        %4043 = vmatprep.mubr.bf16.mxu0 0
        %4044 = vmatmul.mubr.bf16.gmra.mrb[0].mxu0 %v3943
        %v4045 = vpop.f32.mrb[0].mxu0
        %v4046 = vadd.f32 0.0, %v4045
        %v4047 = vpop.f32.mrb[0].mxu0
        %v4048 = vpop.f32.mrb[0].mxu0
        %v4049 = vadd.f32 0.0, %v4048
        %v4050 = vpop.f32.mrb[0].mxu0
        %4051 = vmatprep.mubr.bf16.mxu0 0
        %4052 = vmatmul.mubr.bf16.gmra.mrb[0].mxu0 %v3944
        %v4053 = vpop.f32.mrb[0].mxu0
        %v4054 = vadd.f32 0.0, %v4053
        %v4055 = vpop.f32.mrb[0].mxu0
        %v4056 = vpop.f32.mrb[0].mxu0
        %v4057 = vadd.f32 0.0, %v4056
        %v4058 = vpop.f32.mrb[0].mxu0
        %4059 = vmatprep.mubr.bf16.mxu0 0
        %4060 = vmatmul.mubr.bf16.gmra.mrb[0].mxu0 %v3945
        %v4061 = vpop.f32.mrb[0].mxu0
        %v4062 = vadd.f32 0.0, %v4061
        %v4063 = vpop.f32.mrb[0].mxu0
        %v4064 = vpop.f32.mrb[0].mxu0
        %v4065 = vadd.f32 0.0, %v4064
        %v4066 = vpop.f32.mrb[0].mxu0
        %4067 = vmatprep.mubr.bf16.mxu0 0
        %4068 = vmatmul.mubr.bf16.gmra.mrb[0].mxu0 %v3946
        %v4069 = vpop.f32.mrb[0].mxu0
        %v4070 = vadd.f32 0.0, %v4069
        %v4071 = vpop.f32.mrb[0].mxu0
        %v4072 = vpop.f32.mrb[0].mxu0
        %v4073 = vadd.f32 0.0, %v4072
        %v4074 = vpop.f32.mrb[0].mxu0
        %4075 = vdwg.mxu0
        %v4092 = vunpack.c.l.b16 %v3919
        %v4093 = vunpack.c.l.b16 %v3920
        %v4094 = vunpack.c.l.b16 %v3921
        %v4095 = vunpack.c.l.b16 %v3922
        %v4096 = vunpack.c.l.b16 %v3923
        %v4097 = vunpack.c.l.b16 %v3924
        %v4098 = vunpack.c.l.b16 %v3925
        %v4099 = vunpack.c.l.b16 %v3926
        %v4100 = vunpack.c.l.b16 %v3927
        %v4101 = vunpack.c.l.b16 %v3928
        %v4102 = vunpack.c.l.b16 %v3929
        %v4103 = vunpack.c.l.b16 %v3930
        %v4104 = vunpack.c.l.b16 %v3931
        %v4105 = vunpack.c.l.b16 %v3932
        %v4106 = vunpack.c.l.b16 %v3933
        %v4107 = vunpack.c.l.b16 %v3934
        %v4108 = vpack.c.b16 %v4093, %v4092
        %v4109 = vpack.c.b16 %v4095, %v4094
        %v4110 = vpack.c.b16 %v4097, %v4096
        %v4111 = vpack.c.b16 %v4099, %v4098
        %v4112 = vpack.c.b16 %v4101, %v4100
        %v4113 = vpack.c.b16 %v4103, %v4102
        %v4114 = vpack.c.b16 %v4105, %v4104
        %v4115 = vpack.c.b16 %v4107, %v4106
        %4124 = vmatprep.subr.bf16.mxu0 0
        %4125 = vmatpush1.bf16.msra.mxu0 %v4108
        %4126 = vmatprep.subr.bf16.mxu0 0
        %4127 = vmatpush1.bf16.msra.mxu0 %v4109
        %4128 = vmatprep.subr.bf16.mxu0 0
        %4129 = vmatpush1.bf16.msra.mxu0 %v4110
        %4130 = vmatprep.subr.bf16.mxu0 0
        %4131 = vmatpush1.bf16.msra.mxu0 %v4111
        %4132 = vmatprep.subr.bf16.mxu0 0
        %4133 = vmatpush1.bf16.msra.mxu0 %v4112
        %4134 = vmatprep.subr.bf16.mxu0 0
        %4135 = vmatpush1.bf16.msra.mxu0 %v4113
        %4136 = vmatprep.subr.bf16.mxu0 0
        %4137 = vmatpush1.bf16.msra.mxu0 %v4114
        %4138 = vmatprep.subr.bf16.mxu0 0
        %4139 = vmatpush1.bf16.msra.mxu0 %v4115
        %4140 = vmatprep.subr.bf16.mxu0 0
        %4141 = vmatpush1.bf16.msra.mxu0 0
        %4142 = vmatprep.subr.bf16.mxu0 0
        %4143 = vmatpush1.bf16.msra.mxu0 0
        %4144 = vmatprep.subr.bf16.mxu0 0
        %4145 = vmatpush1.bf16.msra.mxu0 0
        %4146 = vmatprep.subr.bf16.mxu0 0
        %4147 = vmatpush1.bf16.msra.mxu0 0
        %4148 = vmatprep.subr.bf16.mxu0 0
        %4149 = vmatpush1.bf16.msra.mxu0 0
        %4150 = vmatprep.subr.bf16.mxu0 0
        %4151 = vmatpush1.bf16.msra.mxu0 0
        %4152 = vmatprep.subr.bf16.mxu0 0
        %4153 = vmatpush1.bf16.msra.mxu0 0
        %4154 = vmatprep.subr.bf16.mxu0 0
        %4155 = vmatpush1.bf16.msra.mxu0 0
        %4156 = vmatprep.mubr.bf16.mxu0 0
        %4157 = vmatmul.mubr.bf16.gmra.mrb[0].mxu0 %v3915
        %v4158 = vpop.f32.mrb[0].mxu0
        %v4159 = vadd.f32 %v4046, %v4158
        %v4160 = vpop.f32.mrb[0].mxu0
        %v4161 = vpop.f32.mrb[0].mxu0
        %v4162 = vadd.f32 %v4049, %v4161
        %v4163 = vpop.f32.mrb[0].mxu0
        %4164 = vmatprep.mubr.bf16.mxu0 0
        %4165 = vmatmul.mubr.bf16.gmra.mrb[0].mxu0 %v3916
        %v4166 = vpop.f32.mrb[0].mxu0
        %v4167 = vadd.f32 %v4054, %v4166
        %v4168 = vpop.f32.mrb[0].mxu0
        %v4169 = vpop.f32.mrb[0].mxu0
        %v4170 = vadd.f32 %v4057, %v4169
        %v4171 = vpop.f32.mrb[0].mxu0
        %4172 = vmatprep.mubr.bf16.mxu0 0
        %4173 = vmatmul.mubr.bf16.gmra.mrb[0].mxu0 %v3917
        %v4174 = vpop.f32.mrb[0].mxu0
        %v4175 = vadd.f32 %v4062, %v4174
        %v4176 = vpop.f32.mrb[0].mxu0
        %v4177 = vpop.f32.mrb[0].mxu0
        %v4178 = vadd.f32 %v4065, %v4177
        %v4179 = vpop.f32.mrb[0].mxu0
        %4180 = vmatprep.mubr.bf16.mxu0 0
        %4181 = vmatmul.mubr.bf16.gmra.mrb[0].mxu0 %v3918
        %v4182 = vpop.f32.mrb[0].mxu0
        %v4183 = vadd.f32 %v4070, %v4182
        %v4184 = vpop.f32.mrb[0].mxu0
        %v4185 = vpop.f32.mrb[0].mxu0
        %v4186 = vadd.f32 %v4073, %v4185
        %v4187 = vpop.f32.mrb[0].mxu0
        %4188 = vdwg.mxu0
        %v4189 = vmul.f32 %v3787, %v3899
        %v4190 = vmul.f32 %v3788, %v3900
        %v4191 = vmul.f32 %v3789, %v3901
        %v4192 = vmul.f32 %v3790, %v3902
        %v4193 = vmul.f32 %v3791, %v3903
        %v4194 = vmul.f32 %v3792, %v3904
        %v4195 = vmul.f32 %v3793, %v3905
        %v4196 = vmul.f32 %v3794, %v3906
        %v4197 = vpack.c.bf16 %v4190, %v4189
        %v4198 = vpack.c.bf16 %v4192, %v4191
        %v4199 = vpack.c.bf16 %v4194, %v4193
        %v4200 = vpack.c.bf16 %v4196, %v4195
        %v4201 = vld [vmem:[%s2 + $0x80] sm:$0xf]
        %v4202 = vld [vmem:[%s2 + $0x84] sm:$0xf]
        %v4203 = vld [vmem:[%s2 + $0x88] sm:$0xf]
        %v4204 = vld [vmem:[%s2 + $0x8c] sm:$0xf]
        %v4205 = vld [vmem:[%s2 + $0x90] sm:$0xf]
        %v4206 = vld [vmem:[%s2 + $0x94] sm:$0xf]
        %v4207 = vld [vmem:[%s2 + $0x98] sm:$0xf]
        %v4208 = vld [vmem:[%s2 + $0x9c] sm:$0xf]
        %v4209 = vld [vmem:[%s2 + $0xa0] sm:$0xf]
        %v4210 = vld [vmem:[%s2 + $0xa4] sm:$0xf]
        %v4211 = vld [vmem:[%s2 + $0xa8] sm:$0xf]
        %v4212 = vld [vmem:[%s2 + $0xac] sm:$0xf]
        %v4213 = vld [vmem:[%s2 + $0xb0] sm:$0xf]
        %v4214 = vld [vmem:[%s2 + $0xb4] sm:$0xf]
        %v4215 = vld [vmem:[%s2 + $0xb8] sm:$0xf]
        %v4216 = vld [vmem:[%s2 + $0xbc] sm:$0xf]
        %v4233 = vunpack.c.l.b16 %v4201
        %v4234 = vunpack.c.l.b16 %v4202
        %v4235 = vunpack.c.l.b16 %v4203
        %v4236 = vunpack.c.l.b16 %v4204
        %v4237 = vunpack.c.l.b16 %v4205
        %v4238 = vunpack.c.l.b16 %v4206
        %v4239 = vunpack.c.l.b16 %v4207
        %v4240 = vunpack.c.l.b16 %v4208
        %v4241 = vunpack.c.l.b16 %v4209
        %v4242 = vunpack.c.l.b16 %v4210
        %v4243 = vunpack.c.l.b16 %v4211
        %v4244 = vunpack.c.l.b16 %v4212
        %v4245 = vunpack.c.l.b16 %v4213
        %v4246 = vunpack.c.l.b16 %v4214
        %v4247 = vunpack.c.l.b16 %v4215
        %v4248 = vunpack.c.l.b16 %v4216
        %v4249 = vpack.c.b16 %v4234, %v4233
        %v4250 = vpack.c.b16 %v4236, %v4235
        %v4251 = vpack.c.b16 %v4238, %v4237
        %v4252 = vpack.c.b16 %v4240, %v4239
        %v4253 = vpack.c.b16 %v4242, %v4241
        %v4254 = vpack.c.b16 %v4244, %v4243
        %v4255 = vpack.c.b16 %v4246, %v4245
        %v4256 = vpack.c.b16 %v4248, %v4247
        %4265 = vmatprep.subr.bf16.mxu0 0
        %4266 = vmatpush1.bf16.msra.mxu0 %v4249
        %4267 = vmatprep.subr.bf16.mxu0 0
        %4268 = vmatpush1.bf16.msra.mxu0 %v4250
        %4269 = vmatprep.subr.bf16.mxu0 0
        %4270 = vmatpush1.bf16.msra.mxu0 %v4251
        %4271 = vmatprep.subr.bf16.mxu0 0
        %4272 = vmatpush1.bf16.msra.mxu0 %v4252
        %4273 = vmatprep.subr.bf16.mxu0 0
        %4274 = vmatpush1.bf16.msra.mxu0 %v4253
        %4275 = vmatprep.subr.bf16.mxu0 0
        %4276 = vmatpush1.bf16.msra.mxu0 %v4254
        %4277 = vmatprep.subr.bf16.mxu0 0
        %4278 = vmatpush1.bf16.msra.mxu0 %v4255
        %4279 = vmatprep.subr.bf16.mxu0 0
        %4280 = vmatpush1.bf16.msra.mxu0 %v4256
        %4281 = vmatprep.subr.bf16.mxu0 0
        %4282 = vmatpush1.bf16.msra.mxu0 0
        %4283 = vmatprep.subr.bf16.mxu0 0
        %4284 = vmatpush1.bf16.msra.mxu0 0
        %4285 = vmatprep.subr.bf16.mxu0 0
        %4286 = vmatpush1.bf16.msra.mxu0 0
        %4287 = vmatprep.subr.bf16.mxu0 0
        %4288 = vmatpush1.bf16.msra.mxu0 0
        %4289 = vmatprep.subr.bf16.mxu0 0
        %4290 = vmatpush1.bf16.msra.mxu0 0
        %4291 = vmatprep.subr.bf16.mxu0 0
        %4292 = vmatpush1.bf16.msra.mxu0 0
        %4293 = vmatprep.subr.bf16.mxu0 0
        %4294 = vmatpush1.bf16.msra.mxu0 0
        %4295 = vmatprep.subr.bf16.mxu0 0
        %4296 = vmatpush1.bf16.msra.mxu0 0
        %4297 = vmatprep.mubr.bf16.mxu0 0
        %4298 = vmatmul.mubr.bf16.gmra.mrb[0].mxu0 %v4197
        %v4299 = vpop.f32.mrb[0].mxu0
        %v4300 = vadd.f32 0.0, %v4299
        %v4301 = vpop.f32.mrb[0].mxu0
        %v4302 = vpop.f32.mrb[0].mxu0
        %v4303 = vadd.f32 0.0, %v4302
        %v4304 = vpop.f32.mrb[0].mxu0
        %4305 = vmatprep.mubr.bf16.mxu0 0
        %4306 = vmatmul.mubr.bf16.gmra.mrb[0].mxu0 %v4198
        %v4307 = vpop.f32.mrb[0].mxu0
        %v4308 = vadd.f32 0.0, %v4307
        %v4309 = vpop.f32.mrb[0].mxu0
        %v4310 = vpop.f32.mrb[0].mxu0
        %v4311 = vadd.f32 0.0, %v4310
        %v4312 = vpop.f32.mrb[0].mxu0
        %4313 = vmatprep.mubr.bf16.mxu0 0
        %4314 = vmatmul.mubr.bf16.gmra.mrb[0].mxu0 %v4199
        %v4315 = vpop.f32.mrb[0].mxu0
        %v4316 = vadd.f32 0.0, %v4315
        %v4317 = vpop.f32.mrb[0].mxu0
        %v4318 = vpop.f32.mrb[0].mxu0
        %v4319 = vadd.f32 0.0, %v4318
        %v4320 = vpop.f32.mrb[0].mxu0
        %4321 = vmatprep.mubr.bf16.mxu0 0
        %4322 = vmatmul.mubr.bf16.gmra.mrb[0].mxu0 %v4200
        %v4323 = vpop.f32.mrb[0].mxu0
        %v4324 = vadd.f32 0.0, %v4323
        %v4325 = vpop.f32.mrb[0].mxu0
        %v4326 = vpop.f32.mrb[0].mxu0
        %v4327 = vadd.f32 0.0, %v4326
        %v4328 = vpop.f32.mrb[0].mxu0
        %4329 = vdwg.mxu0
        %v4330 = vadd.f32 %v4159, %v4300
        %v4331 = vadd.f32 %v4162, %v4303
        %v4332 = vadd.f32 %v4167, %v4308
        %v4333 = vadd.f32 %v4170, %v4311
        %v4334 = vadd.f32 %v4175, %v4316
        %v4335 = vadd.f32 %v4178, %v4319
        %v4336 = vadd.f32 %v4183, %v4324
        %v4337 = vadd.f32 %v4186, %v4327
        %v4338 = vmul.f32 %v3835, %v3899
        %v4339 = vmul.f32 %v3836, %v3900
        %v4340 = vmul.f32 %v3837, %v3901
        %v4341 = vmul.f32 %v3838, %v3902
        %v4342 = vmul.f32 %v3839, %v3903
        %v4343 = vmul.f32 %v3840, %v3904
        %v4344 = vmul.f32 %v3841, %v3905
        %v4345 = vmul.f32 %v3842, %v3906
        %v4346 = vpack.c.bf16 %v4339, %v4338
        %v4347 = vpack.c.bf16 %v4341, %v4340
        %v4348 = vpack.c.bf16 %v4343, %v4342
        %v4349 = vpack.c.bf16 %v4345, %v4344
        %v4350 = vld [vmem:[%s2 + $0xc0] sm:$0xf]
        %v4351 = vld [vmem:[%s2 + $0xc4] sm:$0xf]
        %v4352 = vld [vmem:[%s2 + $0xc8] sm:$0xf]
        %v4353 = vld [vmem:[%s2 + $0xcc] sm:$0xf]
        %v4354 = vld [vmem:[%s2 + $0xd0] sm:$0xf]
        %v4355 = vld [vmem:[%s2 + $0xd4] sm:$0xf]
        %v4356 = vld [vmem:[%s2 + $0xd8] sm:$0xf]
        %v4357 = vld [vmem:[%s2 + $0xdc] sm:$0xf]
        %v4358 = vld [vmem:[%s2 + $0xe0] sm:$0xf]
        %v4359 = vld [vmem:[%s2 + $0xe4] sm:$0xf]
        %v4360 = vld [vmem:[%s2 + $0xe8] sm:$0xf]
        %v4361 = vld [vmem:[%s2 + $0xec] sm:$0xf]
        %v4362 = vld [vmem:[%s2 + $0xf0] sm:$0xf]
        %v4363 = vld [vmem:[%s2 + $0xf4] sm:$0xf]
        %v4364 = vld [vmem:[%s2 + $0xf8] sm:$0xf]
        %v4365 = vld [vmem:[%s2 + $0xfc] sm:$0xf]
        %v4382 = vunpack.c.l.b16 %v4350
        %v4383 = vunpack.c.l.b16 %v4351
        %v4384 = vunpack.c.l.b16 %v4352
        %v4385 = vunpack.c.l.b16 %v4353
        %v4386 = vunpack.c.l.b16 %v4354
        %v4387 = vunpack.c.l.b16 %v4355
        %v4388 = vunpack.c.l.b16 %v4356
        %v4389 = vunpack.c.l.b16 %v4357
        %v4390 = vunpack.c.l.b16 %v4358
        %v4391 = vunpack.c.l.b16 %v4359
        %v4392 = vunpack.c.l.b16 %v4360
        %v4393 = vunpack.c.l.b16 %v4361
        %v4394 = vunpack.c.l.b16 %v4362
        %v4395 = vunpack.c.l.b16 %v4363
        %v4396 = vunpack.c.l.b16 %v4364
        %v4397 = vunpack.c.l.b16 %v4365
        %v4398 = vpack.c.b16 %v4383, %v4382
        %v4399 = vpack.c.b16 %v4385, %v4384
        %v4400 = vpack.c.b16 %v4387, %v4386
        %v4401 = vpack.c.b16 %v4389, %v4388
        %v4402 = vpack.c.b16 %v4391, %v4390
        %v4403 = vpack.c.b16 %v4393, %v4392
        %v4404 = vpack.c.b16 %v4395, %v4394
        %v4405 = vpack.c.b16 %v4397, %v4396
        %4414 = vmatprep.subr.bf16.mxu0 0
        %4415 = vmatpush1.bf16.msra.mxu0 %v4398
        %4416 = vmatprep.subr.bf16.mxu0 0
        %4417 = vmatpush1.bf16.msra.mxu0 %v4399
        %4418 = vmatprep.subr.bf16.mxu0 0
        %4419 = vmatpush1.bf16.msra.mxu0 %v4400
        %4420 = vmatprep.subr.bf16.mxu0 0
        %4421 = vmatpush1.bf16.msra.mxu0 %v4401
        %4422 = vmatprep.subr.bf16.mxu0 0
        %4423 = vmatpush1.bf16.msra.mxu0 %v4402
        %4424 = vmatprep.subr.bf16.mxu0 0
        %4425 = vmatpush1.bf16.msra.mxu0 %v4403
        %4426 = vmatprep.subr.bf16.mxu0 0
        %4427 = vmatpush1.bf16.msra.mxu0 %v4404
        %4428 = vmatprep.subr.bf16.mxu0 0
        %4429 = vmatpush1.bf16.msra.mxu0 %v4405
        %4430 = vmatprep.subr.bf16.mxu0 0
        %4431 = vmatpush1.bf16.msra.mxu0 0
        %4432 = vmatprep.subr.bf16.mxu0 0
        %4433 = vmatpush1.bf16.msra.mxu0 0
        %4434 = vmatprep.subr.bf16.mxu0 0
        %4435 = vmatpush1.bf16.msra.mxu0 0
        %4436 = vmatprep.subr.bf16.mxu0 0
        %4437 = vmatpush1.bf16.msra.mxu0 0
        %4438 = vmatprep.subr.bf16.mxu0 0
        %4439 = vmatpush1.bf16.msra.mxu0 0
        %4440 = vmatprep.subr.bf16.mxu0 0
        %4441 = vmatpush1.bf16.msra.mxu0 0
        %4442 = vmatprep.subr.bf16.mxu0 0
        %4443 = vmatpush1.bf16.msra.mxu0 0
        %4444 = vmatprep.subr.bf16.mxu0 0
        %4445 = vmatpush1.bf16.msra.mxu0 0
        %4446 = vmatprep.mubr.bf16.mxu0 0
        %4447 = vmatmul.mubr.bf16.gmra.mrb[0].mxu0 %v4346
        %v4448 = vpop.f32.mrb[0].mxu0
        %v4449 = vadd.f32 0.0, %v4448
        %v4450 = vpop.f32.mrb[0].mxu0
        %v4451 = vpop.f32.mrb[0].mxu0
        %v4452 = vadd.f32 0.0, %v4451
        %v4453 = vpop.f32.mrb[0].mxu0
        %4454 = vmatprep.mubr.bf16.mxu0 0
        %4455 = vmatmul.mubr.bf16.gmra.mrb[0].mxu0 %v4347
        %v4456 = vpop.f32.mrb[0].mxu0
        %v4457 = vadd.f32 0.0, %v4456
        %v4458 = vpop.f32.mrb[0].mxu0
        %v4459 = vpop.f32.mrb[0].mxu0
        %v4460 = vadd.f32 0.0, %v4459
        %v4461 = vpop.f32.mrb[0].mxu0
        %4462 = vmatprep.mubr.bf16.mxu0 0
        %4463 = vmatmul.mubr.bf16.gmra.mrb[0].mxu0 %v4348
        %v4464 = vpop.f32.mrb[0].mxu0
        %v4465 = vadd.f32 0.0, %v4464
        %v4466 = vpop.f32.mrb[0].mxu0
        %v4467 = vpop.f32.mrb[0].mxu0
        %v4468 = vadd.f32 0.0, %v4467
        %v4469 = vpop.f32.mrb[0].mxu0
        %4470 = vmatprep.mubr.bf16.mxu0 0
        %4471 = vmatmul.mubr.bf16.gmra.mrb[0].mxu0 %v4349
        %v4472 = vpop.f32.mrb[0].mxu0
        %v4473 = vadd.f32 0.0, %v4472
        %v4474 = vpop.f32.mrb[0].mxu0
        %v4475 = vpop.f32.mrb[0].mxu0
        %v4476 = vadd.f32 0.0, %v4475
        %v4477 = vpop.f32.mrb[0].mxu0
        %4478 = vdwg.mxu0
        %v4479 = vadd.f32 %v4330, %v4449
        %v4480 = vadd.f32 %v4331, %v4452
        %v4481 = vadd.f32 %v4332, %v4457
        %v4482 = vadd.f32 %v4333, %v4460
        %v4483 = vadd.f32 %v4334, %v4465
        %v4484 = vadd.f32 %v4335, %v4468
        %v4485 = vadd.f32 %v4336, %v4473
        %v4486 = vadd.f32 %v4337, %v4476
        %v4487 = vlaneseq
        %v4488 = vshrl.u32 %v4487, 7
        %v4489 = vsub.s32 2, %v4488
        %v4490 = vrot.slane %v224, %v4489
        %v4491 = vadd.f32 %v4479, %v4490
        %v4492 = vadd.f32 %v4480, %v4490
        %v4493 = vadd.f32 %v4481, %v4490
        %v4494 = vadd.f32 %v4482, %v4490
        %v4495 = vadd.f32 %v4483, %v4490
        %v4496 = vadd.f32 %v4484, %v4490
        %v4497 = vadd.f32 %v4485, %v4490
        %v4498 = vadd.f32 %v4486, %v4490
        %v4499 = vpack.c.bf16 %v4492, %v4491
        %v4500 = vpack.c.bf16 %v4494, %v4493
        %v4501 = vpack.c.bf16 %v4496, %v4495
        %v4502 = vpack.c.bf16 %v4498, %v4497
        %4503 = vst [vmem:[#allocation3] sm:$0xff] %v4499
        %4504 = vst [vmem:[#allocation3 + $0x8] sm:$0xff] %v4500
        %4505 = vst [vmem:[#allocation3 + $0x10] sm:$0xff] %v4501
        %4506 = vst [vmem:[#allocation3 + $0x18] sm:$0xff] %v4502
        %s4507 = scalar_lea.vmem [#allocation2], 32
        %v4508 = vld [vmem:[%s4507] sm:$0xff]
        %v4509 = vld [vmem:[%s4507 + $0x8] sm:$0xff]
        %v4510 = vld [vmem:[%s4507 + $0x10] sm:$0xff]
        %v4511 = vld [vmem:[%s4507 + $0x18] sm:$0xff]
        %v4512 = vunpack.c.l.bf16 %v4508
        %v4513 = vunpack.c.h.bf16 %v4508
        %v4514 = vunpack.c.l.bf16 %v4509
        %v4515 = vunpack.c.h.bf16 %v4509
        %v4516 = vunpack.c.l.bf16 %v4510
        %v4517 = vunpack.c.h.bf16 %v4510
        %v4518 = vunpack.c.l.bf16 %v4511
        %v4519 = vunpack.c.h.bf16 %v4511
        %4520 = vadd.xlane.f32.xlu0 %v4512
        %v4521 = vpop.xlane.xlu0 %4520
        %4522 = vadd.xlane.f32.xlu0 %v4513
        %v4523 = vpop.xlane.xlu0 %4522
        %4524 = vadd.xlane.f32.xlu0 %v4514
        %v4525 = vpop.xlane.xlu0 %4524
        %4526 = vadd.xlane.f32.xlu0 %v4515
        %v4527 = vpop.xlane.xlu0 %4526
        %4528 = vadd.xlane.f32.xlu0 %v4516
        %v4529 = vpop.xlane.xlu0 %4528
        %4530 = vadd.xlane.f32.xlu0 %v4517
        %v4531 = vpop.xlane.xlu0 %4530
        %4532 = vadd.xlane.f32.xlu0 %v4518
        %v4533 = vpop.xlane.xlu0 %4532
        %4534 = vadd.xlane.f32.xlu0 %v4519
        %v4535 = vpop.xlane.xlu0 %4534
        %v4536 = vadd.f32 %v4521, 0.0
        %v4537 = vadd.f32 %v4523, 0.0
        %v4538 = vadd.f32 %v4525, 0.0
        %v4539 = vadd.f32 %v4527, 0.0
        %v4540 = vadd.f32 %v4529, 0.0
        %v4541 = vadd.f32 %v4531, 0.0
        %v4542 = vadd.f32 %v4533, 0.0
        %v4543 = vadd.f32 %v4535, 0.0
        %s4544 = sadd.s32 64, 256
        %s4545 = sshra.s32 %s4544, 4
        %s4546 = sand.u32 %s4544, 15
        %s4547 = smul.addr %s4545, 8
        %s4548 = scalar_lea.vmem [#allocation2], %s4547
        %v4549 = vld [vmem:[%s4548] sm:$0xff]
        %v4550 = vld [vmem:[%s4548 + $0x8] sm:$0xff]
        %v4551 = vld [vmem:[%s4548 + $0x10] sm:$0xff]
        %v4552 = vld [vmem:[%s4548 + $0x18] sm:$0xff]
        %v4553 = vunpack.c.l.bf16 %v4549
        %v4554 = vunpack.c.h.bf16 %v4549
        %v4555 = vunpack.c.l.bf16 %v4550
        %v4556 = vunpack.c.h.bf16 %v4550
        %v4557 = vunpack.c.l.bf16 %v4551
        %v4558 = vunpack.c.h.bf16 %v4551
        %v4559 = vunpack.c.l.bf16 %v4552
        %v4560 = vunpack.c.h.bf16 %v4552
        %4561 = vadd.xlane.f32.xlu0 %v4553
        %v4562 = vpop.xlane.xlu0 %4561
        %4563 = vadd.xlane.f32.xlu0 %v4554
        %v4564 = vpop.xlane.xlu0 %4563
        %4565 = vadd.xlane.f32.xlu0 %v4555
        %v4566 = vpop.xlane.xlu0 %4565
        %4567 = vadd.xlane.f32.xlu0 %v4556
        %v4568 = vpop.xlane.xlu0 %4567
        %4569 = vadd.xlane.f32.xlu0 %v4557
        %v4570 = vpop.xlane.xlu0 %4569
        %4571 = vadd.xlane.f32.xlu0 %v4558
        %v4572 = vpop.xlane.xlu0 %4571
        %4573 = vadd.xlane.f32.xlu0 %v4559
        %v4574 = vpop.xlane.xlu0 %4573
        %4575 = vadd.xlane.f32.xlu0 %v4560
        %v4576 = vpop.xlane.xlu0 %4575
        %v4577 = vadd.f32 %v4536, %v4562
        %v4578 = vadd.f32 %v4537, %v4564
        %v4579 = vadd.f32 %v4538, %v4566
        %v4580 = vadd.f32 %v4539, %v4568
        %v4581 = vadd.f32 %v4540, %v4570
        %v4582 = vadd.f32 %v4541, %v4572
        %v4583 = vadd.f32 %v4542, %v4574
        %v4584 = vadd.f32 %v4543, %v4576
        %s4585 = sadd.s32 64, 512
        %s4586 = sshra.s32 %s4585, 4
        %s4587 = sand.u32 %s4585, 15
        %s4588 = smul.addr %s4586, 8
        %s4589 = scalar_lea.vmem [#allocation2], %s4588
        %v4590 = vld [vmem:[%s4589] sm:$0xff]
        %v4591 = vld [vmem:[%s4589 + $0x8] sm:$0xff]
        %v4592 = vld [vmem:[%s4589 + $0x10] sm:$0xff]
        %v4593 = vld [vmem:[%s4589 + $0x18] sm:$0xff]
        %v4594 = vunpack.c.l.bf16 %v4590
        %v4595 = vunpack.c.h.bf16 %v4590
        %v4596 = vunpack.c.l.bf16 %v4591
        %v4597 = vunpack.c.h.bf16 %v4591
        %v4598 = vunpack.c.l.bf16 %v4592
        %v4599 = vunpack.c.h.bf16 %v4592
        %v4600 = vunpack.c.l.bf16 %v4593
        %v4601 = vunpack.c.h.bf16 %v4593
        %4602 = vadd.xlane.f32.xlu0 %v4594
        %v4603 = vpop.xlane.xlu0 %4602
        %4604 = vadd.xlane.f32.xlu0 %v4595
        %v4605 = vpop.xlane.xlu0 %4604
        %4606 = vadd.xlane.f32.xlu0 %v4596
        %v4607 = vpop.xlane.xlu0 %4606
        %4608 = vadd.xlane.f32.xlu0 %v4597
        %v4609 = vpop.xlane.xlu0 %4608
        %4610 = vadd.xlane.f32.xlu0 %v4598
        %v4611 = vpop.xlane.xlu0 %4610
        %4612 = vadd.xlane.f32.xlu0 %v4599
        %v4613 = vpop.xlane.xlu0 %4612
        %4614 = vadd.xlane.f32.xlu0 %v4600
        %v4615 = vpop.xlane.xlu0 %4614
        %4616 = vadd.xlane.f32.xlu0 %v4601
        %v4617 = vpop.xlane.xlu0 %4616
        %v4618 = vadd.f32 %v4577, %v4603
        %v4619 = vadd.f32 %v4578, %v4605
        %v4620 = vadd.f32 %v4579, %v4607
        %v4621 = vadd.f32 %v4580, %v4609
        %v4622 = vadd.f32 %v4581, %v4611
        %v4623 = vadd.f32 %v4582, %v4613
        %v4624 = vadd.f32 %v4583, %v4615
        %v4625 = vadd.f32 %v4584, %v4617
        %s4626 = sadd.s32 64, 768
        %s4627 = sshra.s32 %s4626, 4
        %s4628 = sand.u32 %s4626, 15
        %s4629 = smul.addr %s4627, 8
        %s4630 = scalar_lea.vmem [#allocation2], %s4629
        %v4631 = vld [vmem:[%s4630] sm:$0xff]
        %v4632 = vld [vmem:[%s4630 + $0x8] sm:$0xff]
        %v4633 = vld [vmem:[%s4630 + $0x10] sm:$0xff]
        %v4634 = vld [vmem:[%s4630 + $0x18] sm:$0xff]
        %v4635 = vunpack.c.l.bf16 %v4631
        %v4636 = vunpack.c.h.bf16 %v4631
        %v4637 = vunpack.c.l.bf16 %v4632
        %v4638 = vunpack.c.h.bf16 %v4632
        %v4639 = vunpack.c.l.bf16 %v4633
        %v4640 = vunpack.c.h.bf16 %v4633
        %v4641 = vunpack.c.l.bf16 %v4634
        %v4642 = vunpack.c.h.bf16 %v4634
        %4643 = vadd.xlane.f32.xlu0 %v4635
        %v4644 = vpop.xlane.xlu0 %4643
        %4645 = vadd.xlane.f32.xlu0 %v4636
        %v4646 = vpop.xlane.xlu0 %4645
        %4647 = vadd.xlane.f32.xlu0 %v4637
        %v4648 = vpop.xlane.xlu0 %4647
        %4649 = vadd.xlane.f32.xlu0 %v4638
        %v4650 = vpop.xlane.xlu0 %4649
        %4651 = vadd.xlane.f32.xlu0 %v4639
        %v4652 = vpop.xlane.xlu0 %4651
        %4653 = vadd.xlane.f32.xlu0 %v4640
        %v4654 = vpop.xlane.xlu0 %4653
        %4655 = vadd.xlane.f32.xlu0 %v4641
        %v4656 = vpop.xlane.xlu0 %4655
        %4657 = vadd.xlane.f32.xlu0 %v4642
        %v4658 = vpop.xlane.xlu0 %4657
        %v4659 = vadd.f32 %v4618, %v4644
        %v4660 = vadd.f32 %v4619, %v4646
        %v4661 = vadd.f32 %v4620, %v4648
        %v4662 = vadd.f32 %v4621, %v4650
        %v4663 = vadd.f32 %v4622, %v4652
        %v4664 = vadd.f32 %v4623, %v4654
        %v4665 = vadd.f32 %v4624, %v4656
        %v4666 = vadd.f32 %v4625, %v4658
        %v4667 = vmul.f32 %v4659, 0.0078125
        %v4668 = vmul.f32 %v4660, 0.0078125
        %v4669 = vmul.f32 %v4661, 0.0078125
        %v4670 = vmul.f32 %v4662, 0.0078125
        %v4671 = vmul.f32 %v4663, 0.0078125
        %v4672 = vmul.f32 %v4664, 0.0078125
        %v4673 = vmul.f32 %v4665, 0.0078125
        %v4674 = vmul.f32 %v4666, 0.0078125
        %v4675 = vsub.f32 %v4512, %v4667
        %v4676 = vsub.f32 %v4513, %v4668
        %v4677 = vsub.f32 %v4514, %v4669
        %v4678 = vsub.f32 %v4515, %v4670
        %v4679 = vsub.f32 %v4516, %v4671
        %v4680 = vsub.f32 %v4517, %v4672
        %v4681 = vsub.f32 %v4518, %v4673
        %v4682 = vsub.f32 %v4519, %v4674
        %v4683 = vsel %vm518, %v4675, 0.0
        %v4684 = vsel %vm518, %v4676, 0.0
        %v4685 = vsel %vm518, %v4677, 0.0
        %v4686 = vsel %vm518, %v4678, 0.0
        %v4687 = vsel %vm518, %v4679, 0.0
        %v4688 = vsel %vm518, %v4680, 0.0
        %v4689 = vsel %vm518, %v4681, 0.0
        %v4690 = vsel %vm518, %v4682, 0.0
        %v4691 = vmul.f32 %v4683, %v4683
        %v4692 = vmul.f32 %v4684, %v4684
        %v4693 = vmul.f32 %v4685, %v4685
        %v4694 = vmul.f32 %v4686, %v4686
        %v4695 = vmul.f32 %v4687, %v4687
        %v4696 = vmul.f32 %v4688, %v4688
        %v4697 = vmul.f32 %v4689, %v4689
        %v4698 = vmul.f32 %v4690, %v4690
        %4699 = vadd.xlane.f32.xlu0 %v4691
        %v4700 = vpop.xlane.xlu0 %4699
        %4701 = vadd.xlane.f32.xlu0 %v4692
        %v4702 = vpop.xlane.xlu0 %4701
        %4703 = vadd.xlane.f32.xlu0 %v4693
        %v4704 = vpop.xlane.xlu0 %4703
        %4705 = vadd.xlane.f32.xlu0 %v4694
        %v4706 = vpop.xlane.xlu0 %4705
        %4707 = vadd.xlane.f32.xlu0 %v4695
        %v4708 = vpop.xlane.xlu0 %4707
        %4709 = vadd.xlane.f32.xlu0 %v4696
        %v4710 = vpop.xlane.xlu0 %4709
        %4711 = vadd.xlane.f32.xlu0 %v4697
        %v4712 = vpop.xlane.xlu0 %4711
        %4713 = vadd.xlane.f32.xlu0 %v4698
        %v4714 = vpop.xlane.xlu0 %4713
        %v4715 = vadd.f32 %v4700, 0.0
        %v4716 = vadd.f32 %v4702, 0.0
        %v4717 = vadd.f32 %v4704, 0.0
        %v4718 = vadd.f32 %v4706, 0.0
        %v4719 = vadd.f32 %v4708, 0.0
        %v4720 = vadd.f32 %v4710, 0.0
        %v4721 = vadd.f32 %v4712, 0.0
        %v4722 = vadd.f32 %v4714, 0.0
        %v4723 = vsub.f32 %v4553, %v4667
        %v4724 = vsub.f32 %v4554, %v4668
        %v4725 = vsub.f32 %v4555, %v4669
        %v4726 = vsub.f32 %v4556, %v4670
        %v4727 = vsub.f32 %v4557, %v4671
        %v4728 = vsub.f32 %v4558, %v4672
        %v4729 = vsub.f32 %v4559, %v4673
        %v4730 = vsub.f32 %v4560, %v4674
        %v4731 = vsel %vm518, %v4723, 0.0
        %v4732 = vsel %vm518, %v4724, 0.0
        %v4733 = vsel %vm518, %v4725, 0.0
        %v4734 = vsel %vm518, %v4726, 0.0
        %v4735 = vsel %vm518, %v4727, 0.0
        %v4736 = vsel %vm518, %v4728, 0.0
        %v4737 = vsel %vm518, %v4729, 0.0
        %v4738 = vsel %vm518, %v4730, 0.0
        %v4739 = vmul.f32 %v4731, %v4731
        %v4740 = vmul.f32 %v4732, %v4732
        %v4741 = vmul.f32 %v4733, %v4733
        %v4742 = vmul.f32 %v4734, %v4734
        %v4743 = vmul.f32 %v4735, %v4735
        %v4744 = vmul.f32 %v4736, %v4736
        %v4745 = vmul.f32 %v4737, %v4737
        %v4746 = vmul.f32 %v4738, %v4738
        %4747 = vadd.xlane.f32.xlu0 %v4739
        %v4748 = vpop.xlane.xlu0 %4747
        %4749 = vadd.xlane.f32.xlu0 %v4740
        %v4750 = vpop.xlane.xlu0 %4749
        %4751 = vadd.xlane.f32.xlu0 %v4741
        %v4752 = vpop.xlane.xlu0 %4751
        %4753 = vadd.xlane.f32.xlu0 %v4742
        %v4754 = vpop.xlane.xlu0 %4753
        %4755 = vadd.xlane.f32.xlu0 %v4743
        %v4756 = vpop.xlane.xlu0 %4755
        %4757 = vadd.xlane.f32.xlu0 %v4744
        %v4758 = vpop.xlane.xlu0 %4757
        %4759 = vadd.xlane.f32.xlu0 %v4745
        %v4760 = vpop.xlane.xlu0 %4759
        %4761 = vadd.xlane.f32.xlu0 %v4746
        %v4762 = vpop.xlane.xlu0 %4761
        %v4763 = vadd.f32 %v4715, %v4748
        %v4764 = vadd.f32 %v4716, %v4750
        %v4765 = vadd.f32 %v4717, %v4752
        %v4766 = vadd.f32 %v4718, %v4754
        %v4767 = vadd.f32 %v4719, %v4756
        %v4768 = vadd.f32 %v4720, %v4758
        %v4769 = vadd.f32 %v4721, %v4760
        %v4770 = vadd.f32 %v4722, %v4762
        %v4771 = vsub.f32 %v4594, %v4667
        %v4772 = vsub.f32 %v4595, %v4668
        %v4773 = vsub.f32 %v4596, %v4669
        %v4774 = vsub.f32 %v4597, %v4670
        %v4775 = vsub.f32 %v4598, %v4671
        %v4776 = vsub.f32 %v4599, %v4672
        %v4777 = vsub.f32 %v4600, %v4673
        %v4778 = vsub.f32 %v4601, %v4674
        %v4779 = vsel %vm518, %v4771, 0.0
        %v4780 = vsel %vm518, %v4772, 0.0
        %v4781 = vsel %vm518, %v4773, 0.0
        %v4782 = vsel %vm518, %v4774, 0.0
        %v4783 = vsel %vm518, %v4775, 0.0
        %v4784 = vsel %vm518, %v4776, 0.0
        %v4785 = vsel %vm518, %v4777, 0.0
        %v4786 = vsel %vm518, %v4778, 0.0
        %v4787 = vmul.f32 %v4779, %v4779
        %v4788 = vmul.f32 %v4780, %v4780
        %v4789 = vmul.f32 %v4781, %v4781
        %v4790 = vmul.f32 %v4782, %v4782
        %v4791 = vmul.f32 %v4783, %v4783
        %v4792 = vmul.f32 %v4784, %v4784
        %v4793 = vmul.f32 %v4785, %v4785
        %v4794 = vmul.f32 %v4786, %v4786
        %4795 = vadd.xlane.f32.xlu0 %v4787
        %v4796 = vpop.xlane.xlu0 %4795
        %4797 = vadd.xlane.f32.xlu0 %v4788
        %v4798 = vpop.xlane.xlu0 %4797
        %4799 = vadd.xlane.f32.xlu0 %v4789
        %v4800 = vpop.xlane.xlu0 %4799
        %4801 = vadd.xlane.f32.xlu0 %v4790
        %v4802 = vpop.xlane.xlu0 %4801
        %4803 = vadd.xlane.f32.xlu0 %v4791
        %v4804 = vpop.xlane.xlu0 %4803
        %4805 = vadd.xlane.f32.xlu0 %v4792
        %v4806 = vpop.xlane.xlu0 %4805
        %4807 = vadd.xlane.f32.xlu0 %v4793
        %v4808 = vpop.xlane.xlu0 %4807
        %4809 = vadd.xlane.f32.xlu0 %v4794
        %v4810 = vpop.xlane.xlu0 %4809
        %v4811 = vadd.f32 %v4763, %v4796
        %v4812 = vadd.f32 %v4764, %v4798
        %v4813 = vadd.f32 %v4765, %v4800
        %v4814 = vadd.f32 %v4766, %v4802
        %v4815 = vadd.f32 %v4767, %v4804
        %v4816 = vadd.f32 %v4768, %v4806
        %v4817 = vadd.f32 %v4769, %v4808
        %v4818 = vadd.f32 %v4770, %v4810
        %v4819 = vsub.f32 %v4635, %v4667
        %v4820 = vsub.f32 %v4636, %v4668
        %v4821 = vsub.f32 %v4637, %v4669
        %v4822 = vsub.f32 %v4638, %v4670
        %v4823 = vsub.f32 %v4639, %v4671
        %v4824 = vsub.f32 %v4640, %v4672
        %v4825 = vsub.f32 %v4641, %v4673
        %v4826 = vsub.f32 %v4642, %v4674
        %v4827 = vsel %vm518, %v4819, 0.0
        %v4828 = vsel %vm518, %v4820, 0.0
        %v4829 = vsel %vm518, %v4821, 0.0
        %v4830 = vsel %vm518, %v4822, 0.0
        %v4831 = vsel %vm518, %v4823, 0.0
        %v4832 = vsel %vm518, %v4824, 0.0
        %v4833 = vsel %vm518, %v4825, 0.0
        %v4834 = vsel %vm518, %v4826, 0.0
        %v4835 = vmul.f32 %v4827, %v4827
        %v4836 = vmul.f32 %v4828, %v4828
        %v4837 = vmul.f32 %v4829, %v4829
        %v4838 = vmul.f32 %v4830, %v4830
        %v4839 = vmul.f32 %v4831, %v4831
        %v4840 = vmul.f32 %v4832, %v4832
        %v4841 = vmul.f32 %v4833, %v4833
        %v4842 = vmul.f32 %v4834, %v4834
        %4843 = vadd.xlane.f32.xlu0 %v4835
        %v4844 = vpop.xlane.xlu0 %4843
        %4845 = vadd.xlane.f32.xlu0 %v4836
        %v4846 = vpop.xlane.xlu0 %4845
        %4847 = vadd.xlane.f32.xlu0 %v4837
        %v4848 = vpop.xlane.xlu0 %4847
        %4849 = vadd.xlane.f32.xlu0 %v4838
        %v4850 = vpop.xlane.xlu0 %4849
        %4851 = vadd.xlane.f32.xlu0 %v4839
        %v4852 = vpop.xlane.xlu0 %4851
        %4853 = vadd.xlane.f32.xlu0 %v4840
        %v4854 = vpop.xlane.xlu0 %4853
        %4855 = vadd.xlane.f32.xlu0 %v4841
        %v4856 = vpop.xlane.xlu0 %4855
        %4857 = vadd.xlane.f32.xlu0 %v4842
        %v4858 = vpop.xlane.xlu0 %4857
        %v4859 = vadd.f32 %v4811, %v4844
        %v4860 = vadd.f32 %v4812, %v4846
        %v4861 = vadd.f32 %v4813, %v4848
        %v4862 = vadd.f32 %v4814, %v4850
        %v4863 = vadd.f32 %v4815, %v4852
        %v4864 = vadd.f32 %v4816, %v4854
        %v4865 = vadd.f32 %v4817, %v4856
        %v4866 = vadd.f32 %v4818, %v4858
        %v4867 = vmul.f32 %v4859, 0.0078125
        %v4868 = vmul.f32 %v4860, 0.0078125
        %v4869 = vmul.f32 %v4861, 0.0078125
        %v4870 = vmul.f32 %v4862, 0.0078125
        %v4871 = vmul.f32 %v4863, 0.0078125
        %v4872 = vmul.f32 %v4864, 0.0078125
        %v4873 = vmul.f32 %v4865, 0.0078125
        %v4874 = vmul.f32 %v4866, 0.0078125
        %v4875 = vadd.f32 %v4867, 1e-05
        %v4876 = vadd.f32 %v4868, 1e-05
        %v4877 = vadd.f32 %v4869, 1e-05
        %v4878 = vadd.f32 %v4870, 1e-05
        %v4879 = vadd.f32 %v4871, 1e-05
        %v4880 = vadd.f32 %v4872, 1e-05
        %v4881 = vadd.f32 %v4873, 1e-05
        %v4882 = vadd.f32 %v4874, 1e-05
        %v4883 = vrsqrt.pop %v4875
        %v4884 = vrsqrt.pop %v4876
        %v4885 = vrsqrt.pop %v4877
        %v4886 = vrsqrt.pop %v4878
        %v4887 = vrsqrt.pop %v4879
        %v4888 = vrsqrt.pop %v4880
        %v4889 = vrsqrt.pop %v4881
        %v4890 = vrsqrt.pop %v4882
        %v4891 = vmul.f32 %v4675, %v4883
        %v4892 = vmul.f32 %v4676, %v4884
        %v4893 = vmul.f32 %v4677, %v4885
        %v4894 = vmul.f32 %v4678, %v4886
        %v4895 = vmul.f32 %v4679, %v4887
        %v4896 = vmul.f32 %v4680, %v4888
        %v4897 = vmul.f32 %v4681, %v4889
        %v4898 = vmul.f32 %v4682, %v4890
        %v4899 = vpack.c.bf16 %v4892, %v4891
        %v4900 = vpack.c.bf16 %v4894, %v4893
        %v4901 = vpack.c.bf16 %v4896, %v4895
        %v4902 = vpack.c.bf16 %v4898, %v4897
        %v4903 = vld [vmem:[%s2] sm:$0xf]
        %v4904 = vld [vmem:[%s2 + $0x4] sm:$0xf]
        %v4905 = vld [vmem:[%s2 + $0x8] sm:$0xf]
        %v4906 = vld [vmem:[%s2 + $0xc] sm:$0xf]
        %v4907 = vld [vmem:[%s2 + $0x10] sm:$0xf]
        %v4908 = vld [vmem:[%s2 + $0x14] sm:$0xf]
        %v4909 = vld [vmem:[%s2 + $0x18] sm:$0xf]
        %v4910 = vld [vmem:[%s2 + $0x1c] sm:$0xf]
        %v4911 = vld [vmem:[%s2 + $0x20] sm:$0xf]
        %v4912 = vld [vmem:[%s2 + $0x24] sm:$0xf]
        %v4913 = vld [vmem:[%s2 + $0x28] sm:$0xf]
        %v4914 = vld [vmem:[%s2 + $0x2c] sm:$0xf]
        %v4915 = vld [vmem:[%s2 + $0x30] sm:$0xf]
        %v4916 = vld [vmem:[%s2 + $0x34] sm:$0xf]
        %v4917 = vld [vmem:[%s2 + $0x38] sm:$0xf]
        %v4918 = vld [vmem:[%s2 + $0x3c] sm:$0xf]
        %v4919 = vmul.f32 %v4723, %v4883
        %v4920 = vmul.f32 %v4724, %v4884
        %v4921 = vmul.f32 %v4725, %v4885
        %v4922 = vmul.f32 %v4726, %v4886
        %v4923 = vmul.f32 %v4727, %v4887
        %v4924 = vmul.f32 %v4728, %v4888
        %v4925 = vmul.f32 %v4729, %v4889
        %v4926 = vmul.f32 %v4730, %v4890
        %v4927 = vpack.c.bf16 %v4920, %v4919
        %v4928 = vpack.c.bf16 %v4922, %v4921
        %v4929 = vpack.c.bf16 %v4924, %v4923
        %v4930 = vpack.c.bf16 %v4926, %v4925
        %v4931 = vld [vmem:[%s2 + $0x40] sm:$0xf]
        %v4932 = vld [vmem:[%s2 + $0x44] sm:$0xf]
        %v4933 = vld [vmem:[%s2 + $0x48] sm:$0xf]
        %v4934 = vld [vmem:[%s2 + $0x4c] sm:$0xf]
        %v4935 = vld [vmem:[%s2 + $0x50] sm:$0xf]
        %v4936 = vld [vmem:[%s2 + $0x54] sm:$0xf]
        %v4937 = vld [vmem:[%s2 + $0x58] sm:$0xf]
        %v4938 = vld [vmem:[%s2 + $0x5c] sm:$0xf]
        %v4939 = vld [vmem:[%s2 + $0x60] sm:$0xf]
        %v4940 = vld [vmem:[%s2 + $0x64] sm:$0xf]
        %v4941 = vld [vmem:[%s2 + $0x68] sm:$0xf]
        %v4942 = vld [vmem:[%s2 + $0x6c] sm:$0xf]
        %v4943 = vld [vmem:[%s2 + $0x70] sm:$0xf]
        %v4944 = vld [vmem:[%s2 + $0x74] sm:$0xf]
        %v4945 = vld [vmem:[%s2 + $0x78] sm:$0xf]
        %v4946 = vld [vmem:[%s2 + $0x7c] sm:$0xf]
        %v4963 = vunpack.c.l.b16 %v4931
        %v4964 = vunpack.c.l.b16 %v4932
        %v4965 = vunpack.c.l.b16 %v4933
        %v4966 = vunpack.c.l.b16 %v4934
        %v4967 = vunpack.c.l.b16 %v4935
        %v4968 = vunpack.c.l.b16 %v4936
        %v4969 = vunpack.c.l.b16 %v4937
        %v4970 = vunpack.c.l.b16 %v4938
        %v4971 = vunpack.c.l.b16 %v4939
        %v4972 = vunpack.c.l.b16 %v4940
        %v4973 = vunpack.c.l.b16 %v4941
        %v4974 = vunpack.c.l.b16 %v4942
        %v4975 = vunpack.c.l.b16 %v4943
        %v4976 = vunpack.c.l.b16 %v4944
        %v4977 = vunpack.c.l.b16 %v4945
        %v4978 = vunpack.c.l.b16 %v4946
        %v4979 = vpack.c.b16 %v4964, %v4963
        %v4980 = vpack.c.b16 %v4966, %v4965
        %v4981 = vpack.c.b16 %v4968, %v4967
        %v4982 = vpack.c.b16 %v4970, %v4969
        %v4983 = vpack.c.b16 %v4972, %v4971
        %v4984 = vpack.c.b16 %v4974, %v4973
        %v4985 = vpack.c.b16 %v4976, %v4975
        %v4986 = vpack.c.b16 %v4978, %v4977
        %4995 = vmatprep.subr.bf16.mxu0 0
        %4996 = vmatpush1.bf16.msra.mxu0 %v4979
        %4997 = vmatprep.subr.bf16.mxu0 0
        %4998 = vmatpush1.bf16.msra.mxu0 %v4980
        %4999 = vmatprep.subr.bf16.mxu0 0
        %5000 = vmatpush1.bf16.msra.mxu0 %v4981
        %5001 = vmatprep.subr.bf16.mxu0 0
        %5002 = vmatpush1.bf16.msra.mxu0 %v4982
        %5003 = vmatprep.subr.bf16.mxu0 0
        %5004 = vmatpush1.bf16.msra.mxu0 %v4983
        %5005 = vmatprep.subr.bf16.mxu0 0
        %5006 = vmatpush1.bf16.msra.mxu0 %v4984
        %5007 = vmatprep.subr.bf16.mxu0 0
        %5008 = vmatpush1.bf16.msra.mxu0 %v4985
        %5009 = vmatprep.subr.bf16.mxu0 0
        %5010 = vmatpush1.bf16.msra.mxu0 %v4986
        %5011 = vmatprep.subr.bf16.mxu0 0
        %5012 = vmatpush1.bf16.msra.mxu0 0
        %5013 = vmatprep.subr.bf16.mxu0 0
        %5014 = vmatpush1.bf16.msra.mxu0 0
        %5015 = vmatprep.subr.bf16.mxu0 0
        %5016 = vmatpush1.bf16.msra.mxu0 0
        %5017 = vmatprep.subr.bf16.mxu0 0
        %5018 = vmatpush1.bf16.msra.mxu0 0
        %5019 = vmatprep.subr.bf16.mxu0 0
        %5020 = vmatpush1.bf16.msra.mxu0 0
        %5021 = vmatprep.subr.bf16.mxu0 0
        %5022 = vmatpush1.bf16.msra.mxu0 0
        %5023 = vmatprep.subr.bf16.mxu0 0
        %5024 = vmatpush1.bf16.msra.mxu0 0
        %5025 = vmatprep.subr.bf16.mxu0 0
        %5026 = vmatpush1.bf16.msra.mxu0 0
        %5027 = vmatprep.mubr.bf16.mxu0 0
        %5028 = vmatmul.mubr.bf16.gmra.mrb[0].mxu0 %v4927
        %v5029 = vpop.f32.mrb[0].mxu0
        %v5030 = vadd.f32 0.0, %v5029
        %v5031 = vpop.f32.mrb[0].mxu0
        %v5032 = vpop.f32.mrb[0].mxu0
        %v5033 = vadd.f32 0.0, %v5032
        %v5034 = vpop.f32.mrb[0].mxu0
        %5035 = vmatprep.mubr.bf16.mxu0 0
        %5036 = vmatmul.mubr.bf16.gmra.mrb[0].mxu0 %v4928
        %v5037 = vpop.f32.mrb[0].mxu0
        %v5038 = vadd.f32 0.0, %v5037
        %v5039 = vpop.f32.mrb[0].mxu0
        %v5040 = vpop.f32.mrb[0].mxu0
        %v5041 = vadd.f32 0.0, %v5040
        %v5042 = vpop.f32.mrb[0].mxu0
        %5043 = vmatprep.mubr.bf16.mxu0 0
        %5044 = vmatmul.mubr.bf16.gmra.mrb[0].mxu0 %v4929
        %v5045 = vpop.f32.mrb[0].mxu0
        %v5046 = vadd.f32 0.0, %v5045
        %v5047 = vpop.f32.mrb[0].mxu0
        %v5048 = vpop.f32.mrb[0].mxu0
        %v5049 = vadd.f32 0.0, %v5048
        %v5050 = vpop.f32.mrb[0].mxu0
        %5051 = vmatprep.mubr.bf16.mxu0 0
        %5052 = vmatmul.mubr.bf16.gmra.mrb[0].mxu0 %v4930
        %v5053 = vpop.f32.mrb[0].mxu0
        %v5054 = vadd.f32 0.0, %v5053
        %v5055 = vpop.f32.mrb[0].mxu0
        %v5056 = vpop.f32.mrb[0].mxu0
        %v5057 = vadd.f32 0.0, %v5056
        %v5058 = vpop.f32.mrb[0].mxu0
        %5059 = vdwg.mxu0
        %v5076 = vunpack.c.l.b16 %v4903
        %v5077 = vunpack.c.l.b16 %v4904
        %v5078 = vunpack.c.l.b16 %v4905
        %v5079 = vunpack.c.l.b16 %v4906
        %v5080 = vunpack.c.l.b16 %v4907
        %v5081 = vunpack.c.l.b16 %v4908
        %v5082 = vunpack.c.l.b16 %v4909
        %v5083 = vunpack.c.l.b16 %v4910
        %v5084 = vunpack.c.l.b16 %v4911
        %v5085 = vunpack.c.l.b16 %v4912
        %v5086 = vunpack.c.l.b16 %v4913
        %v5087 = vunpack.c.l.b16 %v4914
        %v5088 = vunpack.c.l.b16 %v4915
        %v5089 = vunpack.c.l.b16 %v4916
        %v5090 = vunpack.c.l.b16 %v4917
        %v5091 = vunpack.c.l.b16 %v4918
        %v5092 = vpack.c.b16 %v5077, %v5076
        %v5093 = vpack.c.b16 %v5079, %v5078
        %v5094 = vpack.c.b16 %v5081, %v5080
        %v5095 = vpack.c.b16 %v5083, %v5082
        %v5096 = vpack.c.b16 %v5085, %v5084
        %v5097 = vpack.c.b16 %v5087, %v5086
        %v5098 = vpack.c.b16 %v5089, %v5088
        %v5099 = vpack.c.b16 %v5091, %v5090
        %5108 = vmatprep.subr.bf16.mxu0 0
        %5109 = vmatpush1.bf16.msra.mxu0 %v5092
        %5110 = vmatprep.subr.bf16.mxu0 0
        %5111 = vmatpush1.bf16.msra.mxu0 %v5093
        %5112 = vmatprep.subr.bf16.mxu0 0
        %5113 = vmatpush1.bf16.msra.mxu0 %v5094
        %5114 = vmatprep.subr.bf16.mxu0 0
        %5115 = vmatpush1.bf16.msra.mxu0 %v5095
        %5116 = vmatprep.subr.bf16.mxu0 0
        %5117 = vmatpush1.bf16.msra.mxu0 %v5096
        %5118 = vmatprep.subr.bf16.mxu0 0
        %5119 = vmatpush1.bf16.msra.mxu0 %v5097
        %5120 = vmatprep.subr.bf16.mxu0 0
        %5121 = vmatpush1.bf16.msra.mxu0 %v5098
        %5122 = vmatprep.subr.bf16.mxu0 0
        %5123 = vmatpush1.bf16.msra.mxu0 %v5099
        %5124 = vmatprep.subr.bf16.mxu0 0
        %5125 = vmatpush1.bf16.msra.mxu0 0
        %5126 = vmatprep.subr.bf16.mxu0 0
        %5127 = vmatpush1.bf16.msra.mxu0 0
        %5128 = vmatprep.subr.bf16.mxu0 0
        %5129 = vmatpush1.bf16.msra.mxu0 0
        %5130 = vmatprep.subr.bf16.mxu0 0
        %5131 = vmatpush1.bf16.msra.mxu0 0
        %5132 = vmatprep.subr.bf16.mxu0 0
        %5133 = vmatpush1.bf16.msra.mxu0 0
        %5134 = vmatprep.subr.bf16.mxu0 0
        %5135 = vmatpush1.bf16.msra.mxu0 0
        %5136 = vmatprep.subr.bf16.mxu0 0
        %5137 = vmatpush1.bf16.msra.mxu0 0
        %5138 = vmatprep.subr.bf16.mxu0 0
        %5139 = vmatpush1.bf16.msra.mxu0 0
        %5140 = vmatprep.mubr.bf16.mxu0 0
        %5141 = vmatmul.mubr.bf16.gmra.mrb[0].mxu0 %v4899
        %v5142 = vpop.f32.mrb[0].mxu0
        %v5143 = vadd.f32 %v5030, %v5142
        %v5144 = vpop.f32.mrb[0].mxu0
        %v5145 = vpop.f32.mrb[0].mxu0
        %v5146 = vadd.f32 %v5033, %v5145
        %v5147 = vpop.f32.mrb[0].mxu0
        %5148 = vmatprep.mubr.bf16.mxu0 0
        %5149 = vmatmul.mubr.bf16.gmra.mrb[0].mxu0 %v4900
        %v5150 = vpop.f32.mrb[0].mxu0
        %v5151 = vadd.f32 %v5038, %v5150
        %v5152 = vpop.f32.mrb[0].mxu0
        %v5153 = vpop.f32.mrb[0].mxu0
        %v5154 = vadd.f32 %v5041, %v5153
        %v5155 = vpop.f32.mrb[0].mxu0
        %5156 = vmatprep.mubr.bf16.mxu0 0
        %5157 = vmatmul.mubr.bf16.gmra.mrb[0].mxu0 %v4901
        %v5158 = vpop.f32.mrb[0].mxu0
        %v5159 = vadd.f32 %v5046, %v5158
        %v5160 = vpop.f32.mrb[0].mxu0
        %v5161 = vpop.f32.mrb[0].mxu0
        %v5162 = vadd.f32 %v5049, %v5161
        %v5163 = vpop.f32.mrb[0].mxu0
        %5164 = vmatprep.mubr.bf16.mxu0 0
        %5165 = vmatmul.mubr.bf16.gmra.mrb[0].mxu0 %v4902
        %v5166 = vpop.f32.mrb[0].mxu0
        %v5167 = vadd.f32 %v5054, %v5166
        %v5168 = vpop.f32.mrb[0].mxu0
        %v5169 = vpop.f32.mrb[0].mxu0
        %v5170 = vadd.f32 %v5057, %v5169
        %v5171 = vpop.f32.mrb[0].mxu0
        %5172 = vdwg.mxu0
        %v5173 = vmul.f32 %v4771, %v4883
        %v5174 = vmul.f32 %v4772, %v4884
        %v5175 = vmul.f32 %v4773, %v4885
        %v5176 = vmul.f32 %v4774, %v4886
        %v5177 = vmul.f32 %v4775, %v4887
        %v5178 = vmul.f32 %v4776, %v4888
        %v5179 = vmul.f32 %v4777, %v4889
        %v5180 = vmul.f32 %v4778, %v4890
        %v5181 = vpack.c.bf16 %v5174, %v5173
        %v5182 = vpack.c.bf16 %v5176, %v5175
        %v5183 = vpack.c.bf16 %v5178, %v5177
        %v5184 = vpack.c.bf16 %v5180, %v5179
        %v5185 = vld [vmem:[%s2 + $0x80] sm:$0xf]
        %v5186 = vld [vmem:[%s2 + $0x84] sm:$0xf]
        %v5187 = vld [vmem:[%s2 + $0x88] sm:$0xf]
        %v5188 = vld [vmem:[%s2 + $0x8c] sm:$0xf]
        %v5189 = vld [vmem:[%s2 + $0x90] sm:$0xf]
        %v5190 = vld [vmem:[%s2 + $0x94] sm:$0xf]
        %v5191 = vld [vmem:[%s2 + $0x98] sm:$0xf]
        %v5192 = vld [vmem:[%s2 + $0x9c] sm:$0xf]
        %v5193 = vld [vmem:[%s2 + $0xa0] sm:$0xf]
        %v5194 = vld [vmem:[%s2 + $0xa4] sm:$0xf]
        %v5195 = vld [vmem:[%s2 + $0xa8] sm:$0xf]
        %v5196 = vld [vmem:[%s2 + $0xac] sm:$0xf]
        %v5197 = vld [vmem:[%s2 + $0xb0] sm:$0xf]
        %v5198 = vld [vmem:[%s2 + $0xb4] sm:$0xf]
        %v5199 = vld [vmem:[%s2 + $0xb8] sm:$0xf]
        %v5200 = vld [vmem:[%s2 + $0xbc] sm:$0xf]
        %v5217 = vunpack.c.l.b16 %v5185
        %v5218 = vunpack.c.l.b16 %v5186
        %v5219 = vunpack.c.l.b16 %v5187
        %v5220 = vunpack.c.l.b16 %v5188
        %v5221 = vunpack.c.l.b16 %v5189
        %v5222 = vunpack.c.l.b16 %v5190
        %v5223 = vunpack.c.l.b16 %v5191
        %v5224 = vunpack.c.l.b16 %v5192
        %v5225 = vunpack.c.l.b16 %v5193
        %v5226 = vunpack.c.l.b16 %v5194
        %v5227 = vunpack.c.l.b16 %v5195
        %v5228 = vunpack.c.l.b16 %v5196
        %v5229 = vunpack.c.l.b16 %v5197
        %v5230 = vunpack.c.l.b16 %v5198
        %v5231 = vunpack.c.l.b16 %v5199
        %v5232 = vunpack.c.l.b16 %v5200
        %v5233 = vpack.c.b16 %v5218, %v5217
        %v5234 = vpack.c.b16 %v5220, %v5219
        %v5235 = vpack.c.b16 %v5222, %v5221
        %v5236 = vpack.c.b16 %v5224, %v5223
        %v5237 = vpack.c.b16 %v5226, %v5225
        %v5238 = vpack.c.b16 %v5228, %v5227
        %v5239 = vpack.c.b16 %v5230, %v5229
        %v5240 = vpack.c.b16 %v5232, %v5231
        %5249 = vmatprep.subr.bf16.mxu0 0
        %5250 = vmatpush1.bf16.msra.mxu0 %v5233
        %5251 = vmatprep.subr.bf16.mxu0 0
        %5252 = vmatpush1.bf16.msra.mxu0 %v5234
        %5253 = vmatprep.subr.bf16.mxu0 0
        %5254 = vmatpush1.bf16.msra.mxu0 %v5235
        %5255 = vmatprep.subr.bf16.mxu0 0
        %5256 = vmatpush1.bf16.msra.mxu0 %v5236
        %5257 = vmatprep.subr.bf16.mxu0 0
        %5258 = vmatpush1.bf16.msra.mxu0 %v5237
        %5259 = vmatprep.subr.bf16.mxu0 0
        %5260 = vmatpush1.bf16.msra.mxu0 %v5238
        %5261 = vmatprep.subr.bf16.mxu0 0
        %5262 = vmatpush1.bf16.msra.mxu0 %v5239
        %5263 = vmatprep.subr.bf16.mxu0 0
        %5264 = vmatpush1.bf16.msra.mxu0 %v5240
        %5265 = vmatprep.subr.bf16.mxu0 0
        %5266 = vmatpush1.bf16.msra.mxu0 0
        %5267 = vmatprep.subr.bf16.mxu0 0
        %5268 = vmatpush1.bf16.msra.mxu0 0
        %5269 = vmatprep.subr.bf16.mxu0 0
        %5270 = vmatpush1.bf16.msra.mxu0 0
        %5271 = vmatprep.subr.bf16.mxu0 0
        %5272 = vmatpush1.bf16.msra.mxu0 0
        %5273 = vmatprep.subr.bf16.mxu0 0
        %5274 = vmatpush1.bf16.msra.mxu0 0
        %5275 = vmatprep.subr.bf16.mxu0 0
        %5276 = vmatpush1.bf16.msra.mxu0 0
        %5277 = vmatprep.subr.bf16.mxu0 0
        %5278 = vmatpush1.bf16.msra.mxu0 0
        %5279 = vmatprep.subr.bf16.mxu0 0
        %5280 = vmatpush1.bf16.msra.mxu0 0
        %5281 = vmatprep.mubr.bf16.mxu0 0
        %5282 = vmatmul.mubr.bf16.gmra.mrb[0].mxu0 %v5181
        %v5283 = vpop.f32.mrb[0].mxu0
        %v5284 = vadd.f32 0.0, %v5283
        %v5285 = vpop.f32.mrb[0].mxu0
        %v5286 = vpop.f32.mrb[0].mxu0
        %v5287 = vadd.f32 0.0, %v5286
        %v5288 = vpop.f32.mrb[0].mxu0
        %5289 = vmatprep.mubr.bf16.mxu0 0
        %5290 = vmatmul.mubr.bf16.gmra.mrb[0].mxu0 %v5182
        %v5291 = vpop.f32.mrb[0].mxu0
        %v5292 = vadd.f32 0.0, %v5291
        %v5293 = vpop.f32.mrb[0].mxu0
        %v5294 = vpop.f32.mrb[0].mxu0
        %v5295 = vadd.f32 0.0, %v5294
        %v5296 = vpop.f32.mrb[0].mxu0
        %5297 = vmatprep.mubr.bf16.mxu0 0
        %5298 = vmatmul.mubr.bf16.gmra.mrb[0].mxu0 %v5183
        %v5299 = vpop.f32.mrb[0].mxu0
        %v5300 = vadd.f32 0.0, %v5299
        %v5301 = vpop.f32.mrb[0].mxu0
        %v5302 = vpop.f32.mrb[0].mxu0
        %v5303 = vadd.f32 0.0, %v5302
        %v5304 = vpop.f32.mrb[0].mxu0
        %5305 = vmatprep.mubr.bf16.mxu0 0
        %5306 = vmatmul.mubr.bf16.gmra.mrb[0].mxu0 %v5184
        %v5307 = vpop.f32.mrb[0].mxu0
        %v5308 = vadd.f32 0.0, %v5307
        %v5309 = vpop.f32.mrb[0].mxu0
        %v5310 = vpop.f32.mrb[0].mxu0
        %v5311 = vadd.f32 0.0, %v5310
        %v5312 = vpop.f32.mrb[0].mxu0
        %5313 = vdwg.mxu0
        %v5314 = vadd.f32 %v5143, %v5284
        %v5315 = vadd.f32 %v5146, %v5287
        %v5316 = vadd.f32 %v5151, %v5292
        %v5317 = vadd.f32 %v5154, %v5295
        %v5318 = vadd.f32 %v5159, %v5300
        %v5319 = vadd.f32 %v5162, %v5303
        %v5320 = vadd.f32 %v5167, %v5308
        %v5321 = vadd.f32 %v5170, %v5311
        %v5322 = vmul.f32 %v4819, %v4883
        %v5323 = vmul.f32 %v4820, %v4884
        %v5324 = vmul.f32 %v4821, %v4885
        %v5325 = vmul.f32 %v4822, %v4886
        %v5326 = vmul.f32 %v4823, %v4887
        %v5327 = vmul.f32 %v4824, %v4888
        %v5328 = vmul.f32 %v4825, %v4889
        %v5329 = vmul.f32 %v4826, %v4890
        %v5330 = vpack.c.bf16 %v5323, %v5322
        %v5331 = vpack.c.bf16 %v5325, %v5324
        %v5332 = vpack.c.bf16 %v5327, %v5326
        %v5333 = vpack.c.bf16 %v5329, %v5328
        %v5334 = vld [vmem:[%s2 + $0xc0] sm:$0xf]
        %v5335 = vld [vmem:[%s2 + $0xc4] sm:$0xf]
        %v5336 = vld [vmem:[%s2 + $0xc8] sm:$0xf]
        %v5337 = vld [vmem:[%s2 + $0xcc] sm:$0xf]
        %v5338 = vld [vmem:[%s2 + $0xd0] sm:$0xf]
        %v5339 = vld [vmem:[%s2 + $0xd4] sm:$0xf]
        %v5340 = vld [vmem:[%s2 + $0xd8] sm:$0xf]
        %v5341 = vld [vmem:[%s2 + $0xdc] sm:$0xf]
        %v5342 = vld [vmem:[%s2 + $0xe0] sm:$0xf]
        %v5343 = vld [vmem:[%s2 + $0xe4] sm:$0xf]
        %v5344 = vld [vmem:[%s2 + $0xe8] sm:$0xf]
        %v5345 = vld [vmem:[%s2 + $0xec] sm:$0xf]
        %v5346 = vld [vmem:[%s2 + $0xf0] sm:$0xf]
        %v5347 = vld [vmem:[%s2 + $0xf4] sm:$0xf]
        %v5348 = vld [vmem:[%s2 + $0xf8] sm:$0xf]
        %v5349 = vld [vmem:[%s2 + $0xfc] sm:$0xf]
        %v5366 = vunpack.c.l.b16 %v5334
        %v5367 = vunpack.c.l.b16 %v5335
        %v5368 = vunpack.c.l.b16 %v5336
        %v5369 = vunpack.c.l.b16 %v5337
        %v5370 = vunpack.c.l.b16 %v5338
        %v5371 = vunpack.c.l.b16 %v5339
        %v5372 = vunpack.c.l.b16 %v5340
        %v5373 = vunpack.c.l.b16 %v5341
        %v5374 = vunpack.c.l.b16 %v5342
        %v5375 = vunpack.c.l.b16 %v5343
        %v5376 = vunpack.c.l.b16 %v5344
        %v5377 = vunpack.c.l.b16 %v5345
        %v5378 = vunpack.c.l.b16 %v5346
        %v5379 = vunpack.c.l.b16 %v5347
        %v5380 = vunpack.c.l.b16 %v5348
        %v5381 = vunpack.c.l.b16 %v5349
        %v5382 = vpack.c.b16 %v5367, %v5366
        %v5383 = vpack.c.b16 %v5369, %v5368
        %v5384 = vpack.c.b16 %v5371, %v5370
        %v5385 = vpack.c.b16 %v5373, %v5372
        %v5386 = vpack.c.b16 %v5375, %v5374
        %v5387 = vpack.c.b16 %v5377, %v5376
        %v5388 = vpack.c.b16 %v5379, %v5378
        %v5389 = vpack.c.b16 %v5381, %v5380
        %5398 = vmatprep.subr.bf16.mxu0 0
        %5399 = vmatpush1.bf16.msra.mxu0 %v5382
        %5400 = vmatprep.subr.bf16.mxu0 0
        %5401 = vmatpush1.bf16.msra.mxu0 %v5383
        %5402 = vmatprep.subr.bf16.mxu0 0
        %5403 = vmatpush1.bf16.msra.mxu0 %v5384
        %5404 = vmatprep.subr.bf16.mxu0 0
        %5405 = vmatpush1.bf16.msra.mxu0 %v5385
        %5406 = vmatprep.subr.bf16.mxu0 0
        %5407 = vmatpush1.bf16.msra.mxu0 %v5386
        %5408 = vmatprep.subr.bf16.mxu0 0
        %5409 = vmatpush1.bf16.msra.mxu0 %v5387
        %5410 = vmatprep.subr.bf16.mxu0 0
        %5411 = vmatpush1.bf16.msra.mxu0 %v5388
        %5412 = vmatprep.subr.bf16.mxu0 0
        %5413 = vmatpush1.bf16.msra.mxu0 %v5389
        %5414 = vmatprep.subr.bf16.mxu0 0
        %5415 = vmatpush1.bf16.msra.mxu0 0
        %5416 = vmatprep.subr.bf16.mxu0 0
        %5417 = vmatpush1.bf16.msra.mxu0 0
        %5418 = vmatprep.subr.bf16.mxu0 0
        %5419 = vmatpush1.bf16.msra.mxu0 0
        %5420 = vmatprep.subr.bf16.mxu0 0
        %5421 = vmatpush1.bf16.msra.mxu0 0
        %5422 = vmatprep.subr.bf16.mxu0 0
        %5423 = vmatpush1.bf16.msra.mxu0 0
        %5424 = vmatprep.subr.bf16.mxu0 0
        %5425 = vmatpush1.bf16.msra.mxu0 0
        %5426 = vmatprep.subr.bf16.mxu0 0
        %5427 = vmatpush1.bf16.msra.mxu0 0
        %5428 = vmatprep.subr.bf16.mxu0 0
        %5429 = vmatpush1.bf16.msra.mxu0 0
        %5430 = vmatprep.mubr.bf16.mxu0 0
        %5431 = vmatmul.mubr.bf16.gmra.mrb[0].mxu0 %v5330
        %v5432 = vpop.f32.mrb[0].mxu0
        %v5433 = vadd.f32 0.0, %v5432
        %v5434 = vpop.f32.mrb[0].mxu0
        %v5435 = vpop.f32.mrb[0].mxu0
        %v5436 = vadd.f32 0.0, %v5435
        %v5437 = vpop.f32.mrb[0].mxu0
        %5438 = vmatprep.mubr.bf16.mxu0 0
        %5439 = vmatmul.mubr.bf16.gmra.mrb[0].mxu0 %v5331
        %v5440 = vpop.f32.mrb[0].mxu0
        %v5441 = vadd.f32 0.0, %v5440
        %v5442 = vpop.f32.mrb[0].mxu0
        %v5443 = vpop.f32.mrb[0].mxu0
        %v5444 = vadd.f32 0.0, %v5443
        %v5445 = vpop.f32.mrb[0].mxu0
        %5446 = vmatprep.mubr.bf16.mxu0 0
        %5447 = vmatmul.mubr.bf16.gmra.mrb[0].mxu0 %v5332
        %v5448 = vpop.f32.mrb[0].mxu0
        %v5449 = vadd.f32 0.0, %v5448
        %v5450 = vpop.f32.mrb[0].mxu0
        %v5451 = vpop.f32.mrb[0].mxu0
        %v5452 = vadd.f32 0.0, %v5451
        %v5453 = vpop.f32.mrb[0].mxu0
        %5454 = vmatprep.mubr.bf16.mxu0 0
        %5455 = vmatmul.mubr.bf16.gmra.mrb[0].mxu0 %v5333
        %v5456 = vpop.f32.mrb[0].mxu0
        %v5457 = vadd.f32 0.0, %v5456
        %v5458 = vpop.f32.mrb[0].mxu0
        %v5459 = vpop.f32.mrb[0].mxu0
        %v5460 = vadd.f32 0.0, %v5459
        %v5461 = vpop.f32.mrb[0].mxu0
        %5462 = vdwg.mxu0
        %v5463 = vadd.f32 %v5314, %v5433
        %v5464 = vadd.f32 %v5315, %v5436
        %v5465 = vadd.f32 %v5316, %v5441
        %v5466 = vadd.f32 %v5317, %v5444
        %v5467 = vadd.f32 %v5318, %v5449
        %v5468 = vadd.f32 %v5319, %v5452
        %v5469 = vadd.f32 %v5320, %v5457
        %v5470 = vadd.f32 %v5321, %v5460
        %v5471 = vadd.f32 %v5463, %v4490
        %v5472 = vadd.f32 %v5464, %v4490
        %v5473 = vadd.f32 %v5465, %v4490
        %v5474 = vadd.f32 %v5466, %v4490
        %v5475 = vadd.f32 %v5467, %v4490
        %v5476 = vadd.f32 %v5468, %v4490
        %v5477 = vadd.f32 %v5469, %v4490
        %v5478 = vadd.f32 %v5470, %v4490
        %v5479 = vpack.c.bf16 %v5472, %v5471
        %v5480 = vpack.c.bf16 %v5474, %v5473
        %v5481 = vpack.c.bf16 %v5476, %v5475
        %v5482 = vpack.c.bf16 %v5478, %v5477
        %s5483 = scalar_lea.vmem [#allocation3], 32
        %5484 = vst [vmem:[%s5483] sm:$0xff] %v5479
        %5485 = vst [vmem:[%s5483 + $0x8] sm:$0xff] %v5480
        %5486 = vst [vmem:[%s5483 + $0x10] sm:$0xff] %v5481
        %5487 = vst [vmem:[%s5483 + $0x18] sm:$0xff] %v5482
        %s5488 = scalar_lea.vmem [#allocation2], 64
        %v5489 = vld [vmem:[%s5488] sm:$0xff]
        %v5490 = vld [vmem:[%s5488 + $0x8] sm:$0xff]
        %v5491 = vld [vmem:[%s5488 + $0x10] sm:$0xff]
        %v5492 = vld [vmem:[%s5488 + $0x18] sm:$0xff]
        %v5493 = vunpack.c.l.bf16 %v5489
        %v5494 = vunpack.c.h.bf16 %v5489
        %v5495 = vunpack.c.l.bf16 %v5490
        %v5496 = vunpack.c.h.bf16 %v5490
        %v5497 = vunpack.c.l.bf16 %v5491
        %v5498 = vunpack.c.h.bf16 %v5491
        %v5499 = vunpack.c.l.bf16 %v5492
        %v5500 = vunpack.c.h.bf16 %v5492
        %5501 = vadd.xlane.f32.xlu0 %v5493
        %v5502 = vpop.xlane.xlu0 %5501
        %5503 = vadd.xlane.f32.xlu0 %v5494
        %v5504 = vpop.xlane.xlu0 %5503
        %5505 = vadd.xlane.f32.xlu0 %v5495
        %v5506 = vpop.xlane.xlu0 %5505
        %5507 = vadd.xlane.f32.xlu0 %v5496
        %v5508 = vpop.xlane.xlu0 %5507
        %5509 = vadd.xlane.f32.xlu0 %v5497
        %v5510 = vpop.xlane.xlu0 %5509
        %5511 = vadd.xlane.f32.xlu0 %v5498
        %v5512 = vpop.xlane.xlu0 %5511
        %5513 = vadd.xlane.f32.xlu0 %v5499
        %v5514 = vpop.xlane.xlu0 %5513
        %5515 = vadd.xlane.f32.xlu0 %v5500
        %v5516 = vpop.xlane.xlu0 %5515
        %v5517 = vadd.f32 %v5502, 0.0
        %v5518 = vadd.f32 %v5504, 0.0
        %v5519 = vadd.f32 %v5506, 0.0
        %v5520 = vadd.f32 %v5508, 0.0
        %v5521 = vadd.f32 %v5510, 0.0
        %v5522 = vadd.f32 %v5512, 0.0
        %v5523 = vadd.f32 %v5514, 0.0
        %v5524 = vadd.f32 %v5516, 0.0
        %s5525 = sadd.s32 128, 256
        %s5526 = sshra.s32 %s5525, 4
        %s5527 = sand.u32 %s5525, 15
        %s5528 = smul.addr %s5526, 8
        %s5529 = scalar_lea.vmem [#allocation2], %s5528
        %v5530 = vld [vmem:[%s5529] sm:$0xff]
        %v5531 = vld [vmem:[%s5529 + $0x8] sm:$0xff]
        %v5532 = vld [vmem:[%s5529 + $0x10] sm:$0xff]
        %v5533 = vld [vmem:[%s5529 + $0x18] sm:$0xff]
        %v5534 = vunpack.c.l.bf16 %v5530
        %v5535 = vunpack.c.h.bf16 %v5530
        %v5536 = vunpack.c.l.bf16 %v5531
        %v5537 = vunpack.c.h.bf16 %v5531
        %v5538 = vunpack.c.l.bf16 %v5532
        %v5539 = vunpack.c.h.bf16 %v5532
        %v5540 = vunpack.c.l.bf16 %v5533
        %v5541 = vunpack.c.h.bf16 %v5533
        %5542 = vadd.xlane.f32.xlu0 %v5534
        %v5543 = vpop.xlane.xlu0 %5542
        %5544 = vadd.xlane.f32.xlu0 %v5535
        %v5545 = vpop.xlane.xlu0 %5544
        %5546 = vadd.xlane.f32.xlu0 %v5536
        %v5547 = vpop.xlane.xlu0 %5546
        %5548 = vadd.xlane.f32.xlu0 %v5537
        %v5549 = vpop.xlane.xlu0 %5548
        %5550 = vadd.xlane.f32.xlu0 %v5538
        %v5551 = vpop.xlane.xlu0 %5550
        %5552 = vadd.xlane.f32.xlu0 %v5539
        %v5553 = vpop.xlane.xlu0 %5552
        %5554 = vadd.xlane.f32.xlu0 %v5540
        %v5555 = vpop.xlane.xlu0 %5554
        %5556 = vadd.xlane.f32.xlu0 %v5541
        %v5557 = vpop.xlane.xlu0 %5556
        %v5558 = vadd.f32 %v5517, %v5543
        %v5559 = vadd.f32 %v5518, %v5545
        %v5560 = vadd.f32 %v5519, %v5547
        %v5561 = vadd.f32 %v5520, %v5549
        %v5562 = vadd.f32 %v5521, %v5551
        %v5563 = vadd.f32 %v5522, %v5553
        %v5564 = vadd.f32 %v5523, %v5555
        %v5565 = vadd.f32 %v5524, %v5557
        %s5566 = sadd.s32 128, 512
        %s5567 = sshra.s32 %s5566, 4
        %s5568 = sand.u32 %s5566, 15
        %s5569 = smul.addr %s5567, 8
        %s5570 = scalar_lea.vmem [#allocation2], %s5569
        %v5571 = vld [vmem:[%s5570] sm:$0xff]
        %v5572 = vld [vmem:[%s5570 + $0x8] sm:$0xff]
        %v5573 = vld [vmem:[%s5570 + $0x10] sm:$0xff]
        %v5574 = vld [vmem:[%s5570 + $0x18] sm:$0xff]
        %v5575 = vunpack.c.l.bf16 %v5571
        %v5576 = vunpack.c.h.bf16 %v5571
        %v5577 = vunpack.c.l.bf16 %v5572
        %v5578 = vunpack.c.h.bf16 %v5572
        %v5579 = vunpack.c.l.bf16 %v5573
        %v5580 = vunpack.c.h.bf16 %v5573
        %v5581 = vunpack.c.l.bf16 %v5574
        %v5582 = vunpack.c.h.bf16 %v5574
        %5583 = vadd.xlane.f32.xlu0 %v5575
        %v5584 = vpop.xlane.xlu0 %5583
        %5585 = vadd.xlane.f32.xlu0 %v5576
        %v5586 = vpop.xlane.xlu0 %5585
        %5587 = vadd.xlane.f32.xlu0 %v5577
        %v5588 = vpop.xlane.xlu0 %5587
        %5589 = vadd.xlane.f32.xlu0 %v5578
        %v5590 = vpop.xlane.xlu0 %5589
        %5591 = vadd.xlane.f32.xlu0 %v5579
        %v5592 = vpop.xlane.xlu0 %5591
        %5593 = vadd.xlane.f32.xlu0 %v5580
        %v5594 = vpop.xlane.xlu0 %5593
        %5595 = vadd.xlane.f32.xlu0 %v5581
        %v5596 = vpop.xlane.xlu0 %5595
        %5597 = vadd.xlane.f32.xlu0 %v5582
        %v5598 = vpop.xlane.xlu0 %5597
        %v5599 = vadd.f32 %v5558, %v5584
        %v5600 = vadd.f32 %v5559, %v5586
        %v5601 = vadd.f32 %v5560, %v5588
        %v5602 = vadd.f32 %v5561, %v5590
        %v5603 = vadd.f32 %v5562, %v5592
        %v5604 = vadd.f32 %v5563, %v5594
        %v5605 = vadd.f32 %v5564, %v5596
        %v5606 = vadd.f32 %v5565, %v5598
        %s5607 = sadd.s32 128, 768
        %s5608 = sshra.s32 %s5607, 4
        %s5609 = sand.u32 %s5607, 15
        %s5610 = smul.addr %s5608, 8
        %s5611 = scalar_lea.vmem [#allocation2], %s5610
        %v5612 = vld [vmem:[%s5611] sm:$0xff]
        %v5613 = vld [vmem:[%s5611 + $0x8] sm:$0xff]
        %v5614 = vld [vmem:[%s5611 + $0x10] sm:$0xff]
        %v5615 = vld [vmem:[%s5611 + $0x18] sm:$0xff]
        %v5616 = vunpack.c.l.bf16 %v5612
        %v5617 = vunpack.c.h.bf16 %v5612
        %v5618 = vunpack.c.l.bf16 %v5613
        %v5619 = vunpack.c.h.bf16 %v5613
        %v5620 = vunpack.c.l.bf16 %v5614
        %v5621 = vunpack.c.h.bf16 %v5614
        %v5622 = vunpack.c.l.bf16 %v5615
        %v5623 = vunpack.c.h.bf16 %v5615
        %5624 = vadd.xlane.f32.xlu0 %v5616
        %v5625 = vpop.xlane.xlu0 %5624
        %5626 = vadd.xlane.f32.xlu0 %v5617
        %v5627 = vpop.xlane.xlu0 %5626
        %5628 = vadd.xlane.f32.xlu0 %v5618
        %v5629 = vpop.xlane.xlu0 %5628
        %5630 = vadd.xlane.f32.xlu0 %v5619
        %v5631 = vpop.xlane.xlu0 %5630
        %5632 = vadd.xlane.f32.xlu0 %v5620
        %v5633 = vpop.xlane.xlu0 %5632
        %5634 = vadd.xlane.f32.xlu0 %v5621
        %v5635 = vpop.xlane.xlu0 %5634
        %5636 = vadd.xlane.f32.xlu0 %v5622
        %v5637 = vpop.xlane.xlu0 %5636
        %5638 = vadd.xlane.f32.xlu0 %v5623
        %v5639 = vpop.xlane.xlu0 %5638
        %v5640 = vadd.f32 %v5599, %v5625
        %v5641 = vadd.f32 %v5600, %v5627
        %v5642 = vadd.f32 %v5601, %v5629
        %v5643 = vadd.f32 %v5602, %v5631
        %v5644 = vadd.f32 %v5603, %v5633
        %v5645 = vadd.f32 %v5604, %v5635
        %v5646 = vadd.f32 %v5605, %v5637
        %v5647 = vadd.f32 %v5606, %v5639
        %v5648 = vmul.f32 %v5640, 0.0078125
        %v5649 = vmul.f32 %v5641, 0.0078125
        %v5650 = vmul.f32 %v5642, 0.0078125
        %v5651 = vmul.f32 %v5643, 0.0078125
        %v5652 = vmul.f32 %v5644, 0.0078125
        %v5653 = vmul.f32 %v5645, 0.0078125
        %v5654 = vmul.f32 %v5646, 0.0078125
        %v5655 = vmul.f32 %v5647, 0.0078125
        %v5656 = vsub.f32 %v5493, %v5648
        %v5657 = vsub.f32 %v5494, %v5649
        %v5658 = vsub.f32 %v5495, %v5650
        %v5659 = vsub.f32 %v5496, %v5651
        %v5660 = vsub.f32 %v5497, %v5652
        %v5661 = vsub.f32 %v5498, %v5653
        %v5662 = vsub.f32 %v5499, %v5654
        %v5663 = vsub.f32 %v5500, %v5655
        %v5664 = vsel %vm518, %v5656, 0.0
        %v5665 = vsel %vm518, %v5657, 0.0
        %v5666 = vsel %vm518, %v5658, 0.0
        %v5667 = vsel %vm518, %v5659, 0.0
        %v5668 = vsel %vm518, %v5660, 0.0
        %v5669 = vsel %vm518, %v5661, 0.0
        %v5670 = vsel %vm518, %v5662, 0.0
        %v5671 = vsel %vm518, %v5663, 0.0
        %v5672 = vmul.f32 %v5664, %v5664
        %v5673 = vmul.f32 %v5665, %v5665
        %v5674 = vmul.f32 %v5666, %v5666
        %v5675 = vmul.f32 %v5667, %v5667
        %v5676 = vmul.f32 %v5668, %v5668
        %v5677 = vmul.f32 %v5669, %v5669
        %v5678 = vmul.f32 %v5670, %v5670
        %v5679 = vmul.f32 %v5671, %v5671
        %5680 = vadd.xlane.f32.xlu0 %v5672
        %v5681 = vpop.xlane.xlu0 %5680
        %5682 = vadd.xlane.f32.xlu0 %v5673
        %v5683 = vpop.xlane.xlu0 %5682
        %5684 = vadd.xlane.f32.xlu0 %v5674
        %v5685 = vpop.xlane.xlu0 %5684
        %5686 = vadd.xlane.f32.xlu0 %v5675
        %v5687 = vpop.xlane.xlu0 %5686
        %5688 = vadd.xlane.f32.xlu0 %v5676
        %v5689 = vpop.xlane.xlu0 %5688
        %5690 = vadd.xlane.f32.xlu0 %v5677
        %v5691 = vpop.xlane.xlu0 %5690
        %5692 = vadd.xlane.f32.xlu0 %v5678
        %v5693 = vpop.xlane.xlu0 %5692
        %5694 = vadd.xlane.f32.xlu0 %v5679
        %v5695 = vpop.xlane.xlu0 %5694
        %v5696 = vadd.f32 %v5681, 0.0
        %v5697 = vadd.f32 %v5683, 0.0
        %v5698 = vadd.f32 %v5685, 0.0
        %v5699 = vadd.f32 %v5687, 0.0
        %v5700 = vadd.f32 %v5689, 0.0
        %v5701 = vadd.f32 %v5691, 0.0
        %v5702 = vadd.f32 %v5693, 0.0
        %v5703 = vadd.f32 %v5695, 0.0
        %v5704 = vsub.f32 %v5534, %v5648
        %v5705 = vsub.f32 %v5535, %v5649
        %v5706 = vsub.f32 %v5536, %v5650
        %v5707 = vsub.f32 %v5537, %v5651
        %v5708 = vsub.f32 %v5538, %v5652
        %v5709 = vsub.f32 %v5539, %v5653
        %v5710 = vsub.f32 %v5540, %v5654
        %v5711 = vsub.f32 %v5541, %v5655
        %v5712 = vsel %vm518, %v5704, 0.0
        %v5713 = vsel %vm518, %v5705, 0.0
        %v5714 = vsel %vm518, %v5706, 0.0
        %v5715 = vsel %vm518, %v5707, 0.0
        %v5716 = vsel %vm518, %v5708, 0.0
        %v5717 = vsel %vm518, %v5709, 0.0
        %v5718 = vsel %vm518, %v5710, 0.0
        %v5719 = vsel %vm518, %v5711, 0.0
        %v5720 = vmul.f32 %v5712, %v5712
        %v5721 = vmul.f32 %v5713, %v5713
        %v5722 = vmul.f32 %v5714, %v5714
        %v5723 = vmul.f32 %v5715, %v5715
        %v5724 = vmul.f32 %v5716, %v5716
        %v5725 = vmul.f32 %v5717, %v5717
        %v5726 = vmul.f32 %v5718, %v5718
        %v5727 = vmul.f32 %v5719, %v5719
        %5728 = vadd.xlane.f32.xlu0 %v5720
        %v5729 = vpop.xlane.xlu0 %5728
        %5730 = vadd.xlane.f32.xlu0 %v5721
        %v5731 = vpop.xlane.xlu0 %5730
        %5732 = vadd.xlane.f32.xlu0 %v5722
        %v5733 = vpop.xlane.xlu0 %5732
        %5734 = vadd.xlane.f32.xlu0 %v5723
        %v5735 = vpop.xlane.xlu0 %5734
        %5736 = vadd.xlane.f32.xlu0 %v5724
        %v5737 = vpop.xlane.xlu0 %5736
        %5738 = vadd.xlane.f32.xlu0 %v5725
        %v5739 = vpop.xlane.xlu0 %5738
        %5740 = vadd.xlane.f32.xlu0 %v5726
        %v5741 = vpop.xlane.xlu0 %5740
        %5742 = vadd.xlane.f32.xlu0 %v5727
        %v5743 = vpop.xlane.xlu0 %5742
        %v5744 = vadd.f32 %v5696, %v5729
        %v5745 = vadd.f32 %v5697, %v5731
        %v5746 = vadd.f32 %v5698, %v5733
        %v5747 = vadd.f32 %v5699, %v5735
        %v5748 = vadd.f32 %v5700, %v5737
        %v5749 = vadd.f32 %v5701, %v5739
        %v5750 = vadd.f32 %v5702, %v5741
        %v5751 = vadd.f32 %v5703, %v5743
        %v5752 = vsub.f32 %v5575, %v5648
        %v5753 = vsub.f32 %v5576, %v5649
        %v5754 = vsub.f32 %v5577, %v5650
        %v5755 = vsub.f32 %v5578, %v5651
        %v5756 = vsub.f32 %v5579, %v5652
        %v5757 = vsub.f32 %v5580, %v5653
        %v5758 = vsub.f32 %v5581, %v5654
        %v5759 = vsub.f32 %v5582, %v5655
        %v5760 = vsel %vm518, %v5752, 0.0
        %v5761 = vsel %vm518, %v5753, 0.0
        %v5762 = vsel %vm518, %v5754, 0.0
        %v5763 = vsel %vm518, %v5755, 0.0
        %v5764 = vsel %vm518, %v5756, 0.0
        %v5765 = vsel %vm518, %v5757, 0.0
        %v5766 = vsel %vm518, %v5758, 0.0
        %v5767 = vsel %vm518, %v5759, 0.0
        %v5768 = vmul.f32 %v5760, %v5760
        %v5769 = vmul.f32 %v5761, %v5761
        %v5770 = vmul.f32 %v5762, %v5762
        %v5771 = vmul.f32 %v5763, %v5763
        %v5772 = vmul.f32 %v5764, %v5764
        %v5773 = vmul.f32 %v5765, %v5765
        %v5774 = vmul.f32 %v5766, %v5766
        %v5775 = vmul.f32 %v5767, %v5767
        %5776 = vadd.xlane.f32.xlu0 %v5768
        %v5777 = vpop.xlane.xlu0 %5776
        %5778 = vadd.xlane.f32.xlu0 %v5769
        %v5779 = vpop.xlane.xlu0 %5778
        %5780 = vadd.xlane.f32.xlu0 %v5770
        %v5781 = vpop.xlane.xlu0 %5780
        %5782 = vadd.xlane.f32.xlu0 %v5771
        %v5783 = vpop.xlane.xlu0 %5782
        %5784 = vadd.xlane.f32.xlu0 %v5772
        %v5785 = vpop.xlane.xlu0 %5784
        %5786 = vadd.xlane.f32.xlu0 %v5773
        %v5787 = vpop.xlane.xlu0 %5786
        %5788 = vadd.xlane.f32.xlu0 %v5774
        %v5789 = vpop.xlane.xlu0 %5788
        %5790 = vadd.xlane.f32.xlu0 %v5775
        %v5791 = vpop.xlane.xlu0 %5790
        %v5792 = vadd.f32 %v5744, %v5777
        %v5793 = vadd.f32 %v5745, %v5779
        %v5794 = vadd.f32 %v5746, %v5781
        %v5795 = vadd.f32 %v5747, %v5783
        %v5796 = vadd.f32 %v5748, %v5785
        %v5797 = vadd.f32 %v5749, %v5787
        %v5798 = vadd.f32 %v5750, %v5789
        %v5799 = vadd.f32 %v5751, %v5791
        %v5800 = vsub.f32 %v5616, %v5648
        %v5801 = vsub.f32 %v5617, %v5649
        %v5802 = vsub.f32 %v5618, %v5650
        %v5803 = vsub.f32 %v5619, %v5651
        %v5804 = vsub.f32 %v5620, %v5652
        %v5805 = vsub.f32 %v5621, %v5653
        %v5806 = vsub.f32 %v5622, %v5654
        %v5807 = vsub.f32 %v5623, %v5655
        %v5808 = vsel %vm518, %v5800, 0.0
        %v5809 = vsel %vm518, %v5801, 0.0
        %v5810 = vsel %vm518, %v5802, 0.0
        %v5811 = vsel %vm518, %v5803, 0.0
        %v5812 = vsel %vm518, %v5804, 0.0
        %v5813 = vsel %vm518, %v5805, 0.0
        %v5814 = vsel %vm518, %v5806, 0.0
        %v5815 = vsel %vm518, %v5807, 0.0
        %v5816 = vmul.f32 %v5808, %v5808
        %v5817 = vmul.f32 %v5809, %v5809
        %v5818 = vmul.f32 %v5810, %v5810
        %v5819 = vmul.f32 %v5811, %v5811
        %v5820 = vmul.f32 %v5812, %v5812
        %v5821 = vmul.f32 %v5813, %v5813
        %v5822 = vmul.f32 %v5814, %v5814
        %v5823 = vmul.f32 %v5815, %v5815
        %5824 = vadd.xlane.f32.xlu0 %v5816
        %v5825 = vpop.xlane.xlu0 %5824
        %5826 = vadd.xlane.f32.xlu0 %v5817
        %v5827 = vpop.xlane.xlu0 %5826
        %5828 = vadd.xlane.f32.xlu0 %v5818
        %v5829 = vpop.xlane.xlu0 %5828
        %5830 = vadd.xlane.f32.xlu0 %v5819
        %v5831 = vpop.xlane.xlu0 %5830
        %5832 = vadd.xlane.f32.xlu0 %v5820
        %v5833 = vpop.xlane.xlu0 %5832
        %5834 = vadd.xlane.f32.xlu0 %v5821
        %v5835 = vpop.xlane.xlu0 %5834
        %5836 = vadd.xlane.f32.xlu0 %v5822
        %v5837 = vpop.xlane.xlu0 %5836
        %5838 = vadd.xlane.f32.xlu0 %v5823
        %v5839 = vpop.xlane.xlu0 %5838
        %v5840 = vadd.f32 %v5792, %v5825
        %v5841 = vadd.f32 %v5793, %v5827
        %v5842 = vadd.f32 %v5794, %v5829
        %v5843 = vadd.f32 %v5795, %v5831
        %v5844 = vadd.f32 %v5796, %v5833
        %v5845 = vadd.f32 %v5797, %v5835
        %v5846 = vadd.f32 %v5798, %v5837
        %v5847 = vadd.f32 %v5799, %v5839
        %v5848 = vmul.f32 %v5840, 0.0078125
        %v5849 = vmul.f32 %v5841, 0.0078125
        %v5850 = vmul.f32 %v5842, 0.0078125
        %v5851 = vmul.f32 %v5843, 0.0078125
        %v5852 = vmul.f32 %v5844, 0.0078125
        %v5853 = vmul.f32 %v5845, 0.0078125
        %v5854 = vmul.f32 %v5846, 0.0078125
        %v5855 = vmul.f32 %v5847, 0.0078125
        %v5856 = vadd.f32 %v5848, 1e-05
        %v5857 = vadd.f32 %v5849, 1e-05
        %v5858 = vadd.f32 %v5850, 1e-05
        %v5859 = vadd.f32 %v5851, 1e-05
        %v5860 = vadd.f32 %v5852, 1e-05
        %v5861 = vadd.f32 %v5853, 1e-05
        %v5862 = vadd.f32 %v5854, 1e-05
        %v5863 = vadd.f32 %v5855, 1e-05
        %v5864 = vrsqrt.pop %v5856
        %v5865 = vrsqrt.pop %v5857
        %v5866 = vrsqrt.pop %v5858
        %v5867 = vrsqrt.pop %v5859
        %v5868 = vrsqrt.pop %v5860
        %v5869 = vrsqrt.pop %v5861
        %v5870 = vrsqrt.pop %v5862
        %v5871 = vrsqrt.pop %v5863
        %v5872 = vmul.f32 %v5656, %v5864
        %v5873 = vmul.f32 %v5657, %v5865
        %v5874 = vmul.f32 %v5658, %v5866
        %v5875 = vmul.f32 %v5659, %v5867
        %v5876 = vmul.f32 %v5660, %v5868
        %v5877 = vmul.f32 %v5661, %v5869
        %v5878 = vmul.f32 %v5662, %v5870
        %v5879 = vmul.f32 %v5663, %v5871
        %v5880 = vpack.c.bf16 %v5873, %v5872
        %v5881 = vpack.c.bf16 %v5875, %v5874
        %v5882 = vpack.c.bf16 %v5877, %v5876
        %v5883 = vpack.c.bf16 %v5879, %v5878
        %v5884 = vld [vmem:[%s2] sm:$0xf]
        %v5885 = vld [vmem:[%s2 + $0x4] sm:$0xf]
        %v5886 = vld [vmem:[%s2 + $0x8] sm:$0xf]
        %v5887 = vld [vmem:[%s2 + $0xc] sm:$0xf]
        %v5888 = vld [vmem:[%s2 + $0x10] sm:$0xf]
        %v5889 = vld [vmem:[%s2 + $0x14] sm:$0xf]
        %v5890 = vld [vmem:[%s2 + $0x18] sm:$0xf]
        %v5891 = vld [vmem:[%s2 + $0x1c] sm:$0xf]
        %v5892 = vld [vmem:[%s2 + $0x20] sm:$0xf]
        %v5893 = vld [vmem:[%s2 + $0x24] sm:$0xf]
        %v5894 = vld [vmem:[%s2 + $0x28] sm:$0xf]
        %v5895 = vld [vmem:[%s2 + $0x2c] sm:$0xf]
        %v5896 = vld [vmem:[%s2 + $0x30] sm:$0xf]
        %v5897 = vld [vmem:[%s2 + $0x34] sm:$0xf]
        %v5898 = vld [vmem:[%s2 + $0x38] sm:$0xf]
        %v5899 = vld [vmem:[%s2 + $0x3c] sm:$0xf]
        %v5900 = vmul.f32 %v5704, %v5864
        %v5901 = vmul.f32 %v5705, %v5865
        %v5902 = vmul.f32 %v5706, %v5866
        %v5903 = vmul.f32 %v5707, %v5867
        %v5904 = vmul.f32 %v5708, %v5868
        %v5905 = vmul.f32 %v5709, %v5869
        %v5906 = vmul.f32 %v5710, %v5870
        %v5907 = vmul.f32 %v5711, %v5871
        %v5908 = vpack.c.bf16 %v5901, %v5900
        %v5909 = vpack.c.bf16 %v5903, %v5902
        %v5910 = vpack.c.bf16 %v5905, %v5904
        %v5911 = vpack.c.bf16 %v5907, %v5906
        %v5912 = vld [vmem:[%s2 + $0x40] sm:$0xf]
        %v5913 = vld [vmem:[%s2 + $0x44] sm:$0xf]
        %v5914 = vld [vmem:[%s2 + $0x48] sm:$0xf]
        %v5915 = vld [vmem:[%s2 + $0x4c] sm:$0xf]
        %v5916 = vld [vmem:[%s2 + $0x50] sm:$0xf]
        %v5917 = vld [vmem:[%s2 + $0x54] sm:$0xf]
        %v5918 = vld [vmem:[%s2 + $0x58] sm:$0xf]
        %v5919 = vld [vmem:[%s2 + $0x5c] sm:$0xf]
        %v5920 = vld [vmem:[%s2 + $0x60] sm:$0xf]
        %v5921 = vld [vmem:[%s2 + $0x64] sm:$0xf]
        %v5922 = vld [vmem:[%s2 + $0x68] sm:$0xf]
        %v5923 = vld [vmem:[%s2 + $0x6c] sm:$0xf]
        %v5924 = vld [vmem:[%s2 + $0x70] sm:$0xf]
        %v5925 = vld [vmem:[%s2 + $0x74] sm:$0xf]
        %v5926 = vld [vmem:[%s2 + $0x78] sm:$0xf]
        %v5927 = vld [vmem:[%s2 + $0x7c] sm:$0xf]
        %v5944 = vunpack.c.l.b16 %v5912
        %v5945 = vunpack.c.l.b16 %v5913
        %v5946 = vunpack.c.l.b16 %v5914
        %v5947 = vunpack.c.l.b16 %v5915
        %v5948 = vunpack.c.l.b16 %v5916
        %v5949 = vunpack.c.l.b16 %v5917
        %v5950 = vunpack.c.l.b16 %v5918
        %v5951 = vunpack.c.l.b16 %v5919
        %v5952 = vunpack.c.l.b16 %v5920
        %v5953 = vunpack.c.l.b16 %v5921
        %v5954 = vunpack.c.l.b16 %v5922
        %v5955 = vunpack.c.l.b16 %v5923
        %v5956 = vunpack.c.l.b16 %v5924
        %v5957 = vunpack.c.l.b16 %v5925
        %v5958 = vunpack.c.l.b16 %v5926
        %v5959 = vunpack.c.l.b16 %v5927
        %v5960 = vpack.c.b16 %v5945, %v5944
        %v5961 = vpack.c.b16 %v5947, %v5946
        %v5962 = vpack.c.b16 %v5949, %v5948
        %v5963 = vpack.c.b16 %v5951, %v5950
        %v5964 = vpack.c.b16 %v5953, %v5952
        %v5965 = vpack.c.b16 %v5955, %v5954
        %v5966 = vpack.c.b16 %v5957, %v5956
        %v5967 = vpack.c.b16 %v5959, %v5958
        %5976 = vmatprep.subr.bf16.mxu0 0
        %5977 = vmatpush1.bf16.msra.mxu0 %v5960
        %5978 = vmatprep.subr.bf16.mxu0 0
        %5979 = vmatpush1.bf16.msra.mxu0 %v5961
        %5980 = vmatprep.subr.bf16.mxu0 0
        %5981 = vmatpush1.bf16.msra.mxu0 %v5962
        %5982 = vmatprep.subr.bf16.mxu0 0
        %5983 = vmatpush1.bf16.msra.mxu0 %v5963
        %5984 = vmatprep.subr.bf16.mxu0 0
        %5985 = vmatpush1.bf16.msra.mxu0 %v5964
        %5986 = vmatprep.subr.bf16.mxu0 0
        %5987 = vmatpush1.bf16.msra.mxu0 %v5965
        %5988 = vmatprep.subr.bf16.mxu0 0
        %5989 = vmatpush1.bf16.msra.mxu0 %v5966
        %5990 = vmatprep.subr.bf16.mxu0 0
        %5991 = vmatpush1.bf16.msra.mxu0 %v5967
        %5992 = vmatprep.subr.bf16.mxu0 0
        %5993 = vmatpush1.bf16.msra.mxu0 0
        %5994 = vmatprep.subr.bf16.mxu0 0
        %5995 = vmatpush1.bf16.msra.mxu0 0
        %5996 = vmatprep.subr.bf16.mxu0 0
        %5997 = vmatpush1.bf16.msra.mxu0 0
        %5998 = vmatprep.subr.bf16.mxu0 0
        %5999 = vmatpush1.bf16.msra.mxu0 0
        %6000 = vmatprep.subr.bf16.mxu0 0
        %6001 = vmatpush1.bf16.msra.mxu0 0
        %6002 = vmatprep.subr.bf16.mxu0 0
        %6003 = vmatpush1.bf16.msra.mxu0 0
        %6004 = vmatprep.subr.bf16.mxu0 0
        %6005 = vmatpush1.bf16.msra.mxu0 0
        %6006 = vmatprep.subr.bf16.mxu0 0
        %6007 = vmatpush1.bf16.msra.mxu0 0
        %6008 = vmatprep.mubr.bf16.mxu0 0
        %6009 = vmatmul.mubr.bf16.gmra.mrb[0].mxu0 %v5908
        %v6010 = vpop.f32.mrb[0].mxu0
        %v6011 = vadd.f32 0.0, %v6010
        %v6012 = vpop.f32.mrb[0].mxu0
        %v6013 = vpop.f32.mrb[0].mxu0
        %v6014 = vadd.f32 0.0, %v6013
        %v6015 = vpop.f32.mrb[0].mxu0
        %6016 = vmatprep.mubr.bf16.mxu0 0
        %6017 = vmatmul.mubr.bf16.gmra.mrb[0].mxu0 %v5909
        %v6018 = vpop.f32.mrb[0].mxu0
        %v6019 = vadd.f32 0.0, %v6018
        %v6020 = vpop.f32.mrb[0].mxu0
        %v6021 = vpop.f32.mrb[0].mxu0
        %v6022 = vadd.f32 0.0, %v6021
        %v6023 = vpop.f32.mrb[0].mxu0
        %6024 = vmatprep.mubr.bf16.mxu0 0
        %6025 = vmatmul.mubr.bf16.gmra.mrb[0].mxu0 %v5910
        %v6026 = vpop.f32.mrb[0].mxu0
        %v6027 = vadd.f32 0.0, %v6026
        %v6028 = vpop.f32.mrb[0].mxu0
        %v6029 = vpop.f32.mrb[0].mxu0
        %v6030 = vadd.f32 0.0, %v6029
        %v6031 = vpop.f32.mrb[0].mxu0
        %6032 = vmatprep.mubr.bf16.mxu0 0
        %6033 = vmatmul.mubr.bf16.gmra.mrb[0].mxu0 %v5911
        %v6034 = vpop.f32.mrb[0].mxu0
        %v6035 = vadd.f32 0.0, %v6034
        %v6036 = vpop.f32.mrb[0].mxu0
        %v6037 = vpop.f32.mrb[0].mxu0
        %v6038 = vadd.f32 0.0, %v6037
        %v6039 = vpop.f32.mrb[0].mxu0
        %6040 = vdwg.mxu0
        %v6057 = vunpack.c.l.b16 %v5884
        %v6058 = vunpack.c.l.b16 %v5885
        %v6059 = vunpack.c.l.b16 %v5886
        %v6060 = vunpack.c.l.b16 %v5887
        %v6061 = vunpack.c.l.b16 %v5888
        %v6062 = vunpack.c.l.b16 %v5889
        %v6063 = vunpack.c.l.b16 %v5890
        %v6064 = vunpack.c.l.b16 %v5891
        %v6065 = vunpack.c.l.b16 %v5892
        %v6066 = vunpack.c.l.b16 %v5893
        %v6067 = vunpack.c.l.b16 %v5894
        %v6068 = vunpack.c.l.b16 %v5895
        %v6069 = vunpack.c.l.b16 %v5896
        %v6070 = vunpack.c.l.b16 %v5897
        %v6071 = vunpack.c.l.b16 %v5898
        %v6072 = vunpack.c.l.b16 %v5899
        %v6073 = vpack.c.b16 %v6058, %v6057
        %v6074 = vpack.c.b16 %v6060, %v6059
        %v6075 = vpack.c.b16 %v6062, %v6061
        %v6076 = vpack.c.b16 %v6064, %v6063
        %v6077 = vpack.c.b16 %v6066, %v6065
        %v6078 = vpack.c.b16 %v6068, %v6067
        %v6079 = vpack.c.b16 %v6070, %v6069
        %v6080 = vpack.c.b16 %v6072, %v6071
        %6089 = vmatprep.subr.bf16.mxu0 0
        %6090 = vmatpush1.bf16.msra.mxu0 %v6073
        %6091 = vmatprep.subr.bf16.mxu0 0
        %6092 = vmatpush1.bf16.msra.mxu0 %v6074
        %6093 = vmatprep.subr.bf16.mxu0 0
        %6094 = vmatpush1.bf16.msra.mxu0 %v6075
        %6095 = vmatprep.subr.bf16.mxu0 0
        %6096 = vmatpush1.bf16.msra.mxu0 %v6076
        %6097 = vmatprep.subr.bf16.mxu0 0
        %6098 = vmatpush1.bf16.msra.mxu0 %v6077
        %6099 = vmatprep.subr.bf16.mxu0 0
        %6100 = vmatpush1.bf16.msra.mxu0 %v6078
        %6101 = vmatprep.subr.bf16.mxu0 0
        %6102 = vmatpush1.bf16.msra.mxu0 %v6079
        %6103 = vmatprep.subr.bf16.mxu0 0
        %6104 = vmatpush1.bf16.msra.mxu0 %v6080
        %6105 = vmatprep.subr.bf16.mxu0 0
        %6106 = vmatpush1.bf16.msra.mxu0 0
        %6107 = vmatprep.subr.bf16.mxu0 0
        %6108 = vmatpush1.bf16.msra.mxu0 0
        %6109 = vmatprep.subr.bf16.mxu0 0
        %6110 = vmatpush1.bf16.msra.mxu0 0
        %6111 = vmatprep.subr.bf16.mxu0 0
        %6112 = vmatpush1.bf16.msra.mxu0 0
        %6113 = vmatprep.subr.bf16.mxu0 0
        %6114 = vmatpush1.bf16.msra.mxu0 0
        %6115 = vmatprep.subr.bf16.mxu0 0
        %6116 = vmatpush1.bf16.msra.mxu0 0
        %6117 = vmatprep.subr.bf16.mxu0 0
        %6118 = vmatpush1.bf16.msra.mxu0 0
        %6119 = vmatprep.subr.bf16.mxu0 0
        %6120 = vmatpush1.bf16.msra.mxu0 0
        %6121 = vmatprep.mubr.bf16.mxu0 0
        %6122 = vmatmul.mubr.bf16.gmra.mrb[0].mxu0 %v5880
        %v6123 = vpop.f32.mrb[0].mxu0
        %v6124 = vadd.f32 %v6011, %v6123
        %v6125 = vpop.f32.mrb[0].mxu0
        %v6126 = vpop.f32.mrb[0].mxu0
        %v6127 = vadd.f32 %v6014, %v6126
        %v6128 = vpop.f32.mrb[0].mxu0
        %6129 = vmatprep.mubr.bf16.mxu0 0
        %6130 = vmatmul.mubr.bf16.gmra.mrb[0].mxu0 %v5881
        %v6131 = vpop.f32.mrb[0].mxu0
        %v6132 = vadd.f32 %v6019, %v6131
        %v6133 = vpop.f32.mrb[0].mxu0
        %v6134 = vpop.f32.mrb[0].mxu0
        %v6135 = vadd.f32 %v6022, %v6134
        %v6136 = vpop.f32.mrb[0].mxu0
        %6137 = vmatprep.mubr.bf16.mxu0 0
        %6138 = vmatmul.mubr.bf16.gmra.mrb[0].mxu0 %v5882
        %v6139 = vpop.f32.mrb[0].mxu0
        %v6140 = vadd.f32 %v6027, %v6139
        %v6141 = vpop.f32.mrb[0].mxu0
        %v6142 = vpop.f32.mrb[0].mxu0
        %v6143 = vadd.f32 %v6030, %v6142
        %v6144 = vpop.f32.mrb[0].mxu0
        %6145 = vmatprep.mubr.bf16.mxu0 0
        %6146 = vmatmul.mubr.bf16.gmra.mrb[0].mxu0 %v5883
        %v6147 = vpop.f32.mrb[0].mxu0
        %v6148 = vadd.f32 %v6035, %v6147
        %v6149 = vpop.f32.mrb[0].mxu0
        %v6150 = vpop.f32.mrb[0].mxu0
        %v6151 = vadd.f32 %v6038, %v6150
        %v6152 = vpop.f32.mrb[0].mxu0
        %6153 = vdwg.mxu0
        %v6154 = vmul.f32 %v5752, %v5864
        %v6155 = vmul.f32 %v5753, %v5865
        %v6156 = vmul.f32 %v5754, %v5866
        %v6157 = vmul.f32 %v5755, %v5867
        %v6158 = vmul.f32 %v5756, %v5868
        %v6159 = vmul.f32 %v5757, %v5869
        %v6160 = vmul.f32 %v5758, %v5870
        %v6161 = vmul.f32 %v5759, %v5871
        %v6162 = vpack.c.bf16 %v6155, %v6154
        %v6163 = vpack.c.bf16 %v6157, %v6156
        %v6164 = vpack.c.bf16 %v6159, %v6158
        %v6165 = vpack.c.bf16 %v6161, %v6160
        %v6166 = vld [vmem:[%s2 + $0x80] sm:$0xf]
        %v6167 = vld [vmem:[%s2 + $0x84] sm:$0xf]
        %v6168 = vld [vmem:[%s2 + $0x88] sm:$0xf]
        %v6169 = vld [vmem:[%s2 + $0x8c] sm:$0xf]
        %v6170 = vld [vmem:[%s2 + $0x90] sm:$0xf]
        %v6171 = vld [vmem:[%s2 + $0x94] sm:$0xf]
        %v6172 = vld [vmem:[%s2 + $0x98] sm:$0xf]
        %v6173 = vld [vmem:[%s2 + $0x9c] sm:$0xf]
        %v6174 = vld [vmem:[%s2 + $0xa0] sm:$0xf]
        %v6175 = vld [vmem:[%s2 + $0xa4] sm:$0xf]
        %v6176 = vld [vmem:[%s2 + $0xa8] sm:$0xf]
        %v6177 = vld [vmem:[%s2 + $0xac] sm:$0xf]
        %v6178 = vld [vmem:[%s2 + $0xb0] sm:$0xf]
        %v6179 = vld [vmem:[%s2 + $0xb4] sm:$0xf]
        %v6180 = vld [vmem:[%s2 + $0xb8] sm:$0xf]
        %v6181 = vld [vmem:[%s2 + $0xbc] sm:$0xf]
        %v6198 = vunpack.c.l.b16 %v6166
        %v6199 = vunpack.c.l.b16 %v6167
        %v6200 = vunpack.c.l.b16 %v6168
        %v6201 = vunpack.c.l.b16 %v6169
        %v6202 = vunpack.c.l.b16 %v6170
        %v6203 = vunpack.c.l.b16 %v6171
        %v6204 = vunpack.c.l.b16 %v6172
        %v6205 = vunpack.c.l.b16 %v6173
        %v6206 = vunpack.c.l.b16 %v6174
        %v6207 = vunpack.c.l.b16 %v6175
        %v6208 = vunpack.c.l.b16 %v6176
        %v6209 = vunpack.c.l.b16 %v6177
        %v6210 = vunpack.c.l.b16 %v6178
        %v6211 = vunpack.c.l.b16 %v6179
        %v6212 = vunpack.c.l.b16 %v6180
        %v6213 = vunpack.c.l.b16 %v6181
        %v6214 = vpack.c.b16 %v6199, %v6198
        %v6215 = vpack.c.b16 %v6201, %v6200
        %v6216 = vpack.c.b16 %v6203, %v6202
        %v6217 = vpack.c.b16 %v6205, %v6204
        %v6218 = vpack.c.b16 %v6207, %v6206
        %v6219 = vpack.c.b16 %v6209, %v6208
        %v6220 = vpack.c.b16 %v6211, %v6210
        %v6221 = vpack.c.b16 %v6213, %v6212
        %6230 = vmatprep.subr.bf16.mxu0 0
        %6231 = vmatpush1.bf16.msra.mxu0 %v6214
        %6232 = vmatprep.subr.bf16.mxu0 0
        %6233 = vmatpush1.bf16.msra.mxu0 %v6215
        %6234 = vmatprep.subr.bf16.mxu0 0
        %6235 = vmatpush1.bf16.msra.mxu0 %v6216
        %6236 = vmatprep.subr.bf16.mxu0 0
        %6237 = vmatpush1.bf16.msra.mxu0 %v6217
        %6238 = vmatprep.subr.bf16.mxu0 0
        %6239 = vmatpush1.bf16.msra.mxu0 %v6218
        %6240 = vmatprep.subr.bf16.mxu0 0
        %6241 = vmatpush1.bf16.msra.mxu0 %v6219
        %6242 = vmatprep.subr.bf16.mxu0 0
        %6243 = vmatpush1.bf16.msra.mxu0 %v6220
        %6244 = vmatprep.subr.bf16.mxu0 0
        %6245 = vmatpush1.bf16.msra.mxu0 %v6221
        %6246 = vmatprep.subr.bf16.mxu0 0
        %6247 = vmatpush1.bf16.msra.mxu0 0
        %6248 = vmatprep.subr.bf16.mxu0 0
        %6249 = vmatpush1.bf16.msra.mxu0 0
        %6250 = vmatprep.subr.bf16.mxu0 0
        %6251 = vmatpush1.bf16.msra.mxu0 0
        %6252 = vmatprep.subr.bf16.mxu0 0
        %6253 = vmatpush1.bf16.msra.mxu0 0
        %6254 = vmatprep.subr.bf16.mxu0 0
        %6255 = vmatpush1.bf16.msra.mxu0 0
        %6256 = vmatprep.subr.bf16.mxu0 0
        %6257 = vmatpush1.bf16.msra.mxu0 0
        %6258 = vmatprep.subr.bf16.mxu0 0
        %6259 = vmatpush1.bf16.msra.mxu0 0
        %6260 = vmatprep.subr.bf16.mxu0 0
        %6261 = vmatpush1.bf16.msra.mxu0 0
        %6262 = vmatprep.mubr.bf16.mxu0 0
        %6263 = vmatmul.mubr.bf16.gmra.mrb[0].mxu0 %v6162
        %v6264 = vpop.f32.mrb[0].mxu0
        %v6265 = vadd.f32 0.0, %v6264
        %v6266 = vpop.f32.mrb[0].mxu0
        %v6267 = vpop.f32.mrb[0].mxu0
        %v6268 = vadd.f32 0.0, %v6267
        %v6269 = vpop.f32.mrb[0].mxu0
        %6270 = vmatprep.mubr.bf16.mxu0 0
        %6271 = vmatmul.mubr.bf16.gmra.mrb[0].mxu0 %v6163
        %v6272 = vpop.f32.mrb[0].mxu0
        %v6273 = vadd.f32 0.0, %v6272
        %v6274 = vpop.f32.mrb[0].mxu0
        %v6275 = vpop.f32.mrb[0].mxu0
        %v6276 = vadd.f32 0.0, %v6275
        %v6277 = vpop.f32.mrb[0].mxu0
        %6278 = vmatprep.mubr.bf16.mxu0 0
        %6279 = vmatmul.mubr.bf16.gmra.mrb[0].mxu0 %v6164
        %v6280 = vpop.f32.mrb[0].mxu0
        %v6281 = vadd.f32 0.0, %v6280
        %v6282 = vpop.f32.mrb[0].mxu0
        %v6283 = vpop.f32.mrb[0].mxu0
        %v6284 = vadd.f32 0.0, %v6283
        %v6285 = vpop.f32.mrb[0].mxu0
        %6286 = vmatprep.mubr.bf16.mxu0 0
        %6287 = vmatmul.mubr.bf16.gmra.mrb[0].mxu0 %v6165
        %v6288 = vpop.f32.mrb[0].mxu0
        %v6289 = vadd.f32 0.0, %v6288
        %v6290 = vpop.f32.mrb[0].mxu0
        %v6291 = vpop.f32.mrb[0].mxu0
        %v6292 = vadd.f32 0.0, %v6291
        %v6293 = vpop.f32.mrb[0].mxu0
        %6294 = vdwg.mxu0
        %v6295 = vadd.f32 %v6124, %v6265
        %v6296 = vadd.f32 %v6127, %v6268
        %v6297 = vadd.f32 %v6132, %v6273
        %v6298 = vadd.f32 %v6135, %v6276
        %v6299 = vadd.f32 %v6140, %v6281
        %v6300 = vadd.f32 %v6143, %v6284
        %v6301 = vadd.f32 %v6148, %v6289
        %v6302 = vadd.f32 %v6151, %v6292
        %v6303 = vmul.f32 %v5800, %v5864
        %v6304 = vmul.f32 %v5801, %v5865
        %v6305 = vmul.f32 %v5802, %v5866
        %v6306 = vmul.f32 %v5803, %v5867
        %v6307 = vmul.f32 %v5804, %v5868
        %v6308 = vmul.f32 %v5805, %v5869
        %v6309 = vmul.f32 %v5806, %v5870
        %v6310 = vmul.f32 %v5807, %v5871
        %v6311 = vpack.c.bf16 %v6304, %v6303
        %v6312 = vpack.c.bf16 %v6306, %v6305
        %v6313 = vpack.c.bf16 %v6308, %v6307
        %v6314 = vpack.c.bf16 %v6310, %v6309
        %v6315 = vld [vmem:[%s2 + $0xc0] sm:$0xf]
        %v6316 = vld [vmem:[%s2 + $0xc4] sm:$0xf]
        %v6317 = vld [vmem:[%s2 + $0xc8] sm:$0xf]
        %v6318 = vld [vmem:[%s2 + $0xcc] sm:$0xf]
        %v6319 = vld [vmem:[%s2 + $0xd0] sm:$0xf]
        %v6320 = vld [vmem:[%s2 + $0xd4] sm:$0xf]
        %v6321 = vld [vmem:[%s2 + $0xd8] sm:$0xf]
        %v6322 = vld [vmem:[%s2 + $0xdc] sm:$0xf]
        %v6323 = vld [vmem:[%s2 + $0xe0] sm:$0xf]
        %v6324 = vld [vmem:[%s2 + $0xe4] sm:$0xf]
        %v6325 = vld [vmem:[%s2 + $0xe8] sm:$0xf]
        %v6326 = vld [vmem:[%s2 + $0xec] sm:$0xf]
        %v6327 = vld [vmem:[%s2 + $0xf0] sm:$0xf]
        %v6328 = vld [vmem:[%s2 + $0xf4] sm:$0xf]
        %v6329 = vld [vmem:[%s2 + $0xf8] sm:$0xf]
        %v6330 = vld [vmem:[%s2 + $0xfc] sm:$0xf]
        %v6347 = vunpack.c.l.b16 %v6315
        %v6348 = vunpack.c.l.b16 %v6316
        %v6349 = vunpack.c.l.b16 %v6317
        %v6350 = vunpack.c.l.b16 %v6318
        %v6351 = vunpack.c.l.b16 %v6319
        %v6352 = vunpack.c.l.b16 %v6320
        %v6353 = vunpack.c.l.b16 %v6321
        %v6354 = vunpack.c.l.b16 %v6322
        %v6355 = vunpack.c.l.b16 %v6323
        %v6356 = vunpack.c.l.b16 %v6324
        %v6357 = vunpack.c.l.b16 %v6325
        %v6358 = vunpack.c.l.b16 %v6326
        %v6359 = vunpack.c.l.b16 %v6327
        %v6360 = vunpack.c.l.b16 %v6328
        %v6361 = vunpack.c.l.b16 %v6329
        %v6362 = vunpack.c.l.b16 %v6330
        %v6363 = vpack.c.b16 %v6348, %v6347
        %v6364 = vpack.c.b16 %v6350, %v6349
        %v6365 = vpack.c.b16 %v6352, %v6351
        %v6366 = vpack.c.b16 %v6354, %v6353
        %v6367 = vpack.c.b16 %v6356, %v6355
        %v6368 = vpack.c.b16 %v6358, %v6357
        %v6369 = vpack.c.b16 %v6360, %v6359
        %v6370 = vpack.c.b16 %v6362, %v6361
        %6379 = vmatprep.subr.bf16.mxu0 0
        %6380 = vmatpush1.bf16.msra.mxu0 %v6363
        %6381 = vmatprep.subr.bf16.mxu0 0
        %6382 = vmatpush1.bf16.msra.mxu0 %v6364
        %6383 = vmatprep.subr.bf16.mxu0 0
        %6384 = vmatpush1.bf16.msra.mxu0 %v6365
        %6385 = vmatprep.subr.bf16.mxu0 0
        %6386 = vmatpush1.bf16.msra.mxu0 %v6366
        %6387 = vmatprep.subr.bf16.mxu0 0
        %6388 = vmatpush1.bf16.msra.mxu0 %v6367
        %6389 = vmatprep.subr.bf16.mxu0 0
        %6390 = vmatpush1.bf16.msra.mxu0 %v6368
        %6391 = vmatprep.subr.bf16.mxu0 0
        %6392 = vmatpush1.bf16.msra.mxu0 %v6369
        %6393 = vmatprep.subr.bf16.mxu0 0
        %6394 = vmatpush1.bf16.msra.mxu0 %v6370
        %6395 = vmatprep.subr.bf16.mxu0 0
        %6396 = vmatpush1.bf16.msra.mxu0 0
        %6397 = vmatprep.subr.bf16.mxu0 0
        %6398 = vmatpush1.bf16.msra.mxu0 0
        %6399 = vmatprep.subr.bf16.mxu0 0
        %6400 = vmatpush1.bf16.msra.mxu0 0
        %6401 = vmatprep.subr.bf16.mxu0 0
        %6402 = vmatpush1.bf16.msra.mxu0 0
        %6403 = vmatprep.subr.bf16.mxu0 0
        %6404 = vmatpush1.bf16.msra.mxu0 0
        %6405 = vmatprep.subr.bf16.mxu0 0
        %6406 = vmatpush1.bf16.msra.mxu0 0
        %6407 = vmatprep.subr.bf16.mxu0 0
        %6408 = vmatpush1.bf16.msra.mxu0 0
        %6409 = vmatprep.subr.bf16.mxu0 0
        %6410 = vmatpush1.bf16.msra.mxu0 0
        %6411 = vmatprep.mubr.bf16.mxu0 0
        %6412 = vmatmul.mubr.bf16.gmra.mrb[0].mxu0 %v6311
        %v6413 = vpop.f32.mrb[0].mxu0
        %v6414 = vadd.f32 0.0, %v6413
        %v6415 = vpop.f32.mrb[0].mxu0
        %v6416 = vpop.f32.mrb[0].mxu0
        %v6417 = vadd.f32 0.0, %v6416
        %v6418 = vpop.f32.mrb[0].mxu0
        %6419 = vmatprep.mubr.bf16.mxu0 0
        %6420 = vmatmul.mubr.bf16.gmra.mrb[0].mxu0 %v6312
        %v6421 = vpop.f32.mrb[0].mxu0
        %v6422 = vadd.f32 0.0, %v6421
        %v6423 = vpop.f32.mrb[0].mxu0
        %v6424 = vpop.f32.mrb[0].mxu0
        %v6425 = vadd.f32 0.0, %v6424
        %v6426 = vpop.f32.mrb[0].mxu0
        %6427 = vmatprep.mubr.bf16.mxu0 0
        %6428 = vmatmul.mubr.bf16.gmra.mrb[0].mxu0 %v6313
        %v6429 = vpop.f32.mrb[0].mxu0
        %v6430 = vadd.f32 0.0, %v6429
        %v6431 = vpop.f32.mrb[0].mxu0
        %v6432 = vpop.f32.mrb[0].mxu0
        %v6433 = vadd.f32 0.0, %v6432
        %v6434 = vpop.f32.mrb[0].mxu0
        %6435 = vmatprep.mubr.bf16.mxu0 0
        %6436 = vmatmul.mubr.bf16.gmra.mrb[0].mxu0 %v6314
        %v6437 = vpop.f32.mrb[0].mxu0
        %v6438 = vadd.f32 0.0, %v6437
        %v6439 = vpop.f32.mrb[0].mxu0
        %v6440 = vpop.f32.mrb[0].mxu0
        %v6441 = vadd.f32 0.0, %v6440
        %v6442 = vpop.f32.mrb[0].mxu0
        %6443 = vdwg.mxu0
        %v6444 = vadd.f32 %v6295, %v6414
        %v6445 = vadd.f32 %v6296, %v6417
        %v6446 = vadd.f32 %v6297, %v6422
        %v6447 = vadd.f32 %v6298, %v6425
        %v6448 = vadd.f32 %v6299, %v6430
        %v6449 = vadd.f32 %v6300, %v6433
        %v6450 = vadd.f32 %v6301, %v6438
        %v6451 = vadd.f32 %v6302, %v6441
        %v6452 = vadd.f32 %v6444, %v4490
        %v6453 = vadd.f32 %v6445, %v4490
        %v6454 = vadd.f32 %v6446, %v4490
        %v6455 = vadd.f32 %v6447, %v4490
        %v6456 = vadd.f32 %v6448, %v4490
        %v6457 = vadd.f32 %v6449, %v4490
        %v6458 = vadd.f32 %v6450, %v4490
        %v6459 = vadd.f32 %v6451, %v4490
        %v6460 = vpack.c.bf16 %v6453, %v6452
        %v6461 = vpack.c.bf16 %v6455, %v6454
        %v6462 = vpack.c.bf16 %v6457, %v6456
        %v6463 = vpack.c.bf16 %v6459, %v6458
        %s6464 = scalar_lea.vmem [#allocation3], 64
        %6465 = vst [vmem:[%s6464] sm:$0xff] %v6460
        %6466 = vst [vmem:[%s6464 + $0x8] sm:$0xff] %v6461
        %6467 = vst [vmem:[%s6464 + $0x10] sm:$0xff] %v6462
        %6468 = vst [vmem:[%s6464 + $0x18] sm:$0xff] %v6463
        %s6469 = scalar_lea.vmem [#allocation2], 96
        %v6470 = vld [vmem:[%s6469] sm:$0xff]
        %v6471 = vld [vmem:[%s6469 + $0x8] sm:$0xff]
        %v6472 = vld [vmem:[%s6469 + $0x10] sm:$0xff]
        %v6473 = vld [vmem:[%s6469 + $0x18] sm:$0xff]
        %v6474 = vunpack.c.l.bf16 %v6470
        %v6475 = vunpack.c.h.bf16 %v6470
        %v6476 = vunpack.c.l.bf16 %v6471
        %v6477 = vunpack.c.h.bf16 %v6471
        %v6478 = vunpack.c.l.bf16 %v6472
        %v6479 = vunpack.c.h.bf16 %v6472
        %v6480 = vunpack.c.l.bf16 %v6473
        %v6481 = vunpack.c.h.bf16 %v6473
        %6482 = vadd.xlane.f32.xlu0 %v6474
        %v6483 = vpop.xlane.xlu0 %6482
        %6484 = vadd.xlane.f32.xlu0 %v6475
        %v6485 = vpop.xlane.xlu0 %6484
        %6486 = vadd.xlane.f32.xlu0 %v6476
        %v6487 = vpop.xlane.xlu0 %6486
        %6488 = vadd.xlane.f32.xlu0 %v6477
        %v6489 = vpop.xlane.xlu0 %6488
        %6490 = vadd.xlane.f32.xlu0 %v6478
        %v6491 = vpop.xlane.xlu0 %6490
        %6492 = vadd.xlane.f32.xlu0 %v6479
        %v6493 = vpop.xlane.xlu0 %6492
        %6494 = vadd.xlane.f32.xlu0 %v6480
        %v6495 = vpop.xlane.xlu0 %6494
        %6496 = vadd.xlane.f32.xlu0 %v6481
        %v6497 = vpop.xlane.xlu0 %6496
        %v6498 = vadd.f32 %v6483, 0.0
        %v6499 = vadd.f32 %v6485, 0.0
        %v6500 = vadd.f32 %v6487, 0.0
        %v6501 = vadd.f32 %v6489, 0.0
        %v6502 = vadd.f32 %v6491, 0.0
        %v6503 = vadd.f32 %v6493, 0.0
        %v6504 = vadd.f32 %v6495, 0.0
        %v6505 = vadd.f32 %v6497, 0.0
        %s6506 = sadd.s32 192, 256
        %s6507 = sshra.s32 %s6506, 4
        %s6508 = sand.u32 %s6506, 15
        %s6509 = smul.addr %s6507, 8
        %s6510 = scalar_lea.vmem [#allocation2], %s6509
        %v6511 = vld [vmem:[%s6510] sm:$0xff]
        %v6512 = vld [vmem:[%s6510 + $0x8] sm:$0xff]
        %v6513 = vld [vmem:[%s6510 + $0x10] sm:$0xff]
        %v6514 = vld [vmem:[%s6510 + $0x18] sm:$0xff]
        %v6515 = vunpack.c.l.bf16 %v6511
        %v6516 = vunpack.c.h.bf16 %v6511
        %v6517 = vunpack.c.l.bf16 %v6512
        %v6518 = vunpack.c.h.bf16 %v6512
        %v6519 = vunpack.c.l.bf16 %v6513
        %v6520 = vunpack.c.h.bf16 %v6513
        %v6521 = vunpack.c.l.bf16 %v6514
        %v6522 = vunpack.c.h.bf16 %v6514
        %6523 = vadd.xlane.f32.xlu0 %v6515
        %v6524 = vpop.xlane.xlu0 %6523
        %6525 = vadd.xlane.f32.xlu0 %v6516
        %v6526 = vpop.xlane.xlu0 %6525
        %6527 = vadd.xlane.f32.xlu0 %v6517
        %v6528 = vpop.xlane.xlu0 %6527
        %6529 = vadd.xlane.f32.xlu0 %v6518
        %v6530 = vpop.xlane.xlu0 %6529
        %6531 = vadd.xlane.f32.xlu0 %v6519
        %v6532 = vpop.xlane.xlu0 %6531
        %6533 = vadd.xlane.f32.xlu0 %v6520
        %v6534 = vpop.xlane.xlu0 %6533
        %6535 = vadd.xlane.f32.xlu0 %v6521
        %v6536 = vpop.xlane.xlu0 %6535
        %6537 = vadd.xlane.f32.xlu0 %v6522
        %v6538 = vpop.xlane.xlu0 %6537
        %v6539 = vadd.f32 %v6498, %v6524
        %v6540 = vadd.f32 %v6499, %v6526
        %v6541 = vadd.f32 %v6500, %v6528
        %v6542 = vadd.f32 %v6501, %v6530
        %v6543 = vadd.f32 %v6502, %v6532
        %v6544 = vadd.f32 %v6503, %v6534
        %v6545 = vadd.f32 %v6504, %v6536
        %v6546 = vadd.f32 %v6505, %v6538
        %s6547 = sadd.s32 192, 512
        %s6548 = sshra.s32 %s6547, 4
        %s6549 = sand.u32 %s6547, 15
        %s6550 = smul.addr %s6548, 8
        %s6551 = scalar_lea.vmem [#allocation2], %s6550
        %v6552 = vld [vmem:[%s6551] sm:$0xff]
        %v6553 = vld [vmem:[%s6551 + $0x8] sm:$0xff]
        %v6554 = vld [vmem:[%s6551 + $0x10] sm:$0xff]
        %v6555 = vld [vmem:[%s6551 + $0x18] sm:$0xff]
        %v6556 = vunpack.c.l.bf16 %v6552
        %v6557 = vunpack.c.h.bf16 %v6552
        %v6558 = vunpack.c.l.bf16 %v6553
        %v6559 = vunpack.c.h.bf16 %v6553
        %v6560 = vunpack.c.l.bf16 %v6554
        %v6561 = vunpack.c.h.bf16 %v6554
        %v6562 = vunpack.c.l.bf16 %v6555
        %v6563 = vunpack.c.h.bf16 %v6555
        %6564 = vadd.xlane.f32.xlu0 %v6556
        %v6565 = vpop.xlane.xlu0 %6564
        %6566 = vadd.xlane.f32.xlu0 %v6557
        %v6567 = vpop.xlane.xlu0 %6566
        %6568 = vadd.xlane.f32.xlu0 %v6558
        %v6569 = vpop.xlane.xlu0 %6568
        %6570 = vadd.xlane.f32.xlu0 %v6559
        %v6571 = vpop.xlane.xlu0 %6570
        %6572 = vadd.xlane.f32.xlu0 %v6560
        %v6573 = vpop.xlane.xlu0 %6572
        %6574 = vadd.xlane.f32.xlu0 %v6561
        %v6575 = vpop.xlane.xlu0 %6574
        %6576 = vadd.xlane.f32.xlu0 %v6562
        %v6577 = vpop.xlane.xlu0 %6576
        %6578 = vadd.xlane.f32.xlu0 %v6563
        %v6579 = vpop.xlane.xlu0 %6578
        %v6580 = vadd.f32 %v6539, %v6565
        %v6581 = vadd.f32 %v6540, %v6567
        %v6582 = vadd.f32 %v6541, %v6569
        %v6583 = vadd.f32 %v6542, %v6571
        %v6584 = vadd.f32 %v6543, %v6573
        %v6585 = vadd.f32 %v6544, %v6575
        %v6586 = vadd.f32 %v6545, %v6577
        %v6587 = vadd.f32 %v6546, %v6579
        %s6588 = sadd.s32 192, 768
        %s6589 = sshra.s32 %s6588, 4
        %s6590 = sand.u32 %s6588, 15
        %s6591 = smul.addr %s6589, 8
        %s6592 = scalar_lea.vmem [#allocation2], %s6591
        %v6593 = vld [vmem:[%s6592] sm:$0xff]
        %v6594 = vld [vmem:[%s6592 + $0x8] sm:$0xff]
        %v6595 = vld [vmem:[%s6592 + $0x10] sm:$0xff]
        %v6596 = vld [vmem:[%s6592 + $0x18] sm:$0xff]
        %v6597 = vunpack.c.l.bf16 %v6593
        %v6598 = vunpack.c.h.bf16 %v6593
        %v6599 = vunpack.c.l.bf16 %v6594
        %v6600 = vunpack.c.h.bf16 %v6594
        %v6601 = vunpack.c.l.bf16 %v6595
        %v6602 = vunpack.c.h.bf16 %v6595
        %v6603 = vunpack.c.l.bf16 %v6596
        %v6604 = vunpack.c.h.bf16 %v6596
        %6605 = vadd.xlane.f32.xlu0 %v6597
        %v6606 = vpop.xlane.xlu0 %6605
        %6607 = vadd.xlane.f32.xlu0 %v6598
        %v6608 = vpop.xlane.xlu0 %6607
        %6609 = vadd.xlane.f32.xlu0 %v6599
        %v6610 = vpop.xlane.xlu0 %6609
        %6611 = vadd.xlane.f32.xlu0 %v6600
        %v6612 = vpop.xlane.xlu0 %6611
        %6613 = vadd.xlane.f32.xlu0 %v6601
        %v6614 = vpop.xlane.xlu0 %6613
        %6615 = vadd.xlane.f32.xlu0 %v6602
        %v6616 = vpop.xlane.xlu0 %6615
        %6617 = vadd.xlane.f32.xlu0 %v6603
        %v6618 = vpop.xlane.xlu0 %6617
        %6619 = vadd.xlane.f32.xlu0 %v6604
        %v6620 = vpop.xlane.xlu0 %6619
        %v6621 = vadd.f32 %v6580, %v6606
        %v6622 = vadd.f32 %v6581, %v6608
        %v6623 = vadd.f32 %v6582, %v6610
        %v6624 = vadd.f32 %v6583, %v6612
        %v6625 = vadd.f32 %v6584, %v6614
        %v6626 = vadd.f32 %v6585, %v6616
        %v6627 = vadd.f32 %v6586, %v6618
        %v6628 = vadd.f32 %v6587, %v6620
        %v6629 = vmul.f32 %v6621, 0.0078125
        %v6630 = vmul.f32 %v6622, 0.0078125
        %v6631 = vmul.f32 %v6623, 0.0078125
        %v6632 = vmul.f32 %v6624, 0.0078125
        %v6633 = vmul.f32 %v6625, 0.0078125
        %v6634 = vmul.f32 %v6626, 0.0078125
        %v6635 = vmul.f32 %v6627, 0.0078125
        %v6636 = vmul.f32 %v6628, 0.0078125
        %v6637 = vsub.f32 %v6474, %v6629
        %v6638 = vsub.f32 %v6475, %v6630
        %v6639 = vsub.f32 %v6476, %v6631
        %v6640 = vsub.f32 %v6477, %v6632
        %v6641 = vsub.f32 %v6478, %v6633
        %v6642 = vsub.f32 %v6479, %v6634
        %v6643 = vsub.f32 %v6480, %v6635
        %v6644 = vsub.f32 %v6481, %v6636
        %v6645 = vsel %vm518, %v6637, 0.0
        %v6646 = vsel %vm518, %v6638, 0.0
        %v6647 = vsel %vm518, %v6639, 0.0
        %v6648 = vsel %vm518, %v6640, 0.0
        %v6649 = vsel %vm518, %v6641, 0.0
        %v6650 = vsel %vm518, %v6642, 0.0
        %v6651 = vsel %vm518, %v6643, 0.0
        %v6652 = vsel %vm518, %v6644, 0.0
        %v6653 = vmul.f32 %v6645, %v6645
        %v6654 = vmul.f32 %v6646, %v6646
        %v6655 = vmul.f32 %v6647, %v6647
        %v6656 = vmul.f32 %v6648, %v6648
        %v6657 = vmul.f32 %v6649, %v6649
        %v6658 = vmul.f32 %v6650, %v6650
        %v6659 = vmul.f32 %v6651, %v6651
        %v6660 = vmul.f32 %v6652, %v6652
        %6661 = vadd.xlane.f32.xlu0 %v6653
        %v6662 = vpop.xlane.xlu0 %6661
        %6663 = vadd.xlane.f32.xlu0 %v6654
        %v6664 = vpop.xlane.xlu0 %6663
        %6665 = vadd.xlane.f32.xlu0 %v6655
        %v6666 = vpop.xlane.xlu0 %6665
        %6667 = vadd.xlane.f32.xlu0 %v6656
        %v6668 = vpop.xlane.xlu0 %6667
        %6669 = vadd.xlane.f32.xlu0 %v6657
        %v6670 = vpop.xlane.xlu0 %6669
        %6671 = vadd.xlane.f32.xlu0 %v6658
        %v6672 = vpop.xlane.xlu0 %6671
        %6673 = vadd.xlane.f32.xlu0 %v6659
        %v6674 = vpop.xlane.xlu0 %6673
        %6675 = vadd.xlane.f32.xlu0 %v6660
        %v6676 = vpop.xlane.xlu0 %6675
        %v6677 = vadd.f32 %v6662, 0.0
        %v6678 = vadd.f32 %v6664, 0.0
        %v6679 = vadd.f32 %v6666, 0.0
        %v6680 = vadd.f32 %v6668, 0.0
        %v6681 = vadd.f32 %v6670, 0.0
        %v6682 = vadd.f32 %v6672, 0.0
        %v6683 = vadd.f32 %v6674, 0.0
        %v6684 = vadd.f32 %v6676, 0.0
        %v6685 = vsub.f32 %v6515, %v6629
        %v6686 = vsub.f32 %v6516, %v6630
        %v6687 = vsub.f32 %v6517, %v6631
        %v6688 = vsub.f32 %v6518, %v6632
        %v6689 = vsub.f32 %v6519, %v6633
        %v6690 = vsub.f32 %v6520, %v6634
        %v6691 = vsub.f32 %v6521, %v6635
        %v6692 = vsub.f32 %v6522, %v6636
        %v6693 = vsel %vm518, %v6685, 0.0
        %v6694 = vsel %vm518, %v6686, 0.0
        %v6695 = vsel %vm518, %v6687, 0.0
        %v6696 = vsel %vm518, %v6688, 0.0
        %v6697 = vsel %vm518, %v6689, 0.0
        %v6698 = vsel %vm518, %v6690, 0.0
        %v6699 = vsel %vm518, %v6691, 0.0
        %v6700 = vsel %vm518, %v6692, 0.0
        %v6701 = vmul.f32 %v6693, %v6693
        %v6702 = vmul.f32 %v6694, %v6694
        %v6703 = vmul.f32 %v6695, %v6695
        %v6704 = vmul.f32 %v6696, %v6696
        %v6705 = vmul.f32 %v6697, %v6697
        %v6706 = vmul.f32 %v6698, %v6698
        %v6707 = vmul.f32 %v6699, %v6699
        %v6708 = vmul.f32 %v6700, %v6700
        %6709 = vadd.xlane.f32.xlu0 %v6701
        %v6710 = vpop.xlane.xlu0 %6709
        %6711 = vadd.xlane.f32.xlu0 %v6702
        %v6712 = vpop.xlane.xlu0 %6711
        %6713 = vadd.xlane.f32.xlu0 %v6703
        %v6714 = vpop.xlane.xlu0 %6713
        %6715 = vadd.xlane.f32.xlu0 %v6704
        %v6716 = vpop.xlane.xlu0 %6715
        %6717 = vadd.xlane.f32.xlu0 %v6705
        %v6718 = vpop.xlane.xlu0 %6717
        %6719 = vadd.xlane.f32.xlu0 %v6706
        %v6720 = vpop.xlane.xlu0 %6719
        %6721 = vadd.xlane.f32.xlu0 %v6707
        %v6722 = vpop.xlane.xlu0 %6721
        %6723 = vadd.xlane.f32.xlu0 %v6708
        %v6724 = vpop.xlane.xlu0 %6723
        %v6725 = vadd.f32 %v6677, %v6710
        %v6726 = vadd.f32 %v6678, %v6712
        %v6727 = vadd.f32 %v6679, %v6714
        %v6728 = vadd.f32 %v6680, %v6716
        %v6729 = vadd.f32 %v6681, %v6718
        %v6730 = vadd.f32 %v6682, %v6720
        %v6731 = vadd.f32 %v6683, %v6722
        %v6732 = vadd.f32 %v6684, %v6724
        %v6733 = vsub.f32 %v6556, %v6629
        %v6734 = vsub.f32 %v6557, %v6630
        %v6735 = vsub.f32 %v6558, %v6631
        %v6736 = vsub.f32 %v6559, %v6632
        %v6737 = vsub.f32 %v6560, %v6633
        %v6738 = vsub.f32 %v6561, %v6634
        %v6739 = vsub.f32 %v6562, %v6635
        %v6740 = vsub.f32 %v6563, %v6636
        %v6741 = vsel %vm518, %v6733, 0.0
        %v6742 = vsel %vm518, %v6734, 0.0
        %v6743 = vsel %vm518, %v6735, 0.0
        %v6744 = vsel %vm518, %v6736, 0.0
        %v6745 = vsel %vm518, %v6737, 0.0
        %v6746 = vsel %vm518, %v6738, 0.0
        %v6747 = vsel %vm518, %v6739, 0.0
        %v6748 = vsel %vm518, %v6740, 0.0
        %v6749 = vmul.f32 %v6741, %v6741
        %v6750 = vmul.f32 %v6742, %v6742
        %v6751 = vmul.f32 %v6743, %v6743
        %v6752 = vmul.f32 %v6744, %v6744
        %v6753 = vmul.f32 %v6745, %v6745
        %v6754 = vmul.f32 %v6746, %v6746
        %v6755 = vmul.f32 %v6747, %v6747
        %v6756 = vmul.f32 %v6748, %v6748
        %6757 = vadd.xlane.f32.xlu0 %v6749
        %v6758 = vpop.xlane.xlu0 %6757
        %6759 = vadd.xlane.f32.xlu0 %v6750
        %v6760 = vpop.xlane.xlu0 %6759
        %6761 = vadd.xlane.f32.xlu0 %v6751
        %v6762 = vpop.xlane.xlu0 %6761
        %6763 = vadd.xlane.f32.xlu0 %v6752
        %v6764 = vpop.xlane.xlu0 %6763
        %6765 = vadd.xlane.f32.xlu0 %v6753
        %v6766 = vpop.xlane.xlu0 %6765
        %6767 = vadd.xlane.f32.xlu0 %v6754
        %v6768 = vpop.xlane.xlu0 %6767
        %6769 = vadd.xlane.f32.xlu0 %v6755
        %v6770 = vpop.xlane.xlu0 %6769
        %6771 = vadd.xlane.f32.xlu0 %v6756
        %v6772 = vpop.xlane.xlu0 %6771
        %v6773 = vadd.f32 %v6725, %v6758
        %v6774 = vadd.f32 %v6726, %v6760
        %v6775 = vadd.f32 %v6727, %v6762
        %v6776 = vadd.f32 %v6728, %v6764
        %v6777 = vadd.f32 %v6729, %v6766
        %v6778 = vadd.f32 %v6730, %v6768
        %v6779 = vadd.f32 %v6731, %v6770
        %v6780 = vadd.f32 %v6732, %v6772
        %v6781 = vsub.f32 %v6597, %v6629
        %v6782 = vsub.f32 %v6598, %v6630
        %v6783 = vsub.f32 %v6599, %v6631
        %v6784 = vsub.f32 %v6600, %v6632
        %v6785 = vsub.f32 %v6601, %v6633
        %v6786 = vsub.f32 %v6602, %v6634
        %v6787 = vsub.f32 %v6603, %v6635
        %v6788 = vsub.f32 %v6604, %v6636
        %v6789 = vsel %vm518, %v6781, 0.0
        %v6790 = vsel %vm518, %v6782, 0.0
        %v6791 = vsel %vm518, %v6783, 0.0
        %v6792 = vsel %vm518, %v6784, 0.0
        %v6793 = vsel %vm518, %v6785, 0.0
        %v6794 = vsel %vm518, %v6786, 0.0
        %v6795 = vsel %vm518, %v6787, 0.0
        %v6796 = vsel %vm518, %v6788, 0.0
        %v6797 = vmul.f32 %v6789, %v6789
        %v6798 = vmul.f32 %v6790, %v6790
        %v6799 = vmul.f32 %v6791, %v6791
        %v6800 = vmul.f32 %v6792, %v6792
        %v6801 = vmul.f32 %v6793, %v6793
        %v6802 = vmul.f32 %v6794, %v6794
        %v6803 = vmul.f32 %v6795, %v6795
        %v6804 = vmul.f32 %v6796, %v6796
        %6805 = vadd.xlane.f32.xlu0 %v6797
        %v6806 = vpop.xlane.xlu0 %6805
        %6807 = vadd.xlane.f32.xlu0 %v6798
        %v6808 = vpop.xlane.xlu0 %6807
        %6809 = vadd.xlane.f32.xlu0 %v6799
        %v6810 = vpop.xlane.xlu0 %6809
        %6811 = vadd.xlane.f32.xlu0 %v6800
        %v6812 = vpop.xlane.xlu0 %6811
        %6813 = vadd.xlane.f32.xlu0 %v6801
        %v6814 = vpop.xlane.xlu0 %6813
        %6815 = vadd.xlane.f32.xlu0 %v6802
        %v6816 = vpop.xlane.xlu0 %6815
        %6817 = vadd.xlane.f32.xlu0 %v6803
        %v6818 = vpop.xlane.xlu0 %6817
        %6819 = vadd.xlane.f32.xlu0 %v6804
        %v6820 = vpop.xlane.xlu0 %6819
        %v6821 = vadd.f32 %v6773, %v6806
        %v6822 = vadd.f32 %v6774, %v6808
        %v6823 = vadd.f32 %v6775, %v6810
        %v6824 = vadd.f32 %v6776, %v6812
        %v6825 = vadd.f32 %v6777, %v6814
        %v6826 = vadd.f32 %v6778, %v6816
        %v6827 = vadd.f32 %v6779, %v6818
        %v6828 = vadd.f32 %v6780, %v6820
        %v6829 = vmul.f32 %v6821, 0.0078125
        %v6830 = vmul.f32 %v6822, 0.0078125
        %v6831 = vmul.f32 %v6823, 0.0078125
        %v6832 = vmul.f32 %v6824, 0.0078125
        %v6833 = vmul.f32 %v6825, 0.0078125
        %v6834 = vmul.f32 %v6826, 0.0078125
        %v6835 = vmul.f32 %v6827, 0.0078125
        %v6836 = vmul.f32 %v6828, 0.0078125
        %v6837 = vadd.f32 %v6829, 1e-05
        %v6838 = vadd.f32 %v6830, 1e-05
        %v6839 = vadd.f32 %v6831, 1e-05
        %v6840 = vadd.f32 %v6832, 1e-05
        %v6841 = vadd.f32 %v6833, 1e-05
        %v6842 = vadd.f32 %v6834, 1e-05
        %v6843 = vadd.f32 %v6835, 1e-05
        %v6844 = vadd.f32 %v6836, 1e-05
        %v6845 = vrsqrt.pop %v6837
        %v6846 = vrsqrt.pop %v6838
        %v6847 = vrsqrt.pop %v6839
        %v6848 = vrsqrt.pop %v6840
        %v6849 = vrsqrt.pop %v6841
        %v6850 = vrsqrt.pop %v6842
        %v6851 = vrsqrt.pop %v6843
        %v6852 = vrsqrt.pop %v6844
        %v6853 = vmul.f32 %v6637, %v6845
        %v6854 = vmul.f32 %v6638, %v6846
        %v6855 = vmul.f32 %v6639, %v6847
        %v6856 = vmul.f32 %v6640, %v6848
        %v6857 = vmul.f32 %v6641, %v6849
        %v6858 = vmul.f32 %v6642, %v6850
        %v6859 = vmul.f32 %v6643, %v6851
        %v6860 = vmul.f32 %v6644, %v6852
        %v6861 = vpack.c.bf16 %v6854, %v6853
        %v6862 = vpack.c.bf16 %v6856, %v6855
        %v6863 = vpack.c.bf16 %v6858, %v6857
        %v6864 = vpack.c.bf16 %v6860, %v6859
        %v6865 = vld [vmem:[%s2] sm:$0xf]
        %v6866 = vld [vmem:[%s2 + $0x4] sm:$0xf]
        %v6867 = vld [vmem:[%s2 + $0x8] sm:$0xf]
        %v6868 = vld [vmem:[%s2 + $0xc] sm:$0xf]
        %v6869 = vld [vmem:[%s2 + $0x10] sm:$0xf]
        %v6870 = vld [vmem:[%s2 + $0x14] sm:$0xf]
        %v6871 = vld [vmem:[%s2 + $0x18] sm:$0xf]
        %v6872 = vld [vmem:[%s2 + $0x1c] sm:$0xf]
        %v6873 = vld [vmem:[%s2 + $0x20] sm:$0xf]
        %v6874 = vld [vmem:[%s2 + $0x24] sm:$0xf]
        %v6875 = vld [vmem:[%s2 + $0x28] sm:$0xf]
        %v6876 = vld [vmem:[%s2 + $0x2c] sm:$0xf]
        %v6877 = vld [vmem:[%s2 + $0x30] sm:$0xf]
        %v6878 = vld [vmem:[%s2 + $0x34] sm:$0xf]
        %v6879 = vld [vmem:[%s2 + $0x38] sm:$0xf]
        %v6880 = vld [vmem:[%s2 + $0x3c] sm:$0xf]
        %v6881 = vmul.f32 %v6685, %v6845
        %v6882 = vmul.f32 %v6686, %v6846
        %v6883 = vmul.f32 %v6687, %v6847
        %v6884 = vmul.f32 %v6688, %v6848
        %v6885 = vmul.f32 %v6689, %v6849
        %v6886 = vmul.f32 %v6690, %v6850
        %v6887 = vmul.f32 %v6691, %v6851
        %v6888 = vmul.f32 %v6692, %v6852
        %v6889 = vpack.c.bf16 %v6882, %v6881
        %v6890 = vpack.c.bf16 %v6884, %v6883
        %v6891 = vpack.c.bf16 %v6886, %v6885
        %v6892 = vpack.c.bf16 %v6888, %v6887
        %v6893 = vld [vmem:[%s2 + $0x40] sm:$0xf]
        %v6894 = vld [vmem:[%s2 + $0x44] sm:$0xf]
        %v6895 = vld [vmem:[%s2 + $0x48] sm:$0xf]
        %v6896 = vld [vmem:[%s2 + $0x4c] sm:$0xf]
        %v6897 = vld [vmem:[%s2 + $0x50] sm:$0xf]
        %v6898 = vld [vmem:[%s2 + $0x54] sm:$0xf]
        %v6899 = vld [vmem:[%s2 + $0x58] sm:$0xf]
        %v6900 = vld [vmem:[%s2 + $0x5c] sm:$0xf]
        %v6901 = vld [vmem:[%s2 + $0x60] sm:$0xf]
        %v6902 = vld [vmem:[%s2 + $0x64] sm:$0xf]
        %v6903 = vld [vmem:[%s2 + $0x68] sm:$0xf]
        %v6904 = vld [vmem:[%s2 + $0x6c] sm:$0xf]
        %v6905 = vld [vmem:[%s2 + $0x70] sm:$0xf]
        %v6906 = vld [vmem:[%s2 + $0x74] sm:$0xf]
        %v6907 = vld [vmem:[%s2 + $0x78] sm:$0xf]
        %v6908 = vld [vmem:[%s2 + $0x7c] sm:$0xf]
        %v6925 = vunpack.c.l.b16 %v6893
        %v6926 = vunpack.c.l.b16 %v6894
        %v6927 = vunpack.c.l.b16 %v6895
        %v6928 = vunpack.c.l.b16 %v6896
        %v6929 = vunpack.c.l.b16 %v6897
        %v6930 = vunpack.c.l.b16 %v6898
        %v6931 = vunpack.c.l.b16 %v6899
        %v6932 = vunpack.c.l.b16 %v6900
        %v6933 = vunpack.c.l.b16 %v6901
        %v6934 = vunpack.c.l.b16 %v6902
        %v6935 = vunpack.c.l.b16 %v6903
        %v6936 = vunpack.c.l.b16 %v6904
        %v6937 = vunpack.c.l.b16 %v6905
        %v6938 = vunpack.c.l.b16 %v6906
        %v6939 = vunpack.c.l.b16 %v6907
        %v6940 = vunpack.c.l.b16 %v6908
        %v6941 = vpack.c.b16 %v6926, %v6925
        %v6942 = vpack.c.b16 %v6928, %v6927
        %v6943 = vpack.c.b16 %v6930, %v6929
        %v6944 = vpack.c.b16 %v6932, %v6931
        %v6945 = vpack.c.b16 %v6934, %v6933
        %v6946 = vpack.c.b16 %v6936, %v6935
        %v6947 = vpack.c.b16 %v6938, %v6937
        %v6948 = vpack.c.b16 %v6940, %v6939
        %6957 = vmatprep.subr.bf16.mxu0 0
        %6958 = vmatpush1.bf16.msra.mxu0 %v6941
        %6959 = vmatprep.subr.bf16.mxu0 0
        %6960 = vmatpush1.bf16.msra.mxu0 %v6942
        %6961 = vmatprep.subr.bf16.mxu0 0
        %6962 = vmatpush1.bf16.msra.mxu0 %v6943
        %6963 = vmatprep.subr.bf16.mxu0 0
        %6964 = vmatpush1.bf16.msra.mxu0 %v6944
        %6965 = vmatprep.subr.bf16.mxu0 0
        %6966 = vmatpush1.bf16.msra.mxu0 %v6945
        %6967 = vmatprep.subr.bf16.mxu0 0
        %6968 = vmatpush1.bf16.msra.mxu0 %v6946
        %6969 = vmatprep.subr.bf16.mxu0 0
        %6970 = vmatpush1.bf16.msra.mxu0 %v6947
        %6971 = vmatprep.subr.bf16.mxu0 0
        %6972 = vmatpush1.bf16.msra.mxu0 %v6948
        %6973 = vmatprep.subr.bf16.mxu0 0
        %6974 = vmatpush1.bf16.msra.mxu0 0
        %6975 = vmatprep.subr.bf16.mxu0 0
        %6976 = vmatpush1.bf16.msra.mxu0 0
        %6977 = vmatprep.subr.bf16.mxu0 0
        %6978 = vmatpush1.bf16.msra.mxu0 0
        %6979 = vmatprep.subr.bf16.mxu0 0
        %6980 = vmatpush1.bf16.msra.mxu0 0
        %6981 = vmatprep.subr.bf16.mxu0 0
        %6982 = vmatpush1.bf16.msra.mxu0 0
        %6983 = vmatprep.subr.bf16.mxu0 0
        %6984 = vmatpush1.bf16.msra.mxu0 0
        %6985 = vmatprep.subr.bf16.mxu0 0
        %6986 = vmatpush1.bf16.msra.mxu0 0
        %6987 = vmatprep.subr.bf16.mxu0 0
        %6988 = vmatpush1.bf16.msra.mxu0 0
        %6989 = vmatprep.mubr.bf16.mxu0 0
        %6990 = vmatmul.mubr.bf16.gmra.mrb[0].mxu0 %v6889
        %v6991 = vpop.f32.mrb[0].mxu0
        %v6992 = vadd.f32 0.0, %v6991
        %v6993 = vpop.f32.mrb[0].mxu0
        %v6994 = vpop.f32.mrb[0].mxu0
        %v6995 = vadd.f32 0.0, %v6994
        %v6996 = vpop.f32.mrb[0].mxu0
        %6997 = vmatprep.mubr.bf16.mxu0 0
        %6998 = vmatmul.mubr.bf16.gmra.mrb[0].mxu0 %v6890
        %v6999 = vpop.f32.mrb[0].mxu0
        %v7000 = vadd.f32 0.0, %v6999
        %v7001 = vpop.f32.mrb[0].mxu0
        %v7002 = vpop.f32.mrb[0].mxu0
        %v7003 = vadd.f32 0.0, %v7002
        %v7004 = vpop.f32.mrb[0].mxu0
        %7005 = vmatprep.mubr.bf16.mxu0 0
        %7006 = vmatmul.mubr.bf16.gmra.mrb[0].mxu0 %v6891
        %v7007 = vpop.f32.mrb[0].mxu0
        %v7008 = vadd.f32 0.0, %v7007
        %v7009 = vpop.f32.mrb[0].mxu0
        %v7010 = vpop.f32.mrb[0].mxu0
        %v7011 = vadd.f32 0.0, %v7010
        %v7012 = vpop.f32.mrb[0].mxu0
        %7013 = vmatprep.mubr.bf16.mxu0 0
        %7014 = vmatmul.mubr.bf16.gmra.mrb[0].mxu0 %v6892
        %v7015 = vpop.f32.mrb[0].mxu0
        %v7016 = vadd.f32 0.0, %v7015
        %v7017 = vpop.f32.mrb[0].mxu0
        %v7018 = vpop.f32.mrb[0].mxu0
        %v7019 = vadd.f32 0.0, %v7018
        %v7020 = vpop.f32.mrb[0].mxu0
        %7021 = vdwg.mxu0
        %v7038 = vunpack.c.l.b16 %v6865
        %v7039 = vunpack.c.l.b16 %v6866
        %v7040 = vunpack.c.l.b16 %v6867
        %v7041 = vunpack.c.l.b16 %v6868
        %v7042 = vunpack.c.l.b16 %v6869
        %v7043 = vunpack.c.l.b16 %v6870
        %v7044 = vunpack.c.l.b16 %v6871
        %v7045 = vunpack.c.l.b16 %v6872
        %v7046 = vunpack.c.l.b16 %v6873
        %v7047 = vunpack.c.l.b16 %v6874
        %v7048 = vunpack.c.l.b16 %v6875
        %v7049 = vunpack.c.l.b16 %v6876
        %v7050 = vunpack.c.l.b16 %v6877
        %v7051 = vunpack.c.l.b16 %v6878
        %v7052 = vunpack.c.l.b16 %v6879
        %v7053 = vunpack.c.l.b16 %v6880
        %v7054 = vpack.c.b16 %v7039, %v7038
        %v7055 = vpack.c.b16 %v7041, %v7040
        %v7056 = vpack.c.b16 %v7043, %v7042
        %v7057 = vpack.c.b16 %v7045, %v7044
        %v7058 = vpack.c.b16 %v7047, %v7046
        %v7059 = vpack.c.b16 %v7049, %v7048
        %v7060 = vpack.c.b16 %v7051, %v7050
        %v7061 = vpack.c.b16 %v7053, %v7052
        %7070 = vmatprep.subr.bf16.mxu0 0
        %7071 = vmatpush1.bf16.msra.mxu0 %v7054
        %7072 = vmatprep.subr.bf16.mxu0 0
        %7073 = vmatpush1.bf16.msra.mxu0 %v7055
        %7074 = vmatprep.subr.bf16.mxu0 0
        %7075 = vmatpush1.bf16.msra.mxu0 %v7056
        %7076 = vmatprep.subr.bf16.mxu0 0
        %7077 = vmatpush1.bf16.msra.mxu0 %v7057
        %7078 = vmatprep.subr.bf16.mxu0 0
        %7079 = vmatpush1.bf16.msra.mxu0 %v7058
        %7080 = vmatprep.subr.bf16.mxu0 0
        %7081 = vmatpush1.bf16.msra.mxu0 %v7059
        %7082 = vmatprep.subr.bf16.mxu0 0
        %7083 = vmatpush1.bf16.msra.mxu0 %v7060
        %7084 = vmatprep.subr.bf16.mxu0 0
        %7085 = vmatpush1.bf16.msra.mxu0 %v7061
        %7086 = vmatprep.subr.bf16.mxu0 0
        %7087 = vmatpush1.bf16.msra.mxu0 0
        %7088 = vmatprep.subr.bf16.mxu0 0
        %7089 = vmatpush1.bf16.msra.mxu0 0
        %7090 = vmatprep.subr.bf16.mxu0 0
        %7091 = vmatpush1.bf16.msra.mxu0 0
        %7092 = vmatprep.subr.bf16.mxu0 0
        %7093 = vmatpush1.bf16.msra.mxu0 0
        %7094 = vmatprep.subr.bf16.mxu0 0
        %7095 = vmatpush1.bf16.msra.mxu0 0
        %7096 = vmatprep.subr.bf16.mxu0 0
        %7097 = vmatpush1.bf16.msra.mxu0 0
        %7098 = vmatprep.subr.bf16.mxu0 0
        %7099 = vmatpush1.bf16.msra.mxu0 0
        %7100 = vmatprep.subr.bf16.mxu0 0
        %7101 = vmatpush1.bf16.msra.mxu0 0
        %7102 = vmatprep.mubr.bf16.mxu0 0
        %7103 = vmatmul.mubr.bf16.gmra.mrb[0].mxu0 %v6861
        %v7104 = vpop.f32.mrb[0].mxu0
        %v7105 = vadd.f32 %v6992, %v7104
        %v7106 = vpop.f32.mrb[0].mxu0
        %v7107 = vpop.f32.mrb[0].mxu0
        %v7108 = vadd.f32 %v6995, %v7107
        %v7109 = vpop.f32.mrb[0].mxu0
        %7110 = vmatprep.mubr.bf16.mxu0 0
        %7111 = vmatmul.mubr.bf16.gmra.mrb[0].mxu0 %v6862
        %v7112 = vpop.f32.mrb[0].mxu0
        %v7113 = vadd.f32 %v7000, %v7112
        %v7114 = vpop.f32.mrb[0].mxu0
        %v7115 = vpop.f32.mrb[0].mxu0
        %v7116 = vadd.f32 %v7003, %v7115
        %v7117 = vpop.f32.mrb[0].mxu0
        %7118 = vmatprep.mubr.bf16.mxu0 0
        %7119 = vmatmul.mubr.bf16.gmra.mrb[0].mxu0 %v6863
        %v7120 = vpop.f32.mrb[0].mxu0
        %v7121 = vadd.f32 %v7008, %v7120
        %v7122 = vpop.f32.mrb[0].mxu0
        %v7123 = vpop.f32.mrb[0].mxu0
        %v7124 = vadd.f32 %v7011, %v7123
        %v7125 = vpop.f32.mrb[0].mxu0
        %7126 = vmatprep.mubr.bf16.mxu0 0
        %7127 = vmatmul.mubr.bf16.gmra.mrb[0].mxu0 %v6864
        %v7128 = vpop.f32.mrb[0].mxu0
        %v7129 = vadd.f32 %v7016, %v7128
        %v7130 = vpop.f32.mrb[0].mxu0
        %v7131 = vpop.f32.mrb[0].mxu0
        %v7132 = vadd.f32 %v7019, %v7131
        %v7133 = vpop.f32.mrb[0].mxu0
        %7134 = vdwg.mxu0
        %v7135 = vmul.f32 %v6733, %v6845
        %v7136 = vmul.f32 %v6734, %v6846
        %v7137 = vmul.f32 %v6735, %v6847
        %v7138 = vmul.f32 %v6736, %v6848
        %v7139 = vmul.f32 %v6737, %v6849
        %v7140 = vmul.f32 %v6738, %v6850
        %v7141 = vmul.f32 %v6739, %v6851
        %v7142 = vmul.f32 %v6740, %v6852
        %v7143 = vpack.c.bf16 %v7136, %v7135
        %v7144 = vpack.c.bf16 %v7138, %v7137
        %v7145 = vpack.c.bf16 %v7140, %v7139
        %v7146 = vpack.c.bf16 %v7142, %v7141
        %v7147 = vld [vmem:[%s2 + $0x80] sm:$0xf]
        %v7148 = vld [vmem:[%s2 + $0x84] sm:$0xf]
        %v7149 = vld [vmem:[%s2 + $0x88] sm:$0xf]
        %v7150 = vld [vmem:[%s2 + $0x8c] sm:$0xf]
        %v7151 = vld [vmem:[%s2 + $0x90] sm:$0xf]
        %v7152 = vld [vmem:[%s2 + $0x94] sm:$0xf]
        %v7153 = vld [vmem:[%s2 + $0x98] sm:$0xf]
        %v7154 = vld [vmem:[%s2 + $0x9c] sm:$0xf]
        %v7155 = vld [vmem:[%s2 + $0xa0] sm:$0xf]
        %v7156 = vld [vmem:[%s2 + $0xa4] sm:$0xf]
        %v7157 = vld [vmem:[%s2 + $0xa8] sm:$0xf]
        %v7158 = vld [vmem:[%s2 + $0xac] sm:$0xf]
        %v7159 = vld [vmem:[%s2 + $0xb0] sm:$0xf]
        %v7160 = vld [vmem:[%s2 + $0xb4] sm:$0xf]
        %v7161 = vld [vmem:[%s2 + $0xb8] sm:$0xf]
        %v7162 = vld [vmem:[%s2 + $0xbc] sm:$0xf]
        %v7179 = vunpack.c.l.b16 %v7147
        %v7180 = vunpack.c.l.b16 %v7148
        %v7181 = vunpack.c.l.b16 %v7149
        %v7182 = vunpack.c.l.b16 %v7150
        %v7183 = vunpack.c.l.b16 %v7151
        %v7184 = vunpack.c.l.b16 %v7152
        %v7185 = vunpack.c.l.b16 %v7153
        %v7186 = vunpack.c.l.b16 %v7154
        %v7187 = vunpack.c.l.b16 %v7155
        %v7188 = vunpack.c.l.b16 %v7156
        %v7189 = vunpack.c.l.b16 %v7157
        %v7190 = vunpack.c.l.b16 %v7158
        %v7191 = vunpack.c.l.b16 %v7159
        %v7192 = vunpack.c.l.b16 %v7160
        %v7193 = vunpack.c.l.b16 %v7161
        %v7194 = vunpack.c.l.b16 %v7162
        %v7195 = vpack.c.b16 %v7180, %v7179
        %v7196 = vpack.c.b16 %v7182, %v7181
        %v7197 = vpack.c.b16 %v7184, %v7183
        %v7198 = vpack.c.b16 %v7186, %v7185
        %v7199 = vpack.c.b16 %v7188, %v7187
        %v7200 = vpack.c.b16 %v7190, %v7189
        %v7201 = vpack.c.b16 %v7192, %v7191
        %v7202 = vpack.c.b16 %v7194, %v7193
        %7211 = vmatprep.subr.bf16.mxu0 0
        %7212 = vmatpush1.bf16.msra.mxu0 %v7195
        %7213 = vmatprep.subr.bf16.mxu0 0
        %7214 = vmatpush1.bf16.msra.mxu0 %v7196
        %7215 = vmatprep.subr.bf16.mxu0 0
        %7216 = vmatpush1.bf16.msra.mxu0 %v7197
        %7217 = vmatprep.subr.bf16.mxu0 0
        %7218 = vmatpush1.bf16.msra.mxu0 %v7198
        %7219 = vmatprep.subr.bf16.mxu0 0
        %7220 = vmatpush1.bf16.msra.mxu0 %v7199
        %7221 = vmatprep.subr.bf16.mxu0 0
        %7222 = vmatpush1.bf16.msra.mxu0 %v7200
        %7223 = vmatprep.subr.bf16.mxu0 0
        %7224 = vmatpush1.bf16.msra.mxu0 %v7201
        %7225 = vmatprep.subr.bf16.mxu0 0
        %7226 = vmatpush1.bf16.msra.mxu0 %v7202
        %7227 = vmatprep.subr.bf16.mxu0 0
        %7228 = vmatpush1.bf16.msra.mxu0 0
        %7229 = vmatprep.subr.bf16.mxu0 0
        %7230 = vmatpush1.bf16.msra.mxu0 0
        %7231 = vmatprep.subr.bf16.mxu0 0
        %7232 = vmatpush1.bf16.msra.mxu0 0
        %7233 = vmatprep.subr.bf16.mxu0 0
        %7234 = vmatpush1.bf16.msra.mxu0 0
        %7235 = vmatprep.subr.bf16.mxu0 0
        %7236 = vmatpush1.bf16.msra.mxu0 0
        %7237 = vmatprep.subr.bf16.mxu0 0
        %7238 = vmatpush1.bf16.msra.mxu0 0
        %7239 = vmatprep.subr.bf16.mxu0 0
        %7240 = vmatpush1.bf16.msra.mxu0 0
        %7241 = vmatprep.subr.bf16.mxu0 0
        %7242 = vmatpush1.bf16.msra.mxu0 0
        %7243 = vmatprep.mubr.bf16.mxu0 0
        %7244 = vmatmul.mubr.bf16.gmra.mrb[0].mxu0 %v7143
        %v7245 = vpop.f32.mrb[0].mxu0
        %v7246 = vadd.f32 0.0, %v7245
        %v7247 = vpop.f32.mrb[0].mxu0
        %v7248 = vpop.f32.mrb[0].mxu0
        %v7249 = vadd.f32 0.0, %v7248
        %v7250 = vpop.f32.mrb[0].mxu0
        %7251 = vmatprep.mubr.bf16.mxu0 0
        %7252 = vmatmul.mubr.bf16.gmra.mrb[0].mxu0 %v7144
        %v7253 = vpop.f32.mrb[0].mxu0
        %v7254 = vadd.f32 0.0, %v7253
        %v7255 = vpop.f32.mrb[0].mxu0
        %v7256 = vpop.f32.mrb[0].mxu0
        %v7257 = vadd.f32 0.0, %v7256
        %v7258 = vpop.f32.mrb[0].mxu0
        %7259 = vmatprep.mubr.bf16.mxu0 0
        %7260 = vmatmul.mubr.bf16.gmra.mrb[0].mxu0 %v7145
        %v7261 = vpop.f32.mrb[0].mxu0
        %v7262 = vadd.f32 0.0, %v7261
        %v7263 = vpop.f32.mrb[0].mxu0
        %v7264 = vpop.f32.mrb[0].mxu0
        %v7265 = vadd.f32 0.0, %v7264
        %v7266 = vpop.f32.mrb[0].mxu0
        %7267 = vmatprep.mubr.bf16.mxu0 0
        %7268 = vmatmul.mubr.bf16.gmra.mrb[0].mxu0 %v7146
        %v7269 = vpop.f32.mrb[0].mxu0
        %v7270 = vadd.f32 0.0, %v7269
        %v7271 = vpop.f32.mrb[0].mxu0
        %v7272 = vpop.f32.mrb[0].mxu0
        %v7273 = vadd.f32 0.0, %v7272
        %v7274 = vpop.f32.mrb[0].mxu0
        %7275 = vdwg.mxu0
        %v7276 = vadd.f32 %v7105, %v7246
        %v7277 = vadd.f32 %v7108, %v7249
        %v7278 = vadd.f32 %v7113, %v7254
        %v7279 = vadd.f32 %v7116, %v7257
        %v7280 = vadd.f32 %v7121, %v7262
        %v7281 = vadd.f32 %v7124, %v7265
        %v7282 = vadd.f32 %v7129, %v7270
        %v7283 = vadd.f32 %v7132, %v7273
        %v7284 = vmul.f32 %v6781, %v6845
        %v7285 = vmul.f32 %v6782, %v6846
        %v7286 = vmul.f32 %v6783, %v6847
        %v7287 = vmul.f32 %v6784, %v6848
        %v7288 = vmul.f32 %v6785, %v6849
        %v7289 = vmul.f32 %v6786, %v6850
        %v7290 = vmul.f32 %v6787, %v6851
        %v7291 = vmul.f32 %v6788, %v6852
        %v7292 = vpack.c.bf16 %v7285, %v7284
        %v7293 = vpack.c.bf16 %v7287, %v7286
        %v7294 = vpack.c.bf16 %v7289, %v7288
        %v7295 = vpack.c.bf16 %v7291, %v7290
        %v7296 = vld [vmem:[%s2 + $0xc0] sm:$0xf]
        %v7297 = vld [vmem:[%s2 + $0xc4] sm:$0xf]
        %v7298 = vld [vmem:[%s2 + $0xc8] sm:$0xf]
        %v7299 = vld [vmem:[%s2 + $0xcc] sm:$0xf]
        %v7300 = vld [vmem:[%s2 + $0xd0] sm:$0xf]
        %v7301 = vld [vmem:[%s2 + $0xd4] sm:$0xf]
        %v7302 = vld [vmem:[%s2 + $0xd8] sm:$0xf]
        %v7303 = vld [vmem:[%s2 + $0xdc] sm:$0xf]
        %v7304 = vld [vmem:[%s2 + $0xe0] sm:$0xf]
        %v7305 = vld [vmem:[%s2 + $0xe4] sm:$0xf]
        %v7306 = vld [vmem:[%s2 + $0xe8] sm:$0xf]
        %v7307 = vld [vmem:[%s2 + $0xec] sm:$0xf]
        %v7308 = vld [vmem:[%s2 + $0xf0] sm:$0xf]
        %v7309 = vld [vmem:[%s2 + $0xf4] sm:$0xf]
        %v7310 = vld [vmem:[%s2 + $0xf8] sm:$0xf]
        %v7311 = vld [vmem:[%s2 + $0xfc] sm:$0xf]
        %v7328 = vunpack.c.l.b16 %v7296
        %v7329 = vunpack.c.l.b16 %v7297
        %v7330 = vunpack.c.l.b16 %v7298
        %v7331 = vunpack.c.l.b16 %v7299
        %v7332 = vunpack.c.l.b16 %v7300
        %v7333 = vunpack.c.l.b16 %v7301
        %v7334 = vunpack.c.l.b16 %v7302
        %v7335 = vunpack.c.l.b16 %v7303
        %v7336 = vunpack.c.l.b16 %v7304
        %v7337 = vunpack.c.l.b16 %v7305
        %v7338 = vunpack.c.l.b16 %v7306
        %v7339 = vunpack.c.l.b16 %v7307
        %v7340 = vunpack.c.l.b16 %v7308
        %v7341 = vunpack.c.l.b16 %v7309
        %v7342 = vunpack.c.l.b16 %v7310
        %v7343 = vunpack.c.l.b16 %v7311
        %v7344 = vpack.c.b16 %v7329, %v7328
        %v7345 = vpack.c.b16 %v7331, %v7330
        %v7346 = vpack.c.b16 %v7333, %v7332
        %v7347 = vpack.c.b16 %v7335, %v7334
        %v7348 = vpack.c.b16 %v7337, %v7336
        %v7349 = vpack.c.b16 %v7339, %v7338
        %v7350 = vpack.c.b16 %v7341, %v7340
        %v7351 = vpack.c.b16 %v7343, %v7342
        %7360 = vmatprep.subr.bf16.mxu0 0
        %7361 = vmatpush1.bf16.msra.mxu0 %v7344
        %7362 = vmatprep.subr.bf16.mxu0 0
        %7363 = vmatpush1.bf16.msra.mxu0 %v7345
        %7364 = vmatprep.subr.bf16.mxu0 0
        %7365 = vmatpush1.bf16.msra.mxu0 %v7346
        %7366 = vmatprep.subr.bf16.mxu0 0
        %7367 = vmatpush1.bf16.msra.mxu0 %v7347
        %7368 = vmatprep.subr.bf16.mxu0 0
        %7369 = vmatpush1.bf16.msra.mxu0 %v7348
        %7370 = vmatprep.subr.bf16.mxu0 0
        %7371 = vmatpush1.bf16.msra.mxu0 %v7349
        %7372 = vmatprep.subr.bf16.mxu0 0
        %7373 = vmatpush1.bf16.msra.mxu0 %v7350
        %7374 = vmatprep.subr.bf16.mxu0 0
        %7375 = vmatpush1.bf16.msra.mxu0 %v7351
        %7376 = vmatprep.subr.bf16.mxu0 0
        %7377 = vmatpush1.bf16.msra.mxu0 0
        %7378 = vmatprep.subr.bf16.mxu0 0
        %7379 = vmatpush1.bf16.msra.mxu0 0
        %7380 = vmatprep.subr.bf16.mxu0 0
        %7381 = vmatpush1.bf16.msra.mxu0 0
        %7382 = vmatprep.subr.bf16.mxu0 0
        %7383 = vmatpush1.bf16.msra.mxu0 0
        %7384 = vmatprep.subr.bf16.mxu0 0
        %7385 = vmatpush1.bf16.msra.mxu0 0
        %7386 = vmatprep.subr.bf16.mxu0 0
        %7387 = vmatpush1.bf16.msra.mxu0 0
        %7388 = vmatprep.subr.bf16.mxu0 0
        %7389 = vmatpush1.bf16.msra.mxu0 0
        %7390 = vmatprep.subr.bf16.mxu0 0
        %7391 = vmatpush1.bf16.msra.mxu0 0
        %7392 = vmatprep.mubr.bf16.mxu0 0
        %7393 = vmatmul.mubr.bf16.gmra.mrb[0].mxu0 %v7292
        %v7394 = vpop.f32.mrb[0].mxu0
        %v7395 = vadd.f32 0.0, %v7394
        %v7396 = vpop.f32.mrb[0].mxu0
        %v7397 = vpop.f32.mrb[0].mxu0
        %v7398 = vadd.f32 0.0, %v7397
        %v7399 = vpop.f32.mrb[0].mxu0
        %7400 = vmatprep.mubr.bf16.mxu0 0
        %7401 = vmatmul.mubr.bf16.gmra.mrb[0].mxu0 %v7293
        %v7402 = vpop.f32.mrb[0].mxu0
        %v7403 = vadd.f32 0.0, %v7402
        %v7404 = vpop.f32.mrb[0].mxu0
        %v7405 = vpop.f32.mrb[0].mxu0
        %v7406 = vadd.f32 0.0, %v7405
        %v7407 = vpop.f32.mrb[0].mxu0
        %7408 = vmatprep.mubr.bf16.mxu0 0
        %7409 = vmatmul.mubr.bf16.gmra.mrb[0].mxu0 %v7294
        %v7410 = vpop.f32.mrb[0].mxu0
        %v7411 = vadd.f32 0.0, %v7410
        %v7412 = vpop.f32.mrb[0].mxu0
        %v7413 = vpop.f32.mrb[0].mxu0
        %v7414 = vadd.f32 0.0, %v7413
        %v7415 = vpop.f32.mrb[0].mxu0
        %7416 = vmatprep.mubr.bf16.mxu0 0
        %7417 = vmatmul.mubr.bf16.gmra.mrb[0].mxu0 %v7295
        %v7418 = vpop.f32.mrb[0].mxu0
        %v7419 = vadd.f32 0.0, %v7418
        %v7420 = vpop.f32.mrb[0].mxu0
        %v7421 = vpop.f32.mrb[0].mxu0
        %v7422 = vadd.f32 0.0, %v7421
        %v7423 = vpop.f32.mrb[0].mxu0
        %7424 = vdwg.mxu0
        %v7425 = vadd.f32 %v7276, %v7395
        %v7426 = vadd.f32 %v7277, %v7398
        %v7427 = vadd.f32 %v7278, %v7403
        %v7428 = vadd.f32 %v7279, %v7406
        %v7429 = vadd.f32 %v7280, %v7411
        %v7430 = vadd.f32 %v7281, %v7414
        %v7431 = vadd.f32 %v7282, %v7419
        %v7432 = vadd.f32 %v7283, %v7422
        %v7433 = vadd.f32 %v7425, %v4490
        %v7434 = vadd.f32 %v7426, %v4490
        %v7435 = vadd.f32 %v7427, %v4490
        %v7436 = vadd.f32 %v7428, %v4490
        %v7437 = vadd.f32 %v7429, %v4490
        %v7438 = vadd.f32 %v7430, %v4490
        %v7439 = vadd.f32 %v7431, %v4490
        %v7440 = vadd.f32 %v7432, %v4490
        %v7441 = vpack.c.bf16 %v7434, %v7433
        %v7442 = vpack.c.bf16 %v7436, %v7435
        %v7443 = vpack.c.bf16 %v7438, %v7437
        %v7444 = vpack.c.bf16 %v7440, %v7439
        %s7445 = scalar_lea.vmem [#allocation3], 96
        %7446 = vst [vmem:[%s7445] sm:$0xff] %v7441
        %7447 = vst [vmem:[%s7445 + $0x8] sm:$0xff] %v7442
        %7448 = vst [vmem:[%s7445 + $0x10] sm:$0xff] %v7443
        %7449 = vst [vmem:[%s7445 + $0x18] sm:$0xff] %v7444
        %vm7450 = vcmp.lt.s32.totalorder %v242, 64
        %v7451 = vld [vmem:[#allocation3] sm:$0xff]
        %v7452 = vld [vmem:[#allocation3 + $0x8] sm:$0xff]
        %v7453 = vld [vmem:[#allocation3 + $0x10] sm:$0xff]
        %v7454 = vld [vmem:[#allocation3 + $0x18] sm:$0xff]
        %v7455 = vunpack.c.l.bf16 %v7451
        %v7456 = vunpack.c.h.bf16 %v7451
        %v7457 = vunpack.c.l.bf16 %v7452
        %v7458 = vunpack.c.h.bf16 %v7452
        %v7459 = vunpack.c.l.bf16 %v7453
        %v7460 = vunpack.c.h.bf16 %v7453
        %v7461 = vunpack.c.l.bf16 %v7454
        %v7462 = vunpack.c.h.bf16 %v7454
        %7463 = vadd.xlane.f32.xlu0 %v7455
        %v7464 = vpop.xlane.xlu0 %7463
        %7465 = vadd.xlane.f32.xlu0 %v7456
        %v7466 = vpop.xlane.xlu0 %7465
        %7467 = vadd.xlane.f32.xlu0 %v7457
        %v7468 = vpop.xlane.xlu0 %7467
        %7469 = vadd.xlane.f32.xlu0 %v7458
        %v7470 = vpop.xlane.xlu0 %7469
        %7471 = vadd.xlane.f32.xlu0 %v7459
        %v7472 = vpop.xlane.xlu0 %7471
        %7473 = vadd.xlane.f32.xlu0 %v7460
        %v7474 = vpop.xlane.xlu0 %7473
        %7475 = vadd.xlane.f32.xlu0 %v7461
        %v7476 = vpop.xlane.xlu0 %7475
        %7477 = vadd.xlane.f32.xlu0 %v7462
        %v7478 = vpop.xlane.xlu0 %7477
        %v7479 = vadd.f32 %v7464, 0.0
        %v7480 = vadd.f32 %v7466, 0.0
        %v7481 = vadd.f32 %v7468, 0.0
        %v7482 = vadd.f32 %v7470, 0.0
        %v7483 = vadd.f32 %v7472, 0.0
        %v7484 = vadd.f32 %v7474, 0.0
        %v7485 = vadd.f32 %v7476, 0.0
        %v7486 = vadd.f32 %v7478, 0.0
        %s7487 = sadd.s32 0, 64
        %s7488 = sshra.s32 %s7487, 4
        %s7489 = sand.u32 %s7487, 15
        %s7490 = smul.addr %s7488, 8
        %s7491 = scalar_lea.vmem [#allocation3], %s7490
        %v7492 = vld [vmem:[%s7491] sm:$0xff]
        %v7493 = vld [vmem:[%s7491 + $0x8] sm:$0xff]
        %v7494 = vld [vmem:[%s7491 + $0x10] sm:$0xff]
        %v7495 = vld [vmem:[%s7491 + $0x18] sm:$0xff]
        %v7496 = vunpack.c.l.bf16 %v7492
        %v7497 = vunpack.c.h.bf16 %v7492
        %v7498 = vunpack.c.l.bf16 %v7493
        %v7499 = vunpack.c.h.bf16 %v7493
        %v7500 = vunpack.c.l.bf16 %v7494
        %v7501 = vunpack.c.h.bf16 %v7494
        %v7502 = vunpack.c.l.bf16 %v7495
        %v7503 = vunpack.c.h.bf16 %v7495
        %7504 = vadd.xlane.f32.xlu0 %v7496
        %v7505 = vpop.xlane.xlu0 %7504
        %7506 = vadd.xlane.f32.xlu0 %v7497
        %v7507 = vpop.xlane.xlu0 %7506
        %7508 = vadd.xlane.f32.xlu0 %v7498
        %v7509 = vpop.xlane.xlu0 %7508
        %7510 = vadd.xlane.f32.xlu0 %v7499
        %v7511 = vpop.xlane.xlu0 %7510
        %7512 = vadd.xlane.f32.xlu0 %v7500
        %v7513 = vpop.xlane.xlu0 %7512
        %7514 = vadd.xlane.f32.xlu0 %v7501
        %v7515 = vpop.xlane.xlu0 %7514
        %7516 = vadd.xlane.f32.xlu0 %v7502
        %v7517 = vpop.xlane.xlu0 %7516
        %7518 = vadd.xlane.f32.xlu0 %v7503
        %v7519 = vpop.xlane.xlu0 %7518
        %v7520 = vadd.f32 %v7479, %v7505
        %v7521 = vadd.f32 %v7480, %v7507
        %v7522 = vadd.f32 %v7481, %v7509
        %v7523 = vadd.f32 %v7482, %v7511
        %v7524 = vadd.f32 %v7483, %v7513
        %v7525 = vadd.f32 %v7484, %v7515
        %v7526 = vadd.f32 %v7485, %v7517
        %v7527 = vadd.f32 %v7486, %v7519
        %s7528 = sadd.s32 0, 128
        %s7529 = sshra.s32 %s7528, 4
        %s7530 = sand.u32 %s7528, 15
        %s7531 = smul.addr %s7529, 8
        %s7532 = scalar_lea.vmem [#allocation3], %s7531
        %v7533 = vld [vmem:[%s7532] sm:$0xff]
        %v7534 = vld [vmem:[%s7532 + $0x8] sm:$0xff]
        %v7535 = vld [vmem:[%s7532 + $0x10] sm:$0xff]
        %v7536 = vld [vmem:[%s7532 + $0x18] sm:$0xff]
        %v7537 = vunpack.c.l.bf16 %v7533
        %v7538 = vunpack.c.h.bf16 %v7533
        %v7539 = vunpack.c.l.bf16 %v7534
        %v7540 = vunpack.c.h.bf16 %v7534
        %v7541 = vunpack.c.l.bf16 %v7535
        %v7542 = vunpack.c.h.bf16 %v7535
        %v7543 = vunpack.c.l.bf16 %v7536
        %v7544 = vunpack.c.h.bf16 %v7536
        %7545 = vadd.xlane.f32.xlu0 %v7537
        %v7546 = vpop.xlane.xlu0 %7545
        %7547 = vadd.xlane.f32.xlu0 %v7538
        %v7548 = vpop.xlane.xlu0 %7547
        %7549 = vadd.xlane.f32.xlu0 %v7539
        %v7550 = vpop.xlane.xlu0 %7549
        %7551 = vadd.xlane.f32.xlu0 %v7540
        %v7552 = vpop.xlane.xlu0 %7551
        %7553 = vadd.xlane.f32.xlu0 %v7541
        %v7554 = vpop.xlane.xlu0 %7553
        %7555 = vadd.xlane.f32.xlu0 %v7542
        %v7556 = vpop.xlane.xlu0 %7555
        %7557 = vadd.xlane.f32.xlu0 %v7543
        %v7558 = vpop.xlane.xlu0 %7557
        %7559 = vadd.xlane.f32.xlu0 %v7544
        %v7560 = vpop.xlane.xlu0 %7559
        %v7561 = vadd.f32 %v7520, %v7546
        %v7562 = vadd.f32 %v7521, %v7548
        %v7563 = vadd.f32 %v7522, %v7550
        %v7564 = vadd.f32 %v7523, %v7552
        %v7565 = vadd.f32 %v7524, %v7554
        %v7566 = vadd.f32 %v7525, %v7556
        %v7567 = vadd.f32 %v7526, %v7558
        %v7568 = vadd.f32 %v7527, %v7560
        %s7569 = sadd.s32 0, 192
        %s7570 = sshra.s32 %s7569, 4
        %s7571 = sand.u32 %s7569, 15
        %s7572 = smul.addr %s7570, 8
        %s7573 = scalar_lea.vmem [#allocation3], %s7572
        %v7574 = vld [vmem:[%s7573] sm:$0xff]
        %v7575 = vld [vmem:[%s7573 + $0x8] sm:$0xff]
        %v7576 = vld [vmem:[%s7573 + $0x10] sm:$0xff]
        %v7577 = vld [vmem:[%s7573 + $0x18] sm:$0xff]
        %v7578 = vunpack.c.l.bf16 %v7574
        %v7579 = vunpack.c.h.bf16 %v7574
        %v7580 = vunpack.c.l.bf16 %v7575
        %v7581 = vunpack.c.h.bf16 %v7575
        %v7582 = vunpack.c.l.bf16 %v7576
        %v7583 = vunpack.c.h.bf16 %v7576
        %v7584 = vunpack.c.l.bf16 %v7577
        %v7585 = vunpack.c.h.bf16 %v7577
        %7586 = vadd.xlane.f32.xlu0 %v7578
        %v7587 = vpop.xlane.xlu0 %7586
        %7588 = vadd.xlane.f32.xlu0 %v7579
        %v7589 = vpop.xlane.xlu0 %7588
        %7590 = vadd.xlane.f32.xlu0 %v7580
        %v7591 = vpop.xlane.xlu0 %7590
        %7592 = vadd.xlane.f32.xlu0 %v7581
        %v7593 = vpop.xlane.xlu0 %7592
        %7594 = vadd.xlane.f32.xlu0 %v7582
        %v7595 = vpop.xlane.xlu0 %7594
        %7596 = vadd.xlane.f32.xlu0 %v7583
        %v7597 = vpop.xlane.xlu0 %7596
        %7598 = vadd.xlane.f32.xlu0 %v7584
        %v7599 = vpop.xlane.xlu0 %7598
        %7600 = vadd.xlane.f32.xlu0 %v7585
        %v7601 = vpop.xlane.xlu0 %7600
        %v7602 = vadd.f32 %v7561, %v7587
        %v7603 = vadd.f32 %v7562, %v7589
        %v7604 = vadd.f32 %v7563, %v7591
        %v7605 = vadd.f32 %v7564, %v7593
        %v7606 = vadd.f32 %v7565, %v7595
        %v7607 = vadd.f32 %v7566, %v7597
        %v7608 = vadd.f32 %v7567, %v7599
        %v7609 = vadd.f32 %v7568, %v7601
        %v7610 = vmul.f32 %v7602, 0.00390625
        %v7611 = vmul.f32 %v7603, 0.00390625
        %v7612 = vmul.f32 %v7604, 0.00390625
        %v7613 = vmul.f32 %v7605, 0.00390625
        %v7614 = vmul.f32 %v7606, 0.00390625
        %v7615 = vmul.f32 %v7607, 0.00390625
        %v7616 = vmul.f32 %v7608, 0.00390625
        %v7617 = vmul.f32 %v7609, 0.00390625
        %v7618 = vsub.f32 %v7455, %v7610
        %v7619 = vsub.f32 %v7456, %v7611
        %v7620 = vsub.f32 %v7457, %v7612
        %v7621 = vsub.f32 %v7458, %v7613
        %v7622 = vsub.f32 %v7459, %v7614
        %v7623 = vsub.f32 %v7460, %v7615
        %v7624 = vsub.f32 %v7461, %v7616
        %v7625 = vsub.f32 %v7462, %v7617
        %v7626 = vsel %vm7450, 1, 0
        %vm7627 = vcmp.eq.s32.totalorder %v7626, 1
        %v7628 = vsel %vm7627, %v7618, 0.0
        %v7629 = vsel %vm7627, %v7619, 0.0
        %v7630 = vsel %vm7627, %v7620, 0.0
        %v7631 = vsel %vm7627, %v7621, 0.0
        %v7632 = vsel %vm7627, %v7622, 0.0
        %v7633 = vsel %vm7627, %v7623, 0.0
        %v7634 = vsel %vm7627, %v7624, 0.0
        %v7635 = vsel %vm7627, %v7625, 0.0
        %v7636 = vmul.f32 %v7628, %v7628
        %v7637 = vmul.f32 %v7629, %v7629
        %v7638 = vmul.f32 %v7630, %v7630
        %v7639 = vmul.f32 %v7631, %v7631
        %v7640 = vmul.f32 %v7632, %v7632
        %v7641 = vmul.f32 %v7633, %v7633
        %v7642 = vmul.f32 %v7634, %v7634
        %v7643 = vmul.f32 %v7635, %v7635
        %7644 = vadd.xlane.f32.xlu0 %v7636
        %v7645 = vpop.xlane.xlu0 %7644
        %7646 = vadd.xlane.f32.xlu0 %v7637
        %v7647 = vpop.xlane.xlu0 %7646
        %7648 = vadd.xlane.f32.xlu0 %v7638
        %v7649 = vpop.xlane.xlu0 %7648
        %7650 = vadd.xlane.f32.xlu0 %v7639
        %v7651 = vpop.xlane.xlu0 %7650
        %7652 = vadd.xlane.f32.xlu0 %v7640
        %v7653 = vpop.xlane.xlu0 %7652
        %7654 = vadd.xlane.f32.xlu0 %v7641
        %v7655 = vpop.xlane.xlu0 %7654
        %7656 = vadd.xlane.f32.xlu0 %v7642
        %v7657 = vpop.xlane.xlu0 %7656
        %7658 = vadd.xlane.f32.xlu0 %v7643
        %v7659 = vpop.xlane.xlu0 %7658
        %v7660 = vadd.f32 %v7645, 0.0
        %v7661 = vadd.f32 %v7647, 0.0
        %v7662 = vadd.f32 %v7649, 0.0
        %v7663 = vadd.f32 %v7651, 0.0
        %v7664 = vadd.f32 %v7653, 0.0
        %v7665 = vadd.f32 %v7655, 0.0
        %v7666 = vadd.f32 %v7657, 0.0
        %v7667 = vadd.f32 %v7659, 0.0
        %v7668 = vsub.f32 %v7496, %v7610
        %v7669 = vsub.f32 %v7497, %v7611
        %v7670 = vsub.f32 %v7498, %v7612
        %v7671 = vsub.f32 %v7499, %v7613
        %v7672 = vsub.f32 %v7500, %v7614
        %v7673 = vsub.f32 %v7501, %v7615
        %v7674 = vsub.f32 %v7502, %v7616
        %v7675 = vsub.f32 %v7503, %v7617
        %v7676 = vsel %vm7627, %v7668, 0.0
        %v7677 = vsel %vm7627, %v7669, 0.0
        %v7678 = vsel %vm7627, %v7670, 0.0
        %v7679 = vsel %vm7627, %v7671, 0.0
        %v7680 = vsel %vm7627, %v7672, 0.0
        %v7681 = vsel %vm7627, %v7673, 0.0
        %v7682 = vsel %vm7627, %v7674, 0.0
        %v7683 = vsel %vm7627, %v7675, 0.0
        %v7684 = vmul.f32 %v7676, %v7676
        %v7685 = vmul.f32 %v7677, %v7677
        %v7686 = vmul.f32 %v7678, %v7678
        %v7687 = vmul.f32 %v7679, %v7679
        %v7688 = vmul.f32 %v7680, %v7680
        %v7689 = vmul.f32 %v7681, %v7681
        %v7690 = vmul.f32 %v7682, %v7682
        %v7691 = vmul.f32 %v7683, %v7683
        %7692 = vadd.xlane.f32.xlu0 %v7684
        %v7693 = vpop.xlane.xlu0 %7692
        %7694 = vadd.xlane.f32.xlu0 %v7685
        %v7695 = vpop.xlane.xlu0 %7694
        %7696 = vadd.xlane.f32.xlu0 %v7686
        %v7697 = vpop.xlane.xlu0 %7696
        %7698 = vadd.xlane.f32.xlu0 %v7687
        %v7699 = vpop.xlane.xlu0 %7698
        %7700 = vadd.xlane.f32.xlu0 %v7688
        %v7701 = vpop.xlane.xlu0 %7700
        %7702 = vadd.xlane.f32.xlu0 %v7689
        %v7703 = vpop.xlane.xlu0 %7702
        %7704 = vadd.xlane.f32.xlu0 %v7690
        %v7705 = vpop.xlane.xlu0 %7704
        %7706 = vadd.xlane.f32.xlu0 %v7691
        %v7707 = vpop.xlane.xlu0 %7706
        %v7708 = vadd.f32 %v7660, %v7693
        %v7709 = vadd.f32 %v7661, %v7695
        %v7710 = vadd.f32 %v7662, %v7697
        %v7711 = vadd.f32 %v7663, %v7699
        %v7712 = vadd.f32 %v7664, %v7701
        %v7713 = vadd.f32 %v7665, %v7703
        %v7714 = vadd.f32 %v7666, %v7705
        %v7715 = vadd.f32 %v7667, %v7707
        %v7716 = vsub.f32 %v7537, %v7610
        %v7717 = vsub.f32 %v7538, %v7611
        %v7718 = vsub.f32 %v7539, %v7612
        %v7719 = vsub.f32 %v7540, %v7613
        %v7720 = vsub.f32 %v7541, %v7614
        %v7721 = vsub.f32 %v7542, %v7615
        %v7722 = vsub.f32 %v7543, %v7616
        %v7723 = vsub.f32 %v7544, %v7617
        %v7724 = vsel %vm7627, %v7716, 0.0
        %v7725 = vsel %vm7627, %v7717, 0.0
        %v7726 = vsel %vm7627, %v7718, 0.0
        %v7727 = vsel %vm7627, %v7719, 0.0
        %v7728 = vsel %vm7627, %v7720, 0.0
        %v7729 = vsel %vm7627, %v7721, 0.0
        %v7730 = vsel %vm7627, %v7722, 0.0
        %v7731 = vsel %vm7627, %v7723, 0.0
        %v7732 = vmul.f32 %v7724, %v7724
        %v7733 = vmul.f32 %v7725, %v7725
        %v7734 = vmul.f32 %v7726, %v7726
        %v7735 = vmul.f32 %v7727, %v7727
        %v7736 = vmul.f32 %v7728, %v7728
        %v7737 = vmul.f32 %v7729, %v7729
        %v7738 = vmul.f32 %v7730, %v7730
        %v7739 = vmul.f32 %v7731, %v7731
        %7740 = vadd.xlane.f32.xlu0 %v7732
        %v7741 = vpop.xlane.xlu0 %7740
        %7742 = vadd.xlane.f32.xlu0 %v7733
        %v7743 = vpop.xlane.xlu0 %7742
        %7744 = vadd.xlane.f32.xlu0 %v7734
        %v7745 = vpop.xlane.xlu0 %7744
        %7746 = vadd.xlane.f32.xlu0 %v7735
        %v7747 = vpop.xlane.xlu0 %7746
        %7748 = vadd.xlane.f32.xlu0 %v7736
        %v7749 = vpop.xlane.xlu0 %7748
        %7750 = vadd.xlane.f32.xlu0 %v7737
        %v7751 = vpop.xlane.xlu0 %7750
        %7752 = vadd.xlane.f32.xlu0 %v7738
        %v7753 = vpop.xlane.xlu0 %7752
        %7754 = vadd.xlane.f32.xlu0 %v7739
        %v7755 = vpop.xlane.xlu0 %7754
        %v7756 = vadd.f32 %v7708, %v7741
        %v7757 = vadd.f32 %v7709, %v7743
        %v7758 = vadd.f32 %v7710, %v7745
        %v7759 = vadd.f32 %v7711, %v7747
        %v7760 = vadd.f32 %v7712, %v7749
        %v7761 = vadd.f32 %v7713, %v7751
        %v7762 = vadd.f32 %v7714, %v7753
        %v7763 = vadd.f32 %v7715, %v7755
        %v7764 = vsub.f32 %v7578, %v7610
        %v7765 = vsub.f32 %v7579, %v7611
        %v7766 = vsub.f32 %v7580, %v7612
        %v7767 = vsub.f32 %v7581, %v7613
        %v7768 = vsub.f32 %v7582, %v7614
        %v7769 = vsub.f32 %v7583, %v7615
        %v7770 = vsub.f32 %v7584, %v7616
        %v7771 = vsub.f32 %v7585, %v7617
        %v7772 = vsel %vm7627, %v7764, 0.0
        %v7773 = vsel %vm7627, %v7765, 0.0
        %v7774 = vsel %vm7627, %v7766, 0.0
        %v7775 = vsel %vm7627, %v7767, 0.0
        %v7776 = vsel %vm7627, %v7768, 0.0
        %v7777 = vsel %vm7627, %v7769, 0.0
        %v7778 = vsel %vm7627, %v7770, 0.0
        %v7779 = vsel %vm7627, %v7771, 0.0
        %v7780 = vmul.f32 %v7772, %v7772
        %v7781 = vmul.f32 %v7773, %v7773
        %v7782 = vmul.f32 %v7774, %v7774
        %v7783 = vmul.f32 %v7775, %v7775
        %v7784 = vmul.f32 %v7776, %v7776
        %v7785 = vmul.f32 %v7777, %v7777
        %v7786 = vmul.f32 %v7778, %v7778
        %v7787 = vmul.f32 %v7779, %v7779
        %7788 = vadd.xlane.f32.xlu0 %v7780
        %v7789 = vpop.xlane.xlu0 %7788
        %7790 = vadd.xlane.f32.xlu0 %v7781
        %v7791 = vpop.xlane.xlu0 %7790
        %7792 = vadd.xlane.f32.xlu0 %v7782
        %v7793 = vpop.xlane.xlu0 %7792
        %7794 = vadd.xlane.f32.xlu0 %v7783
        %v7795 = vpop.xlane.xlu0 %7794
        %7796 = vadd.xlane.f32.xlu0 %v7784
        %v7797 = vpop.xlane.xlu0 %7796
        %7798 = vadd.xlane.f32.xlu0 %v7785
        %v7799 = vpop.xlane.xlu0 %7798
        %7800 = vadd.xlane.f32.xlu0 %v7786
        %v7801 = vpop.xlane.xlu0 %7800
        %7802 = vadd.xlane.f32.xlu0 %v7787
        %v7803 = vpop.xlane.xlu0 %7802
        %v7804 = vadd.f32 %v7756, %v7789
        %v7805 = vadd.f32 %v7757, %v7791
        %v7806 = vadd.f32 %v7758, %v7793
        %v7807 = vadd.f32 %v7759, %v7795
        %v7808 = vadd.f32 %v7760, %v7797
        %v7809 = vadd.f32 %v7761, %v7799
        %v7810 = vadd.f32 %v7762, %v7801
        %v7811 = vadd.f32 %v7763, %v7803
        %v7812 = vmul.f32 %v7804, 0.00390625
        %v7813 = vmul.f32 %v7805, 0.00390625
        %v7814 = vmul.f32 %v7806, 0.00390625
        %v7815 = vmul.f32 %v7807, 0.00390625
        %v7816 = vmul.f32 %v7808, 0.00390625
        %v7817 = vmul.f32 %v7809, 0.00390625
        %v7818 = vmul.f32 %v7810, 0.00390625
        %v7819 = vmul.f32 %v7811, 0.00390625
        %v7820 = vadd.f32 %v7812, 1e-05
        %v7821 = vadd.f32 %v7813, 1e-05
        %v7822 = vadd.f32 %v7814, 1e-05
        %v7823 = vadd.f32 %v7815, 1e-05
        %v7824 = vadd.f32 %v7816, 1e-05
        %v7825 = vadd.f32 %v7817, 1e-05
        %v7826 = vadd.f32 %v7818, 1e-05
        %v7827 = vadd.f32 %v7819, 1e-05
        %v7828 = vrsqrt.pop %v7820
        %v7829 = vrsqrt.pop %v7821
        %v7830 = vrsqrt.pop %v7822
        %v7831 = vrsqrt.pop %v7823
        %v7832 = vrsqrt.pop %v7824
        %v7833 = vrsqrt.pop %v7825
        %v7834 = vrsqrt.pop %v7826
        %v7835 = vrsqrt.pop %v7827
        %v7836 = vmul.f32 %v7618, %v7828
        %v7837 = vmul.f32 %v7619, %v7829
        %v7838 = vmul.f32 %v7620, %v7830
        %v7839 = vmul.f32 %v7621, %v7831
        %v7840 = vmul.f32 %v7622, %v7832
        %v7841 = vmul.f32 %v7623, %v7833
        %v7842 = vmul.f32 %v7624, %v7834
        %v7843 = vmul.f32 %v7625, %v7835
        %v7844 = vpack.c.bf16 %v7837, %v7836
        %v7845 = vpack.c.bf16 %v7839, %v7838
        %v7846 = vpack.c.bf16 %v7841, %v7840
        %v7847 = vpack.c.bf16 %v7843, %v7842
        %s7848 = scalar_lea.vmem %s2, 256
        %v7849 = vld [vmem:[%s7848] sm:$0xf]
        %v7850 = vld [vmem:[%s7848 + $0x4] sm:$0xf]
        %v7851 = vld [vmem:[%s7848 + $0x8] sm:$0xf]
        %v7852 = vld [vmem:[%s7848 + $0xc] sm:$0xf]
        %v7853 = vld [vmem:[%s7848 + $0x10] sm:$0xf]
        %v7854 = vld [vmem:[%s7848 + $0x14] sm:$0xf]
        %v7855 = vld [vmem:[%s7848 + $0x18] sm:$0xf]
        %v7856 = vld [vmem:[%s7848 + $0x1c] sm:$0xf]
        %v7857 = vld [vmem:[%s7848 + $0x20] sm:$0xf]
        %v7858 = vld [vmem:[%s7848 + $0x24] sm:$0xf]
        %v7859 = vld [vmem:[%s7848 + $0x28] sm:$0xf]
        %v7860 = vld [vmem:[%s7848 + $0x2c] sm:$0xf]
        %v7861 = vld [vmem:[%s7848 + $0x30] sm:$0xf]
        %v7862 = vld [vmem:[%s7848 + $0x34] sm:$0xf]
        %v7863 = vld [vmem:[%s7848 + $0x38] sm:$0xf]
        %v7864 = vld [vmem:[%s7848 + $0x3c] sm:$0xf]
        %v7865 = vmul.f32 %v7668, %v7828
        %v7866 = vmul.f32 %v7669, %v7829
        %v7867 = vmul.f32 %v7670, %v7830
        %v7868 = vmul.f32 %v7671, %v7831
        %v7869 = vmul.f32 %v7672, %v7832
        %v7870 = vmul.f32 %v7673, %v7833
        %v7871 = vmul.f32 %v7674, %v7834
        %v7872 = vmul.f32 %v7675, %v7835
        %v7873 = vpack.c.bf16 %v7866, %v7865
        %v7874 = vpack.c.bf16 %v7868, %v7867
        %v7875 = vpack.c.bf16 %v7870, %v7869
        %v7876 = vpack.c.bf16 %v7872, %v7871
        %v7877 = vld [vmem:[%s7848 + $0x40] sm:$0xf]
        %v7878 = vld [vmem:[%s7848 + $0x44] sm:$0xf]
        %v7879 = vld [vmem:[%s7848 + $0x48] sm:$0xf]
        %v7880 = vld [vmem:[%s7848 + $0x4c] sm:$0xf]
        %v7881 = vld [vmem:[%s7848 + $0x50] sm:$0xf]
        %v7882 = vld [vmem:[%s7848 + $0x54] sm:$0xf]
        %v7883 = vld [vmem:[%s7848 + $0x58] sm:$0xf]
        %v7884 = vld [vmem:[%s7848 + $0x5c] sm:$0xf]
        %v7885 = vld [vmem:[%s7848 + $0x60] sm:$0xf]
        %v7886 = vld [vmem:[%s7848 + $0x64] sm:$0xf]
        %v7887 = vld [vmem:[%s7848 + $0x68] sm:$0xf]
        %v7888 = vld [vmem:[%s7848 + $0x6c] sm:$0xf]
        %v7889 = vld [vmem:[%s7848 + $0x70] sm:$0xf]
        %v7890 = vld [vmem:[%s7848 + $0x74] sm:$0xf]
        %v7891 = vld [vmem:[%s7848 + $0x78] sm:$0xf]
        %v7892 = vld [vmem:[%s7848 + $0x7c] sm:$0xf]
        %v7909 = vunpack.c.l.b16 %v7877
        %v7910 = vunpack.c.l.b16 %v7878
        %v7911 = vunpack.c.l.b16 %v7879
        %v7912 = vunpack.c.l.b16 %v7880
        %v7913 = vunpack.c.l.b16 %v7881
        %v7914 = vunpack.c.l.b16 %v7882
        %v7915 = vunpack.c.l.b16 %v7883
        %v7916 = vunpack.c.l.b16 %v7884
        %v7917 = vunpack.c.l.b16 %v7885
        %v7918 = vunpack.c.l.b16 %v7886
        %v7919 = vunpack.c.l.b16 %v7887
        %v7920 = vunpack.c.l.b16 %v7888
        %v7921 = vunpack.c.l.b16 %v7889
        %v7922 = vunpack.c.l.b16 %v7890
        %v7923 = vunpack.c.l.b16 %v7891
        %v7924 = vunpack.c.l.b16 %v7892
        %v7925 = vpack.c.b16 %v7910, %v7909
        %v7926 = vpack.c.b16 %v7912, %v7911
        %v7927 = vpack.c.b16 %v7914, %v7913
        %v7928 = vpack.c.b16 %v7916, %v7915
        %v7929 = vpack.c.b16 %v7918, %v7917
        %v7930 = vpack.c.b16 %v7920, %v7919
        %v7931 = vpack.c.b16 %v7922, %v7921
        %v7932 = vpack.c.b16 %v7924, %v7923
        %7941 = vmatprep.subr.bf16.mxu0 0
        %7942 = vmatpush1.bf16.msra.mxu0 %v7925
        %7943 = vmatprep.subr.bf16.mxu0 0
        %7944 = vmatpush1.bf16.msra.mxu0 %v7926
        %7945 = vmatprep.subr.bf16.mxu0 0
        %7946 = vmatpush1.bf16.msra.mxu0 %v7927
        %7947 = vmatprep.subr.bf16.mxu0 0
        %7948 = vmatpush1.bf16.msra.mxu0 %v7928
        %7949 = vmatprep.subr.bf16.mxu0 0
        %7950 = vmatpush1.bf16.msra.mxu0 %v7929
        %7951 = vmatprep.subr.bf16.mxu0 0
        %7952 = vmatpush1.bf16.msra.mxu0 %v7930
        %7953 = vmatprep.subr.bf16.mxu0 0
        %7954 = vmatpush1.bf16.msra.mxu0 %v7931
        %7955 = vmatprep.subr.bf16.mxu0 0
        %7956 = vmatpush1.bf16.msra.mxu0 %v7932
        %7957 = vmatprep.subr.bf16.mxu0 0
        %7958 = vmatpush1.bf16.msra.mxu0 0
        %7959 = vmatprep.subr.bf16.mxu0 0
        %7960 = vmatpush1.bf16.msra.mxu0 0
        %7961 = vmatprep.subr.bf16.mxu0 0
        %7962 = vmatpush1.bf16.msra.mxu0 0
        %7963 = vmatprep.subr.bf16.mxu0 0
        %7964 = vmatpush1.bf16.msra.mxu0 0
        %7965 = vmatprep.subr.bf16.mxu0 0
        %7966 = vmatpush1.bf16.msra.mxu0 0
        %7967 = vmatprep.subr.bf16.mxu0 0
        %7968 = vmatpush1.bf16.msra.mxu0 0
        %7969 = vmatprep.subr.bf16.mxu0 0
        %7970 = vmatpush1.bf16.msra.mxu0 0
        %7971 = vmatprep.subr.bf16.mxu0 0
        %7972 = vmatpush1.bf16.msra.mxu0 0
        %7973 = vmatprep.mubr.bf16.mxu0 0
        %7974 = vmatmul.mubr.bf16.gmra.mrb[0].mxu0 %v7873
        %v7975 = vpop.f32.mrb[0].mxu0
        %v7976 = vadd.f32 0.0, %v7975
        %v7977 = vpop.f32.mrb[0].mxu0
        %v7978 = vpop.f32.mrb[0].mxu0
        %v7979 = vadd.f32 0.0, %v7978
        %v7980 = vpop.f32.mrb[0].mxu0
        %7981 = vmatprep.mubr.bf16.mxu0 0
        %7982 = vmatmul.mubr.bf16.gmra.mrb[0].mxu0 %v7874
        %v7983 = vpop.f32.mrb[0].mxu0
        %v7984 = vadd.f32 0.0, %v7983
        %v7985 = vpop.f32.mrb[0].mxu0
        %v7986 = vpop.f32.mrb[0].mxu0
        %v7987 = vadd.f32 0.0, %v7986
        %v7988 = vpop.f32.mrb[0].mxu0
        %7989 = vmatprep.mubr.bf16.mxu0 0
        %7990 = vmatmul.mubr.bf16.gmra.mrb[0].mxu0 %v7875
        %v7991 = vpop.f32.mrb[0].mxu0
        %v7992 = vadd.f32 0.0, %v7991
        %v7993 = vpop.f32.mrb[0].mxu0
        %v7994 = vpop.f32.mrb[0].mxu0
        %v7995 = vadd.f32 0.0, %v7994
        %v7996 = vpop.f32.mrb[0].mxu0
        %7997 = vmatprep.mubr.bf16.mxu0 0
        %7998 = vmatmul.mubr.bf16.gmra.mrb[0].mxu0 %v7876
        %v7999 = vpop.f32.mrb[0].mxu0
        %v8000 = vadd.f32 0.0, %v7999
        %v8001 = vpop.f32.mrb[0].mxu0
        %v8002 = vpop.f32.mrb[0].mxu0
        %v8003 = vadd.f32 0.0, %v8002
        %v8004 = vpop.f32.mrb[0].mxu0
        %8005 = vdwg.mxu0
        %v8022 = vunpack.c.l.b16 %v7849
        %v8023 = vunpack.c.l.b16 %v7850
        %v8024 = vunpack.c.l.b16 %v7851
        %v8025 = vunpack.c.l.b16 %v7852
        %v8026 = vunpack.c.l.b16 %v7853
        %v8027 = vunpack.c.l.b16 %v7854
        %v8028 = vunpack.c.l.b16 %v7855
        %v8029 = vunpack.c.l.b16 %v7856
        %v8030 = vunpack.c.l.b16 %v7857
        %v8031 = vunpack.c.l.b16 %v7858
        %v8032 = vunpack.c.l.b16 %v7859
        %v8033 = vunpack.c.l.b16 %v7860
        %v8034 = vunpack.c.l.b16 %v7861
        %v8035 = vunpack.c.l.b16 %v7862
        %v8036 = vunpack.c.l.b16 %v7863
        %v8037 = vunpack.c.l.b16 %v7864
        %v8038 = vpack.c.b16 %v8023, %v8022
        %v8039 = vpack.c.b16 %v8025, %v8024
        %v8040 = vpack.c.b16 %v8027, %v8026
        %v8041 = vpack.c.b16 %v8029, %v8028
        %v8042 = vpack.c.b16 %v8031, %v8030
        %v8043 = vpack.c.b16 %v8033, %v8032
        %v8044 = vpack.c.b16 %v8035, %v8034
        %v8045 = vpack.c.b16 %v8037, %v8036
        %8054 = vmatprep.subr.bf16.mxu0 0
        %8055 = vmatpush1.bf16.msra.mxu0 %v8038
        %8056 = vmatprep.subr.bf16.mxu0 0
        %8057 = vmatpush1.bf16.msra.mxu0 %v8039
        %8058 = vmatprep.subr.bf16.mxu0 0
        %8059 = vmatpush1.bf16.msra.mxu0 %v8040
        %8060 = vmatprep.subr.bf16.mxu0 0
        %8061 = vmatpush1.bf16.msra.mxu0 %v8041
        %8062 = vmatprep.subr.bf16.mxu0 0
        %8063 = vmatpush1.bf16.msra.mxu0 %v8042
        %8064 = vmatprep.subr.bf16.mxu0 0
        %8065 = vmatpush1.bf16.msra.mxu0 %v8043
        %8066 = vmatprep.subr.bf16.mxu0 0
        %8067 = vmatpush1.bf16.msra.mxu0 %v8044
        %8068 = vmatprep.subr.bf16.mxu0 0
        %8069 = vmatpush1.bf16.msra.mxu0 %v8045
        %8070 = vmatprep.subr.bf16.mxu0 0
        %8071 = vmatpush1.bf16.msra.mxu0 0
        %8072 = vmatprep.subr.bf16.mxu0 0
        %8073 = vmatpush1.bf16.msra.mxu0 0
        %8074 = vmatprep.subr.bf16.mxu0 0
        %8075 = vmatpush1.bf16.msra.mxu0 0
        %8076 = vmatprep.subr.bf16.mxu0 0
        %8077 = vmatpush1.bf16.msra.mxu0 0
        %8078 = vmatprep.subr.bf16.mxu0 0
        %8079 = vmatpush1.bf16.msra.mxu0 0
        %8080 = vmatprep.subr.bf16.mxu0 0
        %8081 = vmatpush1.bf16.msra.mxu0 0
        %8082 = vmatprep.subr.bf16.mxu0 0
        %8083 = vmatpush1.bf16.msra.mxu0 0
        %8084 = vmatprep.subr.bf16.mxu0 0
        %8085 = vmatpush1.bf16.msra.mxu0 0
        %8086 = vmatprep.mubr.bf16.mxu0 0
        %8087 = vmatmul.mubr.bf16.gmra.mrb[0].mxu0 %v7844
        %v8088 = vpop.f32.mrb[0].mxu0
        %v8089 = vadd.f32 %v7976, %v8088
        %v8090 = vpop.f32.mrb[0].mxu0
        %v8091 = vpop.f32.mrb[0].mxu0
        %v8092 = vadd.f32 %v7979, %v8091
        %v8093 = vpop.f32.mrb[0].mxu0
        %8094 = vmatprep.mubr.bf16.mxu0 0
        %8095 = vmatmul.mubr.bf16.gmra.mrb[0].mxu0 %v7845
        %v8096 = vpop.f32.mrb[0].mxu0
        %v8097 = vadd.f32 %v7984, %v8096
        %v8098 = vpop.f32.mrb[0].mxu0
        %v8099 = vpop.f32.mrb[0].mxu0
        %v8100 = vadd.f32 %v7987, %v8099
        %v8101 = vpop.f32.mrb[0].mxu0
        %8102 = vmatprep.mubr.bf16.mxu0 0
        %8103 = vmatmul.mubr.bf16.gmra.mrb[0].mxu0 %v7846
        %v8104 = vpop.f32.mrb[0].mxu0
        %v8105 = vadd.f32 %v7992, %v8104
        %v8106 = vpop.f32.mrb[0].mxu0
        %v8107 = vpop.f32.mrb[0].mxu0
        %v8108 = vadd.f32 %v7995, %v8107
        %v8109 = vpop.f32.mrb[0].mxu0
        %8110 = vmatprep.mubr.bf16.mxu0 0
        %8111 = vmatmul.mubr.bf16.gmra.mrb[0].mxu0 %v7847
        %v8112 = vpop.f32.mrb[0].mxu0
        %v8113 = vadd.f32 %v8000, %v8112
        %v8114 = vpop.f32.mrb[0].mxu0
        %v8115 = vpop.f32.mrb[0].mxu0
        %v8116 = vadd.f32 %v8003, %v8115
        %v8117 = vpop.f32.mrb[0].mxu0
        %8118 = vdwg.mxu0
        %v8119 = vmul.f32 %v7716, %v7828
        %v8120 = vmul.f32 %v7717, %v7829
        %v8121 = vmul.f32 %v7718, %v7830
        %v8122 = vmul.f32 %v7719, %v7831
        %v8123 = vmul.f32 %v7720, %v7832
        %v8124 = vmul.f32 %v7721, %v7833
        %v8125 = vmul.f32 %v7722, %v7834
        %v8126 = vmul.f32 %v7723, %v7835
        %v8127 = vpack.c.bf16 %v8120, %v8119
        %v8128 = vpack.c.bf16 %v8122, %v8121
        %v8129 = vpack.c.bf16 %v8124, %v8123
        %v8130 = vpack.c.bf16 %v8126, %v8125
        %v8131 = vld [vmem:[%s7848 + $0x80] sm:$0xf]
        %v8132 = vld [vmem:[%s7848 + $0x84] sm:$0xf]
        %v8133 = vld [vmem:[%s7848 + $0x88] sm:$0xf]
        %v8134 = vld [vmem:[%s7848 + $0x8c] sm:$0xf]
        %v8135 = vld [vmem:[%s7848 + $0x90] sm:$0xf]
        %v8136 = vld [vmem:[%s7848 + $0x94] sm:$0xf]
        %v8137 = vld [vmem:[%s7848 + $0x98] sm:$0xf]
        %v8138 = vld [vmem:[%s7848 + $0x9c] sm:$0xf]
        %v8139 = vld [vmem:[%s7848 + $0xa0] sm:$0xf]
        %v8140 = vld [vmem:[%s7848 + $0xa4] sm:$0xf]
        %v8141 = vld [vmem:[%s7848 + $0xa8] sm:$0xf]
        %v8142 = vld [vmem:[%s7848 + $0xac] sm:$0xf]
        %v8143 = vld [vmem:[%s7848 + $0xb0] sm:$0xf]
        %v8144 = vld [vmem:[%s7848 + $0xb4] sm:$0xf]
        %v8145 = vld [vmem:[%s7848 + $0xb8] sm:$0xf]
        %v8146 = vld [vmem:[%s7848 + $0xbc] sm:$0xf]
        %v8163 = vunpack.c.l.b16 %v8131
        %v8164 = vunpack.c.l.b16 %v8132
        %v8165 = vunpack.c.l.b16 %v8133
        %v8166 = vunpack.c.l.b16 %v8134
        %v8167 = vunpack.c.l.b16 %v8135
        %v8168 = vunpack.c.l.b16 %v8136
        %v8169 = vunpack.c.l.b16 %v8137
        %v8170 = vunpack.c.l.b16 %v8138
        %v8171 = vunpack.c.l.b16 %v8139
        %v8172 = vunpack.c.l.b16 %v8140
        %v8173 = vunpack.c.l.b16 %v8141
        %v8174 = vunpack.c.l.b16 %v8142
        %v8175 = vunpack.c.l.b16 %v8143
        %v8176 = vunpack.c.l.b16 %v8144
        %v8177 = vunpack.c.l.b16 %v8145
        %v8178 = vunpack.c.l.b16 %v8146
        %v8179 = vpack.c.b16 %v8164, %v8163
        %v8180 = vpack.c.b16 %v8166, %v8165
        %v8181 = vpack.c.b16 %v8168, %v8167
        %v8182 = vpack.c.b16 %v8170, %v8169
        %v8183 = vpack.c.b16 %v8172, %v8171
        %v8184 = vpack.c.b16 %v8174, %v8173
        %v8185 = vpack.c.b16 %v8176, %v8175
        %v8186 = vpack.c.b16 %v8178, %v8177
        %8195 = vmatprep.subr.bf16.mxu0 0
        %8196 = vmatpush1.bf16.msra.mxu0 %v8179
        %8197 = vmatprep.subr.bf16.mxu0 0
        %8198 = vmatpush1.bf16.msra.mxu0 %v8180
        %8199 = vmatprep.subr.bf16.mxu0 0
        %8200 = vmatpush1.bf16.msra.mxu0 %v8181
        %8201 = vmatprep.subr.bf16.mxu0 0
        %8202 = vmatpush1.bf16.msra.mxu0 %v8182
        %8203 = vmatprep.subr.bf16.mxu0 0
        %8204 = vmatpush1.bf16.msra.mxu0 %v8183
        %8205 = vmatprep.subr.bf16.mxu0 0
        %8206 = vmatpush1.bf16.msra.mxu0 %v8184
        %8207 = vmatprep.subr.bf16.mxu0 0
        %8208 = vmatpush1.bf16.msra.mxu0 %v8185
        %8209 = vmatprep.subr.bf16.mxu0 0
        %8210 = vmatpush1.bf16.msra.mxu0 %v8186
        %8211 = vmatprep.subr.bf16.mxu0 0
        %8212 = vmatpush1.bf16.msra.mxu0 0
        %8213 = vmatprep.subr.bf16.mxu0 0
        %8214 = vmatpush1.bf16.msra.mxu0 0
        %8215 = vmatprep.subr.bf16.mxu0 0
        %8216 = vmatpush1.bf16.msra.mxu0 0
        %8217 = vmatprep.subr.bf16.mxu0 0
        %8218 = vmatpush1.bf16.msra.mxu0 0
        %8219 = vmatprep.subr.bf16.mxu0 0
        %8220 = vmatpush1.bf16.msra.mxu0 0
        %8221 = vmatprep.subr.bf16.mxu0 0
        %8222 = vmatpush1.bf16.msra.mxu0 0
        %8223 = vmatprep.subr.bf16.mxu0 0
        %8224 = vmatpush1.bf16.msra.mxu0 0
        %8225 = vmatprep.subr.bf16.mxu0 0
        %8226 = vmatpush1.bf16.msra.mxu0 0
        %8227 = vmatprep.mubr.bf16.mxu0 0
        %8228 = vmatmul.mubr.bf16.gmra.mrb[0].mxu0 %v8127
        %v8229 = vpop.f32.mrb[0].mxu0
        %v8230 = vadd.f32 0.0, %v8229
        %v8231 = vpop.f32.mrb[0].mxu0
        %v8232 = vpop.f32.mrb[0].mxu0
        %v8233 = vadd.f32 0.0, %v8232
        %v8234 = vpop.f32.mrb[0].mxu0
        %8235 = vmatprep.mubr.bf16.mxu0 0
        %8236 = vmatmul.mubr.bf16.gmra.mrb[0].mxu0 %v8128
        %v8237 = vpop.f32.mrb[0].mxu0
        %v8238 = vadd.f32 0.0, %v8237
        %v8239 = vpop.f32.mrb[0].mxu0
        %v8240 = vpop.f32.mrb[0].mxu0
        %v8241 = vadd.f32 0.0, %v8240
        %v8242 = vpop.f32.mrb[0].mxu0
        %8243 = vmatprep.mubr.bf16.mxu0 0
        %8244 = vmatmul.mubr.bf16.gmra.mrb[0].mxu0 %v8129
        %v8245 = vpop.f32.mrb[0].mxu0
        %v8246 = vadd.f32 0.0, %v8245
        %v8247 = vpop.f32.mrb[0].mxu0
        %v8248 = vpop.f32.mrb[0].mxu0
        %v8249 = vadd.f32 0.0, %v8248
        %v8250 = vpop.f32.mrb[0].mxu0
        %8251 = vmatprep.mubr.bf16.mxu0 0
        %8252 = vmatmul.mubr.bf16.gmra.mrb[0].mxu0 %v8130
        %v8253 = vpop.f32.mrb[0].mxu0
        %v8254 = vadd.f32 0.0, %v8253
        %v8255 = vpop.f32.mrb[0].mxu0
        %v8256 = vpop.f32.mrb[0].mxu0
        %v8257 = vadd.f32 0.0, %v8256
        %v8258 = vpop.f32.mrb[0].mxu0
        %8259 = vdwg.mxu0
        %v8260 = vadd.f32 %v8089, %v8230
        %v8261 = vadd.f32 %v8092, %v8233
        %v8262 = vadd.f32 %v8097, %v8238
        %v8263 = vadd.f32 %v8100, %v8241
        %v8264 = vadd.f32 %v8105, %v8246
        %v8265 = vadd.f32 %v8108, %v8249
        %v8266 = vadd.f32 %v8113, %v8254
        %v8267 = vadd.f32 %v8116, %v8257
        %v8268 = vmul.f32 %v7764, %v7828
        %v8269 = vmul.f32 %v7765, %v7829
        %v8270 = vmul.f32 %v7766, %v7830
        %v8271 = vmul.f32 %v7767, %v7831
        %v8272 = vmul.f32 %v7768, %v7832
        %v8273 = vmul.f32 %v7769, %v7833
        %v8274 = vmul.f32 %v7770, %v7834
        %v8275 = vmul.f32 %v7771, %v7835
        %v8276 = vpack.c.bf16 %v8269, %v8268
        %v8277 = vpack.c.bf16 %v8271, %v8270
        %v8278 = vpack.c.bf16 %v8273, %v8272
        %v8279 = vpack.c.bf16 %v8275, %v8274
        %v8280 = vld [vmem:[%s7848 + $0xc0] sm:$0xf]
        %v8281 = vld [vmem:[%s7848 + $0xc4] sm:$0xf]
        %v8282 = vld [vmem:[%s7848 + $0xc8] sm:$0xf]
        %v8283 = vld [vmem:[%s7848 + $0xcc] sm:$0xf]
        %v8284 = vld [vmem:[%s7848 + $0xd0] sm:$0xf]
        %v8285 = vld [vmem:[%s7848 + $0xd4] sm:$0xf]
        %v8286 = vld [vmem:[%s7848 + $0xd8] sm:$0xf]
        %v8287 = vld [vmem:[%s7848 + $0xdc] sm:$0xf]
        %v8288 = vld [vmem:[%s7848 + $0xe0] sm:$0xf]
        %v8289 = vld [vmem:[%s7848 + $0xe4] sm:$0xf]
        %v8290 = vld [vmem:[%s7848 + $0xe8] sm:$0xf]
        %v8291 = vld [vmem:[%s7848 + $0xec] sm:$0xf]
        %v8292 = vld [vmem:[%s7848 + $0xf0] sm:$0xf]
        %v8293 = vld [vmem:[%s7848 + $0xf4] sm:$0xf]
        %v8294 = vld [vmem:[%s7848 + $0xf8] sm:$0xf]
        %v8295 = vld [vmem:[%s7848 + $0xfc] sm:$0xf]
        %v8312 = vunpack.c.l.b16 %v8280
        %v8313 = vunpack.c.l.b16 %v8281
        %v8314 = vunpack.c.l.b16 %v8282
        %v8315 = vunpack.c.l.b16 %v8283
        %v8316 = vunpack.c.l.b16 %v8284
        %v8317 = vunpack.c.l.b16 %v8285
        %v8318 = vunpack.c.l.b16 %v8286
        %v8319 = vunpack.c.l.b16 %v8287
        %v8320 = vunpack.c.l.b16 %v8288
        %v8321 = vunpack.c.l.b16 %v8289
        %v8322 = vunpack.c.l.b16 %v8290
        %v8323 = vunpack.c.l.b16 %v8291
        %v8324 = vunpack.c.l.b16 %v8292
        %v8325 = vunpack.c.l.b16 %v8293
        %v8326 = vunpack.c.l.b16 %v8294
        %v8327 = vunpack.c.l.b16 %v8295
        %v8328 = vpack.c.b16 %v8313, %v8312
        %v8329 = vpack.c.b16 %v8315, %v8314
        %v8330 = vpack.c.b16 %v8317, %v8316
        %v8331 = vpack.c.b16 %v8319, %v8318
        %v8332 = vpack.c.b16 %v8321, %v8320
        %v8333 = vpack.c.b16 %v8323, %v8322
        %v8334 = vpack.c.b16 %v8325, %v8324
        %v8335 = vpack.c.b16 %v8327, %v8326
        %8344 = vmatprep.subr.bf16.mxu0 0
        %8345 = vmatpush1.bf16.msra.mxu0 %v8328
        %8346 = vmatprep.subr.bf16.mxu0 0
        %8347 = vmatpush1.bf16.msra.mxu0 %v8329
        %8348 = vmatprep.subr.bf16.mxu0 0
        %8349 = vmatpush1.bf16.msra.mxu0 %v8330
        %8350 = vmatprep.subr.bf16.mxu0 0
        %8351 = vmatpush1.bf16.msra.mxu0 %v8331
        %8352 = vmatprep.subr.bf16.mxu0 0
        %8353 = vmatpush1.bf16.msra.mxu0 %v8332
        %8354 = vmatprep.subr.bf16.mxu0 0
        %8355 = vmatpush1.bf16.msra.mxu0 %v8333
        %8356 = vmatprep.subr.bf16.mxu0 0
        %8357 = vmatpush1.bf16.msra.mxu0 %v8334
        %8358 = vmatprep.subr.bf16.mxu0 0
        %8359 = vmatpush1.bf16.msra.mxu0 %v8335
        %8360 = vmatprep.subr.bf16.mxu0 0
        %8361 = vmatpush1.bf16.msra.mxu0 0
        %8362 = vmatprep.subr.bf16.mxu0 0
        %8363 = vmatpush1.bf16.msra.mxu0 0
        %8364 = vmatprep.subr.bf16.mxu0 0
        %8365 = vmatpush1.bf16.msra.mxu0 0
        %8366 = vmatprep.subr.bf16.mxu0 0
        %8367 = vmatpush1.bf16.msra.mxu0 0
        %8368 = vmatprep.subr.bf16.mxu0 0
        %8369 = vmatpush1.bf16.msra.mxu0 0
        %8370 = vmatprep.subr.bf16.mxu0 0
        %8371 = vmatpush1.bf16.msra.mxu0 0
        %8372 = vmatprep.subr.bf16.mxu0 0
        %8373 = vmatpush1.bf16.msra.mxu0 0
        %8374 = vmatprep.subr.bf16.mxu0 0
        %8375 = vmatpush1.bf16.msra.mxu0 0
        %8376 = vmatprep.mubr.bf16.mxu0 0
        %8377 = vmatmul.mubr.bf16.gmra.mrb[0].mxu0 %v8276
        %v8378 = vpop.f32.mrb[0].mxu0
        %v8379 = vadd.f32 0.0, %v8378
        %v8380 = vpop.f32.mrb[0].mxu0
        %v8381 = vpop.f32.mrb[0].mxu0
        %v8382 = vadd.f32 0.0, %v8381
        %v8383 = vpop.f32.mrb[0].mxu0
        %8384 = vmatprep.mubr.bf16.mxu0 0
        %8385 = vmatmul.mubr.bf16.gmra.mrb[0].mxu0 %v8277
        %v8386 = vpop.f32.mrb[0].mxu0
        %v8387 = vadd.f32 0.0, %v8386
        %v8388 = vpop.f32.mrb[0].mxu0
        %v8389 = vpop.f32.mrb[0].mxu0
        %v8390 = vadd.f32 0.0, %v8389
        %v8391 = vpop.f32.mrb[0].mxu0
        %8392 = vmatprep.mubr.bf16.mxu0 0
        %8393 = vmatmul.mubr.bf16.gmra.mrb[0].mxu0 %v8278
        %v8394 = vpop.f32.mrb[0].mxu0
        %v8395 = vadd.f32 0.0, %v8394
        %v8396 = vpop.f32.mrb[0].mxu0
        %v8397 = vpop.f32.mrb[0].mxu0
        %v8398 = vadd.f32 0.0, %v8397
        %v8399 = vpop.f32.mrb[0].mxu0
        %8400 = vmatprep.mubr.bf16.mxu0 0
        %8401 = vmatmul.mubr.bf16.gmra.mrb[0].mxu0 %v8279
        %v8402 = vpop.f32.mrb[0].mxu0
        %v8403 = vadd.f32 0.0, %v8402
        %v8404 = vpop.f32.mrb[0].mxu0
        %v8405 = vpop.f32.mrb[0].mxu0
        %v8406 = vadd.f32 0.0, %v8405
        %v8407 = vpop.f32.mrb[0].mxu0
        %8408 = vdwg.mxu0
        %v8409 = vadd.f32 %v8260, %v8379
        %v8410 = vadd.f32 %v8261, %v8382
        %v8411 = vadd.f32 %v8262, %v8387
        %v8412 = vadd.f32 %v8263, %v8390
        %v8413 = vadd.f32 %v8264, %v8395
        %v8414 = vadd.f32 %v8265, %v8398
        %v8415 = vadd.f32 %v8266, %v8403
        %v8416 = vadd.f32 %v8267, %v8406
        %v8417 = vlaneseq
        %v8418 = vshrl.u32 %v8417, 7
        %v8419 = vsub.s32 3, %v8418
        %v8420 = vrot.slane %v224, %v8419
        %v8421 = vadd.f32 %v8409, %v8420
        %v8422 = vadd.f32 %v8410, %v8420
        %v8423 = vadd.f32 %v8411, %v8420
        %v8424 = vadd.f32 %v8412, %v8420
        %v8425 = vadd.f32 %v8413, %v8420
        %v8426 = vadd.f32 %v8414, %v8420
        %v8427 = vadd.f32 %v8415, %v8420
        %v8428 = vadd.f32 %v8416, %v8420
        %v8429 = vpack.c.bf16 %v8422, %v8421
        %v8430 = vpack.c.bf16 %v8424, %v8423
        %v8431 = vpack.c.bf16 %v8426, %v8425
        %v8432 = vpack.c.bf16 %v8428, %v8427
        %8433 = vst [vmem:[#allocation4] sm:$0xff] %v8429
        %8434 = vst [vmem:[#allocation4 + $0x8] sm:$0xff] %v8430
        %8435 = vst [vmem:[#allocation4 + $0x10] sm:$0xff] %v8431
        %8436 = vst [vmem:[#allocation4 + $0x18] sm:$0xff] %v8432
        %vm8437 = vcmp.lt.s32.totalorder %v242, 96
        %v8438 = vld [vmem:[#allocation4] sm:$0xff]
        %v8439 = vunpack.c.l.bf16 %v8438
        %v8440 = vunpack.c.h.bf16 %v8438
        %8441 = vadd.xlane.f32.xlu0 %v8439
        %v8442 = vpop.xlane.xlu0 %8441
        %8443 = vadd.xlane.f32.xlu0 %v8440
        %v8444 = vpop.xlane.xlu0 %8443
        %v8445 = vadd.f32 %v8442, 0.0
        %v8446 = vadd.f32 %v8444, 0.0
        %s8447 = sadd.s32 0, 16
        %s8448 = sshra.s32 %s8447, 4
        %s8449 = sand.u32 %s8447, 15
        %s8450 = smul.addr %s8448, 8
        %s8451 = scalar_lea.vmem [#allocation4], %s8450
        %v8452 = vld [vmem:[%s8451] sm:$0xff]
        %v8453 = vunpack.c.l.bf16 %v8452
        %v8454 = vunpack.c.h.bf16 %v8452
        %8455 = vadd.xlane.f32.xlu0 %v8453
        %v8456 = vpop.xlane.xlu0 %8455
        %8457 = vadd.xlane.f32.xlu0 %v8454
        %v8458 = vpop.xlane.xlu0 %8457
        %v8459 = vadd.f32 %v8445, %v8456
        %v8460 = vadd.f32 %v8446, %v8458
        %s8461 = sadd.s32 0, 32
        %s8462 = sshra.s32 %s8461, 4
        %s8463 = sand.u32 %s8461, 15
        %s8464 = smul.addr %s8462, 8
        %s8465 = scalar_lea.vmem [#allocation4], %s8464
        %v8466 = vld [vmem:[%s8465] sm:$0xff]
        %v8467 = vunpack.c.l.bf16 %v8466
        %v8468 = vunpack.c.h.bf16 %v8466
        %8469 = vadd.xlane.f32.xlu0 %v8467
        %v8470 = vpop.xlane.xlu0 %8469
        %8471 = vadd.xlane.f32.xlu0 %v8468
        %v8472 = vpop.xlane.xlu0 %8471
        %v8473 = vadd.f32 %v8459, %v8470
        %v8474 = vadd.f32 %v8460, %v8472
        %s8475 = sadd.s32 0, 48
        %s8476 = sshra.s32 %s8475, 4
        %s8477 = sand.u32 %s8475, 15
        %s8478 = smul.addr %s8476, 8
        %s8479 = scalar_lea.vmem [#allocation4], %s8478
        %v8480 = vld [vmem:[%s8479] sm:$0xff]
        %v8481 = vunpack.c.l.bf16 %v8480
        %v8482 = vunpack.c.h.bf16 %v8480
        %8483 = vadd.xlane.f32.xlu0 %v8481
        %v8484 = vpop.xlane.xlu0 %8483
        %8485 = vadd.xlane.f32.xlu0 %v8482
        %v8486 = vpop.xlane.xlu0 %8485
        %v8487 = vadd.f32 %v8473, %v8484
        %v8488 = vadd.f32 %v8474, %v8486
        %v8489 = vmul.f32 %v8487, 0.0026041667
        %v8490 = vmul.f32 %v8488, 0.0026041667
        %v8491 = vsub.f32 %v8439, %v8489
        %v8492 = vsub.f32 %v8440, %v8490
        %v8493 = vsel %vm8437, 1, 0
        %vm8494 = vcmp.eq.s32.totalorder %v8493, 1
        %v8495 = vsel %vm8494, %v8491, 0.0
        %v8496 = vsel %vm8494, %v8492, 0.0
        %v8497 = vmul.f32 %v8495, %v8495
        %v8498 = vmul.f32 %v8496, %v8496
        %8499 = vadd.xlane.f32.xlu0 %v8497
        %v8500 = vpop.xlane.xlu0 %8499
        %8501 = vadd.xlane.f32.xlu0 %v8498
        %v8502 = vpop.xlane.xlu0 %8501
        %v8503 = vadd.f32 %v8500, 0.0
        %v8504 = vadd.f32 %v8502, 0.0
        %v8505 = vsub.f32 %v8453, %v8489
        %v8506 = vsub.f32 %v8454, %v8490
        %v8507 = vsel %vm8494, %v8505, 0.0
        %v8508 = vsel %vm8494, %v8506, 0.0
        %v8509 = vmul.f32 %v8507, %v8507
        %v8510 = vmul.f32 %v8508, %v8508
        %8511 = vadd.xlane.f32.xlu0 %v8509
        %v8512 = vpop.xlane.xlu0 %8511
        %8513 = vadd.xlane.f32.xlu0 %v8510
        %v8514 = vpop.xlane.xlu0 %8513
        %v8515 = vadd.f32 %v8503, %v8512
        %v8516 = vadd.f32 %v8504, %v8514
        %v8517 = vsub.f32 %v8467, %v8489
        %v8518 = vsub.f32 %v8468, %v8490
        %v8519 = vsel %vm8494, %v8517, 0.0
        %v8520 = vsel %vm8494, %v8518, 0.0
        %v8521 = vmul.f32 %v8519, %v8519
        %v8522 = vmul.f32 %v8520, %v8520
        %8523 = vadd.xlane.f32.xlu0 %v8521
        %v8524 = vpop.xlane.xlu0 %8523
        %8525 = vadd.xlane.f32.xlu0 %v8522
        %v8526 = vpop.xlane.xlu0 %8525
        %v8527 = vadd.f32 %v8515, %v8524
        %v8528 = vadd.f32 %v8516, %v8526
        %v8529 = vsub.f32 %v8481, %v8489
        %v8530 = vsub.f32 %v8482, %v8490
        %v8531 = vsel %vm8494, %v8529, 0.0
        %v8532 = vsel %vm8494, %v8530, 0.0
        %v8533 = vmul.f32 %v8531, %v8531
        %v8534 = vmul.f32 %v8532, %v8532
        %8535 = vadd.xlane.f32.xlu0 %v8533
        %v8536 = vpop.xlane.xlu0 %8535
        %8537 = vadd.xlane.f32.xlu0 %v8534
        %v8538 = vpop.xlane.xlu0 %8537
        %v8539 = vadd.f32 %v8527, %v8536
        %v8540 = vadd.f32 %v8528, %v8538
        %v8541 = vmul.f32 %v8539, 0.0026041667
        %v8542 = vmul.f32 %v8540, 0.0026041667
        %v8543 = vadd.f32 %v8541, 1e-05
        %v8544 = vadd.f32 %v8542, 1e-05
        %v8545 = vrsqrt.pop %v8543
        %v8546 = vrsqrt.pop %v8544
        %v8547 = vmul.f32 %v8491, %v8545
        %v8548 = vmul.f32 %v8492, %v8546
        %v8549 = vpack.c.bf16 %v8548, %v8547
        %s8550 = scalar_lea.vmem %s2, 512
        %v8551 = vld [vmem:[%s8550] sm:$0xf]
        %v8552 = vld [vmem:[%s8550 + $0x4] sm:$0xf]
        %v8553 = vld [vmem:[%s8550 + $0x8] sm:$0xf]
        %v8554 = vld [vmem:[%s8550 + $0xc] sm:$0xf]
        %v8555 = vld [vmem:[%s8550 + $0x10] sm:$0xf]
        %v8556 = vld [vmem:[%s8550 + $0x14] sm:$0xf]
        %v8557 = vld [vmem:[%s8550 + $0x18] sm:$0xf]
        %v8558 = vld [vmem:[%s8550 + $0x1c] sm:$0xf]
        %v8559 = vld [vmem:[%s8550 + $0x20] sm:$0xf]
        %v8560 = vld [vmem:[%s8550 + $0x24] sm:$0xf]
        %v8561 = vld [vmem:[%s8550 + $0x28] sm:$0xf]
        %v8562 = vld [vmem:[%s8550 + $0x2c] sm:$0xf]
        %v8563 = vld [vmem:[%s8550 + $0x30] sm:$0xf]
        %v8564 = vld [vmem:[%s8550 + $0x34] sm:$0xf]
        %v8565 = vld [vmem:[%s8550 + $0x38] sm:$0xf]
        %v8566 = vld [vmem:[%s8550 + $0x3c] sm:$0xf]
        %v8567 = vmul.f32 %v8505, %v8545
        %v8568 = vmul.f32 %v8506, %v8546
        %v8569 = vpack.c.bf16 %v8568, %v8567
        %v8570 = vld [vmem:[%s8550 + $0x40] sm:$0xf]
        %v8571 = vld [vmem:[%s8550 + $0x44] sm:$0xf]
        %v8572 = vld [vmem:[%s8550 + $0x48] sm:$0xf]
        %v8573 = vld [vmem:[%s8550 + $0x4c] sm:$0xf]
        %v8574 = vld [vmem:[%s8550 + $0x50] sm:$0xf]
        %v8575 = vld [vmem:[%s8550 + $0x54] sm:$0xf]
        %v8576 = vld [vmem:[%s8550 + $0x58] sm:$0xf]
        %v8577 = vld [vmem:[%s8550 + $0x5c] sm:$0xf]
        %v8578 = vld [vmem:[%s8550 + $0x60] sm:$0xf]
        %v8579 = vld [vmem:[%s8550 + $0x64] sm:$0xf]
        %v8580 = vld [vmem:[%s8550 + $0x68] sm:$0xf]
        %v8581 = vld [vmem:[%s8550 + $0x6c] sm:$0xf]
        %v8582 = vld [vmem:[%s8550 + $0x70] sm:$0xf]
        %v8583 = vld [vmem:[%s8550 + $0x74] sm:$0xf]
        %v8584 = vld [vmem:[%s8550 + $0x78] sm:$0xf]
        %v8585 = vld [vmem:[%s8550 + $0x7c] sm:$0xf]
        %v8602 = vunpack.c.l.b16 %v8570
        %v8603 = vunpack.c.l.b16 %v8571
        %v8604 = vunpack.c.l.b16 %v8572
        %v8605 = vunpack.c.l.b16 %v8573
        %v8606 = vunpack.c.l.b16 %v8574
        %v8607 = vunpack.c.l.b16 %v8575
        %v8608 = vunpack.c.l.b16 %v8576
        %v8609 = vunpack.c.l.b16 %v8577
        %v8610 = vunpack.c.l.b16 %v8578
        %v8611 = vunpack.c.l.b16 %v8579
        %v8612 = vunpack.c.l.b16 %v8580
        %v8613 = vunpack.c.l.b16 %v8581
        %v8614 = vunpack.c.l.b16 %v8582
        %v8615 = vunpack.c.l.b16 %v8583
        %v8616 = vunpack.c.l.b16 %v8584
        %v8617 = vunpack.c.l.b16 %v8585
        %v8618 = vpack.c.b16 %v8603, %v8602
        %v8619 = vpack.c.b16 %v8605, %v8604
        %v8620 = vpack.c.b16 %v8607, %v8606
        %v8621 = vpack.c.b16 %v8609, %v8608
        %v8622 = vpack.c.b16 %v8611, %v8610
        %v8623 = vpack.c.b16 %v8613, %v8612
        %v8624 = vpack.c.b16 %v8615, %v8614
        %v8625 = vpack.c.b16 %v8617, %v8616
        %8634 = vmatprep.subr.bf16.mxu0 0
        %8635 = vmatpush1.bf16.msra.mxu0 %v8618
        %8636 = vmatprep.subr.bf16.mxu0 0
        %8637 = vmatpush1.bf16.msra.mxu0 %v8619
        %8638 = vmatprep.subr.bf16.mxu0 0
        %8639 = vmatpush1.bf16.msra.mxu0 %v8620
        %8640 = vmatprep.subr.bf16.mxu0 0
        %8641 = vmatpush1.bf16.msra.mxu0 %v8621
        %8642 = vmatprep.subr.bf16.mxu0 0
        %8643 = vmatpush1.bf16.msra.mxu0 %v8622
        %8644 = vmatprep.subr.bf16.mxu0 0
        %8645 = vmatpush1.bf16.msra.mxu0 %v8623
        %8646 = vmatprep.subr.bf16.mxu0 0
        %8647 = vmatpush1.bf16.msra.mxu0 %v8624
        %8648 = vmatprep.subr.bf16.mxu0 0
        %8649 = vmatpush1.bf16.msra.mxu0 %v8625
        %8650 = vmatprep.subr.bf16.mxu0 0
        %8651 = vmatpush1.bf16.msra.mxu0 0
        %8652 = vmatprep.subr.bf16.mxu0 0
        %8653 = vmatpush1.bf16.msra.mxu0 0
        %8654 = vmatprep.subr.bf16.mxu0 0
        %8655 = vmatpush1.bf16.msra.mxu0 0
        %8656 = vmatprep.subr.bf16.mxu0 0
        %8657 = vmatpush1.bf16.msra.mxu0 0
        %8658 = vmatprep.subr.bf16.mxu0 0
        %8659 = vmatpush1.bf16.msra.mxu0 0
        %8660 = vmatprep.subr.bf16.mxu0 0
        %8661 = vmatpush1.bf16.msra.mxu0 0
        %8662 = vmatprep.subr.bf16.mxu0 0
        %8663 = vmatpush1.bf16.msra.mxu0 0
        %8664 = vmatprep.subr.bf16.mxu0 0
        %8665 = vmatpush1.bf16.msra.mxu0 0
        %8666 = vmatprep.mubr.bf16.mxu0 0
        %8667 = vmatmul.mubr.bf16.gmra.mrb[0].mxu0 %v8569
        %v8668 = vpop.f32.mrb[0].mxu0
        %v8669 = vadd.f32 0.0, %v8668
        %v8670 = vpop.f32.mrb[0].mxu0
        %v8671 = vpop.f32.mrb[0].mxu0
        %v8672 = vadd.f32 0.0, %v8671
        %v8673 = vpop.f32.mrb[0].mxu0
        %8674 = vdwg.mxu0
        %v8691 = vunpack.c.l.b16 %v8551
        %v8692 = vunpack.c.l.b16 %v8552
        %v8693 = vunpack.c.l.b16 %v8553
        %v8694 = vunpack.c.l.b16 %v8554
        %v8695 = vunpack.c.l.b16 %v8555
        %v8696 = vunpack.c.l.b16 %v8556
        %v8697 = vunpack.c.l.b16 %v8557
        %v8698 = vunpack.c.l.b16 %v8558
        %v8699 = vunpack.c.l.b16 %v8559
        %v8700 = vunpack.c.l.b16 %v8560
        %v8701 = vunpack.c.l.b16 %v8561
        %v8702 = vunpack.c.l.b16 %v8562
        %v8703 = vunpack.c.l.b16 %v8563
        %v8704 = vunpack.c.l.b16 %v8564
        %v8705 = vunpack.c.l.b16 %v8565
        %v8706 = vunpack.c.l.b16 %v8566
        %v8707 = vpack.c.b16 %v8692, %v8691
        %v8708 = vpack.c.b16 %v8694, %v8693
        %v8709 = vpack.c.b16 %v8696, %v8695
        %v8710 = vpack.c.b16 %v8698, %v8697
        %v8711 = vpack.c.b16 %v8700, %v8699
        %v8712 = vpack.c.b16 %v8702, %v8701
        %v8713 = vpack.c.b16 %v8704, %v8703
        %v8714 = vpack.c.b16 %v8706, %v8705
        %8723 = vmatprep.subr.bf16.mxu0 0
        %8724 = vmatpush1.bf16.msra.mxu0 %v8707
        %8725 = vmatprep.subr.bf16.mxu0 0
        %8726 = vmatpush1.bf16.msra.mxu0 %v8708
        %8727 = vmatprep.subr.bf16.mxu0 0
        %8728 = vmatpush1.bf16.msra.mxu0 %v8709
        %8729 = vmatprep.subr.bf16.mxu0 0
        %8730 = vmatpush1.bf16.msra.mxu0 %v8710
        %8731 = vmatprep.subr.bf16.mxu0 0
        %8732 = vmatpush1.bf16.msra.mxu0 %v8711
        %8733 = vmatprep.subr.bf16.mxu0 0
        %8734 = vmatpush1.bf16.msra.mxu0 %v8712
        %8735 = vmatprep.subr.bf16.mxu0 0
        %8736 = vmatpush1.bf16.msra.mxu0 %v8713
        %8737 = vmatprep.subr.bf16.mxu0 0
        %8738 = vmatpush1.bf16.msra.mxu0 %v8714
        %8739 = vmatprep.subr.bf16.mxu0 0
        %8740 = vmatpush1.bf16.msra.mxu0 0
        %8741 = vmatprep.subr.bf16.mxu0 0
        %8742 = vmatpush1.bf16.msra.mxu0 0
        %8743 = vmatprep.subr.bf16.mxu0 0
        %8744 = vmatpush1.bf16.msra.mxu0 0
        %8745 = vmatprep.subr.bf16.mxu0 0
        %8746 = vmatpush1.bf16.msra.mxu0 0
        %8747 = vmatprep.subr.bf16.mxu0 0
        %8748 = vmatpush1.bf16.msra.mxu0 0
        %8749 = vmatprep.subr.bf16.mxu0 0
        %8750 = vmatpush1.bf16.msra.mxu0 0
        %8751 = vmatprep.subr.bf16.mxu0 0
        %8752 = vmatpush1.bf16.msra.mxu0 0
        %8753 = vmatprep.subr.bf16.mxu0 0
        %8754 = vmatpush1.bf16.msra.mxu0 0
        %8755 = vmatprep.mubr.bf16.mxu0 0
        %8756 = vmatmul.mubr.bf16.gmra.mrb[0].mxu0 %v8549
        %v8757 = vpop.f32.mrb[0].mxu0
        %v8758 = vadd.f32 %v8669, %v8757
        %v8759 = vpop.f32.mrb[0].mxu0
        %v8760 = vpop.f32.mrb[0].mxu0
        %v8761 = vadd.f32 %v8672, %v8760
        %v8762 = vpop.f32.mrb[0].mxu0
        %8763 = vdwg.mxu0
        %v8764 = vmul.f32 %v8517, %v8545
        %v8765 = vmul.f32 %v8518, %v8546
        %v8766 = vpack.c.bf16 %v8765, %v8764
        %v8767 = vld [vmem:[%s8550 + $0x80] sm:$0xf]
        %v8768 = vld [vmem:[%s8550 + $0x84] sm:$0xf]
        %v8769 = vld [vmem:[%s8550 + $0x88] sm:$0xf]
        %v8770 = vld [vmem:[%s8550 + $0x8c] sm:$0xf]
        %v8771 = vld [vmem:[%s8550 + $0x90] sm:$0xf]
        %v8772 = vld [vmem:[%s8550 + $0x94] sm:$0xf]
        %v8773 = vld [vmem:[%s8550 + $0x98] sm:$0xf]
        %v8774 = vld [vmem:[%s8550 + $0x9c] sm:$0xf]
        %v8775 = vld [vmem:[%s8550 + $0xa0] sm:$0xf]
        %v8776 = vld [vmem:[%s8550 + $0xa4] sm:$0xf]
        %v8777 = vld [vmem:[%s8550 + $0xa8] sm:$0xf]
        %v8778 = vld [vmem:[%s8550 + $0xac] sm:$0xf]
        %v8779 = vld [vmem:[%s8550 + $0xb0] sm:$0xf]
        %v8780 = vld [vmem:[%s8550 + $0xb4] sm:$0xf]
        %v8781 = vld [vmem:[%s8550 + $0xb8] sm:$0xf]
        %v8782 = vld [vmem:[%s8550 + $0xbc] sm:$0xf]
        %v8799 = vunpack.c.l.b16 %v8767
        %v8800 = vunpack.c.l.b16 %v8768
        %v8801 = vunpack.c.l.b16 %v8769
        %v8802 = vunpack.c.l.b16 %v8770
        %v8803 = vunpack.c.l.b16 %v8771
        %v8804 = vunpack.c.l.b16 %v8772
        %v8805 = vunpack.c.l.b16 %v8773
        %v8806 = vunpack.c.l.b16 %v8774
        %v8807 = vunpack.c.l.b16 %v8775
        %v8808 = vunpack.c.l.b16 %v8776
        %v8809 = vunpack.c.l.b16 %v8777
        %v8810 = vunpack.c.l.b16 %v8778
        %v8811 = vunpack.c.l.b16 %v8779
        %v8812 = vunpack.c.l.b16 %v8780
        %v8813 = vunpack.c.l.b16 %v8781
        %v8814 = vunpack.c.l.b16 %v8782
        %v8815 = vpack.c.b16 %v8800, %v8799
        %v8816 = vpack.c.b16 %v8802, %v8801
        %v8817 = vpack.c.b16 %v8804, %v8803
        %v8818 = vpack.c.b16 %v8806, %v8805
        %v8819 = vpack.c.b16 %v8808, %v8807
        %v8820 = vpack.c.b16 %v8810, %v8809
        %v8821 = vpack.c.b16 %v8812, %v8811
        %v8822 = vpack.c.b16 %v8814, %v8813
        %8831 = vmatprep.subr.bf16.mxu0 0
        %8832 = vmatpush1.bf16.msra.mxu0 %v8815
        %8833 = vmatprep.subr.bf16.mxu0 0
        %8834 = vmatpush1.bf16.msra.mxu0 %v8816
        %8835 = vmatprep.subr.bf16.mxu0 0
        %8836 = vmatpush1.bf16.msra.mxu0 %v8817
        %8837 = vmatprep.subr.bf16.mxu0 0
        %8838 = vmatpush1.bf16.msra.mxu0 %v8818
        %8839 = vmatprep.subr.bf16.mxu0 0
        %8840 = vmatpush1.bf16.msra.mxu0 %v8819
        %8841 = vmatprep.subr.bf16.mxu0 0
        %8842 = vmatpush1.bf16.msra.mxu0 %v8820
        %8843 = vmatprep.subr.bf16.mxu0 0
        %8844 = vmatpush1.bf16.msra.mxu0 %v8821
        %8845 = vmatprep.subr.bf16.mxu0 0
        %8846 = vmatpush1.bf16.msra.mxu0 %v8822
        %8847 = vmatprep.subr.bf16.mxu0 0
        %8848 = vmatpush1.bf16.msra.mxu0 0
        %8849 = vmatprep.subr.bf16.mxu0 0
        %8850 = vmatpush1.bf16.msra.mxu0 0
        %8851 = vmatprep.subr.bf16.mxu0 0
        %8852 = vmatpush1.bf16.msra.mxu0 0
        %8853 = vmatprep.subr.bf16.mxu0 0
        %8854 = vmatpush1.bf16.msra.mxu0 0
        %8855 = vmatprep.subr.bf16.mxu0 0
        %8856 = vmatpush1.bf16.msra.mxu0 0
        %8857 = vmatprep.subr.bf16.mxu0 0
        %8858 = vmatpush1.bf16.msra.mxu0 0
        %8859 = vmatprep.subr.bf16.mxu0 0
        %8860 = vmatpush1.bf16.msra.mxu0 0
        %8861 = vmatprep.subr.bf16.mxu0 0
        %8862 = vmatpush1.bf16.msra.mxu0 0
        %8863 = vmatprep.mubr.bf16.mxu0 0
        %8864 = vmatmul.mubr.bf16.gmra.mrb[0].mxu0 %v8766
        %v8865 = vpop.f32.mrb[0].mxu0
        %v8866 = vadd.f32 0.0, %v8865
        %v8867 = vpop.f32.mrb[0].mxu0
        %v8868 = vpop.f32.mrb[0].mxu0
        %v8869 = vadd.f32 0.0, %v8868
        %v8870 = vpop.f32.mrb[0].mxu0
        %8871 = vdwg.mxu0
        %v8872 = vadd.f32 %v8758, %v8866
        %v8873 = vadd.f32 %v8761, %v8869
        %v8874 = vmul.f32 %v8529, %v8545
        %v8875 = vmul.f32 %v8530, %v8546
        %v8876 = vpack.c.bf16 %v8875, %v8874
        %v8877 = vld [vmem:[%s8550 + $0xc0] sm:$0xf]
        %v8878 = vld [vmem:[%s8550 + $0xc4] sm:$0xf]
        %v8879 = vld [vmem:[%s8550 + $0xc8] sm:$0xf]
        %v8880 = vld [vmem:[%s8550 + $0xcc] sm:$0xf]
        %v8881 = vld [vmem:[%s8550 + $0xd0] sm:$0xf]
        %v8882 = vld [vmem:[%s8550 + $0xd4] sm:$0xf]
        %v8883 = vld [vmem:[%s8550 + $0xd8] sm:$0xf]
        %v8884 = vld [vmem:[%s8550 + $0xdc] sm:$0xf]
        %v8885 = vld [vmem:[%s8550 + $0xe0] sm:$0xf]
        %v8886 = vld [vmem:[%s8550 + $0xe4] sm:$0xf]
        %v8887 = vld [vmem:[%s8550 + $0xe8] sm:$0xf]
        %v8888 = vld [vmem:[%s8550 + $0xec] sm:$0xf]
        %v8889 = vld [vmem:[%s8550 + $0xf0] sm:$0xf]
        %v8890 = vld [vmem:[%s8550 + $0xf4] sm:$0xf]
        %v8891 = vld [vmem:[%s8550 + $0xf8] sm:$0xf]
        %v8892 = vld [vmem:[%s8550 + $0xfc] sm:$0xf]
        %v8909 = vunpack.c.l.b16 %v8877
        %v8910 = vunpack.c.l.b16 %v8878
        %v8911 = vunpack.c.l.b16 %v8879
        %v8912 = vunpack.c.l.b16 %v8880
        %v8913 = vunpack.c.l.b16 %v8881
        %v8914 = vunpack.c.l.b16 %v8882
        %v8915 = vunpack.c.l.b16 %v8883
        %v8916 = vunpack.c.l.b16 %v8884
        %v8917 = vunpack.c.l.b16 %v8885
        %v8918 = vunpack.c.l.b16 %v8886
        %v8919 = vunpack.c.l.b16 %v8887
        %v8920 = vunpack.c.l.b16 %v8888
        %v8921 = vunpack.c.l.b16 %v8889
        %v8922 = vunpack.c.l.b16 %v8890
        %v8923 = vunpack.c.l.b16 %v8891
        %v8924 = vunpack.c.l.b16 %v8892
        %v8925 = vpack.c.b16 %v8910, %v8909
        %v8926 = vpack.c.b16 %v8912, %v8911
        %v8927 = vpack.c.b16 %v8914, %v8913
        %v8928 = vpack.c.b16 %v8916, %v8915
        %v8929 = vpack.c.b16 %v8918, %v8917
        %v8930 = vpack.c.b16 %v8920, %v8919
        %v8931 = vpack.c.b16 %v8922, %v8921
        %v8932 = vpack.c.b16 %v8924, %v8923
        %8941 = vmatprep.subr.bf16.mxu0 0
        %8942 = vmatpush1.bf16.msra.mxu0 %v8925
        %8943 = vmatprep.subr.bf16.mxu0 0
        %8944 = vmatpush1.bf16.msra.mxu0 %v8926
        %8945 = vmatprep.subr.bf16.mxu0 0
        %8946 = vmatpush1.bf16.msra.mxu0 %v8927
        %8947 = vmatprep.subr.bf16.mxu0 0
        %8948 = vmatpush1.bf16.msra.mxu0 %v8928
        %8949 = vmatprep.subr.bf16.mxu0 0
        %8950 = vmatpush1.bf16.msra.mxu0 %v8929
        %8951 = vmatprep.subr.bf16.mxu0 0
        %8952 = vmatpush1.bf16.msra.mxu0 %v8930
        %8953 = vmatprep.subr.bf16.mxu0 0
        %8954 = vmatpush1.bf16.msra.mxu0 %v8931
        %8955 = vmatprep.subr.bf16.mxu0 0
        %8956 = vmatpush1.bf16.msra.mxu0 %v8932
        %8957 = vmatprep.subr.bf16.mxu0 0
        %8958 = vmatpush1.bf16.msra.mxu0 0
        %8959 = vmatprep.subr.bf16.mxu0 0
        %8960 = vmatpush1.bf16.msra.mxu0 0
        %8961 = vmatprep.subr.bf16.mxu0 0
        %8962 = vmatpush1.bf16.msra.mxu0 0
        %8963 = vmatprep.subr.bf16.mxu0 0
        %8964 = vmatpush1.bf16.msra.mxu0 0
        %8965 = vmatprep.subr.bf16.mxu0 0
        %8966 = vmatpush1.bf16.msra.mxu0 0
        %8967 = vmatprep.subr.bf16.mxu0 0
        %8968 = vmatpush1.bf16.msra.mxu0 0
        %8969 = vmatprep.subr.bf16.mxu0 0
        %8970 = vmatpush1.bf16.msra.mxu0 0
        %8971 = vmatprep.subr.bf16.mxu0 0
        %8972 = vmatpush1.bf16.msra.mxu0 0
        %8973 = vmatprep.mubr.bf16.mxu0 0
        %8974 = vmatmul.mubr.bf16.gmra.mrb[0].mxu0 %v8876
        %v8975 = vpop.f32.mrb[0].mxu0
        %v8976 = vadd.f32 0.0, %v8975
        %v8977 = vpop.f32.mrb[0].mxu0
        %v8978 = vpop.f32.mrb[0].mxu0
        %v8979 = vadd.f32 0.0, %v8978
        %v8980 = vpop.f32.mrb[0].mxu0
        %8981 = vdwg.mxu0
        %v8982 = vadd.f32 %v8872, %v8976
        %v8983 = vadd.f32 %v8873, %v8979
        %v8984 = vlaneseq
        %v8985 = vshrl.u32 %v8984, 7
        %v8986 = vsub.s32 4, %v8985
        %v8987 = vrot.slane %v224, %v8986
        %v8988 = vadd.f32 %v8982, %v8987
        %v8989 = vadd.f32 %v8983, %v8987
        %8990 = vst [vmem:[#allocation5] sm:$0xff] %v8988
        %8991 = vst [vmem:[#allocation5 + $0x8] sm:$0xff] %v8989
        %v8992 = vld [vmem:[#allocation5] sm:$0xff]
        %v8993 = vld [vmem:[#allocation5 + $0x8] sm:$0xff]
        %v8994 = vpack.c.bf16 %v8993, %v8992
        %v8995 = vld [vmem:[%s3] sm:$0xf]
        %v8996 = vld [vmem:[%s3 + $0x4] sm:$0xf]
        %v8997 = vld [vmem:[%s3 + $0x8] sm:$0xf]
        %v8998 = vld [vmem:[%s3 + $0xc] sm:$0xf]
        %v8999 = vld [vmem:[%s3 + $0x10] sm:$0xf]
        %v9000 = vld [vmem:[%s3 + $0x14] sm:$0xf]
        %v9001 = vld [vmem:[%s3 + $0x18] sm:$0xf]
        %v9002 = vld [vmem:[%s3 + $0x1c] sm:$0xf]
        %v9003 = vld [vmem:[%s3 + $0x20] sm:$0xf]
        %v9004 = vld [vmem:[%s3 + $0x24] sm:$0xf]
        %v9005 = vld [vmem:[%s3 + $0x28] sm:$0xf]
        %v9006 = vld [vmem:[%s3 + $0x2c] sm:$0xf]
        %v9007 = vld [vmem:[%s3 + $0x30] sm:$0xf]
        %v9008 = vld [vmem:[%s3 + $0x34] sm:$0xf]
        %v9009 = vld [vmem:[%s3 + $0x38] sm:$0xf]
        %v9010 = vld [vmem:[%s3 + $0x3c] sm:$0xf]
        %v9011 = vlaneseq
        %v9012 = vshrl.u32 %v9011, 7
        %v9013 = vsub.s32 5, %v9012
        %v9014 = vrot.slane %v224, %v9013
        %v9031 = vunpack.c.l.b16 %v8995
        %v9032 = vunpack.c.l.b16 %v8996
        %v9033 = vunpack.c.l.b16 %v8997
        %v9034 = vunpack.c.l.b16 %v8998
        %v9035 = vunpack.c.l.b16 %v8999
        %v9036 = vunpack.c.l.b16 %v9000
        %v9037 = vunpack.c.l.b16 %v9001
        %v9038 = vunpack.c.l.b16 %v9002
        %v9039 = vunpack.c.l.b16 %v9003
        %v9040 = vunpack.c.l.b16 %v9004
        %v9041 = vunpack.c.l.b16 %v9005
        %v9042 = vunpack.c.l.b16 %v9006
        %v9043 = vunpack.c.l.b16 %v9007
        %v9044 = vunpack.c.l.b16 %v9008
        %v9045 = vunpack.c.l.b16 %v9009
        %v9046 = vunpack.c.l.b16 %v9010
        %v9047 = vpack.c.b16 %v9032, %v9031
        %v9048 = vpack.c.b16 %v9034, %v9033
        %v9049 = vpack.c.b16 %v9036, %v9035
        %v9050 = vpack.c.b16 %v9038, %v9037
        %v9051 = vpack.c.b16 %v9040, %v9039
        %v9052 = vpack.c.b16 %v9042, %v9041
        %v9053 = vpack.c.b16 %v9044, %v9043
        %v9054 = vpack.c.b16 %v9046, %v9045
        %9063 = vmatprep.subr.bf16.mxu0 0
        %9064 = vmatpush1.bf16.msra.mxu0 %v9047
        %9065 = vmatprep.subr.bf16.mxu0 0
        %9066 = vmatpush1.bf16.msra.mxu0 %v9048
        %9067 = vmatprep.subr.bf16.mxu0 0
        %9068 = vmatpush1.bf16.msra.mxu0 %v9049
        %9069 = vmatprep.subr.bf16.mxu0 0
        %9070 = vmatpush1.bf16.msra.mxu0 %v9050
        %9071 = vmatprep.subr.bf16.mxu0 0
        %9072 = vmatpush1.bf16.msra.mxu0 %v9051
        %9073 = vmatprep.subr.bf16.mxu0 0
        %9074 = vmatpush1.bf16.msra.mxu0 %v9052
        %9075 = vmatprep.subr.bf16.mxu0 0
        %9076 = vmatpush1.bf16.msra.mxu0 %v9053
        %9077 = vmatprep.subr.bf16.mxu0 0
        %9078 = vmatpush1.bf16.msra.mxu0 %v9054
        %9079 = vmatprep.subr.bf16.mxu0 0
        %9080 = vmatpush1.bf16.msra.mxu0 0
        %9081 = vmatprep.subr.bf16.mxu0 0
        %9082 = vmatpush1.bf16.msra.mxu0 0
        %9083 = vmatprep.subr.bf16.mxu0 0
        %9084 = vmatpush1.bf16.msra.mxu0 0
        %9085 = vmatprep.subr.bf16.mxu0 0
        %9086 = vmatpush1.bf16.msra.mxu0 0
        %9087 = vmatprep.subr.bf16.mxu0 0
        %9088 = vmatpush1.bf16.msra.mxu0 0
        %9089 = vmatprep.subr.bf16.mxu0 0
        %9090 = vmatpush1.bf16.msra.mxu0 0
        %9091 = vmatprep.subr.bf16.mxu0 0
        %9092 = vmatpush1.bf16.msra.mxu0 0
        %9093 = vmatprep.subr.bf16.mxu0 0
        %9094 = vmatpush1.bf16.msra.mxu0 0
        %9095 = vmatprep.mubr.bf16.mxu0 0
        %9096 = vmatmul.mubr.bf16.gmra.mrb[0].mxu0 %v8994
        %v9097 = vpop.f32.mrb[0].mxu0
        %v9098 = vadd.f32 %v9014, %v9097
        %v9099 = vpop.f32.mrb[0].mxu0
        %v9100 = vpop.f32.mrb[0].mxu0
        %v9101 = vadd.f32 %v9014, %v9100
        %v9102 = vpop.f32.mrb[0].mxu0
        %9103 = vdwg.mxu0
        %9104 = vst [vmem:[%s217] sm:$0xff] %v9098
        %9105 = vst [vmem:[%s217 + $0x8] sm:$0xff] %v9101
        %s9106 = sand.u32 %s137, 1
        %s9107 = scalar_lea.sflag [#allocation7], %s9106
        %s9108 = sand.u32 %s137, 1
        %s9109 = smul.addr %s9108, 16
        %s9110 = scalar_lea.vmem [#allocation6], %s9109
        // Predicated region
        $region41: #{mamba_encoder_forward.1} parent=39 // pred_check
          %p9111 = pneg %p147
        $region42: #{mamba_encoder_forward.1} parent=39 // pred_check_branch
          %9113 = sbr.rel (%p9111) target = $region44
        $region43: #{mamba_encoder_forward.1} parent=39 // pred_region
          %s9115 = ssub.s32 256, 256
          %9116 = vsyncadd %s9107, %s9115
          %s9117 = smul.addr %s19, 2
          %s9118 = smul.addr %s9117, 128
          %s9119 = scalar_lea.hbm %s5, %s9118
          %s9120 = sshll.u32 %s9110, 4
          %s9121 = int_to_ptr.vmem [resolvable:$true] %s9120
          %9126 = dma.vmem_to_hbm [thread:$0]  %s9121, 256, %s9119, %s9107, 128, 128, 8
        $region44: #{mamba_encoder_forward.1} parent=39 // pred_fallthru
          _
      $region40: #{mamba_encoder_forward.1} parent=5 // pred_fallthru
        _
      %p9127 = scmp.le.s32.totalorder 2, %s14
      // Predicated region
      $region45: #{mamba_encoder_forward.1} parent=5 // pred_check
        %p9128 = pneg %p9127
      $region46: #{mamba_encoder_forward.1} parent=5 // pred_check_branch
        %9130 = sbr.rel (%p9128) target = $region48
      $region47: #{mamba_encoder_forward.1} parent=5 // pred_region
        %s9131 = ssub.s32 %s14, 2
        // Predicated region
        $region49: #{mamba_encoder_forward.1} parent=47 // pred_check
          %p9132 = pneg %p153
        $region50: #{mamba_encoder_forward.1} parent=47 // pred_check_branch
          %9134 = sbr.rel (%p9132) target = $region52
        $region51: #{mamba_encoder_forward.1} parent=47 // pred_region
          %s9135 = sand.u32 %s138, 1
          %s9136 = scalar_lea.sflag [#allocation7], %s9135
          %s9137 = sand.u32 %s138, 1
          %s9138 = smul.addr %s9137, 16
          %s9139 = scalar_lea.vmem [#allocation6], %s9138
          %9140 = dma.done %s9136, 256
        $region52: #{mamba_encoder_forward.1} parent=47 // pred_fallthru
          _
      $region48: #{mamba_encoder_forward.1} parent=5 // pred_fallthru
        _
    $region6: #{mamba_encoder_forward.1} parent=1 // loop_footer
      %s18 = sadd.s32 1, %s14
    $region7: #{mamba_encoder_forward.1} parent=1 // loop_footer_branch
      %13 = sbr.rel target = $region3
    $region8: #{mamba_encoder_forward.1} parent=1 // loop_exit
      _
    %9141 = vsyncpa [#allocation7], 1
    %s9142 = scalar_lea.sflag [#allocation7], 1
    %9143 = vsyncpa %s9142, 1

</llo_original>
